<compile_context>
chip_gen: v6e
topology: v6e:2x2x1
jax: 0.10.0
libtpu: 0.0.40
codegen_flags: <defaults>
</compile_context>

<pallas_src>
import functools

import jax
import jax.numpy as jnp
from jax.experimental import pallas as pl
from jax.experimental.pallas import tpu as pltpu

KSIZE = 7
PAD = 3


# ----------------------------- Pallas kernels ------------------------------ #

def _make_conv_kernel(L):
    """Fused Conv1d+BN+ReLU -> Conv1d+BN+ReLU over a batch chunk.

    Layout: samples are concatenated along the lane axis (width W = NB*L).

    xs_ref: (7*Cin, W)   im2col'd, zero-padded input (tap-major, channel-minor rows)
    ll_ref: (1, W)       within-sample position index (0..L-1, tiled NB times)
    w1_ref: (Cout, 7*Cin)  conv1 weights with taps folded into the contraction
    s1/b1:  (Cout, 1)    folded BN1 scale / (conv-bias + BN1 shift)
    w2_ref: (7, Cout, Cout) conv2 per-tap weights
    s2/b2:  (Cout, 1)    folded BN2 scale / shift
    o_ref:  (Cout, W)
    """
    def kernel(xs_ref, ll_ref, w1_ref, s1_ref, b1_ref,
               w2_ref, s2_ref, b2_ref, o_ref):
        W = o_ref.shape[-1]
        # ---- conv1: single K = 7*Cin contraction, then folded BN + ReLU ----
        v = jnp.dot(w1_ref[...], xs_ref[...], preferred_element_type=jnp.float32)
        v = jnp.maximum(v * s1_ref[...] + b1_ref[...], 0.0)          # (Cout, W)

        # ---- conv2: 7 taps via static lane rolls + per-sample boundary masks ----
        ll = ll_ref[...]                                             # (1, W) int32
        acc = jnp.dot(w2_ref[PAD], v, preferred_element_type=jnp.float32)  # d = 0 tap
        for k in range(KSIZE):
            d = k - PAD
            if d == 0:
                continue
            # shifted[:, g] = v[:, g + d] within the same sample, else 0 (zero padding)
            shifted = pltpu.roll(v, shift=(-d) % W, axis=1)
            mask = (ll + d >= 0) & (ll + d < L)
            sv = jnp.where(mask, shifted, 0.0)
            acc = acc + jnp.dot(w2_ref[k], sv, preferred_element_type=jnp.float32)

        y = acc * s2_ref[...] + b2_ref[...]
        o_ref[...] = jnp.maximum(y, 0.0)

    return kernel


def _gat_kernel(x_ref, a_ref, adj_ref, w_ref, b_ref, o_ref, alpha_sc, xb_sc):
    """Dense single-head GATConv, merged over 2 channels and tiled over W columns.

    grid = (channel c, column tile j)

    x_ref:   (1, N, F)  f32 node features for channel c
    a_ref:   (1, F, 2)  f32 precomputed [W @ att_src^T | W @ att_dst^T]
    adj_ref: (N, N)     {0,1} mask, adj[dst, src] = 1 (self loops included)
    w_ref:   (1, F, TN) bf16 weight column tile
    b_ref:   (1, 1, TN) f32 bias tile
    o_ref:   (1, N, TN) f32 output tile
    alpha_sc:(N, N)     f32 attention (cached across column tiles)
    xb_sc:   (N, F)     bf16 cast of x (cached across column tiles)
    """
    @pl.when(pl.program_id(1) == 0)
    def _():
        x = x_ref[0]                                                  # (N, F) f32
        xb_sc[...] = x.astype(jnp.bfloat16)
        att = jnp.dot(x, a_ref[0], preferred_element_type=jnp.float32)  # (N, 2)
        asrc = att[:, 0:1]                                            # (N, 1)
        adst = att[:, 1:2]                                            # (N, 1)
        e = adst + asrc.T                                             # e[i,j] = a_dst[i]+a_src[j]
        e = jnp.where(e >= 0.0, e, 0.2 * e)                           # LeakyReLU(0.2)
        e = jnp.where(adj_ref[...] > 0.0, e, -1e30)                   # mask non-edges
        p = jnp.exp(e - jnp.max(e, axis=-1, keepdims=True))
        denom = jnp.sum(p, axis=-1, keepdims=True)
        alpha_sc[...] = p * pl.reciprocal(denom, approx=True)         # softmax over sources
        # TODO(synk): attention dropout (training-only) intentionally omitted (eval mode).

    xw = jnp.dot(xb_sc[...], w_ref[0], preferred_element_type=jnp.float32)   # (N, TN)
    o_ref[0] = (jnp.dot(alpha_sc[...], xw, preferred_element_type=jnp.float32)
                + b_ref[0])


# ------------------------------ Pallas wrappers ----------------------------- #

def _pick_chunk(N, L, max_lanes=32768):
    """Largest divisor of N such that the chunk width NB*L stays VMEM-friendly."""
    for cand in range(N, 0, -1):
        if N % cand == 0 and cand * L <= max_lanes:
            return cand
    return 1


def conv_downsample(x, p1, p2):
    """Fused 2x (Conv1d(k=7,p=3) + BN(eval) + ReLU).

    x: (N, Cin, L) f32.  Returns value in channel-major layout (Cout, N, L).
    """
    N, Cin, L = x.shape
    Cout = p1['scale'].shape[0]

    # im2col for conv1 in the wrapper (cheap: Cin is tiny) -> single K=7*Cin matmul.
    xp = jnp.pad(x, ((0, 0), (0, 0), (PAD, PAD)))                     # (N, Cin, L+6)
    cols = jnp.stack([xp[:, :, k:k + L] for k in range(KSIZE)], axis=1)  # (N, 7, Cin, L)
    xs = (cols.reshape(N, KSIZE * Cin, L)
              .transpose(1, 0, 2)
              .reshape(KSIZE * Cin, N * L))                           # (7*Cin, N*L)

    nb = _pick_chunk(N, L)
    Wc = nb * L
    ll = jnp.tile(jnp.arange(L, dtype=jnp.int32), nb).reshape(1, Wc)

    out = pl.pallas_call(
        _make_conv_kernel(L),
        out_shape=jax.ShapeDtypeStruct((Cout, N * L), jnp.float32),
        grid=(N // nb,),
        in_specs=[
            pl.BlockSpec((KSIZE * Cin, Wc), lambda b: (0, b)),
            pl.BlockSpec((1, Wc), lambda b: (0, 0)),
            pl.BlockSpec((Cout, KSIZE * Cin), lambda b: (0, 0)),
            pl.BlockSpec((Cout, 1), lambda b: (0, 0)),
            pl.BlockSpec((Cout, 1), lambda b: (0, 0)),
            pl.BlockSpec((KSIZE, Cout, Cout), lambda b: (0, 0, 0)),
            pl.BlockSpec((Cout, 1), lambda b: (0, 0)),
            pl.BlockSpec((Cout, 1), lambda b: (0, 0)),
        ],
        out_specs=pl.BlockSpec((Cout, Wc), lambda b: (0, b)),
        compiler_params=pltpu.CompilerParams(dimension_semantics=("parallel",)),
    )(xs, ll, p1['w'], p1['scale'], p1['bias'], p2['w'], p2['scale'], p2['bias'])

    return out.reshape(Cout, N, L)


def gat_pair(x2, adj, gp):
    """Two GATConv layers (channel 0 / channel 1) in one pallas_call.

    x2: (2, N, F) f32 node features; adj: (N, N) dense mask with self loops.
    gp: dict with 'w' (2,F,F) bf16, 'a' (2,F,2) f32, 'bias' (2,1,F) f32.
    Returns (2, N, F) f32.
    """
    _, N, F = x2.shape
    tn = 512 if F % 512 == 0 else F            # bf16 column tile: 2x3 MiB buffers at F=3072
    nj = F // tn

    return pl.pallas_call(
        _gat_kernel,
        out_shape=jax.ShapeDtypeStruct((2, N, F), jnp.float32),
        grid=(2, nj),
        in_specs=[
            pl.BlockSpec((1, N, F), lambda c, j: (c, 0, 0)),
            pl.BlockSpec((1, F, 2), lambda c, j: (c, 0, 0)),
            pl.BlockSpec((N, N), lambda c, j: (0, 0)),
            pl.BlockSpec((1, F, tn), lambda c, j: (c, 0, j)),
            pl.BlockSpec((1, 1, tn), lambda c, j: (c, 0, j)),
        ],
        out_specs=pl.BlockSpec((1, N, tn), lambda c, j: (c, 0, j)),
        scratch_shapes=[pltpu.VMEM((N, N), jnp.float32),
                        pltpu.VMEM((N, F), jnp.bfloat16)],
        compiler_params=pltpu.CompilerParams(
            dimension_semantics=("parallel", "arbitrary")),
    )(x2, gp['a'], adj, gp['w'], gp['bias'])


# ------------------------------ Parameter init ------------------------------ #

def init_params(key, in_ch, out_ch, feature, head=1):
    assert head == 1, "GNN_layer_GAT's channel assignment requires heads == 1."
    ks = jax.random.split(key, 5)

    def conv_block(k, cin, cout, fold_taps):
        kk = jax.random.split(k, 6)
        w = 0.1 * jax.random.normal(kk[0], (cout, cin, KSIZE), jnp.float32)
        b = 0.1 * jax.random.normal(kk[1], (cout,), jnp.float32)
        gamma = 1.0 + 0.1 * jax.random.normal(kk[2], (cout,), jnp.float32)
        beta = 0.1 * jax.random.normal(kk[3], (cout,), jnp.float32)
        mean = 0.1 * jax.random.normal(kk[4], (cout,), jnp.float32)
        var = 0.5 + jnp.abs(jax.random.normal(kk[5], (cout,), jnp.float32))
        s = gamma / jnp.sqrt(var + 1e-5)                 # fold eval-mode BatchNorm
        bias = (b - mean) * s + beta
        if fold_taps:
            wr = jnp.transpose(w, (0, 2, 1)).reshape(cout, KSIZE * cin)   # (Cout, 7*Cin)
        else:
            wr = jnp.transpose(w, (2, 0, 1))                              # (7, Cout, Cin)
        return dict(w=wr, scale=s.reshape(cout, 1), bias=bias.reshape(cout, 1))

    def gat_layer(k, F):
        kk = jax.random.split(k, 4)
        glorot = 1.0 / jnp.sqrt(jnp.float32(F))
        w = glorot * jax.random.normal(kk[0], (F, F), jnp.float32)
        att_src = 0.1 * jax.random.normal(kk[1], (1, F), jnp.float32)
        att_dst = 0.1 * jax.random.normal(kk[2], (1, F), jnp.float32)
        bias = 0.1 * jax.random.normal(kk[3], (1, F), jnp.float32)
        # Precompute W @ att^T so attention never needs the full xp inside the kernel.
        a_both = jnp.concatenate([w @ att_src.reshape(F, 1),
                                  w @ att_dst.reshape(F, 1)], axis=1)    # (F, 2)
        return w, a_both, bias

    w_g1, a_g1, b_g1 = gat_layer(ks[2], feature)
    w_g2, a_g2, b_g2 = gat_layer(ks[3], feature)

    return dict(
        conv1=conv_block(ks[0], in_ch, out_ch, fold_taps=True),
        conv2=conv_block(ks[1], out_ch, out_ch, fold_taps=False),
        gat=dict(
            w=jnp.stack([w_g1, w_g2]).astype(jnp.bfloat16),   # (2, F, F) streamed in bf16
            a=jnp.stack([a_g1, a_g2]),                        # (2, F, 2) f32
            bias=jnp.stack([b_g1, b_g2]),                     # (2, 1, F) f32
        ),
    )


# --------------------------------- Forward ---------------------------------- #

def gnn_layer_gat_forward(params, x, edge_index, dtp, dts, *, feature):
    N = x.shape[0]

    # dtp.view(-1) * feature, truncated to int (matches python int() truncation).
    shift_p = jnp.trunc(dtp.reshape(-1) * feature).astype(jnp.int32)
    shift_s = jnp.trunc(dts.reshape(-1) * feature).astype(jnp.int32)

    # Fused Conv_downsample (both conv+BN+ReLU stages in one Pallas kernel).
    # Output kept channel-major (Cout, N, L) so the GAT kernel consumes it directly.
    value_cm = conv_downsample(x, params['conv1'], params['conv2'])

    # Per-sample circular roll of channels 0 / 1 (data-movement glue, plain JAX).
    # TODO(synk): could be fused into the kernels with dynamic pltpu.roll from SMEM shifts.
    r0 = jax.vmap(jnp.roll)(value_cm[0], shift_p)
    r1 = jax.vmap(jnp.roll)(value_cm[1], shift_s)
    temp_cm = jnp.concatenate([r0[None], r1[None], value_cm[2:]], axis=0)

    # Dense adjacency with self loops (GATConv add_self_loops=True).
    adj = jnp.zeros((N, N), jnp.float32)
    adj = adj.at[edge_index[1], edge_index[0]].set(1.0)   # adj[dst, src] = 1
    adj = jnp.maximum(adj, jnp.eye(N, dtype=jnp.float32))

    # Both GAT layers in one column-tiled, bf16-weight-streamed Pallas call.
    gat_cm = gat_pair(temp_cm[:2], adj, params['gat'])                    # (2, N, F)

    out_cm = jnp.concatenate([gat_cm, temp_cm[2:]], axis=0)

    # Roll channels 0 / 1 back by the negative shifts.
    b0 = jax.vmap(jnp.roll)(gat_cm[0], -shift_p)
    b1 = jax.vmap(jnp.roll)(gat_cm[1], -shift_s)
    out1_cm = jnp.concatenate([b0[None], b1[None], temp_cm[2:]], axis=0)

    to_ncl = lambda a: jnp.transpose(a, (1, 0, 2))         # (Cout, N, L) -> (N, Cout, L)
    return to_ncl(out1_cm), to_ncl(out_cm), to_ncl(temp_cm)


# ----------------------------------- Main ------------------------------------ #

if __name__ == "__main__":
    key = jax.random.PRNGKey(0)
    in_ch, out_ch, head, drop = 3, 8, 1, 0.0
    feature = 256          # module default is 3072; small size for the demo
    N = 8                  # number of graph nodes (== batch dim of x)

    kx, kp, ks_, kparam = jax.random.split(key, 4)
    x = jax.random.normal(kx, (N, in_ch, feature), jnp.float32)
    dtp = jax.random.uniform(kp, (N, 1), jnp.float32)
    dts = jax.random.uniform(ks_, (N, 1), jnp.float32)

    # Simple bidirectional ring graph, edge_index[0]=src, edge_index[1]=dst.
    src = jnp.arange(N, dtype=jnp.int32)
    dst = (src + 1) % N
    edge_index = jnp.stack([jnp.concatenate([src, dst]),
                            jnp.concatenate([dst, src])], axis=0)

    params = init_params(kparam, in_ch, out_ch, feature, head)

    fwd = jax.jit(functools.partial(gnn_layer_gat_forward, feature=feature))
    out1, out, temp_value = fwd(params, x, edge_index, dtp, dts)
    jax.block_until_ready((out1, out, temp_value))

    assert out1.shape == (N, out_ch, feature)
    assert out.shape == (N, out_ch, feature)
    assert temp_value.shape == (N, out_ch, feature)
    print("KERNEL_OK")
</pallas_src>

<mosaic_0001>
module attributes {stable_mosaic.version = 11 : i64} {
  func.func @kernel(%arg0: i32, %arg1: memref<21x2048xf32, #tpu.memory_space<vmem>>, %arg2: memref<1x2048xi32, #tpu.memory_space<vmem>>, %arg3: memref<8x21xf32, #tpu.memory_space<vmem>>, %arg4: memref<8x1xf32, #tpu.memory_space<vmem>>, %arg5: memref<8x1xf32, #tpu.memory_space<vmem>>, %arg6: memref<7x8x8xf32, #tpu.memory_space<vmem>>, %arg7: memref<8x1xf32, #tpu.memory_space<vmem>>, %arg8: memref<8x1xf32, #tpu.memory_space<vmem>>, %arg9: memref<8x2048xf32, #tpu.memory_space<vmem>>) attributes {dimension_semantics = [#tpu.dimension_semantics<parallel>], iteration_bounds = array<i64: 1>, scalar_prefetch = 0 : i64, scratch_operands = 0 : i64, tpu.core_type = #tpu.core_type<tc>, window_params = [{transform_indices = @transform_0, window_bounds = array<i64: 21, 2048>}, {pipeline_mode = #tpu.pipeline_mode<synchronous>, transform_indices = @transform_1, window_bounds = array<i64: 1, 2048>}, {pipeline_mode = #tpu.pipeline_mode<synchronous>, transform_indices = @transform_2, window_bounds = array<i64: 8, 21>}, {pipeline_mode = #tpu.pipeline_mode<synchronous>, transform_indices = @transform_3, window_bounds = array<i64: 8, 1>}, {pipeline_mode = #tpu.pipeline_mode<synchronous>, transform_indices = @transform_4, window_bounds = array<i64: 8, 1>}, {pipeline_mode = #tpu.pipeline_mode<synchronous>, transform_indices = @transform_5, window_bounds = array<i64: 7, 8, 8>}, {pipeline_mode = #tpu.pipeline_mode<synchronous>, transform_indices = @transform_6, window_bounds = array<i64: 8, 1>}, {pipeline_mode = #tpu.pipeline_mode<synchronous>, transform_indices = @transform_7, window_bounds = array<i64: 8, 1>}, {transform_indices = @transform_8, window_bounds = array<i64: 8, 2048>}]} {
    %c0 = arith.constant 0 : index
    %c0_0 = arith.constant 0 : index
    %0 = vector.load %arg3[%c0, %c0_0] : memref<8x21xf32, #tpu.memory_space<vmem>>, vector<8x21xf32>
    %c0_1 = arith.constant 0 : index
    %c0_2 = arith.constant 0 : index
    %1 = vector.load %arg1[%c0_1, %c0_2] : memref<21x2048xf32, #tpu.memory_space<vmem>>, vector<21x2048xf32>
    %cst = arith.constant dense<0.000000e+00> : vector<8x2048xf32>
    %2 = tpu.matmul %0, %1, %cst {dimension_numbers = #tpu.dot_dimension_numbers<[1], [0], [0], [1], [0, 0, 1, 1], [], []>} : vector<8x21xf32>, vector<21x2048xf32>, vector<8x2048xf32> -> vector<8x2048xf32>
    %c0_3 = arith.constant 0 : index
    %c0_4 = arith.constant 0 : index
    %3 = vector.load %arg4[%c0_3, %c0_4] : memref<8x1xf32, #tpu.memory_space<vmem>>, vector<8x1xf32>
    %4 = vector.broadcast %3 : vector<8x1xf32> to vector<8x2048xf32>
    %5 = arith.mulf %2, %4 : vector<8x2048xf32>
    %c0_5 = arith.constant 0 : index
    %c0_6 = arith.constant 0 : index
    %6 = vector.load %arg5[%c0_5, %c0_6] : memref<8x1xf32, #tpu.memory_space<vmem>>, vector<8x1xf32>
    %7 = vector.broadcast %6 : vector<8x1xf32> to vector<8x2048xf32>
    %8 = arith.addf %5, %7 : vector<8x2048xf32>
    %cst_7 = arith.constant 0.000000e+00 : f32
    %9 = vector.broadcast %cst_7 : f32 to vector<8x2048xf32>
    %10 = arith.maximumf %8, %9 : vector<8x2048xf32>
    %c0_8 = arith.constant 0 : index
    %c0_9 = arith.constant 0 : index
    %11 = vector.load %arg2[%c0_8, %c0_9] : memref<1x2048xi32, #tpu.memory_space<vmem>>, vector<1x2048xi32>
    %c3 = arith.constant 3 : index
    %c0_10 = arith.constant 0 : index
    %c0_11 = arith.constant 0 : index
    %12 = vector.load %arg6[%c3, %c0_10, %c0_11] : memref<7x8x8xf32, #tpu.memory_space<vmem>>, vector<1x8x8xf32>
    %13 = vector.shape_cast %12 : vector<1x8x8xf32> to vector<8x8xf32>
    %cst_12 = arith.constant dense<0.000000e+00> : vector<8x2048xf32>
    %14 = tpu.matmul %13, %10, %cst_12 {dimension_numbers = #tpu.dot_dimension_numbers<[1], [0], [0], [1], [0, 0, 1, 1], [], []>} : vector<8x8xf32>, vector<8x2048xf32>, vector<8x2048xf32> -> vector<8x2048xf32>
    %c3_i32 = arith.constant 3 : i32
    %15 = tpu.dynamic_rotate %10 by %c3_i32 dim 1 : vector<8x2048xf32>, i32 -> vector<8x2048xf32>
    %c-3_i32 = arith.constant -3 : i32
    %16 = vector.broadcast %c-3_i32 : i32 to vector<1x2048xi32>
    %17 = arith.addi %11, %16 : vector<1x2048xi32>
    %c0_i32 = arith.constant 0 : i32
    %18 = vector.broadcast %c0_i32 : i32 to vector<1x2048xi32>
    %19 = arith.cmpi sge, %17, %18 : vector<1x2048xi32>
    %c-3_i32_13 = arith.constant -3 : i32
    %20 = vector.broadcast %c-3_i32_13 : i32 to vector<1x2048xi32>
    %21 = arith.addi %11, %20 : vector<1x2048xi32>
    %c256_i32 = arith.constant 256 : i32
    %22 = vector.broadcast %c256_i32 : i32 to vector<1x2048xi32>
    %23 = arith.cmpi slt, %21, %22 : vector<1x2048xi32>
    %24 = arith.andi %19, %23 : vector<1x2048xi1>
    %cst_14 = arith.constant 0.000000e+00 : f32
    %25 = vector.shape_cast %24 : vector<1x2048xi1> to vector<1x2048xi1>
    %26 = vector.broadcast %25 : vector<1x2048xi1> to vector<8x2048xi1>
    %27 = vector.broadcast %cst_14 : f32 to vector<8x2048xf32>
    %28 = arith.select %26, %15, %27 : vector<8x2048xi1>, vector<8x2048xf32>
    %c0_15 = arith.constant 0 : index
    %c0_16 = arith.constant 0 : index
    %c0_17 = arith.constant 0 : index
    %29 = vector.load %arg6[%c0_15, %c0_16, %c0_17] : memref<7x8x8xf32, #tpu.memory_space<vmem>>, vector<1x8x8xf32>
    %30 = vector.shape_cast %29 : vector<1x8x8xf32> to vector<8x8xf32>
    %cst_18 = arith.constant dense<0.000000e+00> : vector<8x2048xf32>
    %31 = tpu.matmul %30, %28, %cst_18 {dimension_numbers = #tpu.dot_dimension_numbers<[1], [0], [0], [1], [0, 0, 1, 1], [], []>} : vector<8x8xf32>, vector<8x2048xf32>, vector<8x2048xf32> -> vector<8x2048xf32>
    %32 = arith.addf %14, %31 : vector<8x2048xf32>
    %c2_i32 = arith.constant 2 : i32
    %33 = tpu.dynamic_rotate %10 by %c2_i32 dim 1 : vector<8x2048xf32>, i32 -> vector<8x2048xf32>
    %c-2_i32 = arith.constant -2 : i32
    %34 = vector.broadcast %c-2_i32 : i32 to vector<1x2048xi32>
    %35 = arith.addi %11, %34 : vector<1x2048xi32>
    %c0_i32_19 = arith.constant 0 : i32
    %36 = vector.broadcast %c0_i32_19 : i32 to vector<1x2048xi32>
    %37 = arith.cmpi sge, %35, %36 : vector<1x2048xi32>
    %c-2_i32_20 = arith.constant -2 : i32
    %38 = vector.broadcast %c-2_i32_20 : i32 to vector<1x2048xi32>
    %39 = arith.addi %11, %38 : vector<1x2048xi32>
    %c256_i32_21 = arith.constant 256 : i32
    %40 = vector.broadcast %c256_i32_21 : i32 to vector<1x2048xi32>
    %41 = arith.cmpi slt, %39, %40 : vector<1x2048xi32>
    %42 = arith.andi %37, %41 : vector<1x2048xi1>
    %cst_22 = arith.constant 0.000000e+00 : f32
    %43 = vector.shape_cast %42 : vector<1x2048xi1> to vector<1x2048xi1>
    %44 = vector.broadcast %43 : vector<1x2048xi1> to vector<8x2048xi1>
    %45 = vector.broadcast %cst_22 : f32 to vector<8x2048xf32>
    %46 = arith.select %44, %33, %45 : vector<8x2048xi1>, vector<8x2048xf32>
    %c1 = arith.constant 1 : index
    %c0_23 = arith.constant 0 : index
    %c0_24 = arith.constant 0 : index
    %47 = vector.load %arg6[%c1, %c0_23, %c0_24] : memref<7x8x8xf32, #tpu.memory_space<vmem>>, vector<1x8x8xf32>
    %48 = vector.shape_cast %47 : vector<1x8x8xf32> to vector<8x8xf32>
    %cst_25 = arith.constant dense<0.000000e+00> : vector<8x2048xf32>
    %49 = tpu.matmul %48, %46, %cst_25 {dimension_numbers = #tpu.dot_dimension_numbers<[1], [0], [0], [1], [0, 0, 1, 1], [], []>} : vector<8x8xf32>, vector<8x2048xf32>, vector<8x2048xf32> -> vector<8x2048xf32>
    %50 = arith.addf %32, %49 : vector<8x2048xf32>
    %c1_i32 = arith.constant 1 : i32
    %51 = tpu.dynamic_rotate %10 by %c1_i32 dim 1 : vector<8x2048xf32>, i32 -> vector<8x2048xf32>
    %c-1_i32 = arith.constant -1 : i32
    %52 = vector.broadcast %c-1_i32 : i32 to vector<1x2048xi32>
    %53 = arith.addi %11, %52 : vector<1x2048xi32>
    %c0_i32_26 = arith.constant 0 : i32
    %54 = vector.broadcast %c0_i32_26 : i32 to vector<1x2048xi32>
    %55 = arith.cmpi sge, %53, %54 : vector<1x2048xi32>
    %c-1_i32_27 = arith.constant -1 : i32
    %56 = vector.broadcast %c-1_i32_27 : i32 to vector<1x2048xi32>
    %57 = arith.addi %11, %56 : vector<1x2048xi32>
    %c256_i32_28 = arith.constant 256 : i32
    %58 = vector.broadcast %c256_i32_28 : i32 to vector<1x2048xi32>
    %59 = arith.cmpi slt, %57, %58 : vector<1x2048xi32>
    %60 = arith.andi %55, %59 : vector<1x2048xi1>
    %cst_29 = arith.constant 0.000000e+00 : f32
    %61 = vector.shape_cast %60 : vector<1x2048xi1> to vector<1x2048xi1>
    %62 = vector.broadcast %61 : vector<1x2048xi1> to vector<8x2048xi1>
    %63 = vector.broadcast %cst_29 : f32 to vector<8x2048xf32>
    %64 = arith.select %62, %51, %63 : vector<8x2048xi1>, vector<8x2048xf32>
    %c2 = arith.constant 2 : index
    %c0_30 = arith.constant 0 : index
    %c0_31 = arith.constant 0 : index
    %65 = vector.load %arg6[%c2, %c0_30, %c0_31] : memref<7x8x8xf32, #tpu.memory_space<vmem>>, vector<1x8x8xf32>
    %66 = vector.shape_cast %65 : vector<1x8x8xf32> to vector<8x8xf32>
    %cst_32 = arith.constant dense<0.000000e+00> : vector<8x2048xf32>
    %67 = tpu.matmul %66, %64, %cst_32 {dimension_numbers = #tpu.dot_dimension_numbers<[1], [0], [0], [1], [0, 0, 1, 1], [], []>} : vector<8x8xf32>, vector<8x2048xf32>, vector<8x2048xf32> -> vector<8x2048xf32>
    %68 = arith.addf %50, %67 : vector<8x2048xf32>
    %c2047_i32 = arith.constant 2047 : i32
    %69 = tpu.dynamic_rotate %10 by %c2047_i32 dim 1 : vector<8x2048xf32>, i32 -> vector<8x2048xf32>
    %c1_i32_33 = arith.constant 1 : i32
    %70 = vector.broadcast %c1_i32_33 : i32 to vector<1x2048xi32>
    %71 = arith.addi %11, %70 : vector<1x2048xi32>
    %c0_i32_34 = arith.constant 0 : i32
    %72 = vector.broadcast %c0_i32_34 : i32 to vector<1x2048xi32>
    %73 = arith.cmpi sge, %71, %72 : vector<1x2048xi32>
    %c1_i32_35 = arith.constant 1 : i32
    %74 = vector.broadcast %c1_i32_35 : i32 to vector<1x2048xi32>
    %75 = arith.addi %11, %74 : vector<1x2048xi32>
    %c256_i32_36 = arith.constant 256 : i32
    %76 = vector.broadcast %c256_i32_36 : i32 to vector<1x2048xi32>
    %77 = arith.cmpi slt, %75, %76 : vector<1x2048xi32>
    %78 = arith.andi %73, %77 : vector<1x2048xi1>
    %cst_37 = arith.constant 0.000000e+00 : f32
    %79 = vector.shape_cast %78 : vector<1x2048xi1> to vector<1x2048xi1>
    %80 = vector.broadcast %79 : vector<1x2048xi1> to vector<8x2048xi1>
    %81 = vector.broadcast %cst_37 : f32 to vector<8x2048xf32>
    %82 = arith.select %80, %69, %81 : vector<8x2048xi1>, vector<8x2048xf32>
    %c4 = arith.constant 4 : index
    %c0_38 = arith.constant 0 : index
    %c0_39 = arith.constant 0 : index
    %83 = vector.load %arg6[%c4, %c0_38, %c0_39] : memref<7x8x8xf32, #tpu.memory_space<vmem>>, vector<1x8x8xf32>
    %84 = vector.shape_cast %83 : vector<1x8x8xf32> to vector<8x8xf32>
    %cst_40 = arith.constant dense<0.000000e+00> : vector<8x2048xf32>
    %85 = tpu.matmul %84, %82, %cst_40 {dimension_numbers = #tpu.dot_dimension_numbers<[1], [0], [0], [1], [0, 0, 1, 1], [], []>} : vector<8x8xf32>, vector<8x2048xf32>, vector<8x2048xf32> -> vector<8x2048xf32>
    %86 = arith.addf %68, %85 : vector<8x2048xf32>
    %c2046_i32 = arith.constant 2046 : i32
    %87 = tpu.dynamic_rotate %10 by %c2046_i32 dim 1 : vector<8x2048xf32>, i32 -> vector<8x2048xf32>
    %c2_i32_41 = arith.constant 2 : i32
    %88 = vector.broadcast %c2_i32_41 : i32 to vector<1x2048xi32>
    %89 = arith.addi %11, %88 : vector<1x2048xi32>
    %c0_i32_42 = arith.constant 0 : i32
    %90 = vector.broadcast %c0_i32_42 : i32 to vector<1x2048xi32>
    %91 = arith.cmpi sge, %89, %90 : vector<1x2048xi32>
    %c2_i32_43 = arith.constant 2 : i32
    %92 = vector.broadcast %c2_i32_43 : i32 to vector<1x2048xi32>
    %93 = arith.addi %11, %92 : vector<1x2048xi32>
    %c256_i32_44 = arith.constant 256 : i32
    %94 = vector.broadcast %c256_i32_44 : i32 to vector<1x2048xi32>
    %95 = arith.cmpi slt, %93, %94 : vector<1x2048xi32>
    %96 = arith.andi %91, %95 : vector<1x2048xi1>
    %cst_45 = arith.constant 0.000000e+00 : f32
    %97 = vector.shape_cast %96 : vector<1x2048xi1> to vector<1x2048xi1>
    %98 = vector.broadcast %97 : vector<1x2048xi1> to vector<8x2048xi1>
    %99 = vector.broadcast %cst_45 : f32 to vector<8x2048xf32>
    %100 = arith.select %98, %87, %99 : vector<8x2048xi1>, vector<8x2048xf32>
    %c5 = arith.constant 5 : index
    %c0_46 = arith.constant 0 : index
    %c0_47 = arith.constant 0 : index
    %101 = vector.load %arg6[%c5, %c0_46, %c0_47] : memref<7x8x8xf32, #tpu.memory_space<vmem>>, vector<1x8x8xf32>
    %102 = vector.shape_cast %101 : vector<1x8x8xf32> to vector<8x8xf32>
    %cst_48 = arith.constant dense<0.000000e+00> : vector<8x2048xf32>
    %103 = tpu.matmul %102, %100, %cst_48 {dimension_numbers = #tpu.dot_dimension_numbers<[1], [0], [0], [1], [0, 0, 1, 1], [], []>} : vector<8x8xf32>, vector<8x2048xf32>, vector<8x2048xf32> -> vector<8x2048xf32>
    %104 = arith.addf %86, %103 : vector<8x2048xf32>
    %c2045_i32 = arith.constant 2045 : i32
    %105 = tpu.dynamic_rotate %10 by %c2045_i32 dim 1 : vector<8x2048xf32>, i32 -> vector<8x2048xf32>
    %c3_i32_49 = arith.constant 3 : i32
    %106 = vector.broadcast %c3_i32_49 : i32 to vector<1x2048xi32>
    %107 = arith.addi %11, %106 : vector<1x2048xi32>
    %c0_i32_50 = arith.constant 0 : i32
    %108 = vector.broadcast %c0_i32_50 : i32 to vector<1x2048xi32>
    %109 = arith.cmpi sge, %107, %108 : vector<1x2048xi32>
    %c3_i32_51 = arith.constant 3 : i32
    %110 = vector.broadcast %c3_i32_51 : i32 to vector<1x2048xi32>
    %111 = arith.addi %11, %110 : vector<1x2048xi32>
    %c256_i32_52 = arith.constant 256 : i32
    %112 = vector.broadcast %c256_i32_52 : i32 to vector<1x2048xi32>
    %113 = arith.cmpi slt, %111, %112 : vector<1x2048xi32>
    %114 = arith.andi %109, %113 : vector<1x2048xi1>
    %cst_53 = arith.constant 0.000000e+00 : f32
    %115 = vector.shape_cast %114 : vector<1x2048xi1> to vector<1x2048xi1>
    %116 = vector.broadcast %115 : vector<1x2048xi1> to vector<8x2048xi1>
    %117 = vector.broadcast %cst_53 : f32 to vector<8x2048xf32>
    %118 = arith.select %116, %105, %117 : vector<8x2048xi1>, vector<8x2048xf32>
    %c6 = arith.constant 6 : index
    %c0_54 = arith.constant 0 : index
    %c0_55 = arith.constant 0 : index
    %119 = vector.load %arg6[%c6, %c0_54, %c0_55] : memref<7x8x8xf32, #tpu.memory_space<vmem>>, vector<1x8x8xf32>
    %120 = vector.shape_cast %119 : vector<1x8x8xf32> to vector<8x8xf32>
    %cst_56 = arith.constant dense<0.000000e+00> : vector<8x2048xf32>
    %121 = tpu.matmul %120, %118, %cst_56 {dimension_numbers = #tpu.dot_dimension_numbers<[1], [0], [0], [1], [0, 0, 1, 1], [], []>} : vector<8x8xf32>, vector<8x2048xf32>, vector<8x2048xf32> -> vector<8x2048xf32>
    %122 = arith.addf %104, %121 : vector<8x2048xf32>
    %c0_57 = arith.constant 0 : index
    %c0_58 = arith.constant 0 : index
    %123 = vector.load %arg7[%c0_57, %c0_58] : memref<8x1xf32, #tpu.memory_space<vmem>>, vector<8x1xf32>
    %124 = vector.broadcast %123 : vector<8x1xf32> to vector<8x2048xf32>
    %125 = arith.mulf %122, %124 : vector<8x2048xf32>
    %c0_59 = arith.constant 0 : index
    %c0_60 = arith.constant 0 : index
    %126 = vector.load %arg8[%c0_59, %c0_60] : memref<8x1xf32, #tpu.memory_space<vmem>>, vector<8x1xf32>
    %127 = vector.broadcast %126 : vector<8x1xf32> to vector<8x2048xf32>
    %128 = arith.addf %125, %127 : vector<8x2048xf32>
    %cst_61 = arith.constant 0.000000e+00 : f32
    %129 = vector.broadcast %cst_61 : f32 to vector<8x2048xf32>
    %130 = arith.maximumf %128, %129 : vector<8x2048xf32>
    %c0_62 = arith.constant 0 : index
    %c0_63 = arith.constant 0 : index
    %131 = vector.load %arg9[%c0_62, %c0_63] : memref<8x2048xf32, #tpu.memory_space<vmem>>, vector<8x2048xf32>
    tpu.vector_store %arg9[%c0_62, %c0_63], %130 {strides = array<i32>} : memref<8x2048xf32, #tpu.memory_space<vmem>>, vector<8x2048xf32>,
    return
  }
  func.func @transform_0(%arg0: i32) -> (i32, i32) {
    %c0_i32 = arith.constant 0 : i32
    %c0_i32_0 = arith.constant 0 : i32
    return %c0_i32, %arg0 : i32, i32
  }
  func.func @transform_1(%arg0: i32) -> (i32, i32) {
    %c0_i32 = arith.constant 0 : i32
    %c0_i32_0 = arith.constant 0 : i32
    %c0_i32_1 = arith.constant 0 : i32
    return %c0_i32, %c0_i32_0 : i32, i32
  }
  func.func @transform_2(%arg0: i32) -> (i32, i32) {
    %c0_i32 = arith.constant 0 : i32
    %c0_i32_0 = arith.constant 0 : i32
    %c0_i32_1 = arith.constant 0 : i32
    return %c0_i32, %c0_i32_0 : i32, i32
  }
  func.func @transform_3(%arg0: i32) -> (i32, i32) {
    %c0_i32 = arith.constant 0 : i32
    %c0_i32_0 = arith.constant 0 : i32
    %c0_i32_1 = arith.constant 0 : i32
    return %c0_i32, %c0_i32_0 : i32, i32
  }
  func.func @transform_4(%arg0: i32) -> (i32, i32) {
    %c0_i32 = arith.constant 0 : i32
    %c0_i32_0 = arith.constant 0 : i32
    %c0_i32_1 = arith.constant 0 : i32
    return %c0_i32, %c0_i32_0 : i32, i32
  }
  func.func @transform_5(%arg0: i32) -> (i32, i32, i32) {
    %c0_i32 = arith.constant 0 : i32
    %c0_i32_0 = arith.constant 0 : i32
    %c0_i32_1 = arith.constant 0 : i32
    %c0_i32_2 = arith.constant 0 : i32
    return %c0_i32, %c0_i32_0, %c0_i32_1 : i32, i32, i32
  }
  func.func @transform_6(%arg0: i32) -> (i32, i32) {
    %c0_i32 = arith.constant 0 : i32
    %c0_i32_0 = arith.constant 0 : i32
    %c0_i32_1 = arith.constant 0 : i32
    return %c0_i32, %c0_i32_0 : i32, i32
  }
  func.func @transform_7(%arg0: i32) -> (i32, i32) {
    %c0_i32 = arith.constant 0 : i32
    %c0_i32_0 = arith.constant 0 : i32
    %c0_i32_1 = arith.constant 0 : i32
    return %c0_i32, %c0_i32_0 : i32, i32
  }
  func.func @transform_8(%arg0: i32) -> (i32, i32) {
    %c0_i32 = arith.constant 0 : i32
    %c0_i32_0 = arith.constant 0 : i32
    return %c0_i32, %arg0 : i32, i32
  }
}

module attributes {stable_mosaic.version = 11 : i64} {
  func.func @_gat_kernel(%arg0: i32, %arg1: i32, %arg2: memref<1x8x256xf32, #tpu.memory_space<vmem>>, %arg3: memref<1x256x2xf32, #tpu.memory_space<vmem>>, %arg4: memref<8x8xf32, #tpu.memory_space<vmem>>, %arg5: memref<1x256x256xbf16, #tpu.memory_space<vmem>>, %arg6: memref<1x1x256xf32, #tpu.memory_space<vmem>>, %arg7: memref<1x8x256xf32, #tpu.memory_space<vmem>>, %arg8: memref<8x8xf32, #tpu.memory_space<vmem>>, %arg9: memref<8x256xbf16, #tpu.memory_space<vmem>>) attributes {dimension_semantics = [#tpu.dimension_semantics<parallel>, #tpu.dimension_semantics<arbitrary>], iteration_bounds = array<i64: 2, 1>, scalar_prefetch = 0 : i64, scratch_operands = 2 : i64, tpu.core_type = #tpu.core_type<tc>, window_params = [{transform_indices = @transform_0, window_bounds = array<i64: 1, 8, 256>}, {transform_indices = @transform_1, window_bounds = array<i64: 1, 256, 2>}, {pipeline_mode = #tpu.pipeline_mode<synchronous>, transform_indices = @transform_2, window_bounds = array<i64: 8, 8>}, {transform_indices = @transform_3, window_bounds = array<i64: 1, 256, 256>}, {transform_indices = @transform_4, window_bounds = array<i64: 1, 1, 256>}, {transform_indices = @transform_5, window_bounds = array<i64: 1, 8, 256>}]} {
    %c0_i32 = arith.constant 0 : i32
    %0 = arith.cmpi eq, %arg1, %c0_i32 : i32
    %1 = arith.extui %0 : i1 to i32
    %c0_i32_0 = arith.constant 0 : i32
    %2 = arith.cmpi ne, %1, %c0_i32_0 : i32
    scf.if %2 {
      %c0_14 = arith.constant 0 : index
      %c0_15 = arith.constant 0 : index
      %c0_16 = arith.constant 0 : index
      %16 = vector.load %arg2[%c0_14, %c0_15, %c0_16] : memref<1x8x256xf32, #tpu.memory_space<vmem>>, vector<1x8x256xf32>
      %17 = vector.shape_cast %16 : vector<1x8x256xf32> to vector<8x256xf32>
      %18 = arith.truncf %17 : vector<8x256xf32> to vector<8x256xbf16>
      %c0_17 = arith.constant 0 : index
      %c0_18 = arith.constant 0 : index
      %19 = vector.load %arg9[%c0_17, %c0_18] : memref<8x256xbf16, #tpu.memory_space<vmem>>, vector<8x256xbf16>
      tpu.vector_store %arg9[%c0_17, %c0_18], %18 {strides = array<i32>} : memref<8x256xbf16, #tpu.memory_space<vmem>>, vector<8x256xbf16>,
      %c0_19 = arith.constant 0 : index
      %c0_20 = arith.constant 0 : index
      %c0_21 = arith.constant 0 : index
      %20 = vector.load %arg3[%c0_19, %c0_20, %c0_21] : memref<1x256x2xf32, #tpu.memory_space<vmem>>, vector<1x256x2xf32>
      %21 = vector.shape_cast %20 : vector<1x256x2xf32> to vector<256x2xf32>
      %cst_22 = arith.constant dense<0.000000e+00> : vector<8x2xf32>
      %22 = tpu.matmul %17, %21, %cst_22 {dimension_numbers = #tpu.dot_dimension_numbers<[1], [0], [0], [1], [0, 0, 1, 1], [], []>} : vector<8x256xf32>, vector<256x2xf32>, vector<8x2xf32> -> vector<8x2xf32>
      %23 = vector.extract_strided_slice %22 {offsets = [0, 0], sizes = [8, 1], strides = [1, 1]} : vector<8x2xf32> to vector<8x1xf32>
      %24 = vector.extract_strided_slice %22 {offsets = [0, 1], sizes = [8, 1], strides = [1, 1]} : vector<8x2xf32> to vector<8x1xf32>
      %25 = tpu.transpose %23, [1, 0] : vector<8x1xf32> -> vector<1x8xf32>
      %26 = vector.broadcast %24 : vector<8x1xf32> to vector<8x8xf32>
      %27 = vector.broadcast %25 : vector<1x8xf32> to vector<8x8xf32>
      %28 = arith.addf %26, %27 : vector<8x8xf32>
      %cst_23 = arith.constant 0.000000e+00 : f32
      %29 = vector.broadcast %cst_23 : f32 to vector<8x8xf32>
      %30 = arith.cmpf oge, %28, %29 : vector<8x8xf32>
      %cst_24 = arith.constant 2.000000e-01 : f32
      %31 = vector.broadcast %cst_24 : f32 to vector<8x8xf32>
      %32 = arith.mulf %31, %28 : vector<8x8xf32>
      %33 = arith.select %30, %28, %32 : vector<8x8xi1>, vector<8x8xf32>
      %c0_25 = arith.constant 0 : index
      %c0_26 = arith.constant 0 : index
      %34 = vector.load %arg4[%c0_25, %c0_26] : memref<8x8xf32, #tpu.memory_space<vmem>>, vector<8x8xf32>
      %cst_27 = arith.constant 0.000000e+00 : f32
      %35 = vector.broadcast %cst_27 : f32 to vector<8x8xf32>
      %36 = arith.cmpf ogt, %34, %35 : vector<8x8xf32>
      %cst_28 = arith.constant -1.000000e+30 : f32
      %37 = vector.broadcast %cst_28 : f32 to vector<8x8xf32>
      %38 = arith.select %36, %33, %37 : vector<8x8xi1>, vector<8x8xf32>
      %cst_29 = arith.constant dense<0xFF800000> : vector<8xf32>
      %39 = vector.multi_reduction <maximumf>, %38, %cst_29 [1] : vector<8x8xf32> to vector<8xf32>
      %40 = vector.shape_cast %39 : vector<8xf32> to vector<8x1xf32>
      %41 = vector.broadcast %40 : vector<8x1xf32> to vector<8x8xf32>
      %42 = arith.subf %38, %41 : vector<8x8xf32>
      %43 = math.exp %42 : vector<8x8xf32>
      %cst_30 = arith.constant dense<0.000000e+00> : vector<8xf32>
      %44 = vector.multi_reduction <add>, %43, %cst_30 [1] : vector<8x8xf32> to vector<8xf32>
      %45 = vector.shape_cast %44 : vector<8xf32> to vector<8x1xf32>
      %46 = tpu.reciprocal %45 {approx = true} : vector<8x1xf32> -> vector<8x1xf32>
      %47 = vector.broadcast %46 : vector<8x1xf32> to vector<8x8xf32>
      %48 = arith.mulf %43, %47 : vector<8x8xf32>
      %c0_31 = arith.constant 0 : index
      %c0_32 = arith.constant 0 : index
      %49 = vector.load %arg8[%c0_31, %c0_32] : memref<8x8xf32, #tpu.memory_space<vmem>>, vector<8x8xf32>
      tpu.vector_store %arg8[%c0_31, %c0_32], %48 {strides = array<i32>} : memref<8x8xf32, #tpu.memory_space<vmem>>, vector<8x8xf32>,
    } else {
    }
    %c0 = arith.constant 0 : index
    %c0_1 = arith.constant 0 : index
    %3 = vector.load %arg9[%c0, %c0_1] : memref<8x256xbf16, #tpu.memory_space<vmem>>, vector<8x256xbf16>
    %c0_2 = arith.constant 0 : index
    %c0_3 = arith.constant 0 : index
    %c0_4 = arith.constant 0 : index
    %4 = vector.load %arg5[%c0_2, %c0_3, %c0_4] : memref<1x256x256xbf16, #tpu.memory_space<vmem>>, vector<1x256x256xbf16>
    %5 = vector.shape_cast %4 : vector<1x256x256xbf16> to vector<256x256xbf16>
    %cst = arith.constant dense<0.000000e+00> : vector<8x256xf32>
    %6 = tpu.matmul %3, %5, %cst {dimension_numbers = #tpu.dot_dimension_numbers<[1], [0], [0], [1], [0, 0, 1, 1], [], []>} : vector<8x256xbf16>, vector<256x256xbf16>, vector<8x256xf32> -> vector<8x256xf32>
    %c0_5 = arith.constant 0 : index
    %c0_6 = arith.constant 0 : index
    %7 = vector.load %arg8[%c0_5, %c0_6] : memref<8x8xf32, #tpu.memory_space<vmem>>, vector<8x8xf32>
    %cst_7 = arith.constant dense<0.000000e+00> : vector<8x256xf32>
    %8 = tpu.matmul %7, %6, %cst_7 {dimension_numbers = #tpu.dot_dimension_numbers<[1], [0], [0], [1], [0, 0, 1, 1], [], []>} : vector<8x8xf32>, vector<8x256xf32>, vector<8x256xf32> -> vector<8x256xf32>
    %c0_8 = arith.constant 0 : index
    %c0_9 = arith.constant 0 : index
    %c0_10 = arith.constant 0 : index
    %9 = vector.load %arg6[%c0_8, %c0_9, %c0_10] : memref<1x1x256xf32, #tpu.memory_space<vmem>>, vector<1x1x256xf32>
    %10 = vector.shape_cast %9 : vector<1x1x256xf32> to vector<1x256xf32>
    %11 = vector.broadcast %10 : vector<1x256xf32> to vector<8x256xf32>
    %12 = arith.addf %8, %11 : vector<8x256xf32>
    %c0_11 = arith.constant 0 : index
    %c0_12 = arith.constant 0 : index
    %c0_13 = arith.constant 0 : index
    %13 = vector.load %arg7[%c0_11, %c0_12, %c0_13] : memref<1x8x256xf32, #tpu.memory_space<vmem>>, vector<1x8x256xf32>
    %14 = vector.shape_cast %13 : vector<1x8x256xf32> to vector<8x256xf32>
    %15 = vector.shape_cast %12 : vector<8x256xf32> to vector<1x8x256xf32>
    tpu.vector_store %arg7[%c0_11, %c0_12, %c0_13], %15 {strides = array<i32>} : memref<1x8x256xf32, #tpu.memory_space<vmem>>, vector<1x8x256xf32>,
    return
  }
  func.func @transform_0(%arg0: i32, %arg1: i32) -> (i32, i32, i32) {
    %c0_i32 = arith.constant 0 : i32
    %c0_i32_0 = arith.constant 0 : i32
    %c0_i32_1 = arith.constant 0 : i32
    return %arg0, %c0_i32, %c0_i32_0 : i32, i32, i32
  }
  func.func @transform_1(%arg0: i32, %arg1: i32) -> (i32, i32, i32) {
    %c0_i32 = arith.constant 0 : i32
    %c0_i32_0 = arith.constant 0 : i32
    %c0_i32_1 = arith.constant 0 : i32
    return %arg0, %c0_i32, %c0_i32_0 : i32, i32, i32
  }
  func.func @transform_2(%arg0: i32, %arg1: i32) -> (i32, i32) {
    %c0_i32 = arith.constant 0 : i32
    %c0_i32_0 = arith.constant 0 : i32
    %c0_i32_1 = arith.constant 0 : i32
    return %c0_i32, %c0_i32_0 : i32, i32
  }
  func.func @transform_3(%arg0: i32, %arg1: i32) -> (i32, i32, i32) {
    %c0_i32 = arith.constant 0 : i32
    %c0_i32_0 = arith.constant 0 : i32
    return %arg0, %c0_i32, %arg1 : i32, i32, i32
  }
  func.func @transform_4(%arg0: i32, %arg1: i32) -> (i32, i32, i32) {
    %c0_i32 = arith.constant 0 : i32
    %c0_i32_0 = arith.constant 0 : i32
    return %arg0, %c0_i32, %arg1 : i32, i32, i32
  }
  func.func @transform_5(%arg0: i32, %arg1: i32) -> (i32, i32, i32) {
    %c0_i32 = arith.constant 0 : i32
    %c0_i32_0 = arith.constant 0 : i32
    return %arg0, %c0_i32, %arg1 : i32, i32, i32
  }
}

</mosaic_0001>

<llo_original>
// kernel: squeeze.6
$region0: #{squeeze.6}
  %s0 = inlined_call_operand.vmem [shape: f32[2048], index: 0, kind: input, shape index: {}]
  %s1 = inlined_call_operand.vmem [shape: f32[8,256], index: 1, kind: output, shape index: {}]
  %v2 = vld [vmem:[%s0] sm:$0xff]
  %3 = vst [vmem:[%s1] ss:$8 sm:$0x3] %v2
  %s4 = scalar_lea.vmem %s1, 4294967281
  %5 = vst [vmem:[%s4] ss:$8 sm:$0xc] %v2
  %s6 = scalar_lea.vmem %s1, 4294967266
  %7 = vst [vmem:[%s6] ss:$8 sm:$0x30] %v2
  %s8 = scalar_lea.vmem %s1, 4294967251
  %9 = vst [vmem:[%s8] ss:$8 sm:$0xc0] %v2
  %s10 = scalar_lea.vmem %s0, 8
  %v11 = vld [vmem:[%s10] sm:$0xff]
  %s12 = scalar_lea.vmem %s1, 4
  %13 = vst [vmem:[%s12] ss:$8 sm:$0x3] %v11
  %s14 = scalar_lea.vmem %s1, 4294967285
  %15 = vst [vmem:[%s14] ss:$8 sm:$0xc] %v11
  %s16 = scalar_lea.vmem %s1, 4294967270
  %17 = vst [vmem:[%s16] ss:$8 sm:$0x30] %v11
  %s18 = scalar_lea.vmem %s1, 4294967255
  %19 = vst [vmem:[%s18] ss:$8 sm:$0xc0] %v11

// kernel: gnn_layer_gat_forward.3
$region0: #{gnn_layer_gat_forward.3}
  #allocation0 [shape = 'u32[]', space=smem, size = 0x4, offset = 0x4, fixed_abs, tag = 'smem constant byte address 0x4 - core index']
  #allocation1 [shape = 'u32[144,128]{1,0:T(1,128)}', space=vmem, size = 0x12000, scoped, tag = 'internal scratch']
  #allocation2 [shape = 'f32[8,8]{1,0:T(8,128)}', space=vmem, size = 0x1000, scoped, tag = 'scratch operand']
  #allocation3 [shape = 'bf16[8,256]{1,0:T(8,128)(2,1)}', space=vmem, size = 0x1000, scoped, tag = 'scratch operand']
  %s0 = inlined_call_operand.vmem [shape: f32[2,8,256], index: 0, kind: input, shape index: {}]
  %s1 = inlined_call_operand.vmem [shape: f32[2,256,2], index: 1, kind: input, shape index: {}]
  %s2 = inlined_call_operand.vmem [shape: f32[8,8], index: 2, kind: input, shape index: {}]
  %s3 = inlined_call_operand.vmem [shape: bf16[2,256,256], index: 3, kind: input, shape index: {}]
  %s4 = inlined_call_operand.vmem [shape: f32[2,1,256], index: 4, kind: input, shape index: {}]
  %s5 = inlined_call_operand.vmem [shape: f32[2,8,256], index: 5, kind: output, shape index: {}]
  %s6 = sld [smem:[#allocation0]]
  $region57: #{gnn_layer_gat_forward.3} parent=0
    _
  %s8 = ssub.s32 1, %s6
  %s9 = scalar_select 0, %s8, %s6
  loop: start=0, step=1, limit=4
  $region2: #{gnn_layer_gat_forward.3} parent=0 // loop_pre_header
    _
  $region3: #{gnn_layer_gat_forward.3} parent=0 // loop_header
    %s11 = sphi 0, %s15
    %p12 = scmp.ge.s32.totalorder %s11, 4
    %s18 = sphi 0, %s30
    %s19 = sphi 0, %s26
    %s20 = sphi 0, %s18
    %s21 = sphi 0, %s19
    %s22 = sphi 0, %s20
    %s23 = sphi 0, %s21
    %s33 = sphi 0, %s35
    %s36 = sphi 0, %s33
    %s37 = sphi 0, %s36
    %s53 = sphi 0, %s37
    %s59 = sphi 0, %s61
    %s62 = sphi 0, %s59
    %s63 = sphi 0, %s62
    %s79 = sphi 0, %s63
    %s83 = sphi 0, %s83
    %s85 = sphi 0, %s83
    %s86 = sphi 0, %s85
    %s100 = sphi 0, %s86
    %s108 = sphi 0, %s110
    %s111 = sphi 0, %s108
    %s112 = sphi 0, %s111
    %s128 = sphi 0, %s112
    %s136 = sphi 0, %s138
    %s139 = sphi 0, %s136
    %s140 = sphi 0, %s139
    %s156 = sphi 0, %s140
    %s164 = sphi 0, %s166
    %s167 = sphi 0, %s164
    %s168 = sphi 0, %s167
    %s184 = sphi 0, %s168
  $region4: #{gnn_layer_gat_forward.3} parent=0 // loop_header_branch
    %14 = sbr.rel (%p12) target = $region8
  $region5: #{gnn_layer_gat_forward.3} parent=0 // loop_body
    %s16 = ssub.s32 %s11, 1
    %s17 = ssub.s32 %s11, 2
    %s24 = sadd.s32 1, %s19
    %p25 = scmp.ge.s32.totalorder %s24, 1
    %s26 = scalar_select %p25, 0, %s24
    %s27 = sadd.s32 1, %s18
    %s28 = scalar_select %p25, %s27, %s18
    %p29 = scmp.ge.s32.totalorder %s28, 2
    %s30 = scalar_select %p29, 0, %s28
    %s31 = ssub.s32 %s18, %s30
    %p32 = scmp.eq.s32.totalorder %s31, 0
    %s34 = sadd.s32 %s33, 1
    %s35 = scalar_select %p32, %s33, %s34
    %p38 = pneg %p32
    %p39 = scmp.eq.s32.totalorder %s11, 1
    %p40 = por %p38, %p39
    %p41 = scmp.ne.s32.totalorder %s33, %s36
    %p42 = scmp.eq.s32.totalorder %s11, 0
    %p43 = por %p41, %p42
    %p44 = scmp.ne.s32.totalorder %s33, %s36
    %p45 = scmp.eq.s32.totalorder %s16, 1
    %p46 = por %p44, %p45
    %p47 = scmp.ne.s32.totalorder %s36, %s37
    %p48 = scmp.eq.s32.totalorder %s16, 0
    %p49 = por %p47, %p48
    %p50 = scmp.ne.s32.totalorder %s36, %s37
    %p51 = scmp.eq.s32.totalorder %s17, 1
    %p52 = por %p50, %p51
    %p54 = scmp.ne.s32.totalorder %s37, %s53
    %p55 = scmp.eq.s32.totalorder %s17, 0
    %p56 = por %p54, %p55
    %s57 = ssub.s32 %s18, %s30
    %p58 = scmp.eq.s32.totalorder %s57, 0
    %s60 = sadd.s32 %s59, 1
    %s61 = scalar_select %p58, %s59, %s60
    %p64 = pneg %p58
    %p65 = scmp.eq.s32.totalorder %s11, 1
    %p66 = por %p64, %p65
    %p67 = scmp.ne.s32.totalorder %s59, %s62
    %p68 = scmp.eq.s32.totalorder %s11, 0
    %p69 = por %p67, %p68
    %p70 = scmp.ne.s32.totalorder %s59, %s62
    %p71 = scmp.eq.s32.totalorder %s16, 1
    %p72 = por %p70, %p71
    %p73 = scmp.ne.s32.totalorder %s62, %s63
    %p74 = scmp.eq.s32.totalorder %s16, 0
    %p75 = por %p73, %p74
    %p76 = scmp.ne.s32.totalorder %s62, %s63
    %p77 = scmp.eq.s32.totalorder %s17, 1
    %p78 = por %p76, %p77
    %p80 = scmp.ne.s32.totalorder %s63, %s79
    %p81 = scmp.eq.s32.totalorder %s17, 0
    %p82 = por %p80, %p81
    %s84 = sadd.s32 %s83, 1
    %p87 = scmp.eq.s32.totalorder %s11, 1
    %p88 = scmp.ne.s32.totalorder %s83, %s85
    %p89 = scmp.eq.s32.totalorder %s11, 0
    %p90 = por %p88, %p89
    %p91 = scmp.ne.s32.totalorder %s83, %s85
    %p92 = scmp.eq.s32.totalorder %s16, 1
    %p93 = por %p91, %p92
    %p94 = scmp.ne.s32.totalorder %s85, %s86
    %p95 = scmp.eq.s32.totalorder %s16, 0
    %p96 = por %p94, %p95
    %p97 = scmp.ne.s32.totalorder %s85, %s86
    %p98 = scmp.eq.s32.totalorder %s17, 1
    %p99 = por %p97, %p98
    %p101 = scmp.ne.s32.totalorder %s86, %s100
    %p102 = scmp.eq.s32.totalorder %s17, 0
    %p103 = por %p101, %p102
    %s104 = ssub.s32 %s18, %s30
    %s105 = ssub.s32 %s19, %s26
    %s106 = sor.u32 %s104, %s105
    %p107 = scmp.eq.s32.totalorder %s106, 0
    %s109 = sadd.s32 %s108, 1
    %s110 = scalar_select %p107, %s108, %s109
    %p113 = pneg %p107
    %p114 = scmp.eq.s32.totalorder %s11, 1
    %p115 = por %p113, %p114
    %p116 = scmp.ne.s32.totalorder %s108, %s111
    %p117 = scmp.eq.s32.totalorder %s11, 0
    %p118 = por %p116, %p117
    %p119 = scmp.ne.s32.totalorder %s108, %s111
    %p120 = scmp.eq.s32.totalorder %s16, 1
    %p121 = por %p119, %p120
    %p122 = scmp.ne.s32.totalorder %s111, %s112
    %p123 = scmp.eq.s32.totalorder %s16, 0
    %p124 = por %p122, %p123
    %p125 = scmp.ne.s32.totalorder %s111, %s112
    %p126 = scmp.eq.s32.totalorder %s17, 1
    %p127 = por %p125, %p126
    %p129 = scmp.ne.s32.totalorder %s112, %s128
    %p130 = scmp.eq.s32.totalorder %s17, 0
    %p131 = por %p129, %p130
    %s132 = ssub.s32 %s18, %s30
    %s133 = ssub.s32 %s19, %s26
    %s134 = sor.u32 %s132, %s133
    %p135 = scmp.eq.s32.totalorder %s134, 0
    %s137 = sadd.s32 %s136, 1
    %s138 = scalar_select %p135, %s136, %s137
    %p141 = pneg %p135
    %p142 = scmp.eq.s32.totalorder %s11, 1
    %p143 = por %p141, %p142
    %p144 = scmp.ne.s32.totalorder %s136, %s139
    %p145 = scmp.eq.s32.totalorder %s11, 0
    %p146 = por %p144, %p145
    %p147 = scmp.ne.s32.totalorder %s136, %s139
    %p148 = scmp.eq.s32.totalorder %s16, 1
    %p149 = por %p147, %p148
    %p150 = scmp.ne.s32.totalorder %s139, %s140
    %p151 = scmp.eq.s32.totalorder %s16, 0
    %p152 = por %p150, %p151
    %p153 = scmp.ne.s32.totalorder %s139, %s140
    %p154 = scmp.eq.s32.totalorder %s17, 1
    %p155 = por %p153, %p154
    %p157 = scmp.ne.s32.totalorder %s140, %s156
    %p158 = scmp.eq.s32.totalorder %s17, 0
    %p159 = por %p157, %p158
    %s160 = ssub.s32 %s18, %s30
    %s161 = ssub.s32 %s19, %s26
    %s162 = sor.u32 %s160, %s161
    %p163 = scmp.eq.s32.totalorder %s162, 0
    %s165 = sadd.s32 %s164, 1
    %s166 = scalar_select %p163, %s164, %s165
    %p169 = pneg %p163
    %p170 = scmp.eq.s32.totalorder %s11, 1
    %p171 = por %p169, %p170
    %p172 = scmp.ne.s32.totalorder %s164, %s167
    %p173 = scmp.eq.s32.totalorder %s11, 0
    %p174 = por %p172, %p173
    %p175 = scmp.ne.s32.totalorder %s164, %s167
    %p176 = scmp.eq.s32.totalorder %s16, 1
    %p177 = por %p175, %p176
    %p178 = scmp.ne.s32.totalorder %s167, %s168
    %p179 = scmp.eq.s32.totalorder %s16, 0
    %p180 = por %p178, %p179
    %p181 = scmp.ne.s32.totalorder %s167, %s168
    %p182 = scmp.eq.s32.totalorder %s17, 1
    %p183 = por %p181, %p182
    %p185 = scmp.ne.s32.totalorder %s168, %s184
    %p186 = scmp.eq.s32.totalorder %s17, 0
    %p187 = por %p185, %p186
    %p188 = scmp.le.s32.totalorder 1, %s11
    %p189 = scmp.lt.s32.totalorder %s11, 3
    %p190 = pnand %p188, %p189
    %p191 = pneg %p190
    // Predicated region
    $region9: #{gnn_layer_gat_forward.3} parent=5 // pred_check
      _
    $region10: #{gnn_layer_gat_forward.3} parent=5 // pred_check_branch
      %193 = sbr.rel (%p190) target = $region12
    $region11: #{gnn_layer_gat_forward.3} parent=5 // pred_region
      %s194 = ssub.s32 %s11, 1
      // Predicated region
      $region13: #{gnn_layer_gat_forward.3} parent=11 // pred_check
        %p195 = pneg %p96
      $region14: #{gnn_layer_gat_forward.3} parent=11 // pred_check_branch
        %197 = sbr.rel (%p195) target = $region16
      $region15: #{gnn_layer_gat_forward.3} parent=11 // pred_region
        _
      $region16: #{gnn_layer_gat_forward.3} parent=11 // pred_fallthru
        _
    $region12: #{gnn_layer_gat_forward.3} parent=5 // pred_fallthru
      _
    %p198 = scmp.lt.s32.totalorder %s11, 2
    // Predicated region
    $region17: #{gnn_layer_gat_forward.3} parent=5 // pred_check
      %p199 = pneg %p198
    $region18: #{gnn_layer_gat_forward.3} parent=5 // pred_check_branch
      %201 = sbr.rel (%p199) target = $region20
    $region19: #{gnn_layer_gat_forward.3} parent=5 // pred_region
      // Predicated region
      $region21: #{gnn_layer_gat_forward.3} parent=19 // pred_check
        %p202 = pneg %p43
      $region22: #{gnn_layer_gat_forward.3} parent=19 // pred_check_branch
        %204 = sbr.rel (%p202) target = $region24
      $region23: #{gnn_layer_gat_forward.3} parent=19 // pred_region
        %p205 = scmp.lt.s32.totalorder %s18, 1
        %s206 = scalar_select %p205, %s18, 1
        %s207 = smul.addr %s206, 2
        %s208 = smul.addr %s207, 8
        %s209 = scalar_lea.vmem %s0, %s208
      $region24: #{gnn_layer_gat_forward.3} parent=19 // pred_fallthru
        _
      // Predicated region
      $region25: #{gnn_layer_gat_forward.3} parent=19 // pred_check
        %p210 = pneg %p69
      $region26: #{gnn_layer_gat_forward.3} parent=19 // pred_check_branch
        %212 = sbr.rel (%p210) target = $region28
      $region27: #{gnn_layer_gat_forward.3} parent=19 // pred_region
        %p213 = scmp.lt.s32.totalorder %s18, 1
        %s214 = scalar_select %p213, %s18, 1
        %s215 = smul.addr %s214, 32
        %s216 = smul.addr %s215, 8
        %s217 = scalar_lea.vmem %s1, %s216
      $region28: #{gnn_layer_gat_forward.3} parent=19 // pred_fallthru
        _
      // Predicated region
      $region29: #{gnn_layer_gat_forward.3} parent=19 // pred_check
        %p218 = pneg %p118
      $region30: #{gnn_layer_gat_forward.3} parent=19 // pred_check_branch
        %220 = sbr.rel (%p218) target = $region32
      $region31: #{gnn_layer_gat_forward.3} parent=19 // pred_region
        %s221 = smul.u32 2, %s19
        %p222 = scmp.lt.s32.totalorder %s18, 1
        %s223 = scalar_select %p222, %s18, 1
        %p224 = scmp.lt.s32.totalorder %s221, 1
        %s225 = scalar_select %p224, %s221, 1
        %s226 = smul.addr %s223, 64
        %s227 = sadd.s32 %s225, %s226
        %s228 = smul.addr %s227, 4
        %s229 = scalar_lea.vmem %s3, %s228
        %s230 = smul.u32 2, %s19
      $region32: #{gnn_layer_gat_forward.3} parent=19 // pred_fallthru
        _
      // Predicated region
      $region33: #{gnn_layer_gat_forward.3} parent=19 // pred_check
        %p231 = pneg %p146
      $region34: #{gnn_layer_gat_forward.3} parent=19 // pred_check_branch
        %233 = sbr.rel (%p231) target = $region36
      $region35: #{gnn_layer_gat_forward.3} parent=19 // pred_region
        %s234 = smul.u32 2, %s19
        %p235 = scmp.lt.s32.totalorder %s18, 1
        %s236 = scalar_select %p235, %s18, 1
        %p237 = scmp.lt.s32.totalorder %s234, 1
        %s238 = scalar_select %p237, %s234, 1
        %s239 = smul.addr %s236, 2
        %s240 = sadd.s32 %s238, %s239
        %s241 = scalar_lea.vmem %s4, %s240
        %s242 = smul.u32 2, %s19
      $region36: #{gnn_layer_gat_forward.3} parent=19 // pred_fallthru
        _
    $region20: #{gnn_layer_gat_forward.3} parent=5 // pred_fallthru
      _
    %p243 = scmp.le.s32.totalorder 1, %s11
    %p244 = scmp.lt.s32.totalorder %s11, 3
    %p245 = pnand %p243, %p244
    %p246 = pneg %p245
    // Predicated region
    $region37: #{gnn_layer_gat_forward.3} parent=5 // pred_check
      _
    $region38: #{gnn_layer_gat_forward.3} parent=5 // pred_check_branch
      %248 = sbr.rel (%p245) target = $region40
    $region39: #{gnn_layer_gat_forward.3} parent=5 // pred_region
      %s249 = ssub.s32 %s11, 1
      %p250 = scmp.lt.s32.totalorder %s20, 1
      %s251 = scalar_select %p250, %s20, 1
      %s252 = smul.addr %s251, 2
      %s253 = smul.addr %s252, 8
      %s254 = scalar_lea.vmem %s0, %s253
      %p255 = pneg %p49
      %p256 = pneg %p46
      %p257 = scmp.lt.s32.totalorder %s20, 1
      %s258 = scalar_select %p257, %s20, 1
      %s259 = smul.addr %s258, 32
      %s260 = smul.addr %s259, 8
      %s261 = scalar_lea.vmem %s1, %s260
      %p262 = pneg %p75
      %p263 = pneg %p72
      %p264 = pneg %p96
      %p265 = pneg %p93
      %s266 = smul.u32 2, %s21
      %p267 = scmp.lt.s32.totalorder %s20, 1
      %s268 = scalar_select %p267, %s20, 1
      %p269 = scmp.lt.s32.totalorder %s266, 1
      %s270 = scalar_select %p269, %s266, 1
      %s271 = smul.addr %s268, 64
      %s272 = sadd.s32 %s270, %s271
      %s273 = smul.addr %s272, 4
      %s274 = scalar_lea.vmem %s3, %s273
      %p275 = pneg %p124
      %p276 = pneg %p121
      %s277 = smul.u32 2, %s21
      %p278 = scmp.lt.s32.totalorder %s20, 1
      %s279 = scalar_select %p278, %s20, 1
      %p280 = scmp.lt.s32.totalorder %s277, 1
      %s281 = scalar_select %p280, %s277, 1
      %s282 = smul.addr %s279, 2
      %s283 = sadd.s32 %s281, %s282
      %s284 = scalar_lea.vmem %s4, %s283
      %p285 = pneg %p152
      %p286 = pneg %p149
      %p287 = pneg %p180
      %p288 = pneg %p177
      %s289 = smul.u32 2, %s21
      %p290 = scmp.lt.s32.totalorder %s20, 1
      %s291 = scalar_select %p290, %s20, 1
      %p292 = scmp.lt.s32.totalorder %s289, 1
      %s293 = scalar_select %p292, %s289, 1
      %s294 = smul.addr %s291, 2
      %s295 = sadd.s32 %s293, %s294
      %s296 = smul.addr %s295, 8
      %s297 = scalar_lea.vmem %s5, %s296
      %p298 = scmp.lt.s32.totalorder %s20, 1
      %s299 = scalar_select %p298, %s20, 1
      %s300 = smul.addr %s299, 2
      %s301 = smul.addr %s300, 8
      %s302 = scalar_lea.vmem %s0, %s301
      %p303 = scmp.lt.s32.totalorder %s20, 1
      %s304 = scalar_select %p303, %s20, 1
      %s305 = smul.addr %s304, 32
      %s306 = smul.addr %s305, 8
      %s307 = scalar_lea.vmem %s1, %s306
      %s308 = smul.u32 2, %s21
      %p309 = scmp.lt.s32.totalorder %s20, 1
      %s310 = scalar_select %p309, %s20, 1
      %p311 = scmp.lt.s32.totalorder %s308, 1
      %s312 = scalar_select %p311, %s308, 1
      %s313 = smul.addr %s310, 64
      %s314 = sadd.s32 %s312, %s313
      %s315 = smul.addr %s314, 4
      %s316 = scalar_lea.vmem %s3, %s315
      %s317 = smul.u32 2, %s21
      %s318 = smul.u32 2, %s21
      %p319 = scmp.lt.s32.totalorder %s20, 1
      %s320 = scalar_select %p319, %s20, 1
      %p321 = scmp.lt.s32.totalorder %s318, 1
      %s322 = scalar_select %p321, %s318, 1
      %s323 = smul.addr %s320, 2
      %s324 = sadd.s32 %s322, %s323
      %s325 = scalar_lea.vmem %s4, %s324
      %s326 = smul.u32 2, %s21
      %s327 = smul.u32 2, %s21
      %p328 = scmp.lt.s32.totalorder %s20, 1
      %s329 = scalar_select %p328, %s20, 1
      %p330 = scmp.lt.s32.totalorder %s327, 1
      %s331 = scalar_select %p330, %s327, 1
      %s332 = smul.addr %s329, 2
      %s333 = sadd.s32 %s331, %s332
      %s334 = smul.addr %s333, 8
      %s335 = scalar_lea.vmem %s5, %s334
      %s336 = smul.u32 2, %s21
      %p337 = scmp.eq.s32.totalorder %s21, 0
      // Predicated region
      $region41: #{gnn_layer_gat_forward.3} parent=39 // pred_check
        %p338 = pneg %p337
      $region42: #{gnn_layer_gat_forward.3} parent=39 // pred_check_branch
        %340 = sbr.rel (%p338) target = $region44
      $region43: #{gnn_layer_gat_forward.3} parent=39 // pred_region
        %v341 = vld [vmem:[%s302] sm:$0xff]
        %v342 = vld [vmem:[%s302 + $0x8] sm:$0xff]
        %v343 = vpack.c.bf16 %v341, %v341
        %v344 = vpack.c.bf16 %v342, %v342
        %v347 = vunpack.c.l.b16 %v343
        %v348 = vunpack.c.l.b16 %v344
        %v349 = vpack.c.b16 %v348, %v347
        %351 = vst [vmem:[#allocation3] sm:$0xff] %v349
        %v352 = vld [vmem:[%s307] sm:$0xff]
        %v353 = vld [vmem:[%s307 + $0x8] sm:$0xff]
        %v354 = vld [vmem:[%s307 + $0x10] sm:$0xff]
        %v355 = vld [vmem:[%s307 + $0x18] sm:$0xff]
        %v356 = vld [vmem:[%s307 + $0x20] sm:$0xff]
        %v357 = vld [vmem:[%s307 + $0x28] sm:$0xff]
        %v358 = vld [vmem:[%s307 + $0x30] sm:$0xff]
        %v359 = vld [vmem:[%s307 + $0x38] sm:$0xff]
        %v360 = vld [vmem:[%s307 + $0x40] sm:$0xff]
        %v361 = vld [vmem:[%s307 + $0x48] sm:$0xff]
        %v362 = vld [vmem:[%s307 + $0x50] sm:$0xff]
        %v363 = vld [vmem:[%s307 + $0x58] sm:$0xff]
        %v364 = vld [vmem:[%s307 + $0x60] sm:$0xff]
        %v365 = vld [vmem:[%s307 + $0x68] sm:$0xff]
        %v366 = vld [vmem:[%s307 + $0x70] sm:$0xff]
        %v367 = vld [vmem:[%s307 + $0x78] sm:$0xff]
        %v368 = vld [vmem:[%s307 + $0x80] sm:$0xff]
        %v369 = vld [vmem:[%s307 + $0x88] sm:$0xff]
        %v370 = vld [vmem:[%s307 + $0x90] sm:$0xff]
        %v371 = vld [vmem:[%s307 + $0x98] sm:$0xff]
        %v372 = vld [vmem:[%s307 + $0xa0] sm:$0xff]
        %v373 = vld [vmem:[%s307 + $0xa8] sm:$0xff]
        %v374 = vld [vmem:[%s307 + $0xb0] sm:$0xff]
        %v375 = vld [vmem:[%s307 + $0xb8] sm:$0xff]
        %v376 = vld [vmem:[%s307 + $0xc0] sm:$0xff]
        %v377 = vld [vmem:[%s307 + $0xc8] sm:$0xff]
        %v378 = vld [vmem:[%s307 + $0xd0] sm:$0xff]
        %v379 = vld [vmem:[%s307 + $0xd8] sm:$0xff]
        %v380 = vld [vmem:[%s307 + $0xe0] sm:$0xff]
        %v381 = vld [vmem:[%s307 + $0xe8] sm:$0xff]
        %v382 = vld [vmem:[%s307 + $0xf0] sm:$0xff]
        %v383 = vld [vmem:[%s307 + $0xf8] sm:$0xff]
        %384 = vmatprep.subr.mxu0 0.0
        %385 = vmatpush1.msra.mxu0 %v367
        %386 = vmatprep.subr.mxu0 0.0
        %387 = vmatpush1.msra.mxu0 %v366
        %388 = vmatprep.subr.mxu0 0.0
        %389 = vmatpush1.msra.mxu0 %v365
        %390 = vmatprep.subr.mxu0 0.0
        %391 = vmatpush1.msra.mxu0 %v364
        %392 = vmatprep.subr.mxu0 0.0
        %393 = vmatpush1.msra.mxu0 %v363
        %394 = vmatprep.subr.mxu0 0.0
        %395 = vmatpush1.msra.mxu0 %v362
        %396 = vmatprep.subr.mxu0 0.0
        %397 = vmatpush1.msra.mxu0 %v361
        %398 = vmatprep.subr.mxu0 0.0
        %399 = vmatpush1.msra.mxu0 %v360
        %400 = vmatprep.subr.mxu0 0.0
        %401 = vmatpush1.msra.mxu0 %v359
        %402 = vmatprep.subr.mxu0 0.0
        %403 = vmatpush1.msra.mxu0 %v358
        %404 = vmatprep.subr.mxu0 0.0
        %405 = vmatpush1.msra.mxu0 %v357
        %406 = vmatprep.subr.mxu0 0.0
        %407 = vmatpush1.msra.mxu0 %v356
        %408 = vmatprep.subr.mxu0 0.0
        %409 = vmatpush1.msra.mxu0 %v355
        %410 = vmatprep.subr.mxu0 0.0
        %411 = vmatpush1.msra.mxu0 %v354
        %412 = vmatprep.subr.mxu0 0.0
        %413 = vmatpush1.msra.mxu0 %v353
        %414 = vmatprep.subr.mxu0 0.0
        %415 = vmatpush1.msra.mxu0 %v352
        %416 = vmatprep.subr.mxu0 0.0
        %417 = vmatpush2.msra.mxu0 %v383
        %418 = vmatprep.subr.mxu0 0.0
        %419 = vmatpush2.msra.mxu0 %v382
        %420 = vmatprep.subr.mxu0 0.0
        %421 = vmatpush2.msra.mxu0 %v381
        %422 = vmatprep.subr.mxu0 0.0
        %423 = vmatpush2.msra.mxu0 %v380
        %424 = vmatprep.subr.mxu0 0.0
        %425 = vmatpush2.msra.mxu0 %v379
        %426 = vmatprep.subr.mxu0 0.0
        %427 = vmatpush2.msra.mxu0 %v378
        %428 = vmatprep.subr.mxu0 0.0
        %429 = vmatpush2.msra.mxu0 %v377
        %430 = vmatprep.subr.mxu0 0.0
        %431 = vmatpush2.msra.mxu0 %v376
        %432 = vmatprep.subr.mxu0 0.0
        %433 = vmatpush2.msra.mxu0 %v375
        %434 = vmatprep.subr.mxu0 0.0
        %435 = vmatpush2.msra.mxu0 %v374
        %436 = vmatprep.subr.mxu0 0.0
        %437 = vmatpush2.msra.mxu0 %v373
        %438 = vmatprep.subr.mxu0 0.0
        %439 = vmatpush2.msra.mxu0 %v372
        %440 = vmatprep.subr.mxu0 0.0
        %441 = vmatpush2.msra.mxu0 %v371
        %442 = vmatprep.subr.mxu0 0.0
        %443 = vmatpush2.msra.mxu0 %v370
        %444 = vmatprep.subr.mxu0 0.0
        %445 = vmatpush2.msra.mxu0 %v369
        %446 = vmatprep.subr.mxu0 0.0
        %447 = vmatpush2.msra.mxu0 %v368
        %448 = vmatprep.mubr.f32.mxu0 %v342
        %449 = vmatmul.mubr.f32.gmra.mxu0 %v341
        %v450 = vpop.f32.mrf.mxu0
        %v451 = vadd.f32 0.0, %v450
        %v452 = vpop.f32.mrf.mxu0
        %453 = vdwg.mxu0
        %454 = vxpose.xlu0.b32.start [1/16] %v451, 128
        %455 = vxpose.xlu0.b32.cont [2/16] 0.0, 128
        %456 = vxpose.xlu0.b32.cont [3/16] 0.0, 128
        %457 = vxpose.xlu0.b32.cont [4/16] 0.0, 128
        %458 = vxpose.xlu0.b32.cont [5/16] 0.0, 128
        %459 = vxpose.xlu0.b32.cont [6/16] 0.0, 128
        %460 = vxpose.xlu0.b32.cont [7/16] 0.0, 128
        %461 = vxpose.xlu0.b32.cont [8/16] 0.0, 128
        %462 = vxpose.xlu0.b32.cont [9/16] 0.0, 128
        %463 = vxpose.xlu0.b32.cont [10/16] 0.0, 128
        %464 = vxpose.xlu0.b32.cont [11/16] 0.0, 128
        %465 = vxpose.xlu0.b32.cont [12/16] 0.0, 128
        %466 = vxpose.xlu0.b32.cont [13/16] 0.0, 128
        %467 = vxpose.xlu0.b32.cont [14/16] 0.0, 128
        %468 = vxpose.xlu0.b32.cont [15/16] 0.0, 128
        %469 = vxpose.xlu0.b32.end [16/16] 0.0, 128
        %v470 = vpop.trf.xlu0
        %v471 = vpop.trf.xlu0
        %v472 = vpop.trf.xlu0
        %v473 = vpop.trf.xlu0
        %v474 = vpop.trf.xlu0
        %v475 = vpop.trf.xlu0
        %v476 = vpop.trf.xlu0
        %v477 = vpop.trf.xlu0
        %v478 = vpop.trf.xlu0
        %v479 = vpop.trf.xlu0
        %v480 = vpop.trf.xlu0
        %v481 = vpop.trf.xlu0
        %v482 = vpop.trf.xlu0
        %v483 = vpop.trf.xlu0
        %v484 = vpop.trf.xlu0
        %v485 = vpop.trf.xlu0
        %487 = vset.pattern.permute.xlu0 1
        %488 = vperm.xlu0 %487, %v451
        %v489 = vpop.permute.xlu0 %488
        %v491 = vlaneseq
        %v492 = vshrl.u32 %v491, 7
        %v493 = vsub.s32 0, %v492
        %v494 = vrot.slane %v470, %v493
        %v495 = vadd.f32 %v489, %v494
        %vm496 = vcmp.ge.f32.partialorder %v495, 0.0
        %v497 = vmul.f32 %v495, 0.2
        %v498 = vsel %vm496, %v495, %v497
        %v499 = vld [vmem:[%s2] sm:$0xff]
        %vm500 = vcmp.gt.f32.partialorder %v499, 0.0
        %v501 = vsel %vm500, %v498, -1e+30
        %vm502 = vcmask 64512
        %v503 = vsel %vm502, %v501, -inf
        %504 = vmax.xlane.f32.xlu0 %v503
        %v505 = vpop.xlane.xlu0 %504
        %v506 = vsub.f32 %v501, %v505
        %v507 = vmul.f32 %v506, 1.442695
        %v508 = vpow.pop %v507
        %v509 = vsel %vm502, %v508, 0.0
        %510 = vadd.xlane.f32.xlu0 %v509
        %v511 = vpop.xlane.xlu0 %510
        %v512 = vrcp.pop %v511
        %v513 = vmul.f32 %v508, %v512
        %514 = vst.msk [vmem:[#allocation2] sm:$0xff] %vm502, %v513
      $region44: #{gnn_layer_gat_forward.3} parent=39 // pred_fallthru
        _
      %v515 = vld [vmem:[#allocation3] sm:$0xff]
      %v516 = vld [vmem:[%s316] sm:$0xff]
      %v517 = vld [vmem:[%s316 + $0x8] sm:$0xff]
      %v518 = vld [vmem:[%s316 + $0x10] sm:$0xff]
      %v519 = vld [vmem:[%s316 + $0x18] sm:$0xff]
      %v520 = vld [vmem:[%s316 + $0x20] sm:$0xff]
      %v521 = vld [vmem:[%s316 + $0x28] sm:$0xff]
      %v522 = vld [vmem:[%s316 + $0x30] sm:$0xff]
      %v523 = vld [vmem:[%s316 + $0x38] sm:$0xff]
      %v524 = vld [vmem:[%s316 + $0x40] sm:$0xff]
      %v525 = vld [vmem:[%s316 + $0x48] sm:$0xff]
      %v526 = vld [vmem:[%s316 + $0x50] sm:$0xff]
      %v527 = vld [vmem:[%s316 + $0x58] sm:$0xff]
      %v528 = vld [vmem:[%s316 + $0x60] sm:$0xff]
      %v529 = vld [vmem:[%s316 + $0x68] sm:$0xff]
      %v530 = vld [vmem:[%s316 + $0x70] sm:$0xff]
      %v531 = vld [vmem:[%s316 + $0x78] sm:$0xff]
      %v532 = vld [vmem:[%s316 + $0x80] sm:$0xff]
      %v533 = vld [vmem:[%s316 + $0x88] sm:$0xff]
      %v534 = vld [vmem:[%s316 + $0x90] sm:$0xff]
      %v535 = vld [vmem:[%s316 + $0x98] sm:$0xff]
      %v536 = vld [vmem:[%s316 + $0xa0] sm:$0xff]
      %v537 = vld [vmem:[%s316 + $0xa8] sm:$0xff]
      %v538 = vld [vmem:[%s316 + $0xb0] sm:$0xff]
      %v539 = vld [vmem:[%s316 + $0xb8] sm:$0xff]
      %v540 = vld [vmem:[%s316 + $0xc0] sm:$0xff]
      %v541 = vld [vmem:[%s316 + $0xc8] sm:$0xff]
      %v542 = vld [vmem:[%s316 + $0xd0] sm:$0xff]
      %v543 = vld [vmem:[%s316 + $0xd8] sm:$0xff]
      %v544 = vld [vmem:[%s316 + $0xe0] sm:$0xff]
      %v545 = vld [vmem:[%s316 + $0xe8] sm:$0xff]
      %v546 = vld [vmem:[%s316 + $0xf0] sm:$0xff]
      %v547 = vld [vmem:[%s316 + $0xf8] sm:$0xff]
      %v549 = vunpack.c.l.b16 %v515
      %v550 = vunpack.c.h.b16 %v515
      %v551 = vpack.c.b16 %v549, %v549
      %v552 = vpack.c.b16 %v550, %v550
      %v587 = vunpack.c.l.b16 %v516
      %v588 = vunpack.c.h.b16 %v516
      %v589 = vunpack.c.l.b16 %v517
      %v590 = vunpack.c.h.b16 %v517
      %v591 = vunpack.c.l.b16 %v518
      %v592 = vunpack.c.h.b16 %v518
      %v593 = vunpack.c.l.b16 %v519
      %v594 = vunpack.c.h.b16 %v519
      %v595 = vunpack.c.l.b16 %v520
      %v596 = vunpack.c.h.b16 %v520
      %v597 = vunpack.c.l.b16 %v521
      %v598 = vunpack.c.h.b16 %v521
      %v599 = vunpack.c.l.b16 %v522
      %v600 = vunpack.c.h.b16 %v522
      %v601 = vunpack.c.l.b16 %v523
      %v602 = vunpack.c.h.b16 %v523
      %v603 = vunpack.c.l.b16 %v524
      %v604 = vunpack.c.h.b16 %v524
      %v605 = vunpack.c.l.b16 %v525
      %v606 = vunpack.c.h.b16 %v525
      %v607 = vunpack.c.l.b16 %v526
      %v608 = vunpack.c.h.b16 %v526
      %v609 = vunpack.c.l.b16 %v527
      %v610 = vunpack.c.h.b16 %v527
      %v611 = vunpack.c.l.b16 %v528
      %v612 = vunpack.c.h.b16 %v528
      %v613 = vunpack.c.l.b16 %v529
      %v614 = vunpack.c.h.b16 %v529
      %v615 = vunpack.c.l.b16 %v530
      %v616 = vunpack.c.h.b16 %v530
      %v617 = vunpack.c.l.b16 %v531
      %v618 = vunpack.c.h.b16 %v531
      %v619 = vunpack.c.l.b16 %v532
      %v620 = vunpack.c.h.b16 %v532
      %v621 = vunpack.c.l.b16 %v533
      %v622 = vunpack.c.h.b16 %v533
      %v623 = vunpack.c.l.b16 %v534
      %v624 = vunpack.c.h.b16 %v534
      %v625 = vunpack.c.l.b16 %v535
      %v626 = vunpack.c.h.b16 %v535
      %v627 = vunpack.c.l.b16 %v536
      %v628 = vunpack.c.h.b16 %v536
      %v629 = vunpack.c.l.b16 %v537
      %v630 = vunpack.c.h.b16 %v537
      %v631 = vunpack.c.l.b16 %v538
      %v632 = vunpack.c.h.b16 %v538
      %v633 = vunpack.c.l.b16 %v539
      %v634 = vunpack.c.h.b16 %v539
      %v635 = vunpack.c.l.b16 %v540
      %v636 = vunpack.c.h.b16 %v540
      %v637 = vunpack.c.l.b16 %v541
      %v638 = vunpack.c.h.b16 %v541
      %v639 = vunpack.c.l.b16 %v542
      %v640 = vunpack.c.h.b16 %v542
      %v641 = vunpack.c.l.b16 %v543
      %v642 = vunpack.c.h.b16 %v543
      %v643 = vunpack.c.l.b16 %v544
      %v644 = vunpack.c.h.b16 %v544
      %v645 = vunpack.c.l.b16 %v545
      %v646 = vunpack.c.h.b16 %v545
      %v647 = vunpack.c.l.b16 %v546
      %v648 = vunpack.c.h.b16 %v546
      %v649 = vunpack.c.l.b16 %v547
      %v650 = vunpack.c.h.b16 %v547
      %v651 = vpack.c.b16 %v589, %v587
      %v652 = vpack.c.b16 %v590, %v588
      %v653 = vpack.c.b16 %v593, %v591
      %v654 = vpack.c.b16 %v594, %v592
      %v655 = vpack.c.b16 %v597, %v595
      %v656 = vpack.c.b16 %v598, %v596
      %v657 = vpack.c.b16 %v601, %v599
      %v658 = vpack.c.b16 %v602, %v600
      %v659 = vpack.c.b16 %v605, %v603
      %v660 = vpack.c.b16 %v606, %v604
      %v661 = vpack.c.b16 %v609, %v607
      %v662 = vpack.c.b16 %v610, %v608
      %v663 = vpack.c.b16 %v613, %v611
      %v664 = vpack.c.b16 %v614, %v612
      %v665 = vpack.c.b16 %v617, %v615
      %v666 = vpack.c.b16 %v618, %v616
      %v667 = vpack.c.b16 %v621, %v619
      %v668 = vpack.c.b16 %v622, %v620
      %v669 = vpack.c.b16 %v625, %v623
      %v670 = vpack.c.b16 %v626, %v624
      %v671 = vpack.c.b16 %v629, %v627
      %v672 = vpack.c.b16 %v630, %v628
      %v673 = vpack.c.b16 %v633, %v631
      %v674 = vpack.c.b16 %v634, %v632
      %v675 = vpack.c.b16 %v637, %v635
      %v676 = vpack.c.b16 %v638, %v636
      %v677 = vpack.c.b16 %v641, %v639
      %v678 = vpack.c.b16 %v642, %v640
      %v679 = vpack.c.b16 %v645, %v643
      %v680 = vpack.c.b16 %v646, %v644
      %v681 = vpack.c.b16 %v649, %v647
      %v682 = vpack.c.b16 %v650, %v648
      %715 = vmatprep.subr.bf16.mxu0 %v666
      %716 = vmatpush1.bf16.msra.mxu0 %v665
      %717 = vmatprep.subr.bf16.mxu0 %v664
      %718 = vmatpush1.bf16.msra.mxu0 %v663
      %719 = vmatprep.subr.bf16.mxu0 %v662
      %720 = vmatpush1.bf16.msra.mxu0 %v661
      %721 = vmatprep.subr.bf16.mxu0 %v660
      %722 = vmatpush1.bf16.msra.mxu0 %v659
      %723 = vmatprep.subr.bf16.mxu0 %v658
      %724 = vmatpush1.bf16.msra.mxu0 %v657
      %725 = vmatprep.subr.bf16.mxu0 %v656
      %726 = vmatpush1.bf16.msra.mxu0 %v655
      %727 = vmatprep.subr.bf16.mxu0 %v654
      %728 = vmatpush1.bf16.msra.mxu0 %v653
      %729 = vmatprep.subr.bf16.mxu0 %v652
      %730 = vmatpush1.bf16.msra.mxu0 %v651
      %731 = vmatprep.subr.bf16.mxu0 %v682
      %732 = vmatpush2.bf16.msra.mxu0 %v681
      %733 = vmatprep.subr.bf16.mxu0 %v680
      %734 = vmatpush2.bf16.msra.mxu0 %v679
      %735 = vmatprep.subr.bf16.mxu0 %v678
      %736 = vmatpush2.bf16.msra.mxu0 %v677
      %737 = vmatprep.subr.bf16.mxu0 %v676
      %738 = vmatpush2.bf16.msra.mxu0 %v675
      %739 = vmatprep.subr.bf16.mxu0 %v674
      %740 = vmatpush2.bf16.msra.mxu0 %v673
      %741 = vmatprep.subr.bf16.mxu0 %v672
      %742 = vmatpush2.bf16.msra.mxu0 %v671
      %743 = vmatprep.subr.bf16.mxu0 %v670
      %744 = vmatpush2.bf16.msra.mxu0 %v669
      %745 = vmatprep.subr.bf16.mxu0 %v668
      %746 = vmatpush2.bf16.msra.mxu0 %v667
      %747 = vmatprep.mubr.bf16.mxu0 %v552
      %748 = vmatmul.mubr.bf16.gmra.mxu0 %v551
      %v749 = vpop.f32.mrf.mxu0
      %v750 = vadd.f32 0.0, %v749
      %v751 = vpop.f32.mrf.mxu0
      %v752 = vadd.f32 0.0, %v751
      %v753 = vpop.f32.mrf.mxu0
      %v754 = vpop.f32.mrf.mxu0
      %755 = vdwg.mxu0
      %v756 = vld [vmem:[#allocation2] sm:$0xff]
      %v757 = vld [vmem:[%s325] sm:$0x3]
      %v759 = vlaneseq
      %v760 = vshrl.u32 %v759, 7
      %v761 = vsub.s32 0, %v760
      %v762 = vrot.slane %v757, %v761
      %v763 = vlaneseq
      %v764 = vshrl.u32 %v763, 7
      %v765 = vsub.s32 1, %v764
      %v766 = vrot.slane %v757, %v765
      %vm769 = vcmask 64512
      %v771 = vsel %vm769, %v756, 0
      %773 = vmatprep.subr.mxu0 0.0
      %774 = vmatpush1.msra.mxu0 0.0
      %775 = vmatprep.subr.mxu0 0.0
      %776 = vmatpush1.msra.mxu0 0.0
      %777 = vmatprep.subr.mxu0 0.0
      %778 = vmatpush1.msra.mxu0 0.0
      %779 = vmatprep.subr.mxu0 0.0
      %780 = vmatpush1.msra.mxu0 0.0
      %781 = vmatprep.subr.mxu0 0.0
      %782 = vmatpush1.msra.mxu0 0.0
      %783 = vmatprep.subr.mxu0 0.0
      %784 = vmatpush1.msra.mxu0 0.0
      %785 = vmatprep.subr.mxu0 0.0
      %786 = vmatpush1.msra.mxu0 0.0
      %787 = vmatprep.subr.mxu0 0.0
      %788 = vmatpush1.msra.mxu0 0.0
      %789 = vmatprep.subr.mxu0 0.0
      %790 = vmatpush1.msra.mxu0 0.0
      %791 = vmatprep.subr.mxu0 0.0
      %792 = vmatpush1.msra.mxu0 0.0
      %793 = vmatprep.subr.mxu0 0.0
      %794 = vmatpush1.msra.mxu0 0.0
      %795 = vmatprep.subr.mxu0 0.0
      %796 = vmatpush1.msra.mxu0 0.0
      %797 = vmatprep.subr.mxu0 0.0
      %798 = vmatpush1.msra.mxu0 0.0
      %799 = vmatprep.subr.mxu0 0.0
      %800 = vmatpush1.msra.mxu0 0.0
      %801 = vmatprep.subr.mxu0 0.0
      %802 = vmatpush1.msra.mxu0 0.0
      %803 = vmatprep.subr.mxu0 %v752
      %804 = vmatpush1.msra.mxu0 %v750
      %805 = vmatprep.subr.mxu0 0.0
      %806 = vmatpush2.msra.mxu0 0.0
      %807 = vmatprep.subr.mxu0 0.0
      %808 = vmatpush2.msra.mxu0 0.0
      %809 = vmatprep.subr.mxu0 0.0
      %810 = vmatpush2.msra.mxu0 0.0
      %811 = vmatprep.subr.mxu0 0.0
      %812 = vmatpush2.msra.mxu0 0.0
      %813 = vmatprep.subr.mxu0 0.0
      %814 = vmatpush2.msra.mxu0 0.0
      %815 = vmatprep.subr.mxu0 0.0
      %816 = vmatpush2.msra.mxu0 0.0
      %817 = vmatprep.subr.mxu0 0.0
      %818 = vmatpush2.msra.mxu0 0.0
      %819 = vmatprep.subr.mxu0 0.0
      %820 = vmatpush2.msra.mxu0 0.0
      %821 = vmatprep.subr.mxu0 0.0
      %822 = vmatpush2.msra.mxu0 0.0
      %823 = vmatprep.subr.mxu0 0.0
      %824 = vmatpush2.msra.mxu0 0.0
      %825 = vmatprep.subr.mxu0 0.0
      %826 = vmatpush2.msra.mxu0 0.0
      %827 = vmatprep.subr.mxu0 0.0
      %828 = vmatpush2.msra.mxu0 0.0
      %829 = vmatprep.subr.mxu0 0.0
      %830 = vmatpush2.msra.mxu0 0.0
      %831 = vmatprep.subr.mxu0 0.0
      %832 = vmatpush2.msra.mxu0 0.0
      %833 = vmatprep.subr.mxu0 0.0
      %834 = vmatpush2.msra.mxu0 0.0
      %835 = vmatprep.subr.mxu0 0.0
      %836 = vmatpush2.msra.mxu0 0.0
      %837 = vmatprep.mubr.f32.mxu0 0.0
      %838 = vmatmul.mubr.f32.gmra.mxu0 %v771
      %v839 = vpop.f32.mrf.mxu0
      %v840 = vadd.f32 %v762, %v839
      %v841 = vpop.f32.mrf.mxu0
      %v842 = vadd.f32 %v766, %v841
      %843 = vdwg.mxu0
      %844 = vst [vmem:[%s335] sm:$0xff] %v840
      %845 = vst [vmem:[%s335 + $0x8] sm:$0xff] %v842
      %s846 = smul.u32 2, %s21
      %p847 = scmp.lt.s32.totalorder %s20, 1
      %s848 = scalar_select %p847, %s20, 1
      %p849 = scmp.lt.s32.totalorder %s846, 1
      %s850 = scalar_select %p849, %s846, 1
      %s851 = smul.addr %s848, 2
      %s852 = sadd.s32 %s850, %s851
      %s853 = smul.addr %s852, 8
      %s854 = scalar_lea.vmem %s5, %s853
      // Predicated region
      $region45: #{gnn_layer_gat_forward.3} parent=39 // pred_check
        %p855 = pneg %p177
      $region46: #{gnn_layer_gat_forward.3} parent=39 // pred_check_branch
        %857 = sbr.rel (%p855) target = $region48
      $region47: #{gnn_layer_gat_forward.3} parent=39 // pred_region
        %s858 = smul.u32 2, %s21
      $region48: #{gnn_layer_gat_forward.3} parent=39 // pred_fallthru
        _
    $region40: #{gnn_layer_gat_forward.3} parent=5 // pred_fallthru
      _
    %p859 = scmp.le.s32.totalorder 2, %s11
    // Predicated region
    $region49: #{gnn_layer_gat_forward.3} parent=5 // pred_check
      %p860 = pneg %p859
    $region50: #{gnn_layer_gat_forward.3} parent=5 // pred_check_branch
      %862 = sbr.rel (%p860) target = $region52
    $region51: #{gnn_layer_gat_forward.3} parent=5 // pred_region
      %s863 = ssub.s32 %s11, 2
      // Predicated region
      $region53: #{gnn_layer_gat_forward.3} parent=51 // pred_check
        %p864 = pneg %p183
      $region54: #{gnn_layer_gat_forward.3} parent=51 // pred_check_branch
        %866 = sbr.rel (%p864) target = $region56
      $region55: #{gnn_layer_gat_forward.3} parent=51 // pred_region
        %s867 = smul.u32 2, %s23
        %p868 = scmp.lt.s32.totalorder %s22, 1
        %s869 = scalar_select %p868, %s22, 1
        %p870 = scmp.lt.s32.totalorder %s867, 1
        %s871 = scalar_select %p870, %s867, 1
        %s872 = smul.addr %s869, 2
        %s873 = sadd.s32 %s871, %s872
        %s874 = smul.addr %s873, 8
        %s875 = scalar_lea.vmem %s5, %s874
      $region56: #{gnn_layer_gat_forward.3} parent=51 // pred_fallthru
        _
    $region52: #{gnn_layer_gat_forward.3} parent=5 // pred_fallthru
      _
  $region6: #{gnn_layer_gat_forward.3} parent=0 // loop_footer
    %s15 = sadd.s32 1, %s11
  $region7: #{gnn_layer_gat_forward.3} parent=0 // loop_footer_branch
    %10 = sbr.rel target = $region3
  $region8: #{gnn_layer_gat_forward.3} parent=0 // loop_exit
    _

// kernel: gnn_layer_gat_forward.2
$region0: #{gnn_layer_gat_forward.2}
  #allocation0 [shape = 'u32[]', space=smem, size = 0x4, offset = 0x4, fixed_abs, tag = 'smem constant byte address 0x4 - core index']
  #allocation1 [shape = 'u32[144,128]{1,0:T(1,128)}', space=vmem, size = 0x12000, scoped, tag = 'internal scratch']
  %s0 = inlined_call_operand.vmem [shape: f32[21,2048], index: 0, kind: input, shape index: {}]
  %s1 = inlined_call_operand.vmem [shape: s32[1,2048], index: 1, kind: input, shape index: {}]
  %s2 = inlined_call_operand.vmem [shape: f32[8,21], index: 2, kind: input, shape index: {}]
  %s3 = inlined_call_operand.vmem [shape: f32[8,1], index: 3, kind: input, shape index: {}]
  %s4 = inlined_call_operand.vmem [shape: f32[8,1], index: 4, kind: input, shape index: {}]
  %s5 = inlined_call_operand.vmem [shape: f32[7,8,8], index: 5, kind: input, shape index: {}]
  %s6 = inlined_call_operand.vmem [shape: f32[8,1], index: 6, kind: input, shape index: {}]
  %s7 = inlined_call_operand.vmem [shape: f32[8,1], index: 7, kind: input, shape index: {}]
  %s8 = inlined_call_operand.vmem [shape: f32[8,2048], index: 8, kind: output, shape index: {}]
  %s9 = sld [smem:[#allocation0]]
  $region42: #{gnn_layer_gat_forward.2} parent=0
    _
  %s11 = ssub.s32 1, %s9
  %s12 = scalar_select 0, %s11, %s9
  // Predicated region
  $region2: #{gnn_layer_gat_forward.2} parent=0 // pred_check
    _
  $region3: #{gnn_layer_gat_forward.2} parent=0 // pred_check_branch
    %14 = sbr.rel (0) target = $region5
  $region4: #{gnn_layer_gat_forward.2} parent=0 // pred_region
    _
  $region5: #{gnn_layer_gat_forward.2} parent=0 // pred_fallthru
    _
  // Predicated region
  $region6: #{gnn_layer_gat_forward.2} parent=0 // pred_check
    _
  $region7: #{gnn_layer_gat_forward.2} parent=0 // pred_check_branch
    %16 = sbr.rel (0) target = $region9
  $region8: #{gnn_layer_gat_forward.2} parent=0 // pred_region
    _
  $region9: #{gnn_layer_gat_forward.2} parent=0 // pred_fallthru
    _
  // Predicated region
  $region10: #{gnn_layer_gat_forward.2} parent=0 // pred_check
    _
  $region11: #{gnn_layer_gat_forward.2} parent=0 // pred_check_branch
    %18 = sbr.rel (0) target = $region13
  $region12: #{gnn_layer_gat_forward.2} parent=0 // pred_region
    _
  $region13: #{gnn_layer_gat_forward.2} parent=0 // pred_fallthru
    _
  // Predicated region
  $region14: #{gnn_layer_gat_forward.2} parent=0 // pred_check
    _
  $region15: #{gnn_layer_gat_forward.2} parent=0 // pred_check_branch
    %20 = sbr.rel (0) target = $region17
  $region16: #{gnn_layer_gat_forward.2} parent=0 // pred_region
    _
  $region17: #{gnn_layer_gat_forward.2} parent=0 // pred_fallthru
    _
  // Predicated region
  $region18: #{gnn_layer_gat_forward.2} parent=0 // pred_check
    _
  $region19: #{gnn_layer_gat_forward.2} parent=0 // pred_check_branch
    %22 = sbr.rel (0) target = $region21
  $region20: #{gnn_layer_gat_forward.2} parent=0 // pred_region
    _
  $region21: #{gnn_layer_gat_forward.2} parent=0 // pred_fallthru
    _
  // Predicated region
  $region22: #{gnn_layer_gat_forward.2} parent=0 // pred_check
    _
  $region23: #{gnn_layer_gat_forward.2} parent=0 // pred_check_branch
    %24 = sbr.rel (0) target = $region25
  $region24: #{gnn_layer_gat_forward.2} parent=0 // pred_region
    _
  $region25: #{gnn_layer_gat_forward.2} parent=0 // pred_fallthru
    _
  // Predicated region
  $region26: #{gnn_layer_gat_forward.2} parent=0 // pred_check
    _
  $region27: #{gnn_layer_gat_forward.2} parent=0 // pred_check_branch
    %26 = sbr.rel (0) target = $region29
  $region28: #{gnn_layer_gat_forward.2} parent=0 // pred_region
    _
  $region29: #{gnn_layer_gat_forward.2} parent=0 // pred_fallthru
    _
  // Predicated region
  $region30: #{gnn_layer_gat_forward.2} parent=0 // pred_check
    _
  $region31: #{gnn_layer_gat_forward.2} parent=0 // pred_check_branch
    %28 = sbr.rel (0) target = $region33
  $region32: #{gnn_layer_gat_forward.2} parent=0 // pred_region
    _
  $region33: #{gnn_layer_gat_forward.2} parent=0 // pred_fallthru
    _
  %v29 = vld [vmem:[%s2] sm:$0xff]
  %v30 = vld [vmem:[%s0] sm:$0xff]
  %v31 = vld [vmem:[%s0 + $0x8] sm:$0xff]
  %v32 = vld [vmem:[%s0 + $0x10] sm:$0xff]
  %v33 = vld [vmem:[%s0 + $0x18] sm:$0xff]
  %v34 = vld [vmem:[%s0 + $0x20] sm:$0xff]
  %v35 = vld [vmem:[%s0 + $0x28] sm:$0xff]
  %v36 = vld [vmem:[%s0 + $0x30] sm:$0xff]
  %v37 = vld [vmem:[%s0 + $0x38] sm:$0xff]
  %v38 = vld [vmem:[%s0 + $0x40] sm:$0xff]
  %v39 = vld [vmem:[%s0 + $0x48] sm:$0xff]
  %v40 = vld [vmem:[%s0 + $0x50] sm:$0xff]
  %v41 = vld [vmem:[%s0 + $0x58] sm:$0xff]
  %v42 = vld [vmem:[%s0 + $0x60] sm:$0xff]
  %v43 = vld [vmem:[%s0 + $0x68] sm:$0xff]
  %v44 = vld [vmem:[%s0 + $0x70] sm:$0xff]
  %v45 = vld [vmem:[%s0 + $0x78] sm:$0xff]
  %v46 = vld [vmem:[%s0 + $0x80] sm:$0xff]
  %v47 = vld [vmem:[%s0 + $0x88] sm:$0xff]
  %v48 = vld [vmem:[%s0 + $0x90] sm:$0xff]
  %v49 = vld [vmem:[%s0 + $0x98] sm:$0xff]
  %v50 = vld [vmem:[%s0 + $0xa0] sm:$0xff]
  %v51 = vld [vmem:[%s0 + $0xa8] sm:$0xff]
  %v52 = vld [vmem:[%s0 + $0xb0] sm:$0xff]
  %v53 = vld [vmem:[%s0 + $0xb8] sm:$0xff]
  %v54 = vld [vmem:[%s0 + $0xc0] sm:$0xff]
  %v55 = vld [vmem:[%s0 + $0xc8] sm:$0xff]
  %v56 = vld [vmem:[%s0 + $0xd0] sm:$0xff]
  %v57 = vld [vmem:[%s0 + $0xd8] sm:$0xff]
  %v58 = vld [vmem:[%s0 + $0xe0] sm:$0xff]
  %v59 = vld [vmem:[%s0 + $0xe8] sm:$0xff]
  %v60 = vld [vmem:[%s0 + $0xf0] sm:$0xff]
  %v61 = vld [vmem:[%s0 + $0xf8] sm:$0xff]
  %v62 = vld [vmem:[%s0 + $0x100] sm:$0x1f]
  %v63 = vld [vmem:[%s0 + $0x108] sm:$0x1f]
  %v64 = vld [vmem:[%s0 + $0x110] sm:$0x1f]
  %v65 = vld [vmem:[%s0 + $0x118] sm:$0x1f]
  %v66 = vld [vmem:[%s0 + $0x120] sm:$0x1f]
  %v67 = vld [vmem:[%s0 + $0x128] sm:$0x1f]
  %v68 = vld [vmem:[%s0 + $0x130] sm:$0x1f]
  %v69 = vld [vmem:[%s0 + $0x138] sm:$0x1f]
  %v70 = vld [vmem:[%s0 + $0x140] sm:$0x1f]
  %v71 = vld [vmem:[%s0 + $0x148] sm:$0x1f]
  %v72 = vld [vmem:[%s0 + $0x150] sm:$0x1f]
  %v73 = vld [vmem:[%s0 + $0x158] sm:$0x1f]
  %v74 = vld [vmem:[%s0 + $0x160] sm:$0x1f]
  %v75 = vld [vmem:[%s0 + $0x168] sm:$0x1f]
  %v76 = vld [vmem:[%s0 + $0x170] sm:$0x1f]
  %v77 = vld [vmem:[%s0 + $0x178] sm:$0x1f]
  %vm78 = vcmask 171008
  %v80 = vsel %vm78, %v29, 0
  %vm82 = vcmask 1044480
  %v84 = vsel %vm82, %v62, 0
  %v87 = vsel %vm82, %v63, 0
  %v90 = vsel %vm82, %v64, 0
  %v93 = vsel %vm82, %v65, 0
  %v96 = vsel %vm82, %v66, 0
  %v99 = vsel %vm82, %v67, 0
  %v102 = vsel %vm82, %v68, 0
  %v105 = vsel %vm82, %v69, 0
  %v108 = vsel %vm82, %v70, 0
  %v111 = vsel %vm82, %v71, 0
  %v114 = vsel %vm82, %v72, 0
  %v117 = vsel %vm82, %v73, 0
  %v120 = vsel %vm82, %v74, 0
  %v123 = vsel %vm82, %v75, 0
  %v126 = vsel %vm82, %v76, 0
  %v129 = vsel %vm82, %v77, 0
  %131 = vmatprep.subr.mxu0 0.0
  %132 = vmatpush1.msra.mxu0 0.0
  %133 = vmatprep.subr.mxu0 0.0
  %134 = vmatpush1.msra.mxu0 0.0
  %135 = vmatprep.subr.mxu0 0.0
  %136 = vmatpush1.msra.mxu0 0.0
  %137 = vmatprep.subr.mxu0 0.0
  %138 = vmatpush1.msra.mxu0 0.0
  %139 = vmatprep.subr.mxu0 0.0
  %140 = vmatpush1.msra.mxu0 0.0
  %141 = vmatprep.subr.mxu0 0.0
  %142 = vmatpush1.msra.mxu0 0.0
  %143 = vmatprep.subr.mxu0 0.0
  %144 = vmatpush1.msra.mxu0 0.0
  %145 = vmatprep.subr.mxu0 0.0
  %146 = vmatpush1.msra.mxu0 0.0
  %147 = vmatprep.subr.mxu0 0.0
  %148 = vmatpush1.msra.mxu0 0.0
  %149 = vmatprep.subr.mxu0 0.0
  %150 = vmatpush1.msra.mxu0 0.0
  %151 = vmatprep.subr.mxu0 0.0
  %152 = vmatpush1.msra.mxu0 0.0
  %153 = vmatprep.subr.mxu0 0.0
  %154 = vmatpush1.msra.mxu0 0.0
  %155 = vmatprep.subr.mxu0 0.0
  %156 = vmatpush1.msra.mxu0 0.0
  %157 = vmatprep.subr.mxu0 %v87
  %158 = vmatpush1.msra.mxu0 %v84
  %159 = vmatprep.subr.mxu0 %v47
  %160 = vmatpush1.msra.mxu0 %v46
  %161 = vmatprep.subr.mxu0 %v31
  %162 = vmatpush1.msra.mxu0 %v30
  %163 = vmatprep.subr.mxu0 0.0
  %164 = vmatpush2.msra.mxu0 0.0
  %165 = vmatprep.subr.mxu0 0.0
  %166 = vmatpush2.msra.mxu0 0.0
  %167 = vmatprep.subr.mxu0 0.0
  %168 = vmatpush2.msra.mxu0 0.0
  %169 = vmatprep.subr.mxu0 0.0
  %170 = vmatpush2.msra.mxu0 0.0
  %171 = vmatprep.subr.mxu0 0.0
  %172 = vmatpush2.msra.mxu0 0.0
  %173 = vmatprep.subr.mxu0 0.0
  %174 = vmatpush2.msra.mxu0 0.0
  %175 = vmatprep.subr.mxu0 0.0
  %176 = vmatpush2.msra.mxu0 0.0
  %177 = vmatprep.subr.mxu0 0.0
  %178 = vmatpush2.msra.mxu0 0.0
  %179 = vmatprep.subr.mxu0 0.0
  %180 = vmatpush2.msra.mxu0 0.0
  %181 = vmatprep.subr.mxu0 0.0
  %182 = vmatpush2.msra.mxu0 0.0
  %183 = vmatprep.subr.mxu0 0.0
  %184 = vmatpush2.msra.mxu0 0.0
  %185 = vmatprep.subr.mxu0 0.0
  %186 = vmatpush2.msra.mxu0 0.0
  %187 = vmatprep.subr.mxu0 0.0
  %188 = vmatpush2.msra.mxu0 0.0
  %189 = vmatprep.subr.mxu0 0.0
  %190 = vmatpush2.msra.mxu0 0.0
  %191 = vmatprep.subr.mxu0 0.0
  %192 = vmatpush2.msra.mxu0 0.0
  %193 = vmatprep.subr.mxu0 0.0
  %194 = vmatpush2.msra.mxu0 0.0
  %195 = vmatprep.mubr.f32.mxu0 0.0
  %196 = vmatmul.mubr.f32.gmra.mxu0 %v80
  %v197 = vpop.f32.mrf.mxu0
  %v198 = vadd.f32 0.0, %v197
  %v199 = vpop.f32.mrf.mxu0
  %v200 = vadd.f32 0.0, %v199
  %201 = vdwg.mxu0
  %202 = vmatprep.subr.mxu0 0.0
  %203 = vmatpush1.msra.mxu0 0.0
  %204 = vmatprep.subr.mxu0 0.0
  %205 = vmatpush1.msra.mxu0 0.0
  %206 = vmatprep.subr.mxu0 0.0
  %207 = vmatpush1.msra.mxu0 0.0
  %208 = vmatprep.subr.mxu0 0.0
  %209 = vmatpush1.msra.mxu0 0.0
  %210 = vmatprep.subr.mxu0 0.0
  %211 = vmatpush1.msra.mxu0 0.0
  %212 = vmatprep.subr.mxu0 0.0
  %213 = vmatpush1.msra.mxu0 0.0
  %214 = vmatprep.subr.mxu0 0.0
  %215 = vmatpush1.msra.mxu0 0.0
  %216 = vmatprep.subr.mxu0 0.0
  %217 = vmatpush1.msra.mxu0 0.0
  %218 = vmatprep.subr.mxu0 0.0
  %219 = vmatpush1.msra.mxu0 0.0
  %220 = vmatprep.subr.mxu0 0.0
  %221 = vmatpush1.msra.mxu0 0.0
  %222 = vmatprep.subr.mxu0 0.0
  %223 = vmatpush1.msra.mxu0 0.0
  %224 = vmatprep.subr.mxu0 0.0
  %225 = vmatpush1.msra.mxu0 0.0
  %226 = vmatprep.subr.mxu0 0.0
  %227 = vmatpush1.msra.mxu0 0.0
  %228 = vmatprep.subr.mxu0 %v93
  %229 = vmatpush1.msra.mxu0 %v90
  %230 = vmatprep.subr.mxu0 %v49
  %231 = vmatpush1.msra.mxu0 %v48
  %232 = vmatprep.subr.mxu0 %v33
  %233 = vmatpush1.msra.mxu0 %v32
  %234 = vmatprep.subr.mxu0 0.0
  %235 = vmatpush2.msra.mxu0 0.0
  %236 = vmatprep.subr.mxu0 0.0
  %237 = vmatpush2.msra.mxu0 0.0
  %238 = vmatprep.subr.mxu0 0.0
  %239 = vmatpush2.msra.mxu0 0.0
  %240 = vmatprep.subr.mxu0 0.0
  %241 = vmatpush2.msra.mxu0 0.0
  %242 = vmatprep.subr.mxu0 0.0
  %243 = vmatpush2.msra.mxu0 0.0
  %244 = vmatprep.subr.mxu0 0.0
  %245 = vmatpush2.msra.mxu0 0.0
  %246 = vmatprep.subr.mxu0 0.0
  %247 = vmatpush2.msra.mxu0 0.0
  %248 = vmatprep.subr.mxu0 0.0
  %249 = vmatpush2.msra.mxu0 0.0
  %250 = vmatprep.subr.mxu0 0.0
  %251 = vmatpush2.msra.mxu0 0.0
  %252 = vmatprep.subr.mxu0 0.0
  %253 = vmatpush2.msra.mxu0 0.0
  %254 = vmatprep.subr.mxu0 0.0
  %255 = vmatpush2.msra.mxu0 0.0
  %256 = vmatprep.subr.mxu0 0.0
  %257 = vmatpush2.msra.mxu0 0.0
  %258 = vmatprep.subr.mxu0 0.0
  %259 = vmatpush2.msra.mxu0 0.0
  %260 = vmatprep.subr.mxu0 0.0
  %261 = vmatpush2.msra.mxu0 0.0
  %262 = vmatprep.subr.mxu0 0.0
  %263 = vmatpush2.msra.mxu0 0.0
  %264 = vmatprep.subr.mxu0 0.0
  %265 = vmatpush2.msra.mxu0 0.0
  %266 = vmatprep.mubr.f32.mxu0 0.0
  %267 = vmatmul.mubr.f32.gmra.mxu0 %v80
  %v268 = vpop.f32.mrf.mxu0
  %v269 = vadd.f32 0.0, %v268
  %v270 = vpop.f32.mrf.mxu0
  %v271 = vadd.f32 0.0, %v270
  %272 = vdwg.mxu0
  %273 = vmatprep.subr.mxu0 0.0
  %274 = vmatpush1.msra.mxu0 0.0
  %275 = vmatprep.subr.mxu0 0.0
  %276 = vmatpush1.msra.mxu0 0.0
  %277 = vmatprep.subr.mxu0 0.0
  %278 = vmatpush1.msra.mxu0 0.0
  %279 = vmatprep.subr.mxu0 0.0
  %280 = vmatpush1.msra.mxu0 0.0
  %281 = vmatprep.subr.mxu0 0.0
  %282 = vmatpush1.msra.mxu0 0.0
  %283 = vmatprep.subr.mxu0 0.0
  %284 = vmatpush1.msra.mxu0 0.0
  %285 = vmatprep.subr.mxu0 0.0
  %286 = vmatpush1.msra.mxu0 0.0
  %287 = vmatprep.subr.mxu0 0.0
  %288 = vmatpush1.msra.mxu0 0.0
  %289 = vmatprep.subr.mxu0 0.0
  %290 = vmatpush1.msra.mxu0 0.0
  %291 = vmatprep.subr.mxu0 0.0
  %292 = vmatpush1.msra.mxu0 0.0
  %293 = vmatprep.subr.mxu0 0.0
  %294 = vmatpush1.msra.mxu0 0.0
  %295 = vmatprep.subr.mxu0 0.0
  %296 = vmatpush1.msra.mxu0 0.0
  %297 = vmatprep.subr.mxu0 0.0
  %298 = vmatpush1.msra.mxu0 0.0
  %299 = vmatprep.subr.mxu0 %v99
  %300 = vmatpush1.msra.mxu0 %v96
  %301 = vmatprep.subr.mxu0 %v51
  %302 = vmatpush1.msra.mxu0 %v50
  %303 = vmatprep.subr.mxu0 %v35
  %304 = vmatpush1.msra.mxu0 %v34
  %305 = vmatprep.subr.mxu0 0.0
  %306 = vmatpush2.msra.mxu0 0.0
  %307 = vmatprep.subr.mxu0 0.0
  %308 = vmatpush2.msra.mxu0 0.0
  %309 = vmatprep.subr.mxu0 0.0
  %310 = vmatpush2.msra.mxu0 0.0
  %311 = vmatprep.subr.mxu0 0.0
  %312 = vmatpush2.msra.mxu0 0.0
  %313 = vmatprep.subr.mxu0 0.0
  %314 = vmatpush2.msra.mxu0 0.0
  %315 = vmatprep.subr.mxu0 0.0
  %316 = vmatpush2.msra.mxu0 0.0
  %317 = vmatprep.subr.mxu0 0.0
  %318 = vmatpush2.msra.mxu0 0.0
  %319 = vmatprep.subr.mxu0 0.0
  %320 = vmatpush2.msra.mxu0 0.0
  %321 = vmatprep.subr.mxu0 0.0
  %322 = vmatpush2.msra.mxu0 0.0
  %323 = vmatprep.subr.mxu0 0.0
  %324 = vmatpush2.msra.mxu0 0.0
  %325 = vmatprep.subr.mxu0 0.0
  %326 = vmatpush2.msra.mxu0 0.0
  %327 = vmatprep.subr.mxu0 0.0
  %328 = vmatpush2.msra.mxu0 0.0
  %329 = vmatprep.subr.mxu0 0.0
  %330 = vmatpush2.msra.mxu0 0.0
  %331 = vmatprep.subr.mxu0 0.0
  %332 = vmatpush2.msra.mxu0 0.0
  %333 = vmatprep.subr.mxu0 0.0
  %334 = vmatpush2.msra.mxu0 0.0
  %335 = vmatprep.subr.mxu0 0.0
  %336 = vmatpush2.msra.mxu0 0.0
  %337 = vmatprep.mubr.f32.mxu0 0.0
  %338 = vmatmul.mubr.f32.gmra.mxu0 %v80
  %v339 = vpop.f32.mrf.mxu0
  %v340 = vadd.f32 0.0, %v339
  %v341 = vpop.f32.mrf.mxu0
  %v342 = vadd.f32 0.0, %v341
  %343 = vdwg.mxu0
  %344 = vmatprep.subr.mxu0 0.0
  %345 = vmatpush1.msra.mxu0 0.0
  %346 = vmatprep.subr.mxu0 0.0
  %347 = vmatpush1.msra.mxu0 0.0
  %348 = vmatprep.subr.mxu0 0.0
  %349 = vmatpush1.msra.mxu0 0.0
  %350 = vmatprep.subr.mxu0 0.0
  %351 = vmatpush1.msra.mxu0 0.0
  %352 = vmatprep.subr.mxu0 0.0
  %353 = vmatpush1.msra.mxu0 0.0
  %354 = vmatprep.subr.mxu0 0.0
  %355 = vmatpush1.msra.mxu0 0.0
  %356 = vmatprep.subr.mxu0 0.0
  %357 = vmatpush1.msra.mxu0 0.0
  %358 = vmatprep.subr.mxu0 0.0
  %359 = vmatpush1.msra.mxu0 0.0
  %360 = vmatprep.subr.mxu0 0.0
  %361 = vmatpush1.msra.mxu0 0.0
  %362 = vmatprep.subr.mxu0 0.0
  %363 = vmatpush1.msra.mxu0 0.0
  %364 = vmatprep.subr.mxu0 0.0
  %365 = vmatpush1.msra.mxu0 0.0
  %366 = vmatprep.subr.mxu0 0.0
  %367 = vmatpush1.msra.mxu0 0.0
  %368 = vmatprep.subr.mxu0 0.0
  %369 = vmatpush1.msra.mxu0 0.0
  %370 = vmatprep.subr.mxu0 %v105
  %371 = vmatpush1.msra.mxu0 %v102
  %372 = vmatprep.subr.mxu0 %v53
  %373 = vmatpush1.msra.mxu0 %v52
  %374 = vmatprep.subr.mxu0 %v37
  %375 = vmatpush1.msra.mxu0 %v36
  %376 = vmatprep.subr.mxu0 0.0
  %377 = vmatpush2.msra.mxu0 0.0
  %378 = vmatprep.subr.mxu0 0.0
  %379 = vmatpush2.msra.mxu0 0.0
  %380 = vmatprep.subr.mxu0 0.0
  %381 = vmatpush2.msra.mxu0 0.0
  %382 = vmatprep.subr.mxu0 0.0
  %383 = vmatpush2.msra.mxu0 0.0
  %384 = vmatprep.subr.mxu0 0.0
  %385 = vmatpush2.msra.mxu0 0.0
  %386 = vmatprep.subr.mxu0 0.0
  %387 = vmatpush2.msra.mxu0 0.0
  %388 = vmatprep.subr.mxu0 0.0
  %389 = vmatpush2.msra.mxu0 0.0
  %390 = vmatprep.subr.mxu0 0.0
  %391 = vmatpush2.msra.mxu0 0.0
  %392 = vmatprep.subr.mxu0 0.0
  %393 = vmatpush2.msra.mxu0 0.0
  %394 = vmatprep.subr.mxu0 0.0
  %395 = vmatpush2.msra.mxu0 0.0
  %396 = vmatprep.subr.mxu0 0.0
  %397 = vmatpush2.msra.mxu0 0.0
  %398 = vmatprep.subr.mxu0 0.0
  %399 = vmatpush2.msra.mxu0 0.0
  %400 = vmatprep.subr.mxu0 0.0
  %401 = vmatpush2.msra.mxu0 0.0
  %402 = vmatprep.subr.mxu0 0.0
  %403 = vmatpush2.msra.mxu0 0.0
  %404 = vmatprep.subr.mxu0 0.0
  %405 = vmatpush2.msra.mxu0 0.0
  %406 = vmatprep.subr.mxu0 0.0
  %407 = vmatpush2.msra.mxu0 0.0
  %408 = vmatprep.mubr.f32.mxu0 0.0
  %409 = vmatmul.mubr.f32.gmra.mxu0 %v80
  %v410 = vpop.f32.mrf.mxu0
  %v411 = vadd.f32 0.0, %v410
  %v412 = vpop.f32.mrf.mxu0
  %v413 = vadd.f32 0.0, %v412
  %414 = vdwg.mxu0
  %415 = vmatprep.subr.mxu0 0.0
  %416 = vmatpush1.msra.mxu0 0.0
  %417 = vmatprep.subr.mxu0 0.0
  %418 = vmatpush1.msra.mxu0 0.0
  %419 = vmatprep.subr.mxu0 0.0
  %420 = vmatpush1.msra.mxu0 0.0
  %421 = vmatprep.subr.mxu0 0.0
  %422 = vmatpush1.msra.mxu0 0.0
  %423 = vmatprep.subr.mxu0 0.0
  %424 = vmatpush1.msra.mxu0 0.0
  %425 = vmatprep.subr.mxu0 0.0
  %426 = vmatpush1.msra.mxu0 0.0
  %427 = vmatprep.subr.mxu0 0.0
  %428 = vmatpush1.msra.mxu0 0.0
  %429 = vmatprep.subr.mxu0 0.0
  %430 = vmatpush1.msra.mxu0 0.0
  %431 = vmatprep.subr.mxu0 0.0
  %432 = vmatpush1.msra.mxu0 0.0
  %433 = vmatprep.subr.mxu0 0.0
  %434 = vmatpush1.msra.mxu0 0.0
  %435 = vmatprep.subr.mxu0 0.0
  %436 = vmatpush1.msra.mxu0 0.0
  %437 = vmatprep.subr.mxu0 0.0
  %438 = vmatpush1.msra.mxu0 0.0
  %439 = vmatprep.subr.mxu0 0.0
  %440 = vmatpush1.msra.mxu0 0.0
  %441 = vmatprep.subr.mxu0 %v111
  %442 = vmatpush1.msra.mxu0 %v108
  %443 = vmatprep.subr.mxu0 %v55
  %444 = vmatpush1.msra.mxu0 %v54
  %445 = vmatprep.subr.mxu0 %v39
  %446 = vmatpush1.msra.mxu0 %v38
  %447 = vmatprep.subr.mxu0 0.0
  %448 = vmatpush2.msra.mxu0 0.0
  %449 = vmatprep.subr.mxu0 0.0
  %450 = vmatpush2.msra.mxu0 0.0
  %451 = vmatprep.subr.mxu0 0.0
  %452 = vmatpush2.msra.mxu0 0.0
  %453 = vmatprep.subr.mxu0 0.0
  %454 = vmatpush2.msra.mxu0 0.0
  %455 = vmatprep.subr.mxu0 0.0
  %456 = vmatpush2.msra.mxu0 0.0
  %457 = vmatprep.subr.mxu0 0.0
  %458 = vmatpush2.msra.mxu0 0.0
  %459 = vmatprep.subr.mxu0 0.0
  %460 = vmatpush2.msra.mxu0 0.0
  %461 = vmatprep.subr.mxu0 0.0
  %462 = vmatpush2.msra.mxu0 0.0
  %463 = vmatprep.subr.mxu0 0.0
  %464 = vmatpush2.msra.mxu0 0.0
  %465 = vmatprep.subr.mxu0 0.0
  %466 = vmatpush2.msra.mxu0 0.0
  %467 = vmatprep.subr.mxu0 0.0
  %468 = vmatpush2.msra.mxu0 0.0
  %469 = vmatprep.subr.mxu0 0.0
  %470 = vmatpush2.msra.mxu0 0.0
  %471 = vmatprep.subr.mxu0 0.0
  %472 = vmatpush2.msra.mxu0 0.0
  %473 = vmatprep.subr.mxu0 0.0
  %474 = vmatpush2.msra.mxu0 0.0
  %475 = vmatprep.subr.mxu0 0.0
  %476 = vmatpush2.msra.mxu0 0.0
  %477 = vmatprep.subr.mxu0 0.0
  %478 = vmatpush2.msra.mxu0 0.0
  %479 = vmatprep.mubr.f32.mxu0 0.0
  %480 = vmatmul.mubr.f32.gmra.mxu0 %v80
  %v481 = vpop.f32.mrf.mxu0
  %v482 = vadd.f32 0.0, %v481
  %v483 = vpop.f32.mrf.mxu0
  %v484 = vadd.f32 0.0, %v483
  %485 = vdwg.mxu0
  %486 = vmatprep.subr.mxu0 0.0
  %487 = vmatpush1.msra.mxu0 0.0
  %488 = vmatprep.subr.mxu0 0.0
  %489 = vmatpush1.msra.mxu0 0.0
  %490 = vmatprep.subr.mxu0 0.0
  %491 = vmatpush1.msra.mxu0 0.0
  %492 = vmatprep.subr.mxu0 0.0
  %493 = vmatpush1.msra.mxu0 0.0
  %494 = vmatprep.subr.mxu0 0.0
  %495 = vmatpush1.msra.mxu0 0.0
  %496 = vmatprep.subr.mxu0 0.0
  %497 = vmatpush1.msra.mxu0 0.0
  %498 = vmatprep.subr.mxu0 0.0
  %499 = vmatpush1.msra.mxu0 0.0
  %500 = vmatprep.subr.mxu0 0.0
  %501 = vmatpush1.msra.mxu0 0.0
  %502 = vmatprep.subr.mxu0 0.0
  %503 = vmatpush1.msra.mxu0 0.0
  %504 = vmatprep.subr.mxu0 0.0
  %505 = vmatpush1.msra.mxu0 0.0
  %506 = vmatprep.subr.mxu0 0.0
  %507 = vmatpush1.msra.mxu0 0.0
  %508 = vmatprep.subr.mxu0 0.0
  %509 = vmatpush1.msra.mxu0 0.0
  %510 = vmatprep.subr.mxu0 0.0
  %511 = vmatpush1.msra.mxu0 0.0
  %512 = vmatprep.subr.mxu0 %v117
  %513 = vmatpush1.msra.mxu0 %v114
  %514 = vmatprep.subr.mxu0 %v57
  %515 = vmatpush1.msra.mxu0 %v56
  %516 = vmatprep.subr.mxu0 %v41
  %517 = vmatpush1.msra.mxu0 %v40
  %518 = vmatprep.subr.mxu0 0.0
  %519 = vmatpush2.msra.mxu0 0.0
  %520 = vmatprep.subr.mxu0 0.0
  %521 = vmatpush2.msra.mxu0 0.0
  %522 = vmatprep.subr.mxu0 0.0
  %523 = vmatpush2.msra.mxu0 0.0
  %524 = vmatprep.subr.mxu0 0.0
  %525 = vmatpush2.msra.mxu0 0.0
  %526 = vmatprep.subr.mxu0 0.0
  %527 = vmatpush2.msra.mxu0 0.0
  %528 = vmatprep.subr.mxu0 0.0
  %529 = vmatpush2.msra.mxu0 0.0
  %530 = vmatprep.subr.mxu0 0.0
  %531 = vmatpush2.msra.mxu0 0.0
  %532 = vmatprep.subr.mxu0 0.0
  %533 = vmatpush2.msra.mxu0 0.0
  %534 = vmatprep.subr.mxu0 0.0
  %535 = vmatpush2.msra.mxu0 0.0
  %536 = vmatprep.subr.mxu0 0.0
  %537 = vmatpush2.msra.mxu0 0.0
  %538 = vmatprep.subr.mxu0 0.0
  %539 = vmatpush2.msra.mxu0 0.0
  %540 = vmatprep.subr.mxu0 0.0
  %541 = vmatpush2.msra.mxu0 0.0
  %542 = vmatprep.subr.mxu0 0.0
  %543 = vmatpush2.msra.mxu0 0.0
  %544 = vmatprep.subr.mxu0 0.0
  %545 = vmatpush2.msra.mxu0 0.0
  %546 = vmatprep.subr.mxu0 0.0
  %547 = vmatpush2.msra.mxu0 0.0
  %548 = vmatprep.subr.mxu0 0.0
  %549 = vmatpush2.msra.mxu0 0.0
  %550 = vmatprep.mubr.f32.mxu0 0.0
  %551 = vmatmul.mubr.f32.gmra.mxu0 %v80
  %v552 = vpop.f32.mrf.mxu0
  %v553 = vadd.f32 0.0, %v552
  %v554 = vpop.f32.mrf.mxu0
  %v555 = vadd.f32 0.0, %v554
  %556 = vdwg.mxu0
  %557 = vmatprep.subr.mxu0 0.0
  %558 = vmatpush1.msra.mxu0 0.0
  %559 = vmatprep.subr.mxu0 0.0
  %560 = vmatpush1.msra.mxu0 0.0
  %561 = vmatprep.subr.mxu0 0.0
  %562 = vmatpush1.msra.mxu0 0.0
  %563 = vmatprep.subr.mxu0 0.0
  %564 = vmatpush1.msra.mxu0 0.0
  %565 = vmatprep.subr.mxu0 0.0
  %566 = vmatpush1.msra.mxu0 0.0
  %567 = vmatprep.subr.mxu0 0.0
  %568 = vmatpush1.msra.mxu0 0.0
  %569 = vmatprep.subr.mxu0 0.0
  %570 = vmatpush1.msra.mxu0 0.0
  %571 = vmatprep.subr.mxu0 0.0
  %572 = vmatpush1.msra.mxu0 0.0
  %573 = vmatprep.subr.mxu0 0.0
  %574 = vmatpush1.msra.mxu0 0.0
  %575 = vmatprep.subr.mxu0 0.0
  %576 = vmatpush1.msra.mxu0 0.0
  %577 = vmatprep.subr.mxu0 0.0
  %578 = vmatpush1.msra.mxu0 0.0
  %579 = vmatprep.subr.mxu0 0.0
  %580 = vmatpush1.msra.mxu0 0.0
  %581 = vmatprep.subr.mxu0 0.0
  %582 = vmatpush1.msra.mxu0 0.0
  %583 = vmatprep.subr.mxu0 %v123
  %584 = vmatpush1.msra.mxu0 %v120
  %585 = vmatprep.subr.mxu0 %v59
  %586 = vmatpush1.msra.mxu0 %v58
  %587 = vmatprep.subr.mxu0 %v43
  %588 = vmatpush1.msra.mxu0 %v42
  %589 = vmatprep.subr.mxu0 0.0
  %590 = vmatpush2.msra.mxu0 0.0
  %591 = vmatprep.subr.mxu0 0.0
  %592 = vmatpush2.msra.mxu0 0.0
  %593 = vmatprep.subr.mxu0 0.0
  %594 = vmatpush2.msra.mxu0 0.0
  %595 = vmatprep.subr.mxu0 0.0
  %596 = vmatpush2.msra.mxu0 0.0
  %597 = vmatprep.subr.mxu0 0.0
  %598 = vmatpush2.msra.mxu0 0.0
  %599 = vmatprep.subr.mxu0 0.0
  %600 = vmatpush2.msra.mxu0 0.0
  %601 = vmatprep.subr.mxu0 0.0
  %602 = vmatpush2.msra.mxu0 0.0
  %603 = vmatprep.subr.mxu0 0.0
  %604 = vmatpush2.msra.mxu0 0.0
  %605 = vmatprep.subr.mxu0 0.0
  %606 = vmatpush2.msra.mxu0 0.0
  %607 = vmatprep.subr.mxu0 0.0
  %608 = vmatpush2.msra.mxu0 0.0
  %609 = vmatprep.subr.mxu0 0.0
  %610 = vmatpush2.msra.mxu0 0.0
  %611 = vmatprep.subr.mxu0 0.0
  %612 = vmatpush2.msra.mxu0 0.0
  %613 = vmatprep.subr.mxu0 0.0
  %614 = vmatpush2.msra.mxu0 0.0
  %615 = vmatprep.subr.mxu0 0.0
  %616 = vmatpush2.msra.mxu0 0.0
  %617 = vmatprep.subr.mxu0 0.0
  %618 = vmatpush2.msra.mxu0 0.0
  %619 = vmatprep.subr.mxu0 0.0
  %620 = vmatpush2.msra.mxu0 0.0
  %621 = vmatprep.mubr.f32.mxu0 0.0
  %622 = vmatmul.mubr.f32.gmra.mxu0 %v80
  %v623 = vpop.f32.mrf.mxu0
  %v624 = vadd.f32 0.0, %v623
  %v625 = vpop.f32.mrf.mxu0
  %v626 = vadd.f32 0.0, %v625
  %627 = vdwg.mxu0
  %628 = vmatprep.subr.mxu0 0.0
  %629 = vmatpush1.msra.mxu0 0.0
  %630 = vmatprep.subr.mxu0 0.0
  %631 = vmatpush1.msra.mxu0 0.0
  %632 = vmatprep.subr.mxu0 0.0
  %633 = vmatpush1.msra.mxu0 0.0
  %634 = vmatprep.subr.mxu0 0.0
  %635 = vmatpush1.msra.mxu0 0.0
  %636 = vmatprep.subr.mxu0 0.0
  %637 = vmatpush1.msra.mxu0 0.0
  %638 = vmatprep.subr.mxu0 0.0
  %639 = vmatpush1.msra.mxu0 0.0
  %640 = vmatprep.subr.mxu0 0.0
  %641 = vmatpush1.msra.mxu0 0.0
  %642 = vmatprep.subr.mxu0 0.0
  %643 = vmatpush1.msra.mxu0 0.0
  %644 = vmatprep.subr.mxu0 0.0
  %645 = vmatpush1.msra.mxu0 0.0
  %646 = vmatprep.subr.mxu0 0.0
  %647 = vmatpush1.msra.mxu0 0.0
  %648 = vmatprep.subr.mxu0 0.0
  %649 = vmatpush1.msra.mxu0 0.0
  %650 = vmatprep.subr.mxu0 0.0
  %651 = vmatpush1.msra.mxu0 0.0
  %652 = vmatprep.subr.mxu0 0.0
  %653 = vmatpush1.msra.mxu0 0.0
  %654 = vmatprep.subr.mxu0 %v129
  %655 = vmatpush1.msra.mxu0 %v126
  %656 = vmatprep.subr.mxu0 %v61
  %657 = vmatpush1.msra.mxu0 %v60
  %658 = vmatprep.subr.mxu0 %v45
  %659 = vmatpush1.msra.mxu0 %v44
  %660 = vmatprep.subr.mxu0 0.0
  %661 = vmatpush2.msra.mxu0 0.0
  %662 = vmatprep.subr.mxu0 0.0
  %663 = vmatpush2.msra.mxu0 0.0
  %664 = vmatprep.subr.mxu0 0.0
  %665 = vmatpush2.msra.mxu0 0.0
  %666 = vmatprep.subr.mxu0 0.0
  %667 = vmatpush2.msra.mxu0 0.0
  %668 = vmatprep.subr.mxu0 0.0
  %669 = vmatpush2.msra.mxu0 0.0
  %670 = vmatprep.subr.mxu0 0.0
  %671 = vmatpush2.msra.mxu0 0.0
  %672 = vmatprep.subr.mxu0 0.0
  %673 = vmatpush2.msra.mxu0 0.0
  %674 = vmatprep.subr.mxu0 0.0
  %675 = vmatpush2.msra.mxu0 0.0
  %676 = vmatprep.subr.mxu0 0.0
  %677 = vmatpush2.msra.mxu0 0.0
  %678 = vmatprep.subr.mxu0 0.0
  %679 = vmatpush2.msra.mxu0 0.0
  %680 = vmatprep.subr.mxu0 0.0
  %681 = vmatpush2.msra.mxu0 0.0
  %682 = vmatprep.subr.mxu0 0.0
  %683 = vmatpush2.msra.mxu0 0.0
  %684 = vmatprep.subr.mxu0 0.0
  %685 = vmatpush2.msra.mxu0 0.0
  %686 = vmatprep.subr.mxu0 0.0
  %687 = vmatpush2.msra.mxu0 0.0
  %688 = vmatprep.subr.mxu0 0.0
  %689 = vmatpush2.msra.mxu0 0.0
  %690 = vmatprep.subr.mxu0 0.0
  %691 = vmatpush2.msra.mxu0 0.0
  %692 = vmatprep.mubr.f32.mxu0 0.0
  %693 = vmatmul.mubr.f32.gmra.mxu0 %v80
  %v694 = vpop.f32.mrf.mxu0
  %v695 = vadd.f32 0.0, %v694
  %v696 = vpop.f32.mrf.mxu0
  %v697 = vadd.f32 0.0, %v696
  %698 = vdwg.mxu0
  %v699 = vld [vmem:[%s3] sm:$0xff]
  %701 = vset.pattern.permute.xlu0 0
  %702 = vperm.xlu0 %701, %v699
  %v703 = vpop.permute.xlu0 %702
  %v705 = vmul.f32 %v198, %v703
  %v706 = vmul.f32 %v200, %v703
  %v707 = vmul.f32 %v269, %v703
  %v708 = vmul.f32 %v271, %v703
  %v709 = vmul.f32 %v340, %v703
  %v710 = vmul.f32 %v342, %v703
  %v711 = vmul.f32 %v411, %v703
  %v712 = vmul.f32 %v413, %v703
  %v713 = vmul.f32 %v482, %v703
  %v714 = vmul.f32 %v484, %v703
  %v715 = vmul.f32 %v553, %v703
  %v716 = vmul.f32 %v555, %v703
  %v717 = vmul.f32 %v624, %v703
  %v718 = vmul.f32 %v626, %v703
  %v719 = vmul.f32 %v695, %v703
  %v720 = vmul.f32 %v697, %v703
  %v721 = vld [vmem:[%s4] sm:$0xff]
  %723 = vset.pattern.permute.xlu0 0
  %724 = vperm.xlu0 %723, %v721
  %v725 = vpop.permute.xlu0 %724
  %v727 = vadd.f32 %v705, %v725
  %v728 = vadd.f32 %v706, %v725
  %v729 = vadd.f32 %v707, %v725
  %v730 = vadd.f32 %v708, %v725
  %v731 = vadd.f32 %v709, %v725
  %v732 = vadd.f32 %v710, %v725
  %v733 = vadd.f32 %v711, %v725
  %v734 = vadd.f32 %v712, %v725
  %v735 = vadd.f32 %v713, %v725
  %v736 = vadd.f32 %v714, %v725
  %v737 = vadd.f32 %v715, %v725
  %v738 = vadd.f32 %v716, %v725
  %v739 = vadd.f32 %v717, %v725
  %v740 = vadd.f32 %v718, %v725
  %v741 = vadd.f32 %v719, %v725
  %v742 = vadd.f32 %v720, %v725
  %v743 = vmax.f32 %v727, 0.0
  %v744 = vmax.f32 %v728, 0.0
  %v745 = vmax.f32 %v729, 0.0
  %v746 = vmax.f32 %v730, 0.0
  %v747 = vmax.f32 %v731, 0.0
  %v748 = vmax.f32 %v732, 0.0
  %v749 = vmax.f32 %v733, 0.0
  %v750 = vmax.f32 %v734, 0.0
  %v751 = vmax.f32 %v735, 0.0
  %v752 = vmax.f32 %v736, 0.0
  %v753 = vmax.f32 %v737, 0.0
  %v754 = vmax.f32 %v738, 0.0
  %v755 = vmax.f32 %v739, 0.0
  %v756 = vmax.f32 %v740, 0.0
  %v757 = vmax.f32 %v741, 0.0
  %v758 = vmax.f32 %v742, 0.0
  %v759 = vld [vmem:[%s1] sm:$0xff]
  %v760 = vld [vmem:[%s1 + $0x8] sm:$0xff]
  %s761 = scalar_lea.vmem %s5, 24
  %v762 = vld [vmem:[%s761] sm:$0xff]
  %763 = vrot.lane.b32.xlu0 %v743, 3
  %v764 = vpop.permute.xlu0 %763
  %765 = vrot.lane.b32.xlu0 %v744, 3
  %v766 = vpop.permute.xlu0 %765
  %767 = vrot.lane.b32.xlu0 %v745, 3
  %v768 = vpop.permute.xlu0 %767
  %769 = vrot.lane.b32.xlu0 %v746, 3
  %v770 = vpop.permute.xlu0 %769
  %771 = vrot.lane.b32.xlu0 %v747, 3
  %v772 = vpop.permute.xlu0 %771
  %773 = vrot.lane.b32.xlu0 %v748, 3
  %v774 = vpop.permute.xlu0 %773
  %775 = vrot.lane.b32.xlu0 %v749, 3
  %v776 = vpop.permute.xlu0 %775
  %777 = vrot.lane.b32.xlu0 %v750, 3
  %v778 = vpop.permute.xlu0 %777
  %779 = vrot.lane.b32.xlu0 %v751, 3
  %v780 = vpop.permute.xlu0 %779
  %781 = vrot.lane.b32.xlu0 %v752, 3
  %v782 = vpop.permute.xlu0 %781
  %783 = vrot.lane.b32.xlu0 %v753, 3
  %v784 = vpop.permute.xlu0 %783
  %785 = vrot.lane.b32.xlu0 %v754, 3
  %v786 = vpop.permute.xlu0 %785
  %787 = vrot.lane.b32.xlu0 %v755, 3
  %v788 = vpop.permute.xlu0 %787
  %789 = vrot.lane.b32.xlu0 %v756, 3
  %v790 = vpop.permute.xlu0 %789
  %791 = vrot.lane.b32.xlu0 %v757, 3
  %v792 = vpop.permute.xlu0 %791
  %793 = vrot.lane.b32.xlu0 %v758, 3
  %v794 = vpop.permute.xlu0 %793
  %v795 = vlaneseq
  %v796 = vand.u32 %v795, 127
  %vm797 = vcmp.lt.s32.totalorder %v796, 3
  %v798 = vsel %vm797, %v792, %v794
  %v799 = vsel %vm797, %v790, %v792
  %v800 = vsel %vm797, %v788, %v790
  %v801 = vsel %vm797, %v786, %v788
  %v802 = vsel %vm797, %v784, %v786
  %v803 = vsel %vm797, %v782, %v784
  %v804 = vsel %vm797, %v780, %v782
  %v805 = vsel %vm797, %v778, %v780
  %v806 = vsel %vm797, %v776, %v778
  %v807 = vsel %vm797, %v774, %v776
  %v808 = vsel %vm797, %v772, %v774
  %v809 = vsel %vm797, %v770, %v772
  %v810 = vsel %vm797, %v768, %v770
  %v811 = vsel %vm797, %v766, %v768
  %v812 = vsel %vm797, %v764, %v766
  %v813 = vsel %vm797, %v794, %v764
  %v814 = vadd.s32 %v759, 4294967293
  %v815 = vadd.s32 %v760, 4294967293
  %vm816 = vcmp.ge.s32.totalorder %v814, 0
  %vm817 = vcmp.ge.s32.totalorder %v815, 0
  %vm818 = vcmp.lt.s32.totalorder %v814, 256
  %vm819 = vcmp.lt.s32.totalorder %v815, 256
  %vm820 = vmand %vm816, %vm818
  %vm821 = vmand %vm817, %vm819
  %v822 = vsel %vm820, 1, 0
  %v823 = vsel %vm821, 1, 0
  %v824 = vlaneseq
  %v825 = vshrl.u32 %v824, 7
  %v826 = vsub.s32 0, %v825
  %v827 = vrot.slane %v822, %v826
  %v828 = vlaneseq
  %v829 = vshrl.u32 %v828, 7
  %v830 = vsub.s32 1, %v829
  %v831 = vrot.slane %v822, %v830
  %v832 = vlaneseq
  %v833 = vshrl.u32 %v832, 7
  %v834 = vsub.s32 2, %v833
  %v835 = vrot.slane %v822, %v834
  %v836 = vlaneseq
  %v837 = vshrl.u32 %v836, 7
  %v838 = vsub.s32 3, %v837
  %v839 = vrot.slane %v822, %v838
  %v840 = vlaneseq
  %v841 = vshrl.u32 %v840, 7
  %v842 = vsub.s32 4, %v841
  %v843 = vrot.slane %v822, %v842
  %v844 = vlaneseq
  %v845 = vshrl.u32 %v844, 7
  %v846 = vsub.s32 5, %v845
  %v847 = vrot.slane %v822, %v846
  %v848 = vlaneseq
  %v849 = vshrl.u32 %v848, 7
  %v850 = vsub.s32 6, %v849
  %v851 = vrot.slane %v822, %v850
  %v852 = vlaneseq
  %v853 = vshrl.u32 %v852, 7
  %v854 = vsub.s32 7, %v853
  %v855 = vrot.slane %v822, %v854
  %v856 = vlaneseq
  %v857 = vshrl.u32 %v856, 7
  %v858 = vsub.s32 0, %v857
  %v859 = vrot.slane %v823, %v858
  %v860 = vlaneseq
  %v861 = vshrl.u32 %v860, 7
  %v862 = vsub.s32 1, %v861
  %v863 = vrot.slane %v823, %v862
  %v864 = vlaneseq
  %v865 = vshrl.u32 %v864, 7
  %v866 = vsub.s32 2, %v865
  %v867 = vrot.slane %v823, %v866
  %v868 = vlaneseq
  %v869 = vshrl.u32 %v868, 7
  %v870 = vsub.s32 3, %v869
  %v871 = vrot.slane %v823, %v870
  %v872 = vlaneseq
  %v873 = vshrl.u32 %v872, 7
  %v874 = vsub.s32 4, %v873
  %v875 = vrot.slane %v823, %v874
  %v876 = vlaneseq
  %v877 = vshrl.u32 %v876, 7
  %v878 = vsub.s32 5, %v877
  %v879 = vrot.slane %v823, %v878
  %v880 = vlaneseq
  %v881 = vshrl.u32 %v880, 7
  %v882 = vsub.s32 6, %v881
  %v883 = vrot.slane %v823, %v882
  %v884 = vlaneseq
  %v885 = vshrl.u32 %v884, 7
  %v886 = vsub.s32 7, %v885
  %v887 = vrot.slane %v823, %v886
  %vm888 = vcmp.eq.s32.totalorder %v827, 1
  %vm889 = vcmp.eq.s32.totalorder %v831, 1
  %vm890 = vcmp.eq.s32.totalorder %v835, 1
  %vm891 = vcmp.eq.s32.totalorder %v839, 1
  %vm892 = vcmp.eq.s32.totalorder %v843, 1
  %vm893 = vcmp.eq.s32.totalorder %v847, 1
  %vm894 = vcmp.eq.s32.totalorder %v851, 1
  %vm895 = vcmp.eq.s32.totalorder %v855, 1
  %vm896 = vcmp.eq.s32.totalorder %v859, 1
  %vm897 = vcmp.eq.s32.totalorder %v863, 1
  %vm898 = vcmp.eq.s32.totalorder %v867, 1
  %vm899 = vcmp.eq.s32.totalorder %v871, 1
  %vm900 = vcmp.eq.s32.totalorder %v875, 1
  %vm901 = vcmp.eq.s32.totalorder %v879, 1
  %vm902 = vcmp.eq.s32.totalorder %v883, 1
  %vm903 = vcmp.eq.s32.totalorder %v887, 1
  %v904 = vsel %vm888, %v813, 0.0
  %v905 = vsel %vm889, %v812, 0.0
  %v906 = vsel %vm890, %v811, 0.0
  %v907 = vsel %vm891, %v810, 0.0
  %v908 = vsel %vm892, %v809, 0.0
  %v909 = vsel %vm893, %v808, 0.0
  %v910 = vsel %vm894, %v807, 0.0
  %v911 = vsel %vm895, %v806, 0.0
  %v912 = vsel %vm896, %v805, 0.0
  %v913 = vsel %vm897, %v804, 0.0
  %v914 = vsel %vm898, %v803, 0.0
  %v915 = vsel %vm899, %v802, 0.0
  %v916 = vsel %vm900, %v801, 0.0
  %v917 = vsel %vm901, %v800, 0.0
  %v918 = vsel %vm902, %v799, 0.0
  %v919 = vsel %vm903, %v798, 0.0
  %v920 = vld [vmem:[%s5] sm:$0xff]
  %vm921 = vcmask 64512
  %v923 = vsel %vm921, %v920, 0
  %925 = vmatprep.subr.mxu0 0.0
  %926 = vmatpush1.msra.mxu0 0.0
  %927 = vmatprep.subr.mxu0 0.0
  %928 = vmatpush1.msra.mxu0 0.0
  %929 = vmatprep.subr.mxu0 0.0
  %930 = vmatpush1.msra.mxu0 0.0
  %931 = vmatprep.subr.mxu0 0.0
  %932 = vmatpush1.msra.mxu0 0.0
  %933 = vmatprep.subr.mxu0 0.0
  %934 = vmatpush1.msra.mxu0 0.0
  %935 = vmatprep.subr.mxu0 0.0
  %936 = vmatpush1.msra.mxu0 0.0
  %937 = vmatprep.subr.mxu0 0.0
  %938 = vmatpush1.msra.mxu0 0.0
  %939 = vmatprep.subr.mxu0 0.0
  %940 = vmatpush1.msra.mxu0 0.0
  %941 = vmatprep.subr.mxu0 0.0
  %942 = vmatpush1.msra.mxu0 0.0
  %943 = vmatprep.subr.mxu0 0.0
  %944 = vmatpush1.msra.mxu0 0.0
  %945 = vmatprep.subr.mxu0 0.0
  %946 = vmatpush1.msra.mxu0 0.0
  %947 = vmatprep.subr.mxu0 0.0
  %948 = vmatpush1.msra.mxu0 0.0
  %949 = vmatprep.subr.mxu0 0.0
  %950 = vmatpush1.msra.mxu0 0.0
  %951 = vmatprep.subr.mxu0 0.0
  %952 = vmatpush1.msra.mxu0 0.0
  %953 = vmatprep.subr.mxu0 0.0
  %954 = vmatpush1.msra.mxu0 0.0
  %955 = vmatprep.subr.mxu0 %v905
  %956 = vmatpush1.msra.mxu0 %v904
  %957 = vmatprep.subr.mxu0 0.0
  %958 = vmatpush2.msra.mxu0 0.0
  %959 = vmatprep.subr.mxu0 0.0
  %960 = vmatpush2.msra.mxu0 0.0
  %961 = vmatprep.subr.mxu0 0.0
  %962 = vmatpush2.msra.mxu0 0.0
  %963 = vmatprep.subr.mxu0 0.0
  %964 = vmatpush2.msra.mxu0 0.0
  %965 = vmatprep.subr.mxu0 0.0
  %966 = vmatpush2.msra.mxu0 0.0
  %967 = vmatprep.subr.mxu0 0.0
  %968 = vmatpush2.msra.mxu0 0.0
  %969 = vmatprep.subr.mxu0 0.0
  %970 = vmatpush2.msra.mxu0 0.0
  %971 = vmatprep.subr.mxu0 0.0
  %972 = vmatpush2.msra.mxu0 0.0
  %973 = vmatprep.subr.mxu0 0.0
  %974 = vmatpush2.msra.mxu0 0.0
  %975 = vmatprep.subr.mxu0 0.0
  %976 = vmatpush2.msra.mxu0 0.0
  %977 = vmatprep.subr.mxu0 0.0
  %978 = vmatpush2.msra.mxu0 0.0
  %979 = vmatprep.subr.mxu0 0.0
  %980 = vmatpush2.msra.mxu0 0.0
  %981 = vmatprep.subr.mxu0 0.0
  %982 = vmatpush2.msra.mxu0 0.0
  %983 = vmatprep.subr.mxu0 0.0
  %984 = vmatpush2.msra.mxu0 0.0
  %985 = vmatprep.subr.mxu0 0.0
  %986 = vmatpush2.msra.mxu0 0.0
  %987 = vmatprep.subr.mxu0 0.0
  %988 = vmatpush2.msra.mxu0 0.0
  %989 = vmatprep.mubr.f32.mxu0 0.0
  %990 = vmatmul.mubr.f32.gmra.mxu0 %v923
  %v991 = vpop.f32.mrf.mxu0
  %v992 = vadd.f32 0.0, %v991
  %v993 = vpop.f32.mrf.mxu0
  %v994 = vadd.f32 0.0, %v993
  %995 = vdwg.mxu0
  %996 = vmatprep.subr.mxu0 0.0
  %997 = vmatpush1.msra.mxu0 0.0
  %998 = vmatprep.subr.mxu0 0.0
  %999 = vmatpush1.msra.mxu0 0.0
  %1000 = vmatprep.subr.mxu0 0.0
  %1001 = vmatpush1.msra.mxu0 0.0
  %1002 = vmatprep.subr.mxu0 0.0
  %1003 = vmatpush1.msra.mxu0 0.0
  %1004 = vmatprep.subr.mxu0 0.0
  %1005 = vmatpush1.msra.mxu0 0.0
  %1006 = vmatprep.subr.mxu0 0.0
  %1007 = vmatpush1.msra.mxu0 0.0
  %1008 = vmatprep.subr.mxu0 0.0
  %1009 = vmatpush1.msra.mxu0 0.0
  %1010 = vmatprep.subr.mxu0 0.0
  %1011 = vmatpush1.msra.mxu0 0.0
  %1012 = vmatprep.subr.mxu0 0.0
  %1013 = vmatpush1.msra.mxu0 0.0
  %1014 = vmatprep.subr.mxu0 0.0
  %1015 = vmatpush1.msra.mxu0 0.0
  %1016 = vmatprep.subr.mxu0 0.0
  %1017 = vmatpush1.msra.mxu0 0.0
  %1018 = vmatprep.subr.mxu0 0.0
  %1019 = vmatpush1.msra.mxu0 0.0
  %1020 = vmatprep.subr.mxu0 0.0
  %1021 = vmatpush1.msra.mxu0 0.0
  %1022 = vmatprep.subr.mxu0 0.0
  %1023 = vmatpush1.msra.mxu0 0.0
  %1024 = vmatprep.subr.mxu0 0.0
  %1025 = vmatpush1.msra.mxu0 0.0
  %1026 = vmatprep.subr.mxu0 %v907
  %1027 = vmatpush1.msra.mxu0 %v906
  %1028 = vmatprep.subr.mxu0 0.0
  %1029 = vmatpush2.msra.mxu0 0.0
  %1030 = vmatprep.subr.mxu0 0.0
  %1031 = vmatpush2.msra.mxu0 0.0
  %1032 = vmatprep.subr.mxu0 0.0
  %1033 = vmatpush2.msra.mxu0 0.0
  %1034 = vmatprep.subr.mxu0 0.0
  %1035 = vmatpush2.msra.mxu0 0.0
  %1036 = vmatprep.subr.mxu0 0.0
  %1037 = vmatpush2.msra.mxu0 0.0
  %1038 = vmatprep.subr.mxu0 0.0
  %1039 = vmatpush2.msra.mxu0 0.0
  %1040 = vmatprep.subr.mxu0 0.0
  %1041 = vmatpush2.msra.mxu0 0.0
  %1042 = vmatprep.subr.mxu0 0.0
  %1043 = vmatpush2.msra.mxu0 0.0
  %1044 = vmatprep.subr.mxu0 0.0
  %1045 = vmatpush2.msra.mxu0 0.0
  %1046 = vmatprep.subr.mxu0 0.0
  %1047 = vmatpush2.msra.mxu0 0.0
  %1048 = vmatprep.subr.mxu0 0.0
  %1049 = vmatpush2.msra.mxu0 0.0
  %1050 = vmatprep.subr.mxu0 0.0
  %1051 = vmatpush2.msra.mxu0 0.0
  %1052 = vmatprep.subr.mxu0 0.0
  %1053 = vmatpush2.msra.mxu0 0.0
  %1054 = vmatprep.subr.mxu0 0.0
  %1055 = vmatpush2.msra.mxu0 0.0
  %1056 = vmatprep.subr.mxu0 0.0
  %1057 = vmatpush2.msra.mxu0 0.0
  %1058 = vmatprep.subr.mxu0 0.0
  %1059 = vmatpush2.msra.mxu0 0.0
  %1060 = vmatprep.mubr.f32.mxu0 0.0
  %1061 = vmatmul.mubr.f32.gmra.mxu0 %v923
  %v1062 = vpop.f32.mrf.mxu0
  %v1063 = vadd.f32 0.0, %v1062
  %v1064 = vpop.f32.mrf.mxu0
  %v1065 = vadd.f32 0.0, %v1064
  %1066 = vdwg.mxu0
  %1067 = vmatprep.subr.mxu0 0.0
  %1068 = vmatpush1.msra.mxu0 0.0
  %1069 = vmatprep.subr.mxu0 0.0
  %1070 = vmatpush1.msra.mxu0 0.0
  %1071 = vmatprep.subr.mxu0 0.0
  %1072 = vmatpush1.msra.mxu0 0.0
  %1073 = vmatprep.subr.mxu0 0.0
  %1074 = vmatpush1.msra.mxu0 0.0
  %1075 = vmatprep.subr.mxu0 0.0
  %1076 = vmatpush1.msra.mxu0 0.0
  %1077 = vmatprep.subr.mxu0 0.0
  %1078 = vmatpush1.msra.mxu0 0.0
  %1079 = vmatprep.subr.mxu0 0.0
  %1080 = vmatpush1.msra.mxu0 0.0
  %1081 = vmatprep.subr.mxu0 0.0
  %1082 = vmatpush1.msra.mxu0 0.0
  %1083 = vmatprep.subr.mxu0 0.0
  %1084 = vmatpush1.msra.mxu0 0.0
  %1085 = vmatprep.subr.mxu0 0.0
  %1086 = vmatpush1.msra.mxu0 0.0
  %1087 = vmatprep.subr.mxu0 0.0
  %1088 = vmatpush1.msra.mxu0 0.0
  %1089 = vmatprep.subr.mxu0 0.0
  %1090 = vmatpush1.msra.mxu0 0.0
  %1091 = vmatprep.subr.mxu0 0.0
  %1092 = vmatpush1.msra.mxu0 0.0
  %1093 = vmatprep.subr.mxu0 0.0
  %1094 = vmatpush1.msra.mxu0 0.0
  %1095 = vmatprep.subr.mxu0 0.0
  %1096 = vmatpush1.msra.mxu0 0.0
  %1097 = vmatprep.subr.mxu0 %v909
  %1098 = vmatpush1.msra.mxu0 %v908
  %1099 = vmatprep.subr.mxu0 0.0
  %1100 = vmatpush2.msra.mxu0 0.0
  %1101 = vmatprep.subr.mxu0 0.0
  %1102 = vmatpush2.msra.mxu0 0.0
  %1103 = vmatprep.subr.mxu0 0.0
  %1104 = vmatpush2.msra.mxu0 0.0
  %1105 = vmatprep.subr.mxu0 0.0
  %1106 = vmatpush2.msra.mxu0 0.0
  %1107 = vmatprep.subr.mxu0 0.0
  %1108 = vmatpush2.msra.mxu0 0.0
  %1109 = vmatprep.subr.mxu0 0.0
  %1110 = vmatpush2.msra.mxu0 0.0
  %1111 = vmatprep.subr.mxu0 0.0
  %1112 = vmatpush2.msra.mxu0 0.0
  %1113 = vmatprep.subr.mxu0 0.0
  %1114 = vmatpush2.msra.mxu0 0.0
  %1115 = vmatprep.subr.mxu0 0.0
  %1116 = vmatpush2.msra.mxu0 0.0
  %1117 = vmatprep.subr.mxu0 0.0
  %1118 = vmatpush2.msra.mxu0 0.0
  %1119 = vmatprep.subr.mxu0 0.0
  %1120 = vmatpush2.msra.mxu0 0.0
  %1121 = vmatprep.subr.mxu0 0.0
  %1122 = vmatpush2.msra.mxu0 0.0
  %1123 = vmatprep.subr.mxu0 0.0
  %1124 = vmatpush2.msra.mxu0 0.0
  %1125 = vmatprep.subr.mxu0 0.0
  %1126 = vmatpush2.msra.mxu0 0.0
  %1127 = vmatprep.subr.mxu0 0.0
  %1128 = vmatpush2.msra.mxu0 0.0
  %1129 = vmatprep.subr.mxu0 0.0
  %1130 = vmatpush2.msra.mxu0 0.0
  %1131 = vmatprep.mubr.f32.mxu0 0.0
  %1132 = vmatmul.mubr.f32.gmra.mxu0 %v923
  %v1133 = vpop.f32.mrf.mxu0
  %v1134 = vadd.f32 0.0, %v1133
  %v1135 = vpop.f32.mrf.mxu0
  %v1136 = vadd.f32 0.0, %v1135
  %1137 = vdwg.mxu0
  %1138 = vmatprep.subr.mxu0 0.0
  %1139 = vmatpush1.msra.mxu0 0.0
  %1140 = vmatprep.subr.mxu0 0.0
  %1141 = vmatpush1.msra.mxu0 0.0
  %1142 = vmatprep.subr.mxu0 0.0
  %1143 = vmatpush1.msra.mxu0 0.0
  %1144 = vmatprep.subr.mxu0 0.0
  %1145 = vmatpush1.msra.mxu0 0.0
  %1146 = vmatprep.subr.mxu0 0.0
  %1147 = vmatpush1.msra.mxu0 0.0
  %1148 = vmatprep.subr.mxu0 0.0
  %1149 = vmatpush1.msra.mxu0 0.0
  %1150 = vmatprep.subr.mxu0 0.0
  %1151 = vmatpush1.msra.mxu0 0.0
  %1152 = vmatprep.subr.mxu0 0.0
  %1153 = vmatpush1.msra.mxu0 0.0
  %1154 = vmatprep.subr.mxu0 0.0
  %1155 = vmatpush1.msra.mxu0 0.0
  %1156 = vmatprep.subr.mxu0 0.0
  %1157 = vmatpush1.msra.mxu0 0.0
  %1158 = vmatprep.subr.mxu0 0.0
  %1159 = vmatpush1.msra.mxu0 0.0
  %1160 = vmatprep.subr.mxu0 0.0
  %1161 = vmatpush1.msra.mxu0 0.0
  %1162 = vmatprep.subr.mxu0 0.0
  %1163 = vmatpush1.msra.mxu0 0.0
  %1164 = vmatprep.subr.mxu0 0.0
  %1165 = vmatpush1.msra.mxu0 0.0
  %1166 = vmatprep.subr.mxu0 0.0
  %1167 = vmatpush1.msra.mxu0 0.0
  %1168 = vmatprep.subr.mxu0 %v911
  %1169 = vmatpush1.msra.mxu0 %v910
  %1170 = vmatprep.subr.mxu0 0.0
  %1171 = vmatpush2.msra.mxu0 0.0
  %1172 = vmatprep.subr.mxu0 0.0
  %1173 = vmatpush2.msra.mxu0 0.0
  %1174 = vmatprep.subr.mxu0 0.0
  %1175 = vmatpush2.msra.mxu0 0.0
  %1176 = vmatprep.subr.mxu0 0.0
  %1177 = vmatpush2.msra.mxu0 0.0
  %1178 = vmatprep.subr.mxu0 0.0
  %1179 = vmatpush2.msra.mxu0 0.0
  %1180 = vmatprep.subr.mxu0 0.0
  %1181 = vmatpush2.msra.mxu0 0.0
  %1182 = vmatprep.subr.mxu0 0.0
  %1183 = vmatpush2.msra.mxu0 0.0
  %1184 = vmatprep.subr.mxu0 0.0
  %1185 = vmatpush2.msra.mxu0 0.0
  %1186 = vmatprep.subr.mxu0 0.0
  %1187 = vmatpush2.msra.mxu0 0.0
  %1188 = vmatprep.subr.mxu0 0.0
  %1189 = vmatpush2.msra.mxu0 0.0
  %1190 = vmatprep.subr.mxu0 0.0
  %1191 = vmatpush2.msra.mxu0 0.0
  %1192 = vmatprep.subr.mxu0 0.0
  %1193 = vmatpush2.msra.mxu0 0.0
  %1194 = vmatprep.subr.mxu0 0.0
  %1195 = vmatpush2.msra.mxu0 0.0
  %1196 = vmatprep.subr.mxu0 0.0
  %1197 = vmatpush2.msra.mxu0 0.0
  %1198 = vmatprep.subr.mxu0 0.0
  %1199 = vmatpush2.msra.mxu0 0.0
  %1200 = vmatprep.subr.mxu0 0.0
  %1201 = vmatpush2.msra.mxu0 0.0
  %1202 = vmatprep.mubr.f32.mxu0 0.0
  %1203 = vmatmul.mubr.f32.gmra.mxu0 %v923
  %v1204 = vpop.f32.mrf.mxu0
  %v1205 = vadd.f32 0.0, %v1204
  %v1206 = vpop.f32.mrf.mxu0
  %v1207 = vadd.f32 0.0, %v1206
  %1208 = vdwg.mxu0
  %1209 = vmatprep.subr.mxu0 0.0
  %1210 = vmatpush1.msra.mxu0 0.0
  %1211 = vmatprep.subr.mxu0 0.0
  %1212 = vmatpush1.msra.mxu0 0.0
  %1213 = vmatprep.subr.mxu0 0.0
  %1214 = vmatpush1.msra.mxu0 0.0
  %1215 = vmatprep.subr.mxu0 0.0
  %1216 = vmatpush1.msra.mxu0 0.0
  %1217 = vmatprep.subr.mxu0 0.0
  %1218 = vmatpush1.msra.mxu0 0.0
  %1219 = vmatprep.subr.mxu0 0.0
  %1220 = vmatpush1.msra.mxu0 0.0
  %1221 = vmatprep.subr.mxu0 0.0
  %1222 = vmatpush1.msra.mxu0 0.0
  %1223 = vmatprep.subr.mxu0 0.0
  %1224 = vmatpush1.msra.mxu0 0.0
  %1225 = vmatprep.subr.mxu0 0.0
  %1226 = vmatpush1.msra.mxu0 0.0
  %1227 = vmatprep.subr.mxu0 0.0
  %1228 = vmatpush1.msra.mxu0 0.0
  %1229 = vmatprep.subr.mxu0 0.0
  %1230 = vmatpush1.msra.mxu0 0.0
  %1231 = vmatprep.subr.mxu0 0.0
  %1232 = vmatpush1.msra.mxu0 0.0
  %1233 = vmatprep.subr.mxu0 0.0
  %1234 = vmatpush1.msra.mxu0 0.0
  %1235 = vmatprep.subr.mxu0 0.0
  %1236 = vmatpush1.msra.mxu0 0.0
  %1237 = vmatprep.subr.mxu0 0.0
  %1238 = vmatpush1.msra.mxu0 0.0
  %1239 = vmatprep.subr.mxu0 %v913
  %1240 = vmatpush1.msra.mxu0 %v912
  %1241 = vmatprep.subr.mxu0 0.0
  %1242 = vmatpush2.msra.mxu0 0.0
  %1243 = vmatprep.subr.mxu0 0.0
  %1244 = vmatpush2.msra.mxu0 0.0
  %1245 = vmatprep.subr.mxu0 0.0
  %1246 = vmatpush2.msra.mxu0 0.0
  %1247 = vmatprep.subr.mxu0 0.0
  %1248 = vmatpush2.msra.mxu0 0.0
  %1249 = vmatprep.subr.mxu0 0.0
  %1250 = vmatpush2.msra.mxu0 0.0
  %1251 = vmatprep.subr.mxu0 0.0
  %1252 = vmatpush2.msra.mxu0 0.0
  %1253 = vmatprep.subr.mxu0 0.0
  %1254 = vmatpush2.msra.mxu0 0.0
  %1255 = vmatprep.subr.mxu0 0.0
  %1256 = vmatpush2.msra.mxu0 0.0
  %1257 = vmatprep.subr.mxu0 0.0
  %1258 = vmatpush2.msra.mxu0 0.0
  %1259 = vmatprep.subr.mxu0 0.0
  %1260 = vmatpush2.msra.mxu0 0.0
  %1261 = vmatprep.subr.mxu0 0.0
  %1262 = vmatpush2.msra.mxu0 0.0
  %1263 = vmatprep.subr.mxu0 0.0
  %1264 = vmatpush2.msra.mxu0 0.0
  %1265 = vmatprep.subr.mxu0 0.0
  %1266 = vmatpush2.msra.mxu0 0.0
  %1267 = vmatprep.subr.mxu0 0.0
  %1268 = vmatpush2.msra.mxu0 0.0
  %1269 = vmatprep.subr.mxu0 0.0
  %1270 = vmatpush2.msra.mxu0 0.0
  %1271 = vmatprep.subr.mxu0 0.0
  %1272 = vmatpush2.msra.mxu0 0.0
  %1273 = vmatprep.mubr.f32.mxu0 0.0
  %1274 = vmatmul.mubr.f32.gmra.mxu0 %v923
  %v1275 = vpop.f32.mrf.mxu0
  %v1276 = vadd.f32 0.0, %v1275
  %v1277 = vpop.f32.mrf.mxu0
  %v1278 = vadd.f32 0.0, %v1277
  %1279 = vdwg.mxu0
  %1280 = vmatprep.subr.mxu0 0.0
  %1281 = vmatpush1.msra.mxu0 0.0
  %1282 = vmatprep.subr.mxu0 0.0
  %1283 = vmatpush1.msra.mxu0 0.0
  %1284 = vmatprep.subr.mxu0 0.0
  %1285 = vmatpush1.msra.mxu0 0.0
  %1286 = vmatprep.subr.mxu0 0.0
  %1287 = vmatpush1.msra.mxu0 0.0
  %1288 = vmatprep.subr.mxu0 0.0
  %1289 = vmatpush1.msra.mxu0 0.0
  %1290 = vmatprep.subr.mxu0 0.0
  %1291 = vmatpush1.msra.mxu0 0.0
  %1292 = vmatprep.subr.mxu0 0.0
  %1293 = vmatpush1.msra.mxu0 0.0
  %1294 = vmatprep.subr.mxu0 0.0
  %1295 = vmatpush1.msra.mxu0 0.0
  %1296 = vmatprep.subr.mxu0 0.0
  %1297 = vmatpush1.msra.mxu0 0.0
  %1298 = vmatprep.subr.mxu0 0.0
  %1299 = vmatpush1.msra.mxu0 0.0
  %1300 = vmatprep.subr.mxu0 0.0
  %1301 = vmatpush1.msra.mxu0 0.0
  %1302 = vmatprep.subr.mxu0 0.0
  %1303 = vmatpush1.msra.mxu0 0.0
  %1304 = vmatprep.subr.mxu0 0.0
  %1305 = vmatpush1.msra.mxu0 0.0
  %1306 = vmatprep.subr.mxu0 0.0
  %1307 = vmatpush1.msra.mxu0 0.0
  %1308 = vmatprep.subr.mxu0 0.0
  %1309 = vmatpush1.msra.mxu0 0.0
  %1310 = vmatprep.subr.mxu0 %v915
  %1311 = vmatpush1.msra.mxu0 %v914
  %1312 = vmatprep.subr.mxu0 0.0
  %1313 = vmatpush2.msra.mxu0 0.0
  %1314 = vmatprep.subr.mxu0 0.0
  %1315 = vmatpush2.msra.mxu0 0.0
  %1316 = vmatprep.subr.mxu0 0.0
  %1317 = vmatpush2.msra.mxu0 0.0
  %1318 = vmatprep.subr.mxu0 0.0
  %1319 = vmatpush2.msra.mxu0 0.0
  %1320 = vmatprep.subr.mxu0 0.0
  %1321 = vmatpush2.msra.mxu0 0.0
  %1322 = vmatprep.subr.mxu0 0.0
  %1323 = vmatpush2.msra.mxu0 0.0
  %1324 = vmatprep.subr.mxu0 0.0
  %1325 = vmatpush2.msra.mxu0 0.0
  %1326 = vmatprep.subr.mxu0 0.0
  %1327 = vmatpush2.msra.mxu0 0.0
  %1328 = vmatprep.subr.mxu0 0.0
  %1329 = vmatpush2.msra.mxu0 0.0
  %1330 = vmatprep.subr.mxu0 0.0
  %1331 = vmatpush2.msra.mxu0 0.0
  %1332 = vmatprep.subr.mxu0 0.0
  %1333 = vmatpush2.msra.mxu0 0.0
  %1334 = vmatprep.subr.mxu0 0.0
  %1335 = vmatpush2.msra.mxu0 0.0
  %1336 = vmatprep.subr.mxu0 0.0
  %1337 = vmatpush2.msra.mxu0 0.0
  %1338 = vmatprep.subr.mxu0 0.0
  %1339 = vmatpush2.msra.mxu0 0.0
  %1340 = vmatprep.subr.mxu0 0.0
  %1341 = vmatpush2.msra.mxu0 0.0
  %1342 = vmatprep.subr.mxu0 0.0
  %1343 = vmatpush2.msra.mxu0 0.0
  %1344 = vmatprep.mubr.f32.mxu0 0.0
  %1345 = vmatmul.mubr.f32.gmra.mxu0 %v923
  %v1346 = vpop.f32.mrf.mxu0
  %v1347 = vadd.f32 0.0, %v1346
  %v1348 = vpop.f32.mrf.mxu0
  %v1349 = vadd.f32 0.0, %v1348
  %1350 = vdwg.mxu0
  %1351 = vmatprep.subr.mxu0 0.0
  %1352 = vmatpush1.msra.mxu0 0.0
  %1353 = vmatprep.subr.mxu0 0.0
  %1354 = vmatpush1.msra.mxu0 0.0
  %1355 = vmatprep.subr.mxu0 0.0
  %1356 = vmatpush1.msra.mxu0 0.0
  %1357 = vmatprep.subr.mxu0 0.0
  %1358 = vmatpush1.msra.mxu0 0.0
  %1359 = vmatprep.subr.mxu0 0.0
  %1360 = vmatpush1.msra.mxu0 0.0
  %1361 = vmatprep.subr.mxu0 0.0
  %1362 = vmatpush1.msra.mxu0 0.0
  %1363 = vmatprep.subr.mxu0 0.0
  %1364 = vmatpush1.msra.mxu0 0.0
  %1365 = vmatprep.subr.mxu0 0.0
  %1366 = vmatpush1.msra.mxu0 0.0
  %1367 = vmatprep.subr.mxu0 0.0
  %1368 = vmatpush1.msra.mxu0 0.0
  %1369 = vmatprep.subr.mxu0 0.0
  %1370 = vmatpush1.msra.mxu0 0.0
  %1371 = vmatprep.subr.mxu0 0.0
  %1372 = vmatpush1.msra.mxu0 0.0
  %1373 = vmatprep.subr.mxu0 0.0
  %1374 = vmatpush1.msra.mxu0 0.0
  %1375 = vmatprep.subr.mxu0 0.0
  %1376 = vmatpush1.msra.mxu0 0.0
  %1377 = vmatprep.subr.mxu0 0.0
  %1378 = vmatpush1.msra.mxu0 0.0
  %1379 = vmatprep.subr.mxu0 0.0
  %1380 = vmatpush1.msra.mxu0 0.0
  %1381 = vmatprep.subr.mxu0 %v917
  %1382 = vmatpush1.msra.mxu0 %v916
  %1383 = vmatprep.subr.mxu0 0.0
  %1384 = vmatpush2.msra.mxu0 0.0
  %1385 = vmatprep.subr.mxu0 0.0
  %1386 = vmatpush2.msra.mxu0 0.0
  %1387 = vmatprep.subr.mxu0 0.0
  %1388 = vmatpush2.msra.mxu0 0.0
  %1389 = vmatprep.subr.mxu0 0.0
  %1390 = vmatpush2.msra.mxu0 0.0
  %1391 = vmatprep.subr.mxu0 0.0
  %1392 = vmatpush2.msra.mxu0 0.0
  %1393 = vmatprep.subr.mxu0 0.0
  %1394 = vmatpush2.msra.mxu0 0.0
  %1395 = vmatprep.subr.mxu0 0.0
  %1396 = vmatpush2.msra.mxu0 0.0
  %1397 = vmatprep.subr.mxu0 0.0
  %1398 = vmatpush2.msra.mxu0 0.0
  %1399 = vmatprep.subr.mxu0 0.0
  %1400 = vmatpush2.msra.mxu0 0.0
  %1401 = vmatprep.subr.mxu0 0.0
  %1402 = vmatpush2.msra.mxu0 0.0
  %1403 = vmatprep.subr.mxu0 0.0
  %1404 = vmatpush2.msra.mxu0 0.0
  %1405 = vmatprep.subr.mxu0 0.0
  %1406 = vmatpush2.msra.mxu0 0.0
  %1407 = vmatprep.subr.mxu0 0.0
  %1408 = vmatpush2.msra.mxu0 0.0
  %1409 = vmatprep.subr.mxu0 0.0
  %1410 = vmatpush2.msra.mxu0 0.0
  %1411 = vmatprep.subr.mxu0 0.0
  %1412 = vmatpush2.msra.mxu0 0.0
  %1413 = vmatprep.subr.mxu0 0.0
  %1414 = vmatpush2.msra.mxu0 0.0
  %1415 = vmatprep.mubr.f32.mxu0 0.0
  %1416 = vmatmul.mubr.f32.gmra.mxu0 %v923
  %v1417 = vpop.f32.mrf.mxu0
  %v1418 = vadd.f32 0.0, %v1417
  %v1419 = vpop.f32.mrf.mxu0
  %v1420 = vadd.f32 0.0, %v1419
  %1421 = vdwg.mxu0
  %1422 = vmatprep.subr.mxu0 0.0
  %1423 = vmatpush1.msra.mxu0 0.0
  %1424 = vmatprep.subr.mxu0 0.0
  %1425 = vmatpush1.msra.mxu0 0.0
  %1426 = vmatprep.subr.mxu0 0.0
  %1427 = vmatpush1.msra.mxu0 0.0
  %1428 = vmatprep.subr.mxu0 0.0
  %1429 = vmatpush1.msra.mxu0 0.0
  %1430 = vmatprep.subr.mxu0 0.0
  %1431 = vmatpush1.msra.mxu0 0.0
  %1432 = vmatprep.subr.mxu0 0.0
  %1433 = vmatpush1.msra.mxu0 0.0
  %1434 = vmatprep.subr.mxu0 0.0
  %1435 = vmatpush1.msra.mxu0 0.0
  %1436 = vmatprep.subr.mxu0 0.0
  %1437 = vmatpush1.msra.mxu0 0.0
  %1438 = vmatprep.subr.mxu0 0.0
  %1439 = vmatpush1.msra.mxu0 0.0
  %1440 = vmatprep.subr.mxu0 0.0
  %1441 = vmatpush1.msra.mxu0 0.0
  %1442 = vmatprep.subr.mxu0 0.0
  %1443 = vmatpush1.msra.mxu0 0.0
  %1444 = vmatprep.subr.mxu0 0.0
  %1445 = vmatpush1.msra.mxu0 0.0
  %1446 = vmatprep.subr.mxu0 0.0
  %1447 = vmatpush1.msra.mxu0 0.0
  %1448 = vmatprep.subr.mxu0 0.0
  %1449 = vmatpush1.msra.mxu0 0.0
  %1450 = vmatprep.subr.mxu0 0.0
  %1451 = vmatpush1.msra.mxu0 0.0
  %1452 = vmatprep.subr.mxu0 %v919
  %1453 = vmatpush1.msra.mxu0 %v918
  %1454 = vmatprep.subr.mxu0 0.0
  %1455 = vmatpush2.msra.mxu0 0.0
  %1456 = vmatprep.subr.mxu0 0.0
  %1457 = vmatpush2.msra.mxu0 0.0
  %1458 = vmatprep.subr.mxu0 0.0
  %1459 = vmatpush2.msra.mxu0 0.0
  %1460 = vmatprep.subr.mxu0 0.0
  %1461 = vmatpush2.msra.mxu0 0.0
  %1462 = vmatprep.subr.mxu0 0.0
  %1463 = vmatpush2.msra.mxu0 0.0
  %1464 = vmatprep.subr.mxu0 0.0
  %1465 = vmatpush2.msra.mxu0 0.0
  %1466 = vmatprep.subr.mxu0 0.0
  %1467 = vmatpush2.msra.mxu0 0.0
  %1468 = vmatprep.subr.mxu0 0.0
  %1469 = vmatpush2.msra.mxu0 0.0
  %1470 = vmatprep.subr.mxu0 0.0
  %1471 = vmatpush2.msra.mxu0 0.0
  %1472 = vmatprep.subr.mxu0 0.0
  %1473 = vmatpush2.msra.mxu0 0.0
  %1474 = vmatprep.subr.mxu0 0.0
  %1475 = vmatpush2.msra.mxu0 0.0
  %1476 = vmatprep.subr.mxu0 0.0
  %1477 = vmatpush2.msra.mxu0 0.0
  %1478 = vmatprep.subr.mxu0 0.0
  %1479 = vmatpush2.msra.mxu0 0.0
  %1480 = vmatprep.subr.mxu0 0.0
  %1481 = vmatpush2.msra.mxu0 0.0
  %1482 = vmatprep.subr.mxu0 0.0
  %1483 = vmatpush2.msra.mxu0 0.0
  %1484 = vmatprep.subr.mxu0 0.0
  %1485 = vmatpush2.msra.mxu0 0.0
  %1486 = vmatprep.mubr.f32.mxu0 0.0
  %1487 = vmatmul.mubr.f32.gmra.mxu0 %v923
  %v1488 = vpop.f32.mrf.mxu0
  %v1489 = vadd.f32 0.0, %v1488
  %v1490 = vpop.f32.mrf.mxu0
  %v1491 = vadd.f32 0.0, %v1490
  %1492 = vdwg.mxu0
  %v1494 = vsel %vm921, %v762, 0
  %1496 = vmatprep.subr.mxu0 0.0
  %1497 = vmatpush1.msra.mxu0 0.0
  %1498 = vmatprep.subr.mxu0 0.0
  %1499 = vmatpush1.msra.mxu0 0.0
  %1500 = vmatprep.subr.mxu0 0.0
  %1501 = vmatpush1.msra.mxu0 0.0
  %1502 = vmatprep.subr.mxu0 0.0
  %1503 = vmatpush1.msra.mxu0 0.0
  %1504 = vmatprep.subr.mxu0 0.0
  %1505 = vmatpush1.msra.mxu0 0.0
  %1506 = vmatprep.subr.mxu0 0.0
  %1507 = vmatpush1.msra.mxu0 0.0
  %1508 = vmatprep.subr.mxu0 0.0
  %1509 = vmatpush1.msra.mxu0 0.0
  %1510 = vmatprep.subr.mxu0 0.0
  %1511 = vmatpush1.msra.mxu0 0.0
  %1512 = vmatprep.subr.mxu0 0.0
  %1513 = vmatpush1.msra.mxu0 0.0
  %1514 = vmatprep.subr.mxu0 0.0
  %1515 = vmatpush1.msra.mxu0 0.0
  %1516 = vmatprep.subr.mxu0 0.0
  %1517 = vmatpush1.msra.mxu0 0.0
  %1518 = vmatprep.subr.mxu0 0.0
  %1519 = vmatpush1.msra.mxu0 0.0
  %1520 = vmatprep.subr.mxu0 0.0
  %1521 = vmatpush1.msra.mxu0 0.0
  %1522 = vmatprep.subr.mxu0 0.0
  %1523 = vmatpush1.msra.mxu0 0.0
  %1524 = vmatprep.subr.mxu0 0.0
  %1525 = vmatpush1.msra.mxu0 0.0
  %1526 = vmatprep.subr.mxu0 %v744
  %1527 = vmatpush1.msra.mxu0 %v743
  %1528 = vmatprep.subr.mxu0 0.0
  %1529 = vmatpush2.msra.mxu0 0.0
  %1530 = vmatprep.subr.mxu0 0.0
  %1531 = vmatpush2.msra.mxu0 0.0
  %1532 = vmatprep.subr.mxu0 0.0
  %1533 = vmatpush2.msra.mxu0 0.0
  %1534 = vmatprep.subr.mxu0 0.0
  %1535 = vmatpush2.msra.mxu0 0.0
  %1536 = vmatprep.subr.mxu0 0.0
  %1537 = vmatpush2.msra.mxu0 0.0
  %1538 = vmatprep.subr.mxu0 0.0
  %1539 = vmatpush2.msra.mxu0 0.0
  %1540 = vmatprep.subr.mxu0 0.0
  %1541 = vmatpush2.msra.mxu0 0.0
  %1542 = vmatprep.subr.mxu0 0.0
  %1543 = vmatpush2.msra.mxu0 0.0
  %1544 = vmatprep.subr.mxu0 0.0
  %1545 = vmatpush2.msra.mxu0 0.0
  %1546 = vmatprep.subr.mxu0 0.0
  %1547 = vmatpush2.msra.mxu0 0.0
  %1548 = vmatprep.subr.mxu0 0.0
  %1549 = vmatpush2.msra.mxu0 0.0
  %1550 = vmatprep.subr.mxu0 0.0
  %1551 = vmatpush2.msra.mxu0 0.0
  %1552 = vmatprep.subr.mxu0 0.0
  %1553 = vmatpush2.msra.mxu0 0.0
  %1554 = vmatprep.subr.mxu0 0.0
  %1555 = vmatpush2.msra.mxu0 0.0
  %1556 = vmatprep.subr.mxu0 0.0
  %1557 = vmatpush2.msra.mxu0 0.0
  %1558 = vmatprep.subr.mxu0 0.0
  %1559 = vmatpush2.msra.mxu0 0.0
  %1560 = vmatprep.mubr.f32.mxu0 0.0
  %1561 = vmatmul.mubr.f32.gmra.mxu0 %v1494
  %v1562 = vpop.f32.mrf.mxu0
  %v1563 = vadd.f32 %v992, %v1562
  %v1564 = vpop.f32.mrf.mxu0
  %v1565 = vadd.f32 %v994, %v1564
  %1566 = vdwg.mxu0
  %1567 = vmatprep.subr.mxu0 0.0
  %1568 = vmatpush1.msra.mxu0 0.0
  %1569 = vmatprep.subr.mxu0 0.0
  %1570 = vmatpush1.msra.mxu0 0.0
  %1571 = vmatprep.subr.mxu0 0.0
  %1572 = vmatpush1.msra.mxu0 0.0
  %1573 = vmatprep.subr.mxu0 0.0
  %1574 = vmatpush1.msra.mxu0 0.0
  %1575 = vmatprep.subr.mxu0 0.0
  %1576 = vmatpush1.msra.mxu0 0.0
  %1577 = vmatprep.subr.mxu0 0.0
  %1578 = vmatpush1.msra.mxu0 0.0
  %1579 = vmatprep.subr.mxu0 0.0
  %1580 = vmatpush1.msra.mxu0 0.0
  %1581 = vmatprep.subr.mxu0 0.0
  %1582 = vmatpush1.msra.mxu0 0.0
  %1583 = vmatprep.subr.mxu0 0.0
  %1584 = vmatpush1.msra.mxu0 0.0
  %1585 = vmatprep.subr.mxu0 0.0
  %1586 = vmatpush1.msra.mxu0 0.0
  %1587 = vmatprep.subr.mxu0 0.0
  %1588 = vmatpush1.msra.mxu0 0.0
  %1589 = vmatprep.subr.mxu0 0.0
  %1590 = vmatpush1.msra.mxu0 0.0
  %1591 = vmatprep.subr.mxu0 0.0
  %1592 = vmatpush1.msra.mxu0 0.0
  %1593 = vmatprep.subr.mxu0 0.0
  %1594 = vmatpush1.msra.mxu0 0.0
  %1595 = vmatprep.subr.mxu0 0.0
  %1596 = vmatpush1.msra.mxu0 0.0
  %1597 = vmatprep.subr.mxu0 %v746
  %1598 = vmatpush1.msra.mxu0 %v745
  %1599 = vmatprep.subr.mxu0 0.0
  %1600 = vmatpush2.msra.mxu0 0.0
  %1601 = vmatprep.subr.mxu0 0.0
  %1602 = vmatpush2.msra.mxu0 0.0
  %1603 = vmatprep.subr.mxu0 0.0
  %1604 = vmatpush2.msra.mxu0 0.0
  %1605 = vmatprep.subr.mxu0 0.0
  %1606 = vmatpush2.msra.mxu0 0.0
  %1607 = vmatprep.subr.mxu0 0.0
  %1608 = vmatpush2.msra.mxu0 0.0
  %1609 = vmatprep.subr.mxu0 0.0
  %1610 = vmatpush2.msra.mxu0 0.0
  %1611 = vmatprep.subr.mxu0 0.0
  %1612 = vmatpush2.msra.mxu0 0.0
  %1613 = vmatprep.subr.mxu0 0.0
  %1614 = vmatpush2.msra.mxu0 0.0
  %1615 = vmatprep.subr.mxu0 0.0
  %1616 = vmatpush2.msra.mxu0 0.0
  %1617 = vmatprep.subr.mxu0 0.0
  %1618 = vmatpush2.msra.mxu0 0.0
  %1619 = vmatprep.subr.mxu0 0.0
  %1620 = vmatpush2.msra.mxu0 0.0
  %1621 = vmatprep.subr.mxu0 0.0
  %1622 = vmatpush2.msra.mxu0 0.0
  %1623 = vmatprep.subr.mxu0 0.0
  %1624 = vmatpush2.msra.mxu0 0.0
  %1625 = vmatprep.subr.mxu0 0.0
  %1626 = vmatpush2.msra.mxu0 0.0
  %1627 = vmatprep.subr.mxu0 0.0
  %1628 = vmatpush2.msra.mxu0 0.0
  %1629 = vmatprep.subr.mxu0 0.0
  %1630 = vmatpush2.msra.mxu0 0.0
  %1631 = vmatprep.mubr.f32.mxu0 0.0
  %1632 = vmatmul.mubr.f32.gmra.mxu0 %v1494
  %v1633 = vpop.f32.mrf.mxu0
  %v1634 = vadd.f32 %v1063, %v1633
  %v1635 = vpop.f32.mrf.mxu0
  %v1636 = vadd.f32 %v1065, %v1635
  %1637 = vdwg.mxu0
  %1638 = vmatprep.subr.mxu0 0.0
  %1639 = vmatpush1.msra.mxu0 0.0
  %1640 = vmatprep.subr.mxu0 0.0
  %1641 = vmatpush1.msra.mxu0 0.0
  %1642 = vmatprep.subr.mxu0 0.0
  %1643 = vmatpush1.msra.mxu0 0.0
  %1644 = vmatprep.subr.mxu0 0.0
  %1645 = vmatpush1.msra.mxu0 0.0
  %1646 = vmatprep.subr.mxu0 0.0
  %1647 = vmatpush1.msra.mxu0 0.0
  %1648 = vmatprep.subr.mxu0 0.0
  %1649 = vmatpush1.msra.mxu0 0.0
  %1650 = vmatprep.subr.mxu0 0.0
  %1651 = vmatpush1.msra.mxu0 0.0
  %1652 = vmatprep.subr.mxu0 0.0
  %1653 = vmatpush1.msra.mxu0 0.0
  %1654 = vmatprep.subr.mxu0 0.0
  %1655 = vmatpush1.msra.mxu0 0.0
  %1656 = vmatprep.subr.mxu0 0.0
  %1657 = vmatpush1.msra.mxu0 0.0
  %1658 = vmatprep.subr.mxu0 0.0
  %1659 = vmatpush1.msra.mxu0 0.0
  %1660 = vmatprep.subr.mxu0 0.0
  %1661 = vmatpush1.msra.mxu0 0.0
  %1662 = vmatprep.subr.mxu0 0.0
  %1663 = vmatpush1.msra.mxu0 0.0
  %1664 = vmatprep.subr.mxu0 0.0
  %1665 = vmatpush1.msra.mxu0 0.0
  %1666 = vmatprep.subr.mxu0 0.0
  %1667 = vmatpush1.msra.mxu0 0.0
  %1668 = vmatprep.subr.mxu0 %v748
  %1669 = vmatpush1.msra.mxu0 %v747
  %1670 = vmatprep.subr.mxu0 0.0
  %1671 = vmatpush2.msra.mxu0 0.0
  %1672 = vmatprep.subr.mxu0 0.0
  %1673 = vmatpush2.msra.mxu0 0.0
  %1674 = vmatprep.subr.mxu0 0.0
  %1675 = vmatpush2.msra.mxu0 0.0
  %1676 = vmatprep.subr.mxu0 0.0
  %1677 = vmatpush2.msra.mxu0 0.0
  %1678 = vmatprep.subr.mxu0 0.0
  %1679 = vmatpush2.msra.mxu0 0.0
  %1680 = vmatprep.subr.mxu0 0.0
  %1681 = vmatpush2.msra.mxu0 0.0
  %1682 = vmatprep.subr.mxu0 0.0
  %1683 = vmatpush2.msra.mxu0 0.0
  %1684 = vmatprep.subr.mxu0 0.0
  %1685 = vmatpush2.msra.mxu0 0.0
  %1686 = vmatprep.subr.mxu0 0.0
  %1687 = vmatpush2.msra.mxu0 0.0
  %1688 = vmatprep.subr.mxu0 0.0
  %1689 = vmatpush2.msra.mxu0 0.0
  %1690 = vmatprep.subr.mxu0 0.0
  %1691 = vmatpush2.msra.mxu0 0.0
  %1692 = vmatprep.subr.mxu0 0.0
  %1693 = vmatpush2.msra.mxu0 0.0
  %1694 = vmatprep.subr.mxu0 0.0
  %1695 = vmatpush2.msra.mxu0 0.0
  %1696 = vmatprep.subr.mxu0 0.0
  %1697 = vmatpush2.msra.mxu0 0.0
  %1698 = vmatprep.subr.mxu0 0.0
  %1699 = vmatpush2.msra.mxu0 0.0
  %1700 = vmatprep.subr.mxu0 0.0
  %1701 = vmatpush2.msra.mxu0 0.0
  %1702 = vmatprep.mubr.f32.mxu0 0.0
  %1703 = vmatmul.mubr.f32.gmra.mxu0 %v1494
  %v1704 = vpop.f32.mrf.mxu0
  %v1705 = vadd.f32 %v1134, %v1704
  %v1706 = vpop.f32.mrf.mxu0
  %v1707 = vadd.f32 %v1136, %v1706
  %1708 = vdwg.mxu0
  %1709 = vmatprep.subr.mxu0 0.0
  %1710 = vmatpush1.msra.mxu0 0.0
  %1711 = vmatprep.subr.mxu0 0.0
  %1712 = vmatpush1.msra.mxu0 0.0
  %1713 = vmatprep.subr.mxu0 0.0
  %1714 = vmatpush1.msra.mxu0 0.0
  %1715 = vmatprep.subr.mxu0 0.0
  %1716 = vmatpush1.msra.mxu0 0.0
  %1717 = vmatprep.subr.mxu0 0.0
  %1718 = vmatpush1.msra.mxu0 0.0
  %1719 = vmatprep.subr.mxu0 0.0
  %1720 = vmatpush1.msra.mxu0 0.0
  %1721 = vmatprep.subr.mxu0 0.0
  %1722 = vmatpush1.msra.mxu0 0.0
  %1723 = vmatprep.subr.mxu0 0.0
  %1724 = vmatpush1.msra.mxu0 0.0
  %1725 = vmatprep.subr.mxu0 0.0
  %1726 = vmatpush1.msra.mxu0 0.0
  %1727 = vmatprep.subr.mxu0 0.0
  %1728 = vmatpush1.msra.mxu0 0.0
  %1729 = vmatprep.subr.mxu0 0.0
  %1730 = vmatpush1.msra.mxu0 0.0
  %1731 = vmatprep.subr.mxu0 0.0
  %1732 = vmatpush1.msra.mxu0 0.0
  %1733 = vmatprep.subr.mxu0 0.0
  %1734 = vmatpush1.msra.mxu0 0.0
  %1735 = vmatprep.subr.mxu0 0.0
  %1736 = vmatpush1.msra.mxu0 0.0
  %1737 = vmatprep.subr.mxu0 0.0
  %1738 = vmatpush1.msra.mxu0 0.0
  %1739 = vmatprep.subr.mxu0 %v750
  %1740 = vmatpush1.msra.mxu0 %v749
  %1741 = vmatprep.subr.mxu0 0.0
  %1742 = vmatpush2.msra.mxu0 0.0
  %1743 = vmatprep.subr.mxu0 0.0
  %1744 = vmatpush2.msra.mxu0 0.0
  %1745 = vmatprep.subr.mxu0 0.0
  %1746 = vmatpush2.msra.mxu0 0.0
  %1747 = vmatprep.subr.mxu0 0.0
  %1748 = vmatpush2.msra.mxu0 0.0
  %1749 = vmatprep.subr.mxu0 0.0
  %1750 = vmatpush2.msra.mxu0 0.0
  %1751 = vmatprep.subr.mxu0 0.0
  %1752 = vmatpush2.msra.mxu0 0.0
  %1753 = vmatprep.subr.mxu0 0.0
  %1754 = vmatpush2.msra.mxu0 0.0
  %1755 = vmatprep.subr.mxu0 0.0
  %1756 = vmatpush2.msra.mxu0 0.0
  %1757 = vmatprep.subr.mxu0 0.0
  %1758 = vmatpush2.msra.mxu0 0.0
  %1759 = vmatprep.subr.mxu0 0.0
  %1760 = vmatpush2.msra.mxu0 0.0
  %1761 = vmatprep.subr.mxu0 0.0
  %1762 = vmatpush2.msra.mxu0 0.0
  %1763 = vmatprep.subr.mxu0 0.0
  %1764 = vmatpush2.msra.mxu0 0.0
  %1765 = vmatprep.subr.mxu0 0.0
  %1766 = vmatpush2.msra.mxu0 0.0
  %1767 = vmatprep.subr.mxu0 0.0
  %1768 = vmatpush2.msra.mxu0 0.0
  %1769 = vmatprep.subr.mxu0 0.0
  %1770 = vmatpush2.msra.mxu0 0.0
  %1771 = vmatprep.subr.mxu0 0.0
  %1772 = vmatpush2.msra.mxu0 0.0
  %1773 = vmatprep.mubr.f32.mxu0 0.0
  %1774 = vmatmul.mubr.f32.gmra.mxu0 %v1494
  %v1775 = vpop.f32.mrf.mxu0
  %v1776 = vadd.f32 %v1205, %v1775
  %v1777 = vpop.f32.mrf.mxu0
  %v1778 = vadd.f32 %v1207, %v1777
  %1779 = vdwg.mxu0
  %1780 = vmatprep.subr.mxu0 0.0
  %1781 = vmatpush1.msra.mxu0 0.0
  %1782 = vmatprep.subr.mxu0 0.0
  %1783 = vmatpush1.msra.mxu0 0.0
  %1784 = vmatprep.subr.mxu0 0.0
  %1785 = vmatpush1.msra.mxu0 0.0
  %1786 = vmatprep.subr.mxu0 0.0
  %1787 = vmatpush1.msra.mxu0 0.0
  %1788 = vmatprep.subr.mxu0 0.0
  %1789 = vmatpush1.msra.mxu0 0.0
  %1790 = vmatprep.subr.mxu0 0.0
  %1791 = vmatpush1.msra.mxu0 0.0
  %1792 = vmatprep.subr.mxu0 0.0
  %1793 = vmatpush1.msra.mxu0 0.0
  %1794 = vmatprep.subr.mxu0 0.0
  %1795 = vmatpush1.msra.mxu0 0.0
  %1796 = vmatprep.subr.mxu0 0.0
  %1797 = vmatpush1.msra.mxu0 0.0
  %1798 = vmatprep.subr.mxu0 0.0
  %1799 = vmatpush1.msra.mxu0 0.0
  %1800 = vmatprep.subr.mxu0 0.0
  %1801 = vmatpush1.msra.mxu0 0.0
  %1802 = vmatprep.subr.mxu0 0.0
  %1803 = vmatpush1.msra.mxu0 0.0
  %1804 = vmatprep.subr.mxu0 0.0
  %1805 = vmatpush1.msra.mxu0 0.0
  %1806 = vmatprep.subr.mxu0 0.0
  %1807 = vmatpush1.msra.mxu0 0.0
  %1808 = vmatprep.subr.mxu0 0.0
  %1809 = vmatpush1.msra.mxu0 0.0
  %1810 = vmatprep.subr.mxu0 %v752
  %1811 = vmatpush1.msra.mxu0 %v751
  %1812 = vmatprep.subr.mxu0 0.0
  %1813 = vmatpush2.msra.mxu0 0.0
  %1814 = vmatprep.subr.mxu0 0.0
  %1815 = vmatpush2.msra.mxu0 0.0
  %1816 = vmatprep.subr.mxu0 0.0
  %1817 = vmatpush2.msra.mxu0 0.0
  %1818 = vmatprep.subr.mxu0 0.0
  %1819 = vmatpush2.msra.mxu0 0.0
  %1820 = vmatprep.subr.mxu0 0.0
  %1821 = vmatpush2.msra.mxu0 0.0
  %1822 = vmatprep.subr.mxu0 0.0
  %1823 = vmatpush2.msra.mxu0 0.0
  %1824 = vmatprep.subr.mxu0 0.0
  %1825 = vmatpush2.msra.mxu0 0.0
  %1826 = vmatprep.subr.mxu0 0.0
  %1827 = vmatpush2.msra.mxu0 0.0
  %1828 = vmatprep.subr.mxu0 0.0
  %1829 = vmatpush2.msra.mxu0 0.0
  %1830 = vmatprep.subr.mxu0 0.0
  %1831 = vmatpush2.msra.mxu0 0.0
  %1832 = vmatprep.subr.mxu0 0.0
  %1833 = vmatpush2.msra.mxu0 0.0
  %1834 = vmatprep.subr.mxu0 0.0
  %1835 = vmatpush2.msra.mxu0 0.0
  %1836 = vmatprep.subr.mxu0 0.0
  %1837 = vmatpush2.msra.mxu0 0.0
  %1838 = vmatprep.subr.mxu0 0.0
  %1839 = vmatpush2.msra.mxu0 0.0
  %1840 = vmatprep.subr.mxu0 0.0
  %1841 = vmatpush2.msra.mxu0 0.0
  %1842 = vmatprep.subr.mxu0 0.0
  %1843 = vmatpush2.msra.mxu0 0.0
  %1844 = vmatprep.mubr.f32.mxu0 0.0
  %1845 = vmatmul.mubr.f32.gmra.mxu0 %v1494
  %v1846 = vpop.f32.mrf.mxu0
  %v1847 = vadd.f32 %v1276, %v1846
  %v1848 = vpop.f32.mrf.mxu0
  %v1849 = vadd.f32 %v1278, %v1848
  %1850 = vdwg.mxu0
  %1851 = vmatprep.subr.mxu0 0.0
  %1852 = vmatpush1.msra.mxu0 0.0
  %1853 = vmatprep.subr.mxu0 0.0
  %1854 = vmatpush1.msra.mxu0 0.0
  %1855 = vmatprep.subr.mxu0 0.0
  %1856 = vmatpush1.msra.mxu0 0.0
  %1857 = vmatprep.subr.mxu0 0.0
  %1858 = vmatpush1.msra.mxu0 0.0
  %1859 = vmatprep.subr.mxu0 0.0
  %1860 = vmatpush1.msra.mxu0 0.0
  %1861 = vmatprep.subr.mxu0 0.0
  %1862 = vmatpush1.msra.mxu0 0.0
  %1863 = vmatprep.subr.mxu0 0.0
  %1864 = vmatpush1.msra.mxu0 0.0
  %1865 = vmatprep.subr.mxu0 0.0
  %1866 = vmatpush1.msra.mxu0 0.0
  %1867 = vmatprep.subr.mxu0 0.0
  %1868 = vmatpush1.msra.mxu0 0.0
  %1869 = vmatprep.subr.mxu0 0.0
  %1870 = vmatpush1.msra.mxu0 0.0
  %1871 = vmatprep.subr.mxu0 0.0
  %1872 = vmatpush1.msra.mxu0 0.0
  %1873 = vmatprep.subr.mxu0 0.0
  %1874 = vmatpush1.msra.mxu0 0.0
  %1875 = vmatprep.subr.mxu0 0.0
  %1876 = vmatpush1.msra.mxu0 0.0
  %1877 = vmatprep.subr.mxu0 0.0
  %1878 = vmatpush1.msra.mxu0 0.0
  %1879 = vmatprep.subr.mxu0 0.0
  %1880 = vmatpush1.msra.mxu0 0.0
  %1881 = vmatprep.subr.mxu0 %v754
  %1882 = vmatpush1.msra.mxu0 %v753
  %1883 = vmatprep.subr.mxu0 0.0
  %1884 = vmatpush2.msra.mxu0 0.0
  %1885 = vmatprep.subr.mxu0 0.0
  %1886 = vmatpush2.msra.mxu0 0.0
  %1887 = vmatprep.subr.mxu0 0.0
  %1888 = vmatpush2.msra.mxu0 0.0
  %1889 = vmatprep.subr.mxu0 0.0
  %1890 = vmatpush2.msra.mxu0 0.0
  %1891 = vmatprep.subr.mxu0 0.0
  %1892 = vmatpush2.msra.mxu0 0.0
  %1893 = vmatprep.subr.mxu0 0.0
  %1894 = vmatpush2.msra.mxu0 0.0
  %1895 = vmatprep.subr.mxu0 0.0
  %1896 = vmatpush2.msra.mxu0 0.0
  %1897 = vmatprep.subr.mxu0 0.0
  %1898 = vmatpush2.msra.mxu0 0.0
  %1899 = vmatprep.subr.mxu0 0.0
  %1900 = vmatpush2.msra.mxu0 0.0
  %1901 = vmatprep.subr.mxu0 0.0
  %1902 = vmatpush2.msra.mxu0 0.0
  %1903 = vmatprep.subr.mxu0 0.0
  %1904 = vmatpush2.msra.mxu0 0.0
  %1905 = vmatprep.subr.mxu0 0.0
  %1906 = vmatpush2.msra.mxu0 0.0
  %1907 = vmatprep.subr.mxu0 0.0
  %1908 = vmatpush2.msra.mxu0 0.0
  %1909 = vmatprep.subr.mxu0 0.0
  %1910 = vmatpush2.msra.mxu0 0.0
  %1911 = vmatprep.subr.mxu0 0.0
  %1912 = vmatpush2.msra.mxu0 0.0
  %1913 = vmatprep.subr.mxu0 0.0
  %1914 = vmatpush2.msra.mxu0 0.0
  %1915 = vmatprep.mubr.f32.mxu0 0.0
  %1916 = vmatmul.mubr.f32.gmra.mxu0 %v1494
  %v1917 = vpop.f32.mrf.mxu0
  %v1918 = vadd.f32 %v1347, %v1917
  %v1919 = vpop.f32.mrf.mxu0
  %v1920 = vadd.f32 %v1349, %v1919
  %1921 = vdwg.mxu0
  %1922 = vmatprep.subr.mxu0 0.0
  %1923 = vmatpush1.msra.mxu0 0.0
  %1924 = vmatprep.subr.mxu0 0.0
  %1925 = vmatpush1.msra.mxu0 0.0
  %1926 = vmatprep.subr.mxu0 0.0
  %1927 = vmatpush1.msra.mxu0 0.0
  %1928 = vmatprep.subr.mxu0 0.0
  %1929 = vmatpush1.msra.mxu0 0.0
  %1930 = vmatprep.subr.mxu0 0.0
  %1931 = vmatpush1.msra.mxu0 0.0
  %1932 = vmatprep.subr.mxu0 0.0
  %1933 = vmatpush1.msra.mxu0 0.0
  %1934 = vmatprep.subr.mxu0 0.0
  %1935 = vmatpush1.msra.mxu0 0.0
  %1936 = vmatprep.subr.mxu0 0.0
  %1937 = vmatpush1.msra.mxu0 0.0
  %1938 = vmatprep.subr.mxu0 0.0
  %1939 = vmatpush1.msra.mxu0 0.0
  %1940 = vmatprep.subr.mxu0 0.0
  %1941 = vmatpush1.msra.mxu0 0.0
  %1942 = vmatprep.subr.mxu0 0.0
  %1943 = vmatpush1.msra.mxu0 0.0
  %1944 = vmatprep.subr.mxu0 0.0
  %1945 = vmatpush1.msra.mxu0 0.0
  %1946 = vmatprep.subr.mxu0 0.0
  %1947 = vmatpush1.msra.mxu0 0.0
  %1948 = vmatprep.subr.mxu0 0.0
  %1949 = vmatpush1.msra.mxu0 0.0
  %1950 = vmatprep.subr.mxu0 0.0
  %1951 = vmatpush1.msra.mxu0 0.0
  %1952 = vmatprep.subr.mxu0 %v756
  %1953 = vmatpush1.msra.mxu0 %v755
  %1954 = vmatprep.subr.mxu0 0.0
  %1955 = vmatpush2.msra.mxu0 0.0
  %1956 = vmatprep.subr.mxu0 0.0
  %1957 = vmatpush2.msra.mxu0 0.0
  %1958 = vmatprep.subr.mxu0 0.0
  %1959 = vmatpush2.msra.mxu0 0.0
  %1960 = vmatprep.subr.mxu0 0.0
  %1961 = vmatpush2.msra.mxu0 0.0
  %1962 = vmatprep.subr.mxu0 0.0
  %1963 = vmatpush2.msra.mxu0 0.0
  %1964 = vmatprep.subr.mxu0 0.0
  %1965 = vmatpush2.msra.mxu0 0.0
  %1966 = vmatprep.subr.mxu0 0.0
  %1967 = vmatpush2.msra.mxu0 0.0
  %1968 = vmatprep.subr.mxu0 0.0
  %1969 = vmatpush2.msra.mxu0 0.0
  %1970 = vmatprep.subr.mxu0 0.0
  %1971 = vmatpush2.msra.mxu0 0.0
  %1972 = vmatprep.subr.mxu0 0.0
  %1973 = vmatpush2.msra.mxu0 0.0
  %1974 = vmatprep.subr.mxu0 0.0
  %1975 = vmatpush2.msra.mxu0 0.0
  %1976 = vmatprep.subr.mxu0 0.0
  %1977 = vmatpush2.msra.mxu0 0.0
  %1978 = vmatprep.subr.mxu0 0.0
  %1979 = vmatpush2.msra.mxu0 0.0
  %1980 = vmatprep.subr.mxu0 0.0
  %1981 = vmatpush2.msra.mxu0 0.0
  %1982 = vmatprep.subr.mxu0 0.0
  %1983 = vmatpush2.msra.mxu0 0.0
  %1984 = vmatprep.subr.mxu0 0.0
  %1985 = vmatpush2.msra.mxu0 0.0
  %1986 = vmatprep.mubr.f32.mxu0 0.0
  %1987 = vmatmul.mubr.f32.gmra.mxu0 %v1494
  %v1988 = vpop.f32.mrf.mxu0
  %v1989 = vadd.f32 %v1418, %v1988
  %v1990 = vpop.f32.mrf.mxu0
  %v1991 = vadd.f32 %v1420, %v1990
  %1992 = vdwg.mxu0
  %1993 = vmatprep.subr.mxu0 0.0
  %1994 = vmatpush1.msra.mxu0 0.0
  %1995 = vmatprep.subr.mxu0 0.0
  %1996 = vmatpush1.msra.mxu0 0.0
  %1997 = vmatprep.subr.mxu0 0.0
  %1998 = vmatpush1.msra.mxu0 0.0
  %1999 = vmatprep.subr.mxu0 0.0
  %2000 = vmatpush1.msra.mxu0 0.0
  %2001 = vmatprep.subr.mxu0 0.0
  %2002 = vmatpush1.msra.mxu0 0.0
  %2003 = vmatprep.subr.mxu0 0.0
  %2004 = vmatpush1.msra.mxu0 0.0
  %2005 = vmatprep.subr.mxu0 0.0
  %2006 = vmatpush1.msra.mxu0 0.0
  %2007 = vmatprep.subr.mxu0 0.0
  %2008 = vmatpush1.msra.mxu0 0.0
  %2009 = vmatprep.subr.mxu0 0.0
  %2010 = vmatpush1.msra.mxu0 0.0
  %2011 = vmatprep.subr.mxu0 0.0
  %2012 = vmatpush1.msra.mxu0 0.0
  %2013 = vmatprep.subr.mxu0 0.0
  %2014 = vmatpush1.msra.mxu0 0.0
  %2015 = vmatprep.subr.mxu0 0.0
  %2016 = vmatpush1.msra.mxu0 0.0
  %2017 = vmatprep.subr.mxu0 0.0
  %2018 = vmatpush1.msra.mxu0 0.0
  %2019 = vmatprep.subr.mxu0 0.0
  %2020 = vmatpush1.msra.mxu0 0.0
  %2021 = vmatprep.subr.mxu0 0.0
  %2022 = vmatpush1.msra.mxu0 0.0
  %2023 = vmatprep.subr.mxu0 %v758
  %2024 = vmatpush1.msra.mxu0 %v757
  %2025 = vmatprep.subr.mxu0 0.0
  %2026 = vmatpush2.msra.mxu0 0.0
  %2027 = vmatprep.subr.mxu0 0.0
  %2028 = vmatpush2.msra.mxu0 0.0
  %2029 = vmatprep.subr.mxu0 0.0
  %2030 = vmatpush2.msra.mxu0 0.0
  %2031 = vmatprep.subr.mxu0 0.0
  %2032 = vmatpush2.msra.mxu0 0.0
  %2033 = vmatprep.subr.mxu0 0.0
  %2034 = vmatpush2.msra.mxu0 0.0
  %2035 = vmatprep.subr.mxu0 0.0
  %2036 = vmatpush2.msra.mxu0 0.0
  %2037 = vmatprep.subr.mxu0 0.0
  %2038 = vmatpush2.msra.mxu0 0.0
  %2039 = vmatprep.subr.mxu0 0.0
  %2040 = vmatpush2.msra.mxu0 0.0
  %2041 = vmatprep.subr.mxu0 0.0
  %2042 = vmatpush2.msra.mxu0 0.0
  %2043 = vmatprep.subr.mxu0 0.0
  %2044 = vmatpush2.msra.mxu0 0.0
  %2045 = vmatprep.subr.mxu0 0.0
  %2046 = vmatpush2.msra.mxu0 0.0
  %2047 = vmatprep.subr.mxu0 0.0
  %2048 = vmatpush2.msra.mxu0 0.0
  %2049 = vmatprep.subr.mxu0 0.0
  %2050 = vmatpush2.msra.mxu0 0.0
  %2051 = vmatprep.subr.mxu0 0.0
  %2052 = vmatpush2.msra.mxu0 0.0
  %2053 = vmatprep.subr.mxu0 0.0
  %2054 = vmatpush2.msra.mxu0 0.0
  %2055 = vmatprep.subr.mxu0 0.0
  %2056 = vmatpush2.msra.mxu0 0.0
  %2057 = vmatprep.mubr.f32.mxu0 0.0
  %2058 = vmatmul.mubr.f32.gmra.mxu0 %v1494
  %v2059 = vpop.f32.mrf.mxu0
  %v2060 = vadd.f32 %v1489, %v2059
  %v2061 = vpop.f32.mrf.mxu0
  %v2062 = vadd.f32 %v1491, %v2061
  %2063 = vdwg.mxu0
  %2064 = vrot.lane.b32.xlu0 %v743, 2
  %v2065 = vpop.permute.xlu0 %2064
  %2066 = vrot.lane.b32.xlu0 %v744, 2
  %v2067 = vpop.permute.xlu0 %2066
  %2068 = vrot.lane.b32.xlu0 %v745, 2
  %v2069 = vpop.permute.xlu0 %2068
  %2070 = vrot.lane.b32.xlu0 %v746, 2
  %v2071 = vpop.permute.xlu0 %2070
  %2072 = vrot.lane.b32.xlu0 %v747, 2
  %v2073 = vpop.permute.xlu0 %2072
  %2074 = vrot.lane.b32.xlu0 %v748, 2
  %v2075 = vpop.permute.xlu0 %2074
  %2076 = vrot.lane.b32.xlu0 %v749, 2
  %v2077 = vpop.permute.xlu0 %2076
  %2078 = vrot.lane.b32.xlu0 %v750, 2
  %v2079 = vpop.permute.xlu0 %2078
  %2080 = vrot.lane.b32.xlu0 %v751, 2
  %v2081 = vpop.permute.xlu0 %2080
  %2082 = vrot.lane.b32.xlu0 %v752, 2
  %v2083 = vpop.permute.xlu0 %2082
  %2084 = vrot.lane.b32.xlu0 %v753, 2
  %v2085 = vpop.permute.xlu0 %2084
  %2086 = vrot.lane.b32.xlu0 %v754, 2
  %v2087 = vpop.permute.xlu0 %2086
  %2088 = vrot.lane.b32.xlu0 %v755, 2
  %v2089 = vpop.permute.xlu0 %2088
  %2090 = vrot.lane.b32.xlu0 %v756, 2
  %v2091 = vpop.permute.xlu0 %2090
  %2092 = vrot.lane.b32.xlu0 %v757, 2
  %v2093 = vpop.permute.xlu0 %2092
  %2094 = vrot.lane.b32.xlu0 %v758, 2
  %v2095 = vpop.permute.xlu0 %2094
  %vm2096 = vcmp.lt.s32.totalorder %v796, 2
  %v2097 = vsel %vm2096, %v2093, %v2095
  %v2098 = vsel %vm2096, %v2091, %v2093
  %v2099 = vsel %vm2096, %v2089, %v2091
  %v2100 = vsel %vm2096, %v2087, %v2089
  %v2101 = vsel %vm2096, %v2085, %v2087
  %v2102 = vsel %vm2096, %v2083, %v2085
  %v2103 = vsel %vm2096, %v2081, %v2083
  %v2104 = vsel %vm2096, %v2079, %v2081
  %v2105 = vsel %vm2096, %v2077, %v2079
  %v2106 = vsel %vm2096, %v2075, %v2077
  %v2107 = vsel %vm2096, %v2073, %v2075
  %v2108 = vsel %vm2096, %v2071, %v2073
  %v2109 = vsel %vm2096, %v2069, %v2071
  %v2110 = vsel %vm2096, %v2067, %v2069
  %v2111 = vsel %vm2096, %v2065, %v2067
  %v2112 = vsel %vm2096, %v2095, %v2065
  %v2113 = vadd.s32 %v759, 4294967294
  %v2114 = vadd.s32 %v760, 4294967294
  %vm2115 = vcmp.ge.s32.totalorder %v2113, 0
  %vm2116 = vcmp.ge.s32.totalorder %v2114, 0
  %vm2117 = vcmp.lt.s32.totalorder %v2113, 256
  %vm2118 = vcmp.lt.s32.totalorder %v2114, 256
  %vm2119 = vmand %vm2115, %vm2117
  %vm2120 = vmand %vm2116, %vm2118
  %v2121 = vsel %vm2119, 1, 0
  %v2122 = vsel %vm2120, 1, 0
  %v2123 = vlaneseq
  %v2124 = vshrl.u32 %v2123, 7
  %v2125 = vsub.s32 0, %v2124
  %v2126 = vrot.slane %v2121, %v2125
  %v2127 = vlaneseq
  %v2128 = vshrl.u32 %v2127, 7
  %v2129 = vsub.s32 1, %v2128
  %v2130 = vrot.slane %v2121, %v2129
  %v2131 = vlaneseq
  %v2132 = vshrl.u32 %v2131, 7
  %v2133 = vsub.s32 2, %v2132
  %v2134 = vrot.slane %v2121, %v2133
  %v2135 = vlaneseq
  %v2136 = vshrl.u32 %v2135, 7
  %v2137 = vsub.s32 3, %v2136
  %v2138 = vrot.slane %v2121, %v2137
  %v2139 = vlaneseq
  %v2140 = vshrl.u32 %v2139, 7
  %v2141 = vsub.s32 4, %v2140
  %v2142 = vrot.slane %v2121, %v2141
  %v2143 = vlaneseq
  %v2144 = vshrl.u32 %v2143, 7
  %v2145 = vsub.s32 5, %v2144
  %v2146 = vrot.slane %v2121, %v2145
  %v2147 = vlaneseq
  %v2148 = vshrl.u32 %v2147, 7
  %v2149 = vsub.s32 6, %v2148
  %v2150 = vrot.slane %v2121, %v2149
  %v2151 = vlaneseq
  %v2152 = vshrl.u32 %v2151, 7
  %v2153 = vsub.s32 7, %v2152
  %v2154 = vrot.slane %v2121, %v2153
  %v2155 = vlaneseq
  %v2156 = vshrl.u32 %v2155, 7
  %v2157 = vsub.s32 0, %v2156
  %v2158 = vrot.slane %v2122, %v2157
  %v2159 = vlaneseq
  %v2160 = vshrl.u32 %v2159, 7
  %v2161 = vsub.s32 1, %v2160
  %v2162 = vrot.slane %v2122, %v2161
  %v2163 = vlaneseq
  %v2164 = vshrl.u32 %v2163, 7
  %v2165 = vsub.s32 2, %v2164
  %v2166 = vrot.slane %v2122, %v2165
  %v2167 = vlaneseq
  %v2168 = vshrl.u32 %v2167, 7
  %v2169 = vsub.s32 3, %v2168
  %v2170 = vrot.slane %v2122, %v2169
  %v2171 = vlaneseq
  %v2172 = vshrl.u32 %v2171, 7
  %v2173 = vsub.s32 4, %v2172
  %v2174 = vrot.slane %v2122, %v2173
  %v2175 = vlaneseq
  %v2176 = vshrl.u32 %v2175, 7
  %v2177 = vsub.s32 5, %v2176
  %v2178 = vrot.slane %v2122, %v2177
  %v2179 = vlaneseq
  %v2180 = vshrl.u32 %v2179, 7
  %v2181 = vsub.s32 6, %v2180
  %v2182 = vrot.slane %v2122, %v2181
  %v2183 = vlaneseq
  %v2184 = vshrl.u32 %v2183, 7
  %v2185 = vsub.s32 7, %v2184
  %v2186 = vrot.slane %v2122, %v2185
  %vm2187 = vcmp.eq.s32.totalorder %v2126, 1
  %vm2188 = vcmp.eq.s32.totalorder %v2130, 1
  %vm2189 = vcmp.eq.s32.totalorder %v2134, 1
  %vm2190 = vcmp.eq.s32.totalorder %v2138, 1
  %vm2191 = vcmp.eq.s32.totalorder %v2142, 1
  %vm2192 = vcmp.eq.s32.totalorder %v2146, 1
  %vm2193 = vcmp.eq.s32.totalorder %v2150, 1
  %vm2194 = vcmp.eq.s32.totalorder %v2154, 1
  %vm2195 = vcmp.eq.s32.totalorder %v2158, 1
  %vm2196 = vcmp.eq.s32.totalorder %v2162, 1
  %vm2197 = vcmp.eq.s32.totalorder %v2166, 1
  %vm2198 = vcmp.eq.s32.totalorder %v2170, 1
  %vm2199 = vcmp.eq.s32.totalorder %v2174, 1
  %vm2200 = vcmp.eq.s32.totalorder %v2178, 1
  %vm2201 = vcmp.eq.s32.totalorder %v2182, 1
  %vm2202 = vcmp.eq.s32.totalorder %v2186, 1
  %v2203 = vsel %vm2187, %v2112, 0.0
  %v2204 = vsel %vm2188, %v2111, 0.0
  %v2205 = vsel %vm2189, %v2110, 0.0
  %v2206 = vsel %vm2190, %v2109, 0.0
  %v2207 = vsel %vm2191, %v2108, 0.0
  %v2208 = vsel %vm2192, %v2107, 0.0
  %v2209 = vsel %vm2193, %v2106, 0.0
  %v2210 = vsel %vm2194, %v2105, 0.0
  %v2211 = vsel %vm2195, %v2104, 0.0
  %v2212 = vsel %vm2196, %v2103, 0.0
  %v2213 = vsel %vm2197, %v2102, 0.0
  %v2214 = vsel %vm2198, %v2101, 0.0
  %v2215 = vsel %vm2199, %v2100, 0.0
  %v2216 = vsel %vm2200, %v2099, 0.0
  %v2217 = vsel %vm2201, %v2098, 0.0
  %v2218 = vsel %vm2202, %v2097, 0.0
  %s2219 = scalar_lea.vmem %s5, 8
  %v2220 = vld [vmem:[%s2219] sm:$0xff]
  %v2222 = vsel %vm921, %v2220, 0
  %2224 = vmatprep.subr.mxu0 0.0
  %2225 = vmatpush1.msra.mxu0 0.0
  %2226 = vmatprep.subr.mxu0 0.0
  %2227 = vmatpush1.msra.mxu0 0.0
  %2228 = vmatprep.subr.mxu0 0.0
  %2229 = vmatpush1.msra.mxu0 0.0
  %2230 = vmatprep.subr.mxu0 0.0
  %2231 = vmatpush1.msra.mxu0 0.0
  %2232 = vmatprep.subr.mxu0 0.0
  %2233 = vmatpush1.msra.mxu0 0.0
  %2234 = vmatprep.subr.mxu0 0.0
  %2235 = vmatpush1.msra.mxu0 0.0
  %2236 = vmatprep.subr.mxu0 0.0
  %2237 = vmatpush1.msra.mxu0 0.0
  %2238 = vmatprep.subr.mxu0 0.0
  %2239 = vmatpush1.msra.mxu0 0.0
  %2240 = vmatprep.subr.mxu0 0.0
  %2241 = vmatpush1.msra.mxu0 0.0
  %2242 = vmatprep.subr.mxu0 0.0
  %2243 = vmatpush1.msra.mxu0 0.0
  %2244 = vmatprep.subr.mxu0 0.0
  %2245 = vmatpush1.msra.mxu0 0.0
  %2246 = vmatprep.subr.mxu0 0.0
  %2247 = vmatpush1.msra.mxu0 0.0
  %2248 = vmatprep.subr.mxu0 0.0
  %2249 = vmatpush1.msra.mxu0 0.0
  %2250 = vmatprep.subr.mxu0 0.0
  %2251 = vmatpush1.msra.mxu0 0.0
  %2252 = vmatprep.subr.mxu0 0.0
  %2253 = vmatpush1.msra.mxu0 0.0
  %2254 = vmatprep.subr.mxu0 %v2204
  %2255 = vmatpush1.msra.mxu0 %v2203
  %2256 = vmatprep.subr.mxu0 0.0
  %2257 = vmatpush2.msra.mxu0 0.0
  %2258 = vmatprep.subr.mxu0 0.0
  %2259 = vmatpush2.msra.mxu0 0.0
  %2260 = vmatprep.subr.mxu0 0.0
  %2261 = vmatpush2.msra.mxu0 0.0
  %2262 = vmatprep.subr.mxu0 0.0
  %2263 = vmatpush2.msra.mxu0 0.0
  %2264 = vmatprep.subr.mxu0 0.0
  %2265 = vmatpush2.msra.mxu0 0.0
  %2266 = vmatprep.subr.mxu0 0.0
  %2267 = vmatpush2.msra.mxu0 0.0
  %2268 = vmatprep.subr.mxu0 0.0
  %2269 = vmatpush2.msra.mxu0 0.0
  %2270 = vmatprep.subr.mxu0 0.0
  %2271 = vmatpush2.msra.mxu0 0.0
  %2272 = vmatprep.subr.mxu0 0.0
  %2273 = vmatpush2.msra.mxu0 0.0
  %2274 = vmatprep.subr.mxu0 0.0
  %2275 = vmatpush2.msra.mxu0 0.0
  %2276 = vmatprep.subr.mxu0 0.0
  %2277 = vmatpush2.msra.mxu0 0.0
  %2278 = vmatprep.subr.mxu0 0.0
  %2279 = vmatpush2.msra.mxu0 0.0
  %2280 = vmatprep.subr.mxu0 0.0
  %2281 = vmatpush2.msra.mxu0 0.0
  %2282 = vmatprep.subr.mxu0 0.0
  %2283 = vmatpush2.msra.mxu0 0.0
  %2284 = vmatprep.subr.mxu0 0.0
  %2285 = vmatpush2.msra.mxu0 0.0
  %2286 = vmatprep.subr.mxu0 0.0
  %2287 = vmatpush2.msra.mxu0 0.0
  %2288 = vmatprep.mubr.f32.mxu0 0.0
  %2289 = vmatmul.mubr.f32.gmra.mxu0 %v2222
  %v2290 = vpop.f32.mrf.mxu0
  %v2291 = vadd.f32 0.0, %v2290
  %v2292 = vpop.f32.mrf.mxu0
  %v2293 = vadd.f32 0.0, %v2292
  %2294 = vdwg.mxu0
  %2295 = vmatprep.subr.mxu0 0.0
  %2296 = vmatpush1.msra.mxu0 0.0
  %2297 = vmatprep.subr.mxu0 0.0
  %2298 = vmatpush1.msra.mxu0 0.0
  %2299 = vmatprep.subr.mxu0 0.0
  %2300 = vmatpush1.msra.mxu0 0.0
  %2301 = vmatprep.subr.mxu0 0.0
  %2302 = vmatpush1.msra.mxu0 0.0
  %2303 = vmatprep.subr.mxu0 0.0
  %2304 = vmatpush1.msra.mxu0 0.0
  %2305 = vmatprep.subr.mxu0 0.0
  %2306 = vmatpush1.msra.mxu0 0.0
  %2307 = vmatprep.subr.mxu0 0.0
  %2308 = vmatpush1.msra.mxu0 0.0
  %2309 = vmatprep.subr.mxu0 0.0
  %2310 = vmatpush1.msra.mxu0 0.0
  %2311 = vmatprep.subr.mxu0 0.0
  %2312 = vmatpush1.msra.mxu0 0.0
  %2313 = vmatprep.subr.mxu0 0.0
  %2314 = vmatpush1.msra.mxu0 0.0
  %2315 = vmatprep.subr.mxu0 0.0
  %2316 = vmatpush1.msra.mxu0 0.0
  %2317 = vmatprep.subr.mxu0 0.0
  %2318 = vmatpush1.msra.mxu0 0.0
  %2319 = vmatprep.subr.mxu0 0.0
  %2320 = vmatpush1.msra.mxu0 0.0
  %2321 = vmatprep.subr.mxu0 0.0
  %2322 = vmatpush1.msra.mxu0 0.0
  %2323 = vmatprep.subr.mxu0 0.0
  %2324 = vmatpush1.msra.mxu0 0.0
  %2325 = vmatprep.subr.mxu0 %v2206
  %2326 = vmatpush1.msra.mxu0 %v2205
  %2327 = vmatprep.subr.mxu0 0.0
  %2328 = vmatpush2.msra.mxu0 0.0
  %2329 = vmatprep.subr.mxu0 0.0
  %2330 = vmatpush2.msra.mxu0 0.0
  %2331 = vmatprep.subr.mxu0 0.0
  %2332 = vmatpush2.msra.mxu0 0.0
  %2333 = vmatprep.subr.mxu0 0.0
  %2334 = vmatpush2.msra.mxu0 0.0
  %2335 = vmatprep.subr.mxu0 0.0
  %2336 = vmatpush2.msra.mxu0 0.0
  %2337 = vmatprep.subr.mxu0 0.0
  %2338 = vmatpush2.msra.mxu0 0.0
  %2339 = vmatprep.subr.mxu0 0.0
  %2340 = vmatpush2.msra.mxu0 0.0
  %2341 = vmatprep.subr.mxu0 0.0
  %2342 = vmatpush2.msra.mxu0 0.0
  %2343 = vmatprep.subr.mxu0 0.0
  %2344 = vmatpush2.msra.mxu0 0.0
  %2345 = vmatprep.subr.mxu0 0.0
  %2346 = vmatpush2.msra.mxu0 0.0
  %2347 = vmatprep.subr.mxu0 0.0
  %2348 = vmatpush2.msra.mxu0 0.0
  %2349 = vmatprep.subr.mxu0 0.0
  %2350 = vmatpush2.msra.mxu0 0.0
  %2351 = vmatprep.subr.mxu0 0.0
  %2352 = vmatpush2.msra.mxu0 0.0
  %2353 = vmatprep.subr.mxu0 0.0
  %2354 = vmatpush2.msra.mxu0 0.0
  %2355 = vmatprep.subr.mxu0 0.0
  %2356 = vmatpush2.msra.mxu0 0.0
  %2357 = vmatprep.subr.mxu0 0.0
  %2358 = vmatpush2.msra.mxu0 0.0
  %2359 = vmatprep.mubr.f32.mxu0 0.0
  %2360 = vmatmul.mubr.f32.gmra.mxu0 %v2222
  %v2361 = vpop.f32.mrf.mxu0
  %v2362 = vadd.f32 0.0, %v2361
  %v2363 = vpop.f32.mrf.mxu0
  %v2364 = vadd.f32 0.0, %v2363
  %2365 = vdwg.mxu0
  %2366 = vmatprep.subr.mxu0 0.0
  %2367 = vmatpush1.msra.mxu0 0.0
  %2368 = vmatprep.subr.mxu0 0.0
  %2369 = vmatpush1.msra.mxu0 0.0
  %2370 = vmatprep.subr.mxu0 0.0
  %2371 = vmatpush1.msra.mxu0 0.0
  %2372 = vmatprep.subr.mxu0 0.0
  %2373 = vmatpush1.msra.mxu0 0.0
  %2374 = vmatprep.subr.mxu0 0.0
  %2375 = vmatpush1.msra.mxu0 0.0
  %2376 = vmatprep.subr.mxu0 0.0
  %2377 = vmatpush1.msra.mxu0 0.0
  %2378 = vmatprep.subr.mxu0 0.0
  %2379 = vmatpush1.msra.mxu0 0.0
  %2380 = vmatprep.subr.mxu0 0.0
  %2381 = vmatpush1.msra.mxu0 0.0
  %2382 = vmatprep.subr.mxu0 0.0
  %2383 = vmatpush1.msra.mxu0 0.0
  %2384 = vmatprep.subr.mxu0 0.0
  %2385 = vmatpush1.msra.mxu0 0.0
  %2386 = vmatprep.subr.mxu0 0.0
  %2387 = vmatpush1.msra.mxu0 0.0
  %2388 = vmatprep.subr.mxu0 0.0
  %2389 = vmatpush1.msra.mxu0 0.0
  %2390 = vmatprep.subr.mxu0 0.0
  %2391 = vmatpush1.msra.mxu0 0.0
  %2392 = vmatprep.subr.mxu0 0.0
  %2393 = vmatpush1.msra.mxu0 0.0
  %2394 = vmatprep.subr.mxu0 0.0
  %2395 = vmatpush1.msra.mxu0 0.0
  %2396 = vmatprep.subr.mxu0 %v2208
  %2397 = vmatpush1.msra.mxu0 %v2207
  %2398 = vmatprep.subr.mxu0 0.0
  %2399 = vmatpush2.msra.mxu0 0.0
  %2400 = vmatprep.subr.mxu0 0.0
  %2401 = vmatpush2.msra.mxu0 0.0
  %2402 = vmatprep.subr.mxu0 0.0
  %2403 = vmatpush2.msra.mxu0 0.0
  %2404 = vmatprep.subr.mxu0 0.0
  %2405 = vmatpush2.msra.mxu0 0.0
  %2406 = vmatprep.subr.mxu0 0.0
  %2407 = vmatpush2.msra.mxu0 0.0
  %2408 = vmatprep.subr.mxu0 0.0
  %2409 = vmatpush2.msra.mxu0 0.0
  %2410 = vmatprep.subr.mxu0 0.0
  %2411 = vmatpush2.msra.mxu0 0.0
  %2412 = vmatprep.subr.mxu0 0.0
  %2413 = vmatpush2.msra.mxu0 0.0
  %2414 = vmatprep.subr.mxu0 0.0
  %2415 = vmatpush2.msra.mxu0 0.0
  %2416 = vmatprep.subr.mxu0 0.0
  %2417 = vmatpush2.msra.mxu0 0.0
  %2418 = vmatprep.subr.mxu0 0.0
  %2419 = vmatpush2.msra.mxu0 0.0
  %2420 = vmatprep.subr.mxu0 0.0
  %2421 = vmatpush2.msra.mxu0 0.0
  %2422 = vmatprep.subr.mxu0 0.0
  %2423 = vmatpush2.msra.mxu0 0.0
  %2424 = vmatprep.subr.mxu0 0.0
  %2425 = vmatpush2.msra.mxu0 0.0
  %2426 = vmatprep.subr.mxu0 0.0
  %2427 = vmatpush2.msra.mxu0 0.0
  %2428 = vmatprep.subr.mxu0 0.0
  %2429 = vmatpush2.msra.mxu0 0.0
  %2430 = vmatprep.mubr.f32.mxu0 0.0
  %2431 = vmatmul.mubr.f32.gmra.mxu0 %v2222
  %v2432 = vpop.f32.mrf.mxu0
  %v2433 = vadd.f32 0.0, %v2432
  %v2434 = vpop.f32.mrf.mxu0
  %v2435 = vadd.f32 0.0, %v2434
  %2436 = vdwg.mxu0
  %2437 = vmatprep.subr.mxu0 0.0
  %2438 = vmatpush1.msra.mxu0 0.0
  %2439 = vmatprep.subr.mxu0 0.0
  %2440 = vmatpush1.msra.mxu0 0.0
  %2441 = vmatprep.subr.mxu0 0.0
  %2442 = vmatpush1.msra.mxu0 0.0
  %2443 = vmatprep.subr.mxu0 0.0
  %2444 = vmatpush1.msra.mxu0 0.0
  %2445 = vmatprep.subr.mxu0 0.0
  %2446 = vmatpush1.msra.mxu0 0.0
  %2447 = vmatprep.subr.mxu0 0.0
  %2448 = vmatpush1.msra.mxu0 0.0
  %2449 = vmatprep.subr.mxu0 0.0
  %2450 = vmatpush1.msra.mxu0 0.0
  %2451 = vmatprep.subr.mxu0 0.0
  %2452 = vmatpush1.msra.mxu0 0.0
  %2453 = vmatprep.subr.mxu0 0.0
  %2454 = vmatpush1.msra.mxu0 0.0
  %2455 = vmatprep.subr.mxu0 0.0
  %2456 = vmatpush1.msra.mxu0 0.0
  %2457 = vmatprep.subr.mxu0 0.0
  %2458 = vmatpush1.msra.mxu0 0.0
  %2459 = vmatprep.subr.mxu0 0.0
  %2460 = vmatpush1.msra.mxu0 0.0
  %2461 = vmatprep.subr.mxu0 0.0
  %2462 = vmatpush1.msra.mxu0 0.0
  %2463 = vmatprep.subr.mxu0 0.0
  %2464 = vmatpush1.msra.mxu0 0.0
  %2465 = vmatprep.subr.mxu0 0.0
  %2466 = vmatpush1.msra.mxu0 0.0
  %2467 = vmatprep.subr.mxu0 %v2210
  %2468 = vmatpush1.msra.mxu0 %v2209
  %2469 = vmatprep.subr.mxu0 0.0
  %2470 = vmatpush2.msra.mxu0 0.0
  %2471 = vmatprep.subr.mxu0 0.0
  %2472 = vmatpush2.msra.mxu0 0.0
  %2473 = vmatprep.subr.mxu0 0.0
  %2474 = vmatpush2.msra.mxu0 0.0
  %2475 = vmatprep.subr.mxu0 0.0
  %2476 = vmatpush2.msra.mxu0 0.0
  %2477 = vmatprep.subr.mxu0 0.0
  %2478 = vmatpush2.msra.mxu0 0.0
  %2479 = vmatprep.subr.mxu0 0.0
  %2480 = vmatpush2.msra.mxu0 0.0
  %2481 = vmatprep.subr.mxu0 0.0
  %2482 = vmatpush2.msra.mxu0 0.0
  %2483 = vmatprep.subr.mxu0 0.0
  %2484 = vmatpush2.msra.mxu0 0.0
  %2485 = vmatprep.subr.mxu0 0.0
  %2486 = vmatpush2.msra.mxu0 0.0
  %2487 = vmatprep.subr.mxu0 0.0
  %2488 = vmatpush2.msra.mxu0 0.0
  %2489 = vmatprep.subr.mxu0 0.0
  %2490 = vmatpush2.msra.mxu0 0.0
  %2491 = vmatprep.subr.mxu0 0.0
  %2492 = vmatpush2.msra.mxu0 0.0
  %2493 = vmatprep.subr.mxu0 0.0
  %2494 = vmatpush2.msra.mxu0 0.0
  %2495 = vmatprep.subr.mxu0 0.0
  %2496 = vmatpush2.msra.mxu0 0.0
  %2497 = vmatprep.subr.mxu0 0.0
  %2498 = vmatpush2.msra.mxu0 0.0
  %2499 = vmatprep.subr.mxu0 0.0
  %2500 = vmatpush2.msra.mxu0 0.0
  %2501 = vmatprep.mubr.f32.mxu0 0.0
  %2502 = vmatmul.mubr.f32.gmra.mxu0 %v2222
  %v2503 = vpop.f32.mrf.mxu0
  %v2504 = vadd.f32 0.0, %v2503
  %v2505 = vpop.f32.mrf.mxu0
  %v2506 = vadd.f32 0.0, %v2505
  %2507 = vdwg.mxu0
  %2508 = vmatprep.subr.mxu0 0.0
  %2509 = vmatpush1.msra.mxu0 0.0
  %2510 = vmatprep.subr.mxu0 0.0
  %2511 = vmatpush1.msra.mxu0 0.0
  %2512 = vmatprep.subr.mxu0 0.0
  %2513 = vmatpush1.msra.mxu0 0.0
  %2514 = vmatprep.subr.mxu0 0.0
  %2515 = vmatpush1.msra.mxu0 0.0
  %2516 = vmatprep.subr.mxu0 0.0
  %2517 = vmatpush1.msra.mxu0 0.0
  %2518 = vmatprep.subr.mxu0 0.0
  %2519 = vmatpush1.msra.mxu0 0.0
  %2520 = vmatprep.subr.mxu0 0.0
  %2521 = vmatpush1.msra.mxu0 0.0
  %2522 = vmatprep.subr.mxu0 0.0
  %2523 = vmatpush1.msra.mxu0 0.0
  %2524 = vmatprep.subr.mxu0 0.0
  %2525 = vmatpush1.msra.mxu0 0.0
  %2526 = vmatprep.subr.mxu0 0.0
  %2527 = vmatpush1.msra.mxu0 0.0
  %2528 = vmatprep.subr.mxu0 0.0
  %2529 = vmatpush1.msra.mxu0 0.0
  %2530 = vmatprep.subr.mxu0 0.0
  %2531 = vmatpush1.msra.mxu0 0.0
  %2532 = vmatprep.subr.mxu0 0.0
  %2533 = vmatpush1.msra.mxu0 0.0
  %2534 = vmatprep.subr.mxu0 0.0
  %2535 = vmatpush1.msra.mxu0 0.0
  %2536 = vmatprep.subr.mxu0 0.0
  %2537 = vmatpush1.msra.mxu0 0.0
  %2538 = vmatprep.subr.mxu0 %v2212
  %2539 = vmatpush1.msra.mxu0 %v2211
  %2540 = vmatprep.subr.mxu0 0.0
  %2541 = vmatpush2.msra.mxu0 0.0
  %2542 = vmatprep.subr.mxu0 0.0
  %2543 = vmatpush2.msra.mxu0 0.0
  %2544 = vmatprep.subr.mxu0 0.0
  %2545 = vmatpush2.msra.mxu0 0.0
  %2546 = vmatprep.subr.mxu0 0.0
  %2547 = vmatpush2.msra.mxu0 0.0
  %2548 = vmatprep.subr.mxu0 0.0
  %2549 = vmatpush2.msra.mxu0 0.0
  %2550 = vmatprep.subr.mxu0 0.0
  %2551 = vmatpush2.msra.mxu0 0.0
  %2552 = vmatprep.subr.mxu0 0.0
  %2553 = vmatpush2.msra.mxu0 0.0
  %2554 = vmatprep.subr.mxu0 0.0
  %2555 = vmatpush2.msra.mxu0 0.0
  %2556 = vmatprep.subr.mxu0 0.0
  %2557 = vmatpush2.msra.mxu0 0.0
  %2558 = vmatprep.subr.mxu0 0.0
  %2559 = vmatpush2.msra.mxu0 0.0
  %2560 = vmatprep.subr.mxu0 0.0
  %2561 = vmatpush2.msra.mxu0 0.0
  %2562 = vmatprep.subr.mxu0 0.0
  %2563 = vmatpush2.msra.mxu0 0.0
  %2564 = vmatprep.subr.mxu0 0.0
  %2565 = vmatpush2.msra.mxu0 0.0
  %2566 = vmatprep.subr.mxu0 0.0
  %2567 = vmatpush2.msra.mxu0 0.0
  %2568 = vmatprep.subr.mxu0 0.0
  %2569 = vmatpush2.msra.mxu0 0.0
  %2570 = vmatprep.subr.mxu0 0.0
  %2571 = vmatpush2.msra.mxu0 0.0
  %2572 = vmatprep.mubr.f32.mxu0 0.0
  %2573 = vmatmul.mubr.f32.gmra.mxu0 %v2222
  %v2574 = vpop.f32.mrf.mxu0
  %v2575 = vadd.f32 0.0, %v2574
  %v2576 = vpop.f32.mrf.mxu0
  %v2577 = vadd.f32 0.0, %v2576
  %2578 = vdwg.mxu0
  %2579 = vmatprep.subr.mxu0 0.0
  %2580 = vmatpush1.msra.mxu0 0.0
  %2581 = vmatprep.subr.mxu0 0.0
  %2582 = vmatpush1.msra.mxu0 0.0
  %2583 = vmatprep.subr.mxu0 0.0
  %2584 = vmatpush1.msra.mxu0 0.0
  %2585 = vmatprep.subr.mxu0 0.0
  %2586 = vmatpush1.msra.mxu0 0.0
  %2587 = vmatprep.subr.mxu0 0.0
  %2588 = vmatpush1.msra.mxu0 0.0
  %2589 = vmatprep.subr.mxu0 0.0
  %2590 = vmatpush1.msra.mxu0 0.0
  %2591 = vmatprep.subr.mxu0 0.0
  %2592 = vmatpush1.msra.mxu0 0.0
  %2593 = vmatprep.subr.mxu0 0.0
  %2594 = vmatpush1.msra.mxu0 0.0
  %2595 = vmatprep.subr.mxu0 0.0
  %2596 = vmatpush1.msra.mxu0 0.0
  %2597 = vmatprep.subr.mxu0 0.0
  %2598 = vmatpush1.msra.mxu0 0.0
  %2599 = vmatprep.subr.mxu0 0.0
  %2600 = vmatpush1.msra.mxu0 0.0
  %2601 = vmatprep.subr.mxu0 0.0
  %2602 = vmatpush1.msra.mxu0 0.0
  %2603 = vmatprep.subr.mxu0 0.0
  %2604 = vmatpush1.msra.mxu0 0.0
  %2605 = vmatprep.subr.mxu0 0.0
  %2606 = vmatpush1.msra.mxu0 0.0
  %2607 = vmatprep.subr.mxu0 0.0
  %2608 = vmatpush1.msra.mxu0 0.0
  %2609 = vmatprep.subr.mxu0 %v2214
  %2610 = vmatpush1.msra.mxu0 %v2213
  %2611 = vmatprep.subr.mxu0 0.0
  %2612 = vmatpush2.msra.mxu0 0.0
  %2613 = vmatprep.subr.mxu0 0.0
  %2614 = vmatpush2.msra.mxu0 0.0
  %2615 = vmatprep.subr.mxu0 0.0
  %2616 = vmatpush2.msra.mxu0 0.0
  %2617 = vmatprep.subr.mxu0 0.0
  %2618 = vmatpush2.msra.mxu0 0.0
  %2619 = vmatprep.subr.mxu0 0.0
  %2620 = vmatpush2.msra.mxu0 0.0
  %2621 = vmatprep.subr.mxu0 0.0
  %2622 = vmatpush2.msra.mxu0 0.0
  %2623 = vmatprep.subr.mxu0 0.0
  %2624 = vmatpush2.msra.mxu0 0.0
  %2625 = vmatprep.subr.mxu0 0.0
  %2626 = vmatpush2.msra.mxu0 0.0
  %2627 = vmatprep.subr.mxu0 0.0
  %2628 = vmatpush2.msra.mxu0 0.0
  %2629 = vmatprep.subr.mxu0 0.0
  %2630 = vmatpush2.msra.mxu0 0.0
  %2631 = vmatprep.subr.mxu0 0.0
  %2632 = vmatpush2.msra.mxu0 0.0
  %2633 = vmatprep.subr.mxu0 0.0
  %2634 = vmatpush2.msra.mxu0 0.0
  %2635 = vmatprep.subr.mxu0 0.0
  %2636 = vmatpush2.msra.mxu0 0.0
  %2637 = vmatprep.subr.mxu0 0.0
  %2638 = vmatpush2.msra.mxu0 0.0
  %2639 = vmatprep.subr.mxu0 0.0
  %2640 = vmatpush2.msra.mxu0 0.0
  %2641 = vmatprep.subr.mxu0 0.0
  %2642 = vmatpush2.msra.mxu0 0.0
  %2643 = vmatprep.mubr.f32.mxu0 0.0
  %2644 = vmatmul.mubr.f32.gmra.mxu0 %v2222
  %v2645 = vpop.f32.mrf.mxu0
  %v2646 = vadd.f32 0.0, %v2645
  %v2647 = vpop.f32.mrf.mxu0
  %v2648 = vadd.f32 0.0, %v2647
  %2649 = vdwg.mxu0
  %2650 = vmatprep.subr.mxu0 0.0
  %2651 = vmatpush1.msra.mxu0 0.0
  %2652 = vmatprep.subr.mxu0 0.0
  %2653 = vmatpush1.msra.mxu0 0.0
  %2654 = vmatprep.subr.mxu0 0.0
  %2655 = vmatpush1.msra.mxu0 0.0
  %2656 = vmatprep.subr.mxu0 0.0
  %2657 = vmatpush1.msra.mxu0 0.0
  %2658 = vmatprep.subr.mxu0 0.0
  %2659 = vmatpush1.msra.mxu0 0.0
  %2660 = vmatprep.subr.mxu0 0.0
  %2661 = vmatpush1.msra.mxu0 0.0
  %2662 = vmatprep.subr.mxu0 0.0
  %2663 = vmatpush1.msra.mxu0 0.0
  %2664 = vmatprep.subr.mxu0 0.0
  %2665 = vmatpush1.msra.mxu0 0.0
  %2666 = vmatprep.subr.mxu0 0.0
  %2667 = vmatpush1.msra.mxu0 0.0
  %2668 = vmatprep.subr.mxu0 0.0
  %2669 = vmatpush1.msra.mxu0 0.0
  %2670 = vmatprep.subr.mxu0 0.0
  %2671 = vmatpush1.msra.mxu0 0.0
  %2672 = vmatprep.subr.mxu0 0.0
  %2673 = vmatpush1.msra.mxu0 0.0
  %2674 = vmatprep.subr.mxu0 0.0
  %2675 = vmatpush1.msra.mxu0 0.0
  %2676 = vmatprep.subr.mxu0 0.0
  %2677 = vmatpush1.msra.mxu0 0.0
  %2678 = vmatprep.subr.mxu0 0.0
  %2679 = vmatpush1.msra.mxu0 0.0
  %2680 = vmatprep.subr.mxu0 %v2216
  %2681 = vmatpush1.msra.mxu0 %v2215
  %2682 = vmatprep.subr.mxu0 0.0
  %2683 = vmatpush2.msra.mxu0 0.0
  %2684 = vmatprep.subr.mxu0 0.0
  %2685 = vmatpush2.msra.mxu0 0.0
  %2686 = vmatprep.subr.mxu0 0.0
  %2687 = vmatpush2.msra.mxu0 0.0
  %2688 = vmatprep.subr.mxu0 0.0
  %2689 = vmatpush2.msra.mxu0 0.0
  %2690 = vmatprep.subr.mxu0 0.0
  %2691 = vmatpush2.msra.mxu0 0.0
  %2692 = vmatprep.subr.mxu0 0.0
  %2693 = vmatpush2.msra.mxu0 0.0
  %2694 = vmatprep.subr.mxu0 0.0
  %2695 = vmatpush2.msra.mxu0 0.0
  %2696 = vmatprep.subr.mxu0 0.0
  %2697 = vmatpush2.msra.mxu0 0.0
  %2698 = vmatprep.subr.mxu0 0.0
  %2699 = vmatpush2.msra.mxu0 0.0
  %2700 = vmatprep.subr.mxu0 0.0
  %2701 = vmatpush2.msra.mxu0 0.0
  %2702 = vmatprep.subr.mxu0 0.0
  %2703 = vmatpush2.msra.mxu0 0.0
  %2704 = vmatprep.subr.mxu0 0.0
  %2705 = vmatpush2.msra.mxu0 0.0
  %2706 = vmatprep.subr.mxu0 0.0
  %2707 = vmatpush2.msra.mxu0 0.0
  %2708 = vmatprep.subr.mxu0 0.0
  %2709 = vmatpush2.msra.mxu0 0.0
  %2710 = vmatprep.subr.mxu0 0.0
  %2711 = vmatpush2.msra.mxu0 0.0
  %2712 = vmatprep.subr.mxu0 0.0
  %2713 = vmatpush2.msra.mxu0 0.0
  %2714 = vmatprep.mubr.f32.mxu0 0.0
  %2715 = vmatmul.mubr.f32.gmra.mxu0 %v2222
  %v2716 = vpop.f32.mrf.mxu0
  %v2717 = vadd.f32 0.0, %v2716
  %v2718 = vpop.f32.mrf.mxu0
  %v2719 = vadd.f32 0.0, %v2718
  %2720 = vdwg.mxu0
  %2721 = vmatprep.subr.mxu0 0.0
  %2722 = vmatpush1.msra.mxu0 0.0
  %2723 = vmatprep.subr.mxu0 0.0
  %2724 = vmatpush1.msra.mxu0 0.0
  %2725 = vmatprep.subr.mxu0 0.0
  %2726 = vmatpush1.msra.mxu0 0.0
  %2727 = vmatprep.subr.mxu0 0.0
  %2728 = vmatpush1.msra.mxu0 0.0
  %2729 = vmatprep.subr.mxu0 0.0
  %2730 = vmatpush1.msra.mxu0 0.0
  %2731 = vmatprep.subr.mxu0 0.0
  %2732 = vmatpush1.msra.mxu0 0.0
  %2733 = vmatprep.subr.mxu0 0.0
  %2734 = vmatpush1.msra.mxu0 0.0
  %2735 = vmatprep.subr.mxu0 0.0
  %2736 = vmatpush1.msra.mxu0 0.0
  %2737 = vmatprep.subr.mxu0 0.0
  %2738 = vmatpush1.msra.mxu0 0.0
  %2739 = vmatprep.subr.mxu0 0.0
  %2740 = vmatpush1.msra.mxu0 0.0
  %2741 = vmatprep.subr.mxu0 0.0
  %2742 = vmatpush1.msra.mxu0 0.0
  %2743 = vmatprep.subr.mxu0 0.0
  %2744 = vmatpush1.msra.mxu0 0.0
  %2745 = vmatprep.subr.mxu0 0.0
  %2746 = vmatpush1.msra.mxu0 0.0
  %2747 = vmatprep.subr.mxu0 0.0
  %2748 = vmatpush1.msra.mxu0 0.0
  %2749 = vmatprep.subr.mxu0 0.0
  %2750 = vmatpush1.msra.mxu0 0.0
  %2751 = vmatprep.subr.mxu0 %v2218
  %2752 = vmatpush1.msra.mxu0 %v2217
  %2753 = vmatprep.subr.mxu0 0.0
  %2754 = vmatpush2.msra.mxu0 0.0
  %2755 = vmatprep.subr.mxu0 0.0
  %2756 = vmatpush2.msra.mxu0 0.0
  %2757 = vmatprep.subr.mxu0 0.0
  %2758 = vmatpush2.msra.mxu0 0.0
  %2759 = vmatprep.subr.mxu0 0.0
  %2760 = vmatpush2.msra.mxu0 0.0
  %2761 = vmatprep.subr.mxu0 0.0
  %2762 = vmatpush2.msra.mxu0 0.0
  %2763 = vmatprep.subr.mxu0 0.0
  %2764 = vmatpush2.msra.mxu0 0.0
  %2765 = vmatprep.subr.mxu0 0.0
  %2766 = vmatpush2.msra.mxu0 0.0
  %2767 = vmatprep.subr.mxu0 0.0
  %2768 = vmatpush2.msra.mxu0 0.0
  %2769 = vmatprep.subr.mxu0 0.0
  %2770 = vmatpush2.msra.mxu0 0.0
  %2771 = vmatprep.subr.mxu0 0.0
  %2772 = vmatpush2.msra.mxu0 0.0
  %2773 = vmatprep.subr.mxu0 0.0
  %2774 = vmatpush2.msra.mxu0 0.0
  %2775 = vmatprep.subr.mxu0 0.0
  %2776 = vmatpush2.msra.mxu0 0.0
  %2777 = vmatprep.subr.mxu0 0.0
  %2778 = vmatpush2.msra.mxu0 0.0
  %2779 = vmatprep.subr.mxu0 0.0
  %2780 = vmatpush2.msra.mxu0 0.0
  %2781 = vmatprep.subr.mxu0 0.0
  %2782 = vmatpush2.msra.mxu0 0.0
  %2783 = vmatprep.subr.mxu0 0.0
  %2784 = vmatpush2.msra.mxu0 0.0
  %2785 = vmatprep.mubr.f32.mxu0 0.0
  %2786 = vmatmul.mubr.f32.gmra.mxu0 %v2222
  %v2787 = vpop.f32.mrf.mxu0
  %v2788 = vadd.f32 0.0, %v2787
  %v2789 = vpop.f32.mrf.mxu0
  %v2790 = vadd.f32 0.0, %v2789
  %2791 = vdwg.mxu0
  %v2792 = vadd.f32 %v1563, %v2291
  %v2793 = vadd.f32 %v1565, %v2293
  %v2794 = vadd.f32 %v1634, %v2362
  %v2795 = vadd.f32 %v1636, %v2364
  %v2796 = vadd.f32 %v1705, %v2433
  %v2797 = vadd.f32 %v1707, %v2435
  %v2798 = vadd.f32 %v1776, %v2504
  %v2799 = vadd.f32 %v1778, %v2506
  %v2800 = vadd.f32 %v1847, %v2575
  %v2801 = vadd.f32 %v1849, %v2577
  %v2802 = vadd.f32 %v1918, %v2646
  %v2803 = vadd.f32 %v1920, %v2648
  %v2804 = vadd.f32 %v1989, %v2717
  %v2805 = vadd.f32 %v1991, %v2719
  %v2806 = vadd.f32 %v2060, %v2788
  %v2807 = vadd.f32 %v2062, %v2790
  %2808 = vrot.lane.b32.xlu0 %v743, 1
  %v2809 = vpop.permute.xlu0 %2808
  %2810 = vrot.lane.b32.xlu0 %v744, 1
  %v2811 = vpop.permute.xlu0 %2810
  %2812 = vrot.lane.b32.xlu0 %v745, 1
  %v2813 = vpop.permute.xlu0 %2812
  %2814 = vrot.lane.b32.xlu0 %v746, 1
  %v2815 = vpop.permute.xlu0 %2814
  %2816 = vrot.lane.b32.xlu0 %v747, 1
  %v2817 = vpop.permute.xlu0 %2816
  %2818 = vrot.lane.b32.xlu0 %v748, 1
  %v2819 = vpop.permute.xlu0 %2818
  %2820 = vrot.lane.b32.xlu0 %v749, 1
  %v2821 = vpop.permute.xlu0 %2820
  %2822 = vrot.lane.b32.xlu0 %v750, 1
  %v2823 = vpop.permute.xlu0 %2822
  %2824 = vrot.lane.b32.xlu0 %v751, 1
  %v2825 = vpop.permute.xlu0 %2824
  %2826 = vrot.lane.b32.xlu0 %v752, 1
  %v2827 = vpop.permute.xlu0 %2826
  %2828 = vrot.lane.b32.xlu0 %v753, 1
  %v2829 = vpop.permute.xlu0 %2828
  %2830 = vrot.lane.b32.xlu0 %v754, 1
  %v2831 = vpop.permute.xlu0 %2830
  %2832 = vrot.lane.b32.xlu0 %v755, 1
  %v2833 = vpop.permute.xlu0 %2832
  %2834 = vrot.lane.b32.xlu0 %v756, 1
  %v2835 = vpop.permute.xlu0 %2834
  %2836 = vrot.lane.b32.xlu0 %v757, 1
  %v2837 = vpop.permute.xlu0 %2836
  %2838 = vrot.lane.b32.xlu0 %v758, 1
  %v2839 = vpop.permute.xlu0 %2838
  %vm2840 = vcmp.lt.s32.totalorder %v796, 1
  %v2841 = vsel %vm2840, %v2837, %v2839
  %v2842 = vsel %vm2840, %v2835, %v2837
  %v2843 = vsel %vm2840, %v2833, %v2835
  %v2844 = vsel %vm2840, %v2831, %v2833
  %v2845 = vsel %vm2840, %v2829, %v2831
  %v2846 = vsel %vm2840, %v2827, %v2829
  %v2847 = vsel %vm2840, %v2825, %v2827
  %v2848 = vsel %vm2840, %v2823, %v2825
  %v2849 = vsel %vm2840, %v2821, %v2823
  %v2850 = vsel %vm2840, %v2819, %v2821
  %v2851 = vsel %vm2840, %v2817, %v2819
  %v2852 = vsel %vm2840, %v2815, %v2817
  %v2853 = vsel %vm2840, %v2813, %v2815
  %v2854 = vsel %vm2840, %v2811, %v2813
  %v2855 = vsel %vm2840, %v2809, %v2811
  %v2856 = vsel %vm2840, %v2839, %v2809
  %v2857 = vadd.s32 %v759, 4294967295
  %v2858 = vadd.s32 %v760, 4294967295
  %vm2859 = vcmp.ge.s32.totalorder %v2857, 0
  %vm2860 = vcmp.ge.s32.totalorder %v2858, 0
  %vm2861 = vcmp.lt.s32.totalorder %v2857, 256
  %vm2862 = vcmp.lt.s32.totalorder %v2858, 256
  %vm2863 = vmand %vm2859, %vm2861
  %vm2864 = vmand %vm2860, %vm2862
  %v2865 = vsel %vm2863, 1, 0
  %v2866 = vsel %vm2864, 1, 0
  %v2867 = vlaneseq
  %v2868 = vshrl.u32 %v2867, 7
  %v2869 = vsub.s32 0, %v2868
  %v2870 = vrot.slane %v2865, %v2869
  %v2871 = vlaneseq
  %v2872 = vshrl.u32 %v2871, 7
  %v2873 = vsub.s32 1, %v2872
  %v2874 = vrot.slane %v2865, %v2873
  %v2875 = vlaneseq
  %v2876 = vshrl.u32 %v2875, 7
  %v2877 = vsub.s32 2, %v2876
  %v2878 = vrot.slane %v2865, %v2877
  %v2879 = vlaneseq
  %v2880 = vshrl.u32 %v2879, 7
  %v2881 = vsub.s32 3, %v2880
  %v2882 = vrot.slane %v2865, %v2881
  %v2883 = vlaneseq
  %v2884 = vshrl.u32 %v2883, 7
  %v2885 = vsub.s32 4, %v2884
  %v2886 = vrot.slane %v2865, %v2885
  %v2887 = vlaneseq
  %v2888 = vshrl.u32 %v2887, 7
  %v2889 = vsub.s32 5, %v2888
  %v2890 = vrot.slane %v2865, %v2889
  %v2891 = vlaneseq
  %v2892 = vshrl.u32 %v2891, 7
  %v2893 = vsub.s32 6, %v2892
  %v2894 = vrot.slane %v2865, %v2893
  %v2895 = vlaneseq
  %v2896 = vshrl.u32 %v2895, 7
  %v2897 = vsub.s32 7, %v2896
  %v2898 = vrot.slane %v2865, %v2897
  %v2899 = vlaneseq
  %v2900 = vshrl.u32 %v2899, 7
  %v2901 = vsub.s32 0, %v2900
  %v2902 = vrot.slane %v2866, %v2901
  %v2903 = vlaneseq
  %v2904 = vshrl.u32 %v2903, 7
  %v2905 = vsub.s32 1, %v2904
  %v2906 = vrot.slane %v2866, %v2905
  %v2907 = vlaneseq
  %v2908 = vshrl.u32 %v2907, 7
  %v2909 = vsub.s32 2, %v2908
  %v2910 = vrot.slane %v2866, %v2909
  %v2911 = vlaneseq
  %v2912 = vshrl.u32 %v2911, 7
  %v2913 = vsub.s32 3, %v2912
  %v2914 = vrot.slane %v2866, %v2913
  %v2915 = vlaneseq
  %v2916 = vshrl.u32 %v2915, 7
  %v2917 = vsub.s32 4, %v2916
  %v2918 = vrot.slane %v2866, %v2917
  %v2919 = vlaneseq
  %v2920 = vshrl.u32 %v2919, 7
  %v2921 = vsub.s32 5, %v2920
  %v2922 = vrot.slane %v2866, %v2921
  %v2923 = vlaneseq
  %v2924 = vshrl.u32 %v2923, 7
  %v2925 = vsub.s32 6, %v2924
  %v2926 = vrot.slane %v2866, %v2925
  %v2927 = vlaneseq
  %v2928 = vshrl.u32 %v2927, 7
  %v2929 = vsub.s32 7, %v2928
  %v2930 = vrot.slane %v2866, %v2929
  %vm2931 = vcmp.eq.s32.totalorder %v2870, 1
  %vm2932 = vcmp.eq.s32.totalorder %v2874, 1
  %vm2933 = vcmp.eq.s32.totalorder %v2878, 1
  %vm2934 = vcmp.eq.s32.totalorder %v2882, 1
  %vm2935 = vcmp.eq.s32.totalorder %v2886, 1
  %vm2936 = vcmp.eq.s32.totalorder %v2890, 1
  %vm2937 = vcmp.eq.s32.totalorder %v2894, 1
  %vm2938 = vcmp.eq.s32.totalorder %v2898, 1
  %vm2939 = vcmp.eq.s32.totalorder %v2902, 1
  %vm2940 = vcmp.eq.s32.totalorder %v2906, 1
  %vm2941 = vcmp.eq.s32.totalorder %v2910, 1
  %vm2942 = vcmp.eq.s32.totalorder %v2914, 1
  %vm2943 = vcmp.eq.s32.totalorder %v2918, 1
  %vm2944 = vcmp.eq.s32.totalorder %v2922, 1
  %vm2945 = vcmp.eq.s32.totalorder %v2926, 1
  %vm2946 = vcmp.eq.s32.totalorder %v2930, 1
  %v2947 = vsel %vm2931, %v2856, 0.0
  %v2948 = vsel %vm2932, %v2855, 0.0
  %v2949 = vsel %vm2933, %v2854, 0.0
  %v2950 = vsel %vm2934, %v2853, 0.0
  %v2951 = vsel %vm2935, %v2852, 0.0
  %v2952 = vsel %vm2936, %v2851, 0.0
  %v2953 = vsel %vm2937, %v2850, 0.0
  %v2954 = vsel %vm2938, %v2849, 0.0
  %v2955 = vsel %vm2939, %v2848, 0.0
  %v2956 = vsel %vm2940, %v2847, 0.0
  %v2957 = vsel %vm2941, %v2846, 0.0
  %v2958 = vsel %vm2942, %v2845, 0.0
  %v2959 = vsel %vm2943, %v2844, 0.0
  %v2960 = vsel %vm2944, %v2843, 0.0
  %v2961 = vsel %vm2945, %v2842, 0.0
  %v2962 = vsel %vm2946, %v2841, 0.0
  %s2963 = scalar_lea.vmem %s5, 16
  %v2964 = vld [vmem:[%s2963] sm:$0xff]
  %v2966 = vsel %vm921, %v2964, 0
  %2968 = vmatprep.subr.mxu0 0.0
  %2969 = vmatpush1.msra.mxu0 0.0
  %2970 = vmatprep.subr.mxu0 0.0
  %2971 = vmatpush1.msra.mxu0 0.0
  %2972 = vmatprep.subr.mxu0 0.0
  %2973 = vmatpush1.msra.mxu0 0.0
  %2974 = vmatprep.subr.mxu0 0.0
  %2975 = vmatpush1.msra.mxu0 0.0
  %2976 = vmatprep.subr.mxu0 0.0
  %2977 = vmatpush1.msra.mxu0 0.0
  %2978 = vmatprep.subr.mxu0 0.0
  %2979 = vmatpush1.msra.mxu0 0.0
  %2980 = vmatprep.subr.mxu0 0.0
  %2981 = vmatpush1.msra.mxu0 0.0
  %2982 = vmatprep.subr.mxu0 0.0
  %2983 = vmatpush1.msra.mxu0 0.0
  %2984 = vmatprep.subr.mxu0 0.0
  %2985 = vmatpush1.msra.mxu0 0.0
  %2986 = vmatprep.subr.mxu0 0.0
  %2987 = vmatpush1.msra.mxu0 0.0
  %2988 = vmatprep.subr.mxu0 0.0
  %2989 = vmatpush1.msra.mxu0 0.0
  %2990 = vmatprep.subr.mxu0 0.0
  %2991 = vmatpush1.msra.mxu0 0.0
  %2992 = vmatprep.subr.mxu0 0.0
  %2993 = vmatpush1.msra.mxu0 0.0
  %2994 = vmatprep.subr.mxu0 0.0
  %2995 = vmatpush1.msra.mxu0 0.0
  %2996 = vmatprep.subr.mxu0 0.0
  %2997 = vmatpush1.msra.mxu0 0.0
  %2998 = vmatprep.subr.mxu0 %v2948
  %2999 = vmatpush1.msra.mxu0 %v2947
  %3000 = vmatprep.subr.mxu0 0.0
  %3001 = vmatpush2.msra.mxu0 0.0
  %3002 = vmatprep.subr.mxu0 0.0
  %3003 = vmatpush2.msra.mxu0 0.0
  %3004 = vmatprep.subr.mxu0 0.0
  %3005 = vmatpush2.msra.mxu0 0.0
  %3006 = vmatprep.subr.mxu0 0.0
  %3007 = vmatpush2.msra.mxu0 0.0
  %3008 = vmatprep.subr.mxu0 0.0
  %3009 = vmatpush2.msra.mxu0 0.0
  %3010 = vmatprep.subr.mxu0 0.0
  %3011 = vmatpush2.msra.mxu0 0.0
  %3012 = vmatprep.subr.mxu0 0.0
  %3013 = vmatpush2.msra.mxu0 0.0
  %3014 = vmatprep.subr.mxu0 0.0
  %3015 = vmatpush2.msra.mxu0 0.0
  %3016 = vmatprep.subr.mxu0 0.0
  %3017 = vmatpush2.msra.mxu0 0.0
  %3018 = vmatprep.subr.mxu0 0.0
  %3019 = vmatpush2.msra.mxu0 0.0
  %3020 = vmatprep.subr.mxu0 0.0
  %3021 = vmatpush2.msra.mxu0 0.0
  %3022 = vmatprep.subr.mxu0 0.0
  %3023 = vmatpush2.msra.mxu0 0.0
  %3024 = vmatprep.subr.mxu0 0.0
  %3025 = vmatpush2.msra.mxu0 0.0
  %3026 = vmatprep.subr.mxu0 0.0
  %3027 = vmatpush2.msra.mxu0 0.0
  %3028 = vmatprep.subr.mxu0 0.0
  %3029 = vmatpush2.msra.mxu0 0.0
  %3030 = vmatprep.subr.mxu0 0.0
  %3031 = vmatpush2.msra.mxu0 0.0
  %3032 = vmatprep.mubr.f32.mxu0 0.0
  %3033 = vmatmul.mubr.f32.gmra.mxu0 %v2966
  %v3034 = vpop.f32.mrf.mxu0
  %v3035 = vadd.f32 0.0, %v3034
  %v3036 = vpop.f32.mrf.mxu0
  %v3037 = vadd.f32 0.0, %v3036
  %3038 = vdwg.mxu0
  %3039 = vmatprep.subr.mxu0 0.0
  %3040 = vmatpush1.msra.mxu0 0.0
  %3041 = vmatprep.subr.mxu0 0.0
  %3042 = vmatpush1.msra.mxu0 0.0
  %3043 = vmatprep.subr.mxu0 0.0
  %3044 = vmatpush1.msra.mxu0 0.0
  %3045 = vmatprep.subr.mxu0 0.0
  %3046 = vmatpush1.msra.mxu0 0.0
  %3047 = vmatprep.subr.mxu0 0.0
  %3048 = vmatpush1.msra.mxu0 0.0
  %3049 = vmatprep.subr.mxu0 0.0
  %3050 = vmatpush1.msra.mxu0 0.0
  %3051 = vmatprep.subr.mxu0 0.0
  %3052 = vmatpush1.msra.mxu0 0.0
  %3053 = vmatprep.subr.mxu0 0.0
  %3054 = vmatpush1.msra.mxu0 0.0
  %3055 = vmatprep.subr.mxu0 0.0
  %3056 = vmatpush1.msra.mxu0 0.0
  %3057 = vmatprep.subr.mxu0 0.0
  %3058 = vmatpush1.msra.mxu0 0.0
  %3059 = vmatprep.subr.mxu0 0.0
  %3060 = vmatpush1.msra.mxu0 0.0
  %3061 = vmatprep.subr.mxu0 0.0
  %3062 = vmatpush1.msra.mxu0 0.0
  %3063 = vmatprep.subr.mxu0 0.0
  %3064 = vmatpush1.msra.mxu0 0.0
  %3065 = vmatprep.subr.mxu0 0.0
  %3066 = vmatpush1.msra.mxu0 0.0
  %3067 = vmatprep.subr.mxu0 0.0
  %3068 = vmatpush1.msra.mxu0 0.0
  %3069 = vmatprep.subr.mxu0 %v2950
  %3070 = vmatpush1.msra.mxu0 %v2949
  %3071 = vmatprep.subr.mxu0 0.0
  %3072 = vmatpush2.msra.mxu0 0.0
  %3073 = vmatprep.subr.mxu0 0.0
  %3074 = vmatpush2.msra.mxu0 0.0
  %3075 = vmatprep.subr.mxu0 0.0
  %3076 = vmatpush2.msra.mxu0 0.0
  %3077 = vmatprep.subr.mxu0 0.0
  %3078 = vmatpush2.msra.mxu0 0.0
  %3079 = vmatprep.subr.mxu0 0.0
  %3080 = vmatpush2.msra.mxu0 0.0
  %3081 = vmatprep.subr.mxu0 0.0
  %3082 = vmatpush2.msra.mxu0 0.0
  %3083 = vmatprep.subr.mxu0 0.0
  %3084 = vmatpush2.msra.mxu0 0.0
  %3085 = vmatprep.subr.mxu0 0.0
  %3086 = vmatpush2.msra.mxu0 0.0
  %3087 = vmatprep.subr.mxu0 0.0
  %3088 = vmatpush2.msra.mxu0 0.0
  %3089 = vmatprep.subr.mxu0 0.0
  %3090 = vmatpush2.msra.mxu0 0.0
  %3091 = vmatprep.subr.mxu0 0.0
  %3092 = vmatpush2.msra.mxu0 0.0
  %3093 = vmatprep.subr.mxu0 0.0
  %3094 = vmatpush2.msra.mxu0 0.0
  %3095 = vmatprep.subr.mxu0 0.0
  %3096 = vmatpush2.msra.mxu0 0.0
  %3097 = vmatprep.subr.mxu0 0.0
  %3098 = vmatpush2.msra.mxu0 0.0
  %3099 = vmatprep.subr.mxu0 0.0
  %3100 = vmatpush2.msra.mxu0 0.0
  %3101 = vmatprep.subr.mxu0 0.0
  %3102 = vmatpush2.msra.mxu0 0.0
  %3103 = vmatprep.mubr.f32.mxu0 0.0
  %3104 = vmatmul.mubr.f32.gmra.mxu0 %v2966
  %v3105 = vpop.f32.mrf.mxu0
  %v3106 = vadd.f32 0.0, %v3105
  %v3107 = vpop.f32.mrf.mxu0
  %v3108 = vadd.f32 0.0, %v3107
  %3109 = vdwg.mxu0
  %3110 = vmatprep.subr.mxu0 0.0
  %3111 = vmatpush1.msra.mxu0 0.0
  %3112 = vmatprep.subr.mxu0 0.0
  %3113 = vmatpush1.msra.mxu0 0.0
  %3114 = vmatprep.subr.mxu0 0.0
  %3115 = vmatpush1.msra.mxu0 0.0
  %3116 = vmatprep.subr.mxu0 0.0
  %3117 = vmatpush1.msra.mxu0 0.0
  %3118 = vmatprep.subr.mxu0 0.0
  %3119 = vmatpush1.msra.mxu0 0.0
  %3120 = vmatprep.subr.mxu0 0.0
  %3121 = vmatpush1.msra.mxu0 0.0
  %3122 = vmatprep.subr.mxu0 0.0
  %3123 = vmatpush1.msra.mxu0 0.0
  %3124 = vmatprep.subr.mxu0 0.0
  %3125 = vmatpush1.msra.mxu0 0.0
  %3126 = vmatprep.subr.mxu0 0.0
  %3127 = vmatpush1.msra.mxu0 0.0
  %3128 = vmatprep.subr.mxu0 0.0
  %3129 = vmatpush1.msra.mxu0 0.0
  %3130 = vmatprep.subr.mxu0 0.0
  %3131 = vmatpush1.msra.mxu0 0.0
  %3132 = vmatprep.subr.mxu0 0.0
  %3133 = vmatpush1.msra.mxu0 0.0
  %3134 = vmatprep.subr.mxu0 0.0
  %3135 = vmatpush1.msra.mxu0 0.0
  %3136 = vmatprep.subr.mxu0 0.0
  %3137 = vmatpush1.msra.mxu0 0.0
  %3138 = vmatprep.subr.mxu0 0.0
  %3139 = vmatpush1.msra.mxu0 0.0
  %3140 = vmatprep.subr.mxu0 %v2952
  %3141 = vmatpush1.msra.mxu0 %v2951
  %3142 = vmatprep.subr.mxu0 0.0
  %3143 = vmatpush2.msra.mxu0 0.0
  %3144 = vmatprep.subr.mxu0 0.0
  %3145 = vmatpush2.msra.mxu0 0.0
  %3146 = vmatprep.subr.mxu0 0.0
  %3147 = vmatpush2.msra.mxu0 0.0
  %3148 = vmatprep.subr.mxu0 0.0
  %3149 = vmatpush2.msra.mxu0 0.0
  %3150 = vmatprep.subr.mxu0 0.0
  %3151 = vmatpush2.msra.mxu0 0.0
  %3152 = vmatprep.subr.mxu0 0.0
  %3153 = vmatpush2.msra.mxu0 0.0
  %3154 = vmatprep.subr.mxu0 0.0
  %3155 = vmatpush2.msra.mxu0 0.0
  %3156 = vmatprep.subr.mxu0 0.0
  %3157 = vmatpush2.msra.mxu0 0.0
  %3158 = vmatprep.subr.mxu0 0.0
  %3159 = vmatpush2.msra.mxu0 0.0
  %3160 = vmatprep.subr.mxu0 0.0
  %3161 = vmatpush2.msra.mxu0 0.0
  %3162 = vmatprep.subr.mxu0 0.0
  %3163 = vmatpush2.msra.mxu0 0.0
  %3164 = vmatprep.subr.mxu0 0.0
  %3165 = vmatpush2.msra.mxu0 0.0
  %3166 = vmatprep.subr.mxu0 0.0
  %3167 = vmatpush2.msra.mxu0 0.0
  %3168 = vmatprep.subr.mxu0 0.0
  %3169 = vmatpush2.msra.mxu0 0.0
  %3170 = vmatprep.subr.mxu0 0.0
  %3171 = vmatpush2.msra.mxu0 0.0
  %3172 = vmatprep.subr.mxu0 0.0
  %3173 = vmatpush2.msra.mxu0 0.0
  %3174 = vmatprep.mubr.f32.mxu0 0.0
  %3175 = vmatmul.mubr.f32.gmra.mxu0 %v2966
  %v3176 = vpop.f32.mrf.mxu0
  %v3177 = vadd.f32 0.0, %v3176
  %v3178 = vpop.f32.mrf.mxu0
  %v3179 = vadd.f32 0.0, %v3178
  %3180 = vdwg.mxu0
  %3181 = vmatprep.subr.mxu0 0.0
  %3182 = vmatpush1.msra.mxu0 0.0
  %3183 = vmatprep.subr.mxu0 0.0
  %3184 = vmatpush1.msra.mxu0 0.0
  %3185 = vmatprep.subr.mxu0 0.0
  %3186 = vmatpush1.msra.mxu0 0.0
  %3187 = vmatprep.subr.mxu0 0.0
  %3188 = vmatpush1.msra.mxu0 0.0
  %3189 = vmatprep.subr.mxu0 0.0
  %3190 = vmatpush1.msra.mxu0 0.0
  %3191 = vmatprep.subr.mxu0 0.0
  %3192 = vmatpush1.msra.mxu0 0.0
  %3193 = vmatprep.subr.mxu0 0.0
  %3194 = vmatpush1.msra.mxu0 0.0
  %3195 = vmatprep.subr.mxu0 0.0
  %3196 = vmatpush1.msra.mxu0 0.0
  %3197 = vmatprep.subr.mxu0 0.0
  %3198 = vmatpush1.msra.mxu0 0.0
  %3199 = vmatprep.subr.mxu0 0.0
  %3200 = vmatpush1.msra.mxu0 0.0
  %3201 = vmatprep.subr.mxu0 0.0
  %3202 = vmatpush1.msra.mxu0 0.0
  %3203 = vmatprep.subr.mxu0 0.0
  %3204 = vmatpush1.msra.mxu0 0.0
  %3205 = vmatprep.subr.mxu0 0.0
  %3206 = vmatpush1.msra.mxu0 0.0
  %3207 = vmatprep.subr.mxu0 0.0
  %3208 = vmatpush1.msra.mxu0 0.0
  %3209 = vmatprep.subr.mxu0 0.0
  %3210 = vmatpush1.msra.mxu0 0.0
  %3211 = vmatprep.subr.mxu0 %v2954
  %3212 = vmatpush1.msra.mxu0 %v2953
  %3213 = vmatprep.subr.mxu0 0.0
  %3214 = vmatpush2.msra.mxu0 0.0
  %3215 = vmatprep.subr.mxu0 0.0
  %3216 = vmatpush2.msra.mxu0 0.0
  %3217 = vmatprep.subr.mxu0 0.0
  %3218 = vmatpush2.msra.mxu0 0.0
  %3219 = vmatprep.subr.mxu0 0.0
  %3220 = vmatpush2.msra.mxu0 0.0
  %3221 = vmatprep.subr.mxu0 0.0
  %3222 = vmatpush2.msra.mxu0 0.0
  %3223 = vmatprep.subr.mxu0 0.0
  %3224 = vmatpush2.msra.mxu0 0.0
  %3225 = vmatprep.subr.mxu0 0.0
  %3226 = vmatpush2.msra.mxu0 0.0
  %3227 = vmatprep.subr.mxu0 0.0
  %3228 = vmatpush2.msra.mxu0 0.0
  %3229 = vmatprep.subr.mxu0 0.0
  %3230 = vmatpush2.msra.mxu0 0.0
  %3231 = vmatprep.subr.mxu0 0.0
  %3232 = vmatpush2.msra.mxu0 0.0
  %3233 = vmatprep.subr.mxu0 0.0
  %3234 = vmatpush2.msra.mxu0 0.0
  %3235 = vmatprep.subr.mxu0 0.0
  %3236 = vmatpush2.msra.mxu0 0.0
  %3237 = vmatprep.subr.mxu0 0.0
  %3238 = vmatpush2.msra.mxu0 0.0
  %3239 = vmatprep.subr.mxu0 0.0
  %3240 = vmatpush2.msra.mxu0 0.0
  %3241 = vmatprep.subr.mxu0 0.0
  %3242 = vmatpush2.msra.mxu0 0.0
  %3243 = vmatprep.subr.mxu0 0.0
  %3244 = vmatpush2.msra.mxu0 0.0
  %3245 = vmatprep.mubr.f32.mxu0 0.0
  %3246 = vmatmul.mubr.f32.gmra.mxu0 %v2966
  %v3247 = vpop.f32.mrf.mxu0
  %v3248 = vadd.f32 0.0, %v3247
  %v3249 = vpop.f32.mrf.mxu0
  %v3250 = vadd.f32 0.0, %v3249
  %3251 = vdwg.mxu0
  %3252 = vmatprep.subr.mxu0 0.0
  %3253 = vmatpush1.msra.mxu0 0.0
  %3254 = vmatprep.subr.mxu0 0.0
  %3255 = vmatpush1.msra.mxu0 0.0
  %3256 = vmatprep.subr.mxu0 0.0
  %3257 = vmatpush1.msra.mxu0 0.0
  %3258 = vmatprep.subr.mxu0 0.0
  %3259 = vmatpush1.msra.mxu0 0.0
  %3260 = vmatprep.subr.mxu0 0.0
  %3261 = vmatpush1.msra.mxu0 0.0
  %3262 = vmatprep.subr.mxu0 0.0
  %3263 = vmatpush1.msra.mxu0 0.0
  %3264 = vmatprep.subr.mxu0 0.0
  %3265 = vmatpush1.msra.mxu0 0.0
  %3266 = vmatprep.subr.mxu0 0.0
  %3267 = vmatpush1.msra.mxu0 0.0
  %3268 = vmatprep.subr.mxu0 0.0
  %3269 = vmatpush1.msra.mxu0 0.0
  %3270 = vmatprep.subr.mxu0 0.0
  %3271 = vmatpush1.msra.mxu0 0.0
  %3272 = vmatprep.subr.mxu0 0.0
  %3273 = vmatpush1.msra.mxu0 0.0
  %3274 = vmatprep.subr.mxu0 0.0
  %3275 = vmatpush1.msra.mxu0 0.0
  %3276 = vmatprep.subr.mxu0 0.0
  %3277 = vmatpush1.msra.mxu0 0.0
  %3278 = vmatprep.subr.mxu0 0.0
  %3279 = vmatpush1.msra.mxu0 0.0
  %3280 = vmatprep.subr.mxu0 0.0
  %3281 = vmatpush1.msra.mxu0 0.0
  %3282 = vmatprep.subr.mxu0 %v2956
  %3283 = vmatpush1.msra.mxu0 %v2955
  %3284 = vmatprep.subr.mxu0 0.0
  %3285 = vmatpush2.msra.mxu0 0.0
  %3286 = vmatprep.subr.mxu0 0.0
  %3287 = vmatpush2.msra.mxu0 0.0
  %3288 = vmatprep.subr.mxu0 0.0
  %3289 = vmatpush2.msra.mxu0 0.0
  %3290 = vmatprep.subr.mxu0 0.0
  %3291 = vmatpush2.msra.mxu0 0.0
  %3292 = vmatprep.subr.mxu0 0.0
  %3293 = vmatpush2.msra.mxu0 0.0
  %3294 = vmatprep.subr.mxu0 0.0
  %3295 = vmatpush2.msra.mxu0 0.0
  %3296 = vmatprep.subr.mxu0 0.0
  %3297 = vmatpush2.msra.mxu0 0.0
  %3298 = vmatprep.subr.mxu0 0.0
  %3299 = vmatpush2.msra.mxu0 0.0
  %3300 = vmatprep.subr.mxu0 0.0
  %3301 = vmatpush2.msra.mxu0 0.0
  %3302 = vmatprep.subr.mxu0 0.0
  %3303 = vmatpush2.msra.mxu0 0.0
  %3304 = vmatprep.subr.mxu0 0.0
  %3305 = vmatpush2.msra.mxu0 0.0
  %3306 = vmatprep.subr.mxu0 0.0
  %3307 = vmatpush2.msra.mxu0 0.0
  %3308 = vmatprep.subr.mxu0 0.0
  %3309 = vmatpush2.msra.mxu0 0.0
  %3310 = vmatprep.subr.mxu0 0.0
  %3311 = vmatpush2.msra.mxu0 0.0
  %3312 = vmatprep.subr.mxu0 0.0
  %3313 = vmatpush2.msra.mxu0 0.0
  %3314 = vmatprep.subr.mxu0 0.0
  %3315 = vmatpush2.msra.mxu0 0.0
  %3316 = vmatprep.mubr.f32.mxu0 0.0
  %3317 = vmatmul.mubr.f32.gmra.mxu0 %v2966
  %v3318 = vpop.f32.mrf.mxu0
  %v3319 = vadd.f32 0.0, %v3318
  %v3320 = vpop.f32.mrf.mxu0
  %v3321 = vadd.f32 0.0, %v3320
  %3322 = vdwg.mxu0
  %3323 = vmatprep.subr.mxu0 0.0
  %3324 = vmatpush1.msra.mxu0 0.0
  %3325 = vmatprep.subr.mxu0 0.0
  %3326 = vmatpush1.msra.mxu0 0.0
  %3327 = vmatprep.subr.mxu0 0.0
  %3328 = vmatpush1.msra.mxu0 0.0
  %3329 = vmatprep.subr.mxu0 0.0
  %3330 = vmatpush1.msra.mxu0 0.0
  %3331 = vmatprep.subr.mxu0 0.0
  %3332 = vmatpush1.msra.mxu0 0.0
  %3333 = vmatprep.subr.mxu0 0.0
  %3334 = vmatpush1.msra.mxu0 0.0
  %3335 = vmatprep.subr.mxu0 0.0
  %3336 = vmatpush1.msra.mxu0 0.0
  %3337 = vmatprep.subr.mxu0 0.0
  %3338 = vmatpush1.msra.mxu0 0.0
  %3339 = vmatprep.subr.mxu0 0.0
  %3340 = vmatpush1.msra.mxu0 0.0
  %3341 = vmatprep.subr.mxu0 0.0
  %3342 = vmatpush1.msra.mxu0 0.0
  %3343 = vmatprep.subr.mxu0 0.0
  %3344 = vmatpush1.msra.mxu0 0.0
  %3345 = vmatprep.subr.mxu0 0.0
  %3346 = vmatpush1.msra.mxu0 0.0
  %3347 = vmatprep.subr.mxu0 0.0
  %3348 = vmatpush1.msra.mxu0 0.0
  %3349 = vmatprep.subr.mxu0 0.0
  %3350 = vmatpush1.msra.mxu0 0.0
  %3351 = vmatprep.subr.mxu0 0.0
  %3352 = vmatpush1.msra.mxu0 0.0
  %3353 = vmatprep.subr.mxu0 %v2958
  %3354 = vmatpush1.msra.mxu0 %v2957
  %3355 = vmatprep.subr.mxu0 0.0
  %3356 = vmatpush2.msra.mxu0 0.0
  %3357 = vmatprep.subr.mxu0 0.0
  %3358 = vmatpush2.msra.mxu0 0.0
  %3359 = vmatprep.subr.mxu0 0.0
  %3360 = vmatpush2.msra.mxu0 0.0
  %3361 = vmatprep.subr.mxu0 0.0
  %3362 = vmatpush2.msra.mxu0 0.0
  %3363 = vmatprep.subr.mxu0 0.0
  %3364 = vmatpush2.msra.mxu0 0.0
  %3365 = vmatprep.subr.mxu0 0.0
  %3366 = vmatpush2.msra.mxu0 0.0
  %3367 = vmatprep.subr.mxu0 0.0
  %3368 = vmatpush2.msra.mxu0 0.0
  %3369 = vmatprep.subr.mxu0 0.0
  %3370 = vmatpush2.msra.mxu0 0.0
  %3371 = vmatprep.subr.mxu0 0.0
  %3372 = vmatpush2.msra.mxu0 0.0
  %3373 = vmatprep.subr.mxu0 0.0
  %3374 = vmatpush2.msra.mxu0 0.0
  %3375 = vmatprep.subr.mxu0 0.0
  %3376 = vmatpush2.msra.mxu0 0.0
  %3377 = vmatprep.subr.mxu0 0.0
  %3378 = vmatpush2.msra.mxu0 0.0
  %3379 = vmatprep.subr.mxu0 0.0
  %3380 = vmatpush2.msra.mxu0 0.0
  %3381 = vmatprep.subr.mxu0 0.0
  %3382 = vmatpush2.msra.mxu0 0.0
  %3383 = vmatprep.subr.mxu0 0.0
  %3384 = vmatpush2.msra.mxu0 0.0
  %3385 = vmatprep.subr.mxu0 0.0
  %3386 = vmatpush2.msra.mxu0 0.0
  %3387 = vmatprep.mubr.f32.mxu0 0.0
  %3388 = vmatmul.mubr.f32.gmra.mxu0 %v2966
  %v3389 = vpop.f32.mrf.mxu0
  %v3390 = vadd.f32 0.0, %v3389
  %v3391 = vpop.f32.mrf.mxu0
  %v3392 = vadd.f32 0.0, %v3391
  %3393 = vdwg.mxu0
  %3394 = vmatprep.subr.mxu0 0.0
  %3395 = vmatpush1.msra.mxu0 0.0
  %3396 = vmatprep.subr.mxu0 0.0
  %3397 = vmatpush1.msra.mxu0 0.0
  %3398 = vmatprep.subr.mxu0 0.0
  %3399 = vmatpush1.msra.mxu0 0.0
  %3400 = vmatprep.subr.mxu0 0.0
  %3401 = vmatpush1.msra.mxu0 0.0
  %3402 = vmatprep.subr.mxu0 0.0
  %3403 = vmatpush1.msra.mxu0 0.0
  %3404 = vmatprep.subr.mxu0 0.0
  %3405 = vmatpush1.msra.mxu0 0.0
  %3406 = vmatprep.subr.mxu0 0.0
  %3407 = vmatpush1.msra.mxu0 0.0
  %3408 = vmatprep.subr.mxu0 0.0
  %3409 = vmatpush1.msra.mxu0 0.0
  %3410 = vmatprep.subr.mxu0 0.0
  %3411 = vmatpush1.msra.mxu0 0.0
  %3412 = vmatprep.subr.mxu0 0.0
  %3413 = vmatpush1.msra.mxu0 0.0
  %3414 = vmatprep.subr.mxu0 0.0
  %3415 = vmatpush1.msra.mxu0 0.0
  %3416 = vmatprep.subr.mxu0 0.0
  %3417 = vmatpush1.msra.mxu0 0.0
  %3418 = vmatprep.subr.mxu0 0.0
  %3419 = vmatpush1.msra.mxu0 0.0
  %3420 = vmatprep.subr.mxu0 0.0
  %3421 = vmatpush1.msra.mxu0 0.0
  %3422 = vmatprep.subr.mxu0 0.0
  %3423 = vmatpush1.msra.mxu0 0.0
  %3424 = vmatprep.subr.mxu0 %v2960
  %3425 = vmatpush1.msra.mxu0 %v2959
  %3426 = vmatprep.subr.mxu0 0.0
  %3427 = vmatpush2.msra.mxu0 0.0
  %3428 = vmatprep.subr.mxu0 0.0
  %3429 = vmatpush2.msra.mxu0 0.0
  %3430 = vmatprep.subr.mxu0 0.0
  %3431 = vmatpush2.msra.mxu0 0.0
  %3432 = vmatprep.subr.mxu0 0.0
  %3433 = vmatpush2.msra.mxu0 0.0
  %3434 = vmatprep.subr.mxu0 0.0
  %3435 = vmatpush2.msra.mxu0 0.0
  %3436 = vmatprep.subr.mxu0 0.0
  %3437 = vmatpush2.msra.mxu0 0.0
  %3438 = vmatprep.subr.mxu0 0.0
  %3439 = vmatpush2.msra.mxu0 0.0
  %3440 = vmatprep.subr.mxu0 0.0
  %3441 = vmatpush2.msra.mxu0 0.0
  %3442 = vmatprep.subr.mxu0 0.0
  %3443 = vmatpush2.msra.mxu0 0.0
  %3444 = vmatprep.subr.mxu0 0.0
  %3445 = vmatpush2.msra.mxu0 0.0
  %3446 = vmatprep.subr.mxu0 0.0
  %3447 = vmatpush2.msra.mxu0 0.0
  %3448 = vmatprep.subr.mxu0 0.0
  %3449 = vmatpush2.msra.mxu0 0.0
  %3450 = vmatprep.subr.mxu0 0.0
  %3451 = vmatpush2.msra.mxu0 0.0
  %3452 = vmatprep.subr.mxu0 0.0
  %3453 = vmatpush2.msra.mxu0 0.0
  %3454 = vmatprep.subr.mxu0 0.0
  %3455 = vmatpush2.msra.mxu0 0.0
  %3456 = vmatprep.subr.mxu0 0.0
  %3457 = vmatpush2.msra.mxu0 0.0
  %3458 = vmatprep.mubr.f32.mxu0 0.0
  %3459 = vmatmul.mubr.f32.gmra.mxu0 %v2966
  %v3460 = vpop.f32.mrf.mxu0
  %v3461 = vadd.f32 0.0, %v3460
  %v3462 = vpop.f32.mrf.mxu0
  %v3463 = vadd.f32 0.0, %v3462
  %3464 = vdwg.mxu0
  %3465 = vmatprep.subr.mxu0 0.0
  %3466 = vmatpush1.msra.mxu0 0.0
  %3467 = vmatprep.subr.mxu0 0.0
  %3468 = vmatpush1.msra.mxu0 0.0
  %3469 = vmatprep.subr.mxu0 0.0
  %3470 = vmatpush1.msra.mxu0 0.0
  %3471 = vmatprep.subr.mxu0 0.0
  %3472 = vmatpush1.msra.mxu0 0.0
  %3473 = vmatprep.subr.mxu0 0.0
  %3474 = vmatpush1.msra.mxu0 0.0
  %3475 = vmatprep.subr.mxu0 0.0
  %3476 = vmatpush1.msra.mxu0 0.0
  %3477 = vmatprep.subr.mxu0 0.0
  %3478 = vmatpush1.msra.mxu0 0.0
  %3479 = vmatprep.subr.mxu0 0.0
  %3480 = vmatpush1.msra.mxu0 0.0
  %3481 = vmatprep.subr.mxu0 0.0
  %3482 = vmatpush1.msra.mxu0 0.0
  %3483 = vmatprep.subr.mxu0 0.0
  %3484 = vmatpush1.msra.mxu0 0.0
  %3485 = vmatprep.subr.mxu0 0.0
  %3486 = vmatpush1.msra.mxu0 0.0
  %3487 = vmatprep.subr.mxu0 0.0
  %3488 = vmatpush1.msra.mxu0 0.0
  %3489 = vmatprep.subr.mxu0 0.0
  %3490 = vmatpush1.msra.mxu0 0.0
  %3491 = vmatprep.subr.mxu0 0.0
  %3492 = vmatpush1.msra.mxu0 0.0
  %3493 = vmatprep.subr.mxu0 0.0
  %3494 = vmatpush1.msra.mxu0 0.0
  %3495 = vmatprep.subr.mxu0 %v2962
  %3496 = vmatpush1.msra.mxu0 %v2961
  %3497 = vmatprep.subr.mxu0 0.0
  %3498 = vmatpush2.msra.mxu0 0.0
  %3499 = vmatprep.subr.mxu0 0.0
  %3500 = vmatpush2.msra.mxu0 0.0
  %3501 = vmatprep.subr.mxu0 0.0
  %3502 = vmatpush2.msra.mxu0 0.0
  %3503 = vmatprep.subr.mxu0 0.0
  %3504 = vmatpush2.msra.mxu0 0.0
  %3505 = vmatprep.subr.mxu0 0.0
  %3506 = vmatpush2.msra.mxu0 0.0
  %3507 = vmatprep.subr.mxu0 0.0
  %3508 = vmatpush2.msra.mxu0 0.0
  %3509 = vmatprep.subr.mxu0 0.0
  %3510 = vmatpush2.msra.mxu0 0.0
  %3511 = vmatprep.subr.mxu0 0.0
  %3512 = vmatpush2.msra.mxu0 0.0
  %3513 = vmatprep.subr.mxu0 0.0
  %3514 = vmatpush2.msra.mxu0 0.0
  %3515 = vmatprep.subr.mxu0 0.0
  %3516 = vmatpush2.msra.mxu0 0.0
  %3517 = vmatprep.subr.mxu0 0.0
  %3518 = vmatpush2.msra.mxu0 0.0
  %3519 = vmatprep.subr.mxu0 0.0
  %3520 = vmatpush2.msra.mxu0 0.0
  %3521 = vmatprep.subr.mxu0 0.0
  %3522 = vmatpush2.msra.mxu0 0.0
  %3523 = vmatprep.subr.mxu0 0.0
  %3524 = vmatpush2.msra.mxu0 0.0
  %3525 = vmatprep.subr.mxu0 0.0
  %3526 = vmatpush2.msra.mxu0 0.0
  %3527 = vmatprep.subr.mxu0 0.0
  %3528 = vmatpush2.msra.mxu0 0.0
  %3529 = vmatprep.mubr.f32.mxu0 0.0
  %3530 = vmatmul.mubr.f32.gmra.mxu0 %v2966
  %v3531 = vpop.f32.mrf.mxu0
  %v3532 = vadd.f32 0.0, %v3531
  %v3533 = vpop.f32.mrf.mxu0
  %v3534 = vadd.f32 0.0, %v3533
  %3535 = vdwg.mxu0
  %v3536 = vadd.f32 %v2792, %v3035
  %v3537 = vadd.f32 %v2793, %v3037
  %v3538 = vadd.f32 %v2794, %v3106
  %v3539 = vadd.f32 %v2795, %v3108
  %v3540 = vadd.f32 %v2796, %v3177
  %v3541 = vadd.f32 %v2797, %v3179
  %v3542 = vadd.f32 %v2798, %v3248
  %v3543 = vadd.f32 %v2799, %v3250
  %v3544 = vadd.f32 %v2800, %v3319
  %v3545 = vadd.f32 %v2801, %v3321
  %v3546 = vadd.f32 %v2802, %v3390
  %v3547 = vadd.f32 %v2803, %v3392
  %v3548 = vadd.f32 %v2804, %v3461
  %v3549 = vadd.f32 %v2805, %v3463
  %v3550 = vadd.f32 %v2806, %v3532
  %v3551 = vadd.f32 %v2807, %v3534
  %3552 = vrot.lane.b32.xlu0 %v743, 127
  %v3553 = vpop.permute.xlu0 %3552
  %3554 = vrot.lane.b32.xlu0 %v744, 127
  %v3555 = vpop.permute.xlu0 %3554
  %3556 = vrot.lane.b32.xlu0 %v745, 127
  %v3557 = vpop.permute.xlu0 %3556
  %3558 = vrot.lane.b32.xlu0 %v746, 127
  %v3559 = vpop.permute.xlu0 %3558
  %3560 = vrot.lane.b32.xlu0 %v747, 127
  %v3561 = vpop.permute.xlu0 %3560
  %3562 = vrot.lane.b32.xlu0 %v748, 127
  %v3563 = vpop.permute.xlu0 %3562
  %3564 = vrot.lane.b32.xlu0 %v749, 127
  %v3565 = vpop.permute.xlu0 %3564
  %3566 = vrot.lane.b32.xlu0 %v750, 127
  %v3567 = vpop.permute.xlu0 %3566
  %3568 = vrot.lane.b32.xlu0 %v751, 127
  %v3569 = vpop.permute.xlu0 %3568
  %3570 = vrot.lane.b32.xlu0 %v752, 127
  %v3571 = vpop.permute.xlu0 %3570
  %3572 = vrot.lane.b32.xlu0 %v753, 127
  %v3573 = vpop.permute.xlu0 %3572
  %3574 = vrot.lane.b32.xlu0 %v754, 127
  %v3575 = vpop.permute.xlu0 %3574
  %3576 = vrot.lane.b32.xlu0 %v755, 127
  %v3577 = vpop.permute.xlu0 %3576
  %3578 = vrot.lane.b32.xlu0 %v756, 127
  %v3579 = vpop.permute.xlu0 %3578
  %3580 = vrot.lane.b32.xlu0 %v757, 127
  %v3581 = vpop.permute.xlu0 %3580
  %3582 = vrot.lane.b32.xlu0 %v758, 127
  %v3583 = vpop.permute.xlu0 %3582
  %vm3584 = vcmp.lt.s32.totalorder %v796, 127
  %v3585 = vsel %vm3584, %v3581, %v3583
  %v3586 = vsel %vm3584, %v3579, %v3581
  %v3587 = vsel %vm3584, %v3577, %v3579
  %v3588 = vsel %vm3584, %v3575, %v3577
  %v3589 = vsel %vm3584, %v3573, %v3575
  %v3590 = vsel %vm3584, %v3571, %v3573
  %v3591 = vsel %vm3584, %v3569, %v3571
  %v3592 = vsel %vm3584, %v3567, %v3569
  %v3593 = vsel %vm3584, %v3565, %v3567
  %v3594 = vsel %vm3584, %v3563, %v3565
  %v3595 = vsel %vm3584, %v3561, %v3563
  %v3596 = vsel %vm3584, %v3559, %v3561
  %v3597 = vsel %vm3584, %v3557, %v3559
  %v3598 = vsel %vm3584, %v3555, %v3557
  %v3599 = vsel %vm3584, %v3553, %v3555
  %v3600 = vsel %vm3584, %v3583, %v3553
  %v3601 = vadd.s32 %v759, 1
  %v3602 = vadd.s32 %v760, 1
  %vm3603 = vcmp.ge.s32.totalorder %v3601, 0
  %vm3604 = vcmp.ge.s32.totalorder %v3602, 0
  %vm3605 = vcmp.lt.s32.totalorder %v3601, 256
  %vm3606 = vcmp.lt.s32.totalorder %v3602, 256
  %vm3607 = vmand %vm3603, %vm3605
  %vm3608 = vmand %vm3604, %vm3606
  %v3609 = vsel %vm3607, 1, 0
  %v3610 = vsel %vm3608, 1, 0
  %v3611 = vlaneseq
  %v3612 = vshrl.u32 %v3611, 7
  %v3613 = vsub.s32 0, %v3612
  %v3614 = vrot.slane %v3609, %v3613
  %v3615 = vlaneseq
  %v3616 = vshrl.u32 %v3615, 7
  %v3617 = vsub.s32 1, %v3616
  %v3618 = vrot.slane %v3609, %v3617
  %v3619 = vlaneseq
  %v3620 = vshrl.u32 %v3619, 7
  %v3621 = vsub.s32 2, %v3620
  %v3622 = vrot.slane %v3609, %v3621
  %v3623 = vlaneseq
  %v3624 = vshrl.u32 %v3623, 7
  %v3625 = vsub.s32 3, %v3624
  %v3626 = vrot.slane %v3609, %v3625
  %v3627 = vlaneseq
  %v3628 = vshrl.u32 %v3627, 7
  %v3629 = vsub.s32 4, %v3628
  %v3630 = vrot.slane %v3609, %v3629
  %v3631 = vlaneseq
  %v3632 = vshrl.u32 %v3631, 7
  %v3633 = vsub.s32 5, %v3632
  %v3634 = vrot.slane %v3609, %v3633
  %v3635 = vlaneseq
  %v3636 = vshrl.u32 %v3635, 7
  %v3637 = vsub.s32 6, %v3636
  %v3638 = vrot.slane %v3609, %v3637
  %v3639 = vlaneseq
  %v3640 = vshrl.u32 %v3639, 7
  %v3641 = vsub.s32 7, %v3640
  %v3642 = vrot.slane %v3609, %v3641
  %v3643 = vlaneseq
  %v3644 = vshrl.u32 %v3643, 7
  %v3645 = vsub.s32 0, %v3644
  %v3646 = vrot.slane %v3610, %v3645
  %v3647 = vlaneseq
  %v3648 = vshrl.u32 %v3647, 7
  %v3649 = vsub.s32 1, %v3648
  %v3650 = vrot.slane %v3610, %v3649
  %v3651 = vlaneseq
  %v3652 = vshrl.u32 %v3651, 7
  %v3653 = vsub.s32 2, %v3652
  %v3654 = vrot.slane %v3610, %v3653
  %v3655 = vlaneseq
  %v3656 = vshrl.u32 %v3655, 7
  %v3657 = vsub.s32 3, %v3656
  %v3658 = vrot.slane %v3610, %v3657
  %v3659 = vlaneseq
  %v3660 = vshrl.u32 %v3659, 7
  %v3661 = vsub.s32 4, %v3660
  %v3662 = vrot.slane %v3610, %v3661
  %v3663 = vlaneseq
  %v3664 = vshrl.u32 %v3663, 7
  %v3665 = vsub.s32 5, %v3664
  %v3666 = vrot.slane %v3610, %v3665
  %v3667 = vlaneseq
  %v3668 = vshrl.u32 %v3667, 7
  %v3669 = vsub.s32 6, %v3668
  %v3670 = vrot.slane %v3610, %v3669
  %v3671 = vlaneseq
  %v3672 = vshrl.u32 %v3671, 7
  %v3673 = vsub.s32 7, %v3672
  %v3674 = vrot.slane %v3610, %v3673
  %vm3675 = vcmp.eq.s32.totalorder %v3614, 1
  %vm3676 = vcmp.eq.s32.totalorder %v3618, 1
  %vm3677 = vcmp.eq.s32.totalorder %v3622, 1
  %vm3678 = vcmp.eq.s32.totalorder %v3626, 1
  %vm3679 = vcmp.eq.s32.totalorder %v3630, 1
  %vm3680 = vcmp.eq.s32.totalorder %v3634, 1
  %vm3681 = vcmp.eq.s32.totalorder %v3638, 1
  %vm3682 = vcmp.eq.s32.totalorder %v3642, 1
  %vm3683 = vcmp.eq.s32.totalorder %v3646, 1
  %vm3684 = vcmp.eq.s32.totalorder %v3650, 1
  %vm3685 = vcmp.eq.s32.totalorder %v3654, 1
  %vm3686 = vcmp.eq.s32.totalorder %v3658, 1
  %vm3687 = vcmp.eq.s32.totalorder %v3662, 1
  %vm3688 = vcmp.eq.s32.totalorder %v3666, 1
  %vm3689 = vcmp.eq.s32.totalorder %v3670, 1
  %vm3690 = vcmp.eq.s32.totalorder %v3674, 1
  %v3691 = vsel %vm3675, %v3599, 0.0
  %v3692 = vsel %vm3676, %v3598, 0.0
  %v3693 = vsel %vm3677, %v3597, 0.0
  %v3694 = vsel %vm3678, %v3596, 0.0
  %v3695 = vsel %vm3679, %v3595, 0.0
  %v3696 = vsel %vm3680, %v3594, 0.0
  %v3697 = vsel %vm3681, %v3593, 0.0
  %v3698 = vsel %vm3682, %v3592, 0.0
  %v3699 = vsel %vm3683, %v3591, 0.0
  %v3700 = vsel %vm3684, %v3590, 0.0
  %v3701 = vsel %vm3685, %v3589, 0.0
  %v3702 = vsel %vm3686, %v3588, 0.0
  %v3703 = vsel %vm3687, %v3587, 0.0
  %v3704 = vsel %vm3688, %v3586, 0.0
  %v3705 = vsel %vm3689, %v3585, 0.0
  %v3706 = vsel %vm3690, %v3600, 0.0
  %s3707 = scalar_lea.vmem %s5, 32
  %v3708 = vld [vmem:[%s3707] sm:$0xff]
  %v3710 = vsel %vm921, %v3708, 0
  %3712 = vmatprep.subr.mxu0 0.0
  %3713 = vmatpush1.msra.mxu0 0.0
  %3714 = vmatprep.subr.mxu0 0.0
  %3715 = vmatpush1.msra.mxu0 0.0
  %3716 = vmatprep.subr.mxu0 0.0
  %3717 = vmatpush1.msra.mxu0 0.0
  %3718 = vmatprep.subr.mxu0 0.0
  %3719 = vmatpush1.msra.mxu0 0.0
  %3720 = vmatprep.subr.mxu0 0.0
  %3721 = vmatpush1.msra.mxu0 0.0
  %3722 = vmatprep.subr.mxu0 0.0
  %3723 = vmatpush1.msra.mxu0 0.0
  %3724 = vmatprep.subr.mxu0 0.0
  %3725 = vmatpush1.msra.mxu0 0.0
  %3726 = vmatprep.subr.mxu0 0.0
  %3727 = vmatpush1.msra.mxu0 0.0
  %3728 = vmatprep.subr.mxu0 0.0
  %3729 = vmatpush1.msra.mxu0 0.0
  %3730 = vmatprep.subr.mxu0 0.0
  %3731 = vmatpush1.msra.mxu0 0.0
  %3732 = vmatprep.subr.mxu0 0.0
  %3733 = vmatpush1.msra.mxu0 0.0
  %3734 = vmatprep.subr.mxu0 0.0
  %3735 = vmatpush1.msra.mxu0 0.0
  %3736 = vmatprep.subr.mxu0 0.0
  %3737 = vmatpush1.msra.mxu0 0.0
  %3738 = vmatprep.subr.mxu0 0.0
  %3739 = vmatpush1.msra.mxu0 0.0
  %3740 = vmatprep.subr.mxu0 0.0
  %3741 = vmatpush1.msra.mxu0 0.0
  %3742 = vmatprep.subr.mxu0 %v3692
  %3743 = vmatpush1.msra.mxu0 %v3691
  %3744 = vmatprep.subr.mxu0 0.0
  %3745 = vmatpush2.msra.mxu0 0.0
  %3746 = vmatprep.subr.mxu0 0.0
  %3747 = vmatpush2.msra.mxu0 0.0
  %3748 = vmatprep.subr.mxu0 0.0
  %3749 = vmatpush2.msra.mxu0 0.0
  %3750 = vmatprep.subr.mxu0 0.0
  %3751 = vmatpush2.msra.mxu0 0.0
  %3752 = vmatprep.subr.mxu0 0.0
  %3753 = vmatpush2.msra.mxu0 0.0
  %3754 = vmatprep.subr.mxu0 0.0
  %3755 = vmatpush2.msra.mxu0 0.0
  %3756 = vmatprep.subr.mxu0 0.0
  %3757 = vmatpush2.msra.mxu0 0.0
  %3758 = vmatprep.subr.mxu0 0.0
  %3759 = vmatpush2.msra.mxu0 0.0
  %3760 = vmatprep.subr.mxu0 0.0
  %3761 = vmatpush2.msra.mxu0 0.0
  %3762 = vmatprep.subr.mxu0 0.0
  %3763 = vmatpush2.msra.mxu0 0.0
  %3764 = vmatprep.subr.mxu0 0.0
  %3765 = vmatpush2.msra.mxu0 0.0
  %3766 = vmatprep.subr.mxu0 0.0
  %3767 = vmatpush2.msra.mxu0 0.0
  %3768 = vmatprep.subr.mxu0 0.0
  %3769 = vmatpush2.msra.mxu0 0.0
  %3770 = vmatprep.subr.mxu0 0.0
  %3771 = vmatpush2.msra.mxu0 0.0
  %3772 = vmatprep.subr.mxu0 0.0
  %3773 = vmatpush2.msra.mxu0 0.0
  %3774 = vmatprep.subr.mxu0 0.0
  %3775 = vmatpush2.msra.mxu0 0.0
  %3776 = vmatprep.mubr.f32.mxu0 0.0
  %3777 = vmatmul.mubr.f32.gmra.mxu0 %v3710
  %v3778 = vpop.f32.mrf.mxu0
  %v3779 = vadd.f32 0.0, %v3778
  %v3780 = vpop.f32.mrf.mxu0
  %v3781 = vadd.f32 0.0, %v3780
  %3782 = vdwg.mxu0
  %3783 = vmatprep.subr.mxu0 0.0
  %3784 = vmatpush1.msra.mxu0 0.0
  %3785 = vmatprep.subr.mxu0 0.0
  %3786 = vmatpush1.msra.mxu0 0.0
  %3787 = vmatprep.subr.mxu0 0.0
  %3788 = vmatpush1.msra.mxu0 0.0
  %3789 = vmatprep.subr.mxu0 0.0
  %3790 = vmatpush1.msra.mxu0 0.0
  %3791 = vmatprep.subr.mxu0 0.0
  %3792 = vmatpush1.msra.mxu0 0.0
  %3793 = vmatprep.subr.mxu0 0.0
  %3794 = vmatpush1.msra.mxu0 0.0
  %3795 = vmatprep.subr.mxu0 0.0
  %3796 = vmatpush1.msra.mxu0 0.0
  %3797 = vmatprep.subr.mxu0 0.0
  %3798 = vmatpush1.msra.mxu0 0.0
  %3799 = vmatprep.subr.mxu0 0.0
  %3800 = vmatpush1.msra.mxu0 0.0
  %3801 = vmatprep.subr.mxu0 0.0
  %3802 = vmatpush1.msra.mxu0 0.0
  %3803 = vmatprep.subr.mxu0 0.0
  %3804 = vmatpush1.msra.mxu0 0.0
  %3805 = vmatprep.subr.mxu0 0.0
  %3806 = vmatpush1.msra.mxu0 0.0
  %3807 = vmatprep.subr.mxu0 0.0
  %3808 = vmatpush1.msra.mxu0 0.0
  %3809 = vmatprep.subr.mxu0 0.0
  %3810 = vmatpush1.msra.mxu0 0.0
  %3811 = vmatprep.subr.mxu0 0.0
  %3812 = vmatpush1.msra.mxu0 0.0
  %3813 = vmatprep.subr.mxu0 %v3694
  %3814 = vmatpush1.msra.mxu0 %v3693
  %3815 = vmatprep.subr.mxu0 0.0
  %3816 = vmatpush2.msra.mxu0 0.0
  %3817 = vmatprep.subr.mxu0 0.0
  %3818 = vmatpush2.msra.mxu0 0.0
  %3819 = vmatprep.subr.mxu0 0.0
  %3820 = vmatpush2.msra.mxu0 0.0
  %3821 = vmatprep.subr.mxu0 0.0
  %3822 = vmatpush2.msra.mxu0 0.0
  %3823 = vmatprep.subr.mxu0 0.0
  %3824 = vmatpush2.msra.mxu0 0.0
  %3825 = vmatprep.subr.mxu0 0.0
  %3826 = vmatpush2.msra.mxu0 0.0
  %3827 = vmatprep.subr.mxu0 0.0
  %3828 = vmatpush2.msra.mxu0 0.0
  %3829 = vmatprep.subr.mxu0 0.0
  %3830 = vmatpush2.msra.mxu0 0.0
  %3831 = vmatprep.subr.mxu0 0.0
  %3832 = vmatpush2.msra.mxu0 0.0
  %3833 = vmatprep.subr.mxu0 0.0
  %3834 = vmatpush2.msra.mxu0 0.0
  %3835 = vmatprep.subr.mxu0 0.0
  %3836 = vmatpush2.msra.mxu0 0.0
  %3837 = vmatprep.subr.mxu0 0.0
  %3838 = vmatpush2.msra.mxu0 0.0
  %3839 = vmatprep.subr.mxu0 0.0
  %3840 = vmatpush2.msra.mxu0 0.0
  %3841 = vmatprep.subr.mxu0 0.0
  %3842 = vmatpush2.msra.mxu0 0.0
  %3843 = vmatprep.subr.mxu0 0.0
  %3844 = vmatpush2.msra.mxu0 0.0
  %3845 = vmatprep.subr.mxu0 0.0
  %3846 = vmatpush2.msra.mxu0 0.0
  %3847 = vmatprep.mubr.f32.mxu0 0.0
  %3848 = vmatmul.mubr.f32.gmra.mxu0 %v3710
  %v3849 = vpop.f32.mrf.mxu0
  %v3850 = vadd.f32 0.0, %v3849
  %v3851 = vpop.f32.mrf.mxu0
  %v3852 = vadd.f32 0.0, %v3851
  %3853 = vdwg.mxu0
  %3854 = vmatprep.subr.mxu0 0.0
  %3855 = vmatpush1.msra.mxu0 0.0
  %3856 = vmatprep.subr.mxu0 0.0
  %3857 = vmatpush1.msra.mxu0 0.0
  %3858 = vmatprep.subr.mxu0 0.0
  %3859 = vmatpush1.msra.mxu0 0.0
  %3860 = vmatprep.subr.mxu0 0.0
  %3861 = vmatpush1.msra.mxu0 0.0
  %3862 = vmatprep.subr.mxu0 0.0
  %3863 = vmatpush1.msra.mxu0 0.0
  %3864 = vmatprep.subr.mxu0 0.0
  %3865 = vmatpush1.msra.mxu0 0.0
  %3866 = vmatprep.subr.mxu0 0.0
  %3867 = vmatpush1.msra.mxu0 0.0
  %3868 = vmatprep.subr.mxu0 0.0
  %3869 = vmatpush1.msra.mxu0 0.0
  %3870 = vmatprep.subr.mxu0 0.0
  %3871 = vmatpush1.msra.mxu0 0.0
  %3872 = vmatprep.subr.mxu0 0.0
  %3873 = vmatpush1.msra.mxu0 0.0
  %3874 = vmatprep.subr.mxu0 0.0
  %3875 = vmatpush1.msra.mxu0 0.0
  %3876 = vmatprep.subr.mxu0 0.0
  %3877 = vmatpush1.msra.mxu0 0.0
  %3878 = vmatprep.subr.mxu0 0.0
  %3879 = vmatpush1.msra.mxu0 0.0
  %3880 = vmatprep.subr.mxu0 0.0
  %3881 = vmatpush1.msra.mxu0 0.0
  %3882 = vmatprep.subr.mxu0 0.0
  %3883 = vmatpush1.msra.mxu0 0.0
  %3884 = vmatprep.subr.mxu0 %v3696
  %3885 = vmatpush1.msra.mxu0 %v3695
  %3886 = vmatprep.subr.mxu0 0.0
  %3887 = vmatpush2.msra.mxu0 0.0
  %3888 = vmatprep.subr.mxu0 0.0
  %3889 = vmatpush2.msra.mxu0 0.0
  %3890 = vmatprep.subr.mxu0 0.0
  %3891 = vmatpush2.msra.mxu0 0.0
  %3892 = vmatprep.subr.mxu0 0.0
  %3893 = vmatpush2.msra.mxu0 0.0
  %3894 = vmatprep.subr.mxu0 0.0
  %3895 = vmatpush2.msra.mxu0 0.0
  %3896 = vmatprep.subr.mxu0 0.0
  %3897 = vmatpush2.msra.mxu0 0.0
  %3898 = vmatprep.subr.mxu0 0.0
  %3899 = vmatpush2.msra.mxu0 0.0
  %3900 = vmatprep.subr.mxu0 0.0
  %3901 = vmatpush2.msra.mxu0 0.0
  %3902 = vmatprep.subr.mxu0 0.0
  %3903 = vmatpush2.msra.mxu0 0.0
  %3904 = vmatprep.subr.mxu0 0.0
  %3905 = vmatpush2.msra.mxu0 0.0
  %3906 = vmatprep.subr.mxu0 0.0
  %3907 = vmatpush2.msra.mxu0 0.0
  %3908 = vmatprep.subr.mxu0 0.0
  %3909 = vmatpush2.msra.mxu0 0.0
  %3910 = vmatprep.subr.mxu0 0.0
  %3911 = vmatpush2.msra.mxu0 0.0
  %3912 = vmatprep.subr.mxu0 0.0
  %3913 = vmatpush2.msra.mxu0 0.0
  %3914 = vmatprep.subr.mxu0 0.0
  %3915 = vmatpush2.msra.mxu0 0.0
  %3916 = vmatprep.subr.mxu0 0.0
  %3917 = vmatpush2.msra.mxu0 0.0
  %3918 = vmatprep.mubr.f32.mxu0 0.0
  %3919 = vmatmul.mubr.f32.gmra.mxu0 %v3710
  %v3920 = vpop.f32.mrf.mxu0
  %v3921 = vadd.f32 0.0, %v3920
  %v3922 = vpop.f32.mrf.mxu0
  %v3923 = vadd.f32 0.0, %v3922
  %3924 = vdwg.mxu0
  %3925 = vmatprep.subr.mxu0 0.0
  %3926 = vmatpush1.msra.mxu0 0.0
  %3927 = vmatprep.subr.mxu0 0.0
  %3928 = vmatpush1.msra.mxu0 0.0
  %3929 = vmatprep.subr.mxu0 0.0
  %3930 = vmatpush1.msra.mxu0 0.0
  %3931 = vmatprep.subr.mxu0 0.0
  %3932 = vmatpush1.msra.mxu0 0.0
  %3933 = vmatprep.subr.mxu0 0.0
  %3934 = vmatpush1.msra.mxu0 0.0
  %3935 = vmatprep.subr.mxu0 0.0
  %3936 = vmatpush1.msra.mxu0 0.0
  %3937 = vmatprep.subr.mxu0 0.0
  %3938 = vmatpush1.msra.mxu0 0.0
  %3939 = vmatprep.subr.mxu0 0.0
  %3940 = vmatpush1.msra.mxu0 0.0
  %3941 = vmatprep.subr.mxu0 0.0
  %3942 = vmatpush1.msra.mxu0 0.0
  %3943 = vmatprep.subr.mxu0 0.0
  %3944 = vmatpush1.msra.mxu0 0.0
  %3945 = vmatprep.subr.mxu0 0.0
  %3946 = vmatpush1.msra.mxu0 0.0
  %3947 = vmatprep.subr.mxu0 0.0
  %3948 = vmatpush1.msra.mxu0 0.0
  %3949 = vmatprep.subr.mxu0 0.0
  %3950 = vmatpush1.msra.mxu0 0.0
  %3951 = vmatprep.subr.mxu0 0.0
  %3952 = vmatpush1.msra.mxu0 0.0
  %3953 = vmatprep.subr.mxu0 0.0
  %3954 = vmatpush1.msra.mxu0 0.0
  %3955 = vmatprep.subr.mxu0 %v3698
  %3956 = vmatpush1.msra.mxu0 %v3697
  %3957 = vmatprep.subr.mxu0 0.0
  %3958 = vmatpush2.msra.mxu0 0.0
  %3959 = vmatprep.subr.mxu0 0.0
  %3960 = vmatpush2.msra.mxu0 0.0
  %3961 = vmatprep.subr.mxu0 0.0
  %3962 = vmatpush2.msra.mxu0 0.0
  %3963 = vmatprep.subr.mxu0 0.0
  %3964 = vmatpush2.msra.mxu0 0.0
  %3965 = vmatprep.subr.mxu0 0.0
  %3966 = vmatpush2.msra.mxu0 0.0
  %3967 = vmatprep.subr.mxu0 0.0
  %3968 = vmatpush2.msra.mxu0 0.0
  %3969 = vmatprep.subr.mxu0 0.0
  %3970 = vmatpush2.msra.mxu0 0.0
  %3971 = vmatprep.subr.mxu0 0.0
  %3972 = vmatpush2.msra.mxu0 0.0
  %3973 = vmatprep.subr.mxu0 0.0
  %3974 = vmatpush2.msra.mxu0 0.0
  %3975 = vmatprep.subr.mxu0 0.0
  %3976 = vmatpush2.msra.mxu0 0.0
  %3977 = vmatprep.subr.mxu0 0.0
  %3978 = vmatpush2.msra.mxu0 0.0
  %3979 = vmatprep.subr.mxu0 0.0
  %3980 = vmatpush2.msra.mxu0 0.0
  %3981 = vmatprep.subr.mxu0 0.0
  %3982 = vmatpush2.msra.mxu0 0.0
  %3983 = vmatprep.subr.mxu0 0.0
  %3984 = vmatpush2.msra.mxu0 0.0
  %3985 = vmatprep.subr.mxu0 0.0
  %3986 = vmatpush2.msra.mxu0 0.0
  %3987 = vmatprep.subr.mxu0 0.0
  %3988 = vmatpush2.msra.mxu0 0.0
  %3989 = vmatprep.mubr.f32.mxu0 0.0
  %3990 = vmatmul.mubr.f32.gmra.mxu0 %v3710
  %v3991 = vpop.f32.mrf.mxu0
  %v3992 = vadd.f32 0.0, %v3991
  %v3993 = vpop.f32.mrf.mxu0
  %v3994 = vadd.f32 0.0, %v3993
  %3995 = vdwg.mxu0
  %3996 = vmatprep.subr.mxu0 0.0
  %3997 = vmatpush1.msra.mxu0 0.0
  %3998 = vmatprep.subr.mxu0 0.0
  %3999 = vmatpush1.msra.mxu0 0.0
  %4000 = vmatprep.subr.mxu0 0.0
  %4001 = vmatpush1.msra.mxu0 0.0
  %4002 = vmatprep.subr.mxu0 0.0
  %4003 = vmatpush1.msra.mxu0 0.0
  %4004 = vmatprep.subr.mxu0 0.0
  %4005 = vmatpush1.msra.mxu0 0.0
  %4006 = vmatprep.subr.mxu0 0.0
  %4007 = vmatpush1.msra.mxu0 0.0
  %4008 = vmatprep.subr.mxu0 0.0
  %4009 = vmatpush1.msra.mxu0 0.0
  %4010 = vmatprep.subr.mxu0 0.0
  %4011 = vmatpush1.msra.mxu0 0.0
  %4012 = vmatprep.subr.mxu0 0.0
  %4013 = vmatpush1.msra.mxu0 0.0
  %4014 = vmatprep.subr.mxu0 0.0
  %4015 = vmatpush1.msra.mxu0 0.0
  %4016 = vmatprep.subr.mxu0 0.0
  %4017 = vmatpush1.msra.mxu0 0.0
  %4018 = vmatprep.subr.mxu0 0.0
  %4019 = vmatpush1.msra.mxu0 0.0
  %4020 = vmatprep.subr.mxu0 0.0
  %4021 = vmatpush1.msra.mxu0 0.0
  %4022 = vmatprep.subr.mxu0 0.0
  %4023 = vmatpush1.msra.mxu0 0.0
  %4024 = vmatprep.subr.mxu0 0.0
  %4025 = vmatpush1.msra.mxu0 0.0
  %4026 = vmatprep.subr.mxu0 %v3700
  %4027 = vmatpush1.msra.mxu0 %v3699
  %4028 = vmatprep.subr.mxu0 0.0
  %4029 = vmatpush2.msra.mxu0 0.0
  %4030 = vmatprep.subr.mxu0 0.0
  %4031 = vmatpush2.msra.mxu0 0.0
  %4032 = vmatprep.subr.mxu0 0.0
  %4033 = vmatpush2.msra.mxu0 0.0
  %4034 = vmatprep.subr.mxu0 0.0
  %4035 = vmatpush2.msra.mxu0 0.0
  %4036 = vmatprep.subr.mxu0 0.0
  %4037 = vmatpush2.msra.mxu0 0.0
  %4038 = vmatprep.subr.mxu0 0.0
  %4039 = vmatpush2.msra.mxu0 0.0
  %4040 = vmatprep.subr.mxu0 0.0
  %4041 = vmatpush2.msra.mxu0 0.0
  %4042 = vmatprep.subr.mxu0 0.0
  %4043 = vmatpush2.msra.mxu0 0.0
  %4044 = vmatprep.subr.mxu0 0.0
  %4045 = vmatpush2.msra.mxu0 0.0
  %4046 = vmatprep.subr.mxu0 0.0
  %4047 = vmatpush2.msra.mxu0 0.0
  %4048 = vmatprep.subr.mxu0 0.0
  %4049 = vmatpush2.msra.mxu0 0.0
  %4050 = vmatprep.subr.mxu0 0.0
  %4051 = vmatpush2.msra.mxu0 0.0
  %4052 = vmatprep.subr.mxu0 0.0
  %4053 = vmatpush2.msra.mxu0 0.0
  %4054 = vmatprep.subr.mxu0 0.0
  %4055 = vmatpush2.msra.mxu0 0.0
  %4056 = vmatprep.subr.mxu0 0.0
  %4057 = vmatpush2.msra.mxu0 0.0
  %4058 = vmatprep.subr.mxu0 0.0
  %4059 = vmatpush2.msra.mxu0 0.0
  %4060 = vmatprep.mubr.f32.mxu0 0.0
  %4061 = vmatmul.mubr.f32.gmra.mxu0 %v3710
  %v4062 = vpop.f32.mrf.mxu0
  %v4063 = vadd.f32 0.0, %v4062
  %v4064 = vpop.f32.mrf.mxu0
  %v4065 = vadd.f32 0.0, %v4064
  %4066 = vdwg.mxu0
  %4067 = vmatprep.subr.mxu0 0.0
  %4068 = vmatpush1.msra.mxu0 0.0
  %4069 = vmatprep.subr.mxu0 0.0
  %4070 = vmatpush1.msra.mxu0 0.0
  %4071 = vmatprep.subr.mxu0 0.0
  %4072 = vmatpush1.msra.mxu0 0.0
  %4073 = vmatprep.subr.mxu0 0.0
  %4074 = vmatpush1.msra.mxu0 0.0
  %4075 = vmatprep.subr.mxu0 0.0
  %4076 = vmatpush1.msra.mxu0 0.0
  %4077 = vmatprep.subr.mxu0 0.0
  %4078 = vmatpush1.msra.mxu0 0.0
  %4079 = vmatprep.subr.mxu0 0.0
  %4080 = vmatpush1.msra.mxu0 0.0
  %4081 = vmatprep.subr.mxu0 0.0
  %4082 = vmatpush1.msra.mxu0 0.0
  %4083 = vmatprep.subr.mxu0 0.0
  %4084 = vmatpush1.msra.mxu0 0.0
  %4085 = vmatprep.subr.mxu0 0.0
  %4086 = vmatpush1.msra.mxu0 0.0
  %4087 = vmatprep.subr.mxu0 0.0
  %4088 = vmatpush1.msra.mxu0 0.0
  %4089 = vmatprep.subr.mxu0 0.0
  %4090 = vmatpush1.msra.mxu0 0.0
  %4091 = vmatprep.subr.mxu0 0.0
  %4092 = vmatpush1.msra.mxu0 0.0
  %4093 = vmatprep.subr.mxu0 0.0
  %4094 = vmatpush1.msra.mxu0 0.0
  %4095 = vmatprep.subr.mxu0 0.0
  %4096 = vmatpush1.msra.mxu0 0.0
  %4097 = vmatprep.subr.mxu0 %v3702
  %4098 = vmatpush1.msra.mxu0 %v3701
  %4099 = vmatprep.subr.mxu0 0.0
  %4100 = vmatpush2.msra.mxu0 0.0
  %4101 = vmatprep.subr.mxu0 0.0
  %4102 = vmatpush2.msra.mxu0 0.0
  %4103 = vmatprep.subr.mxu0 0.0
  %4104 = vmatpush2.msra.mxu0 0.0
  %4105 = vmatprep.subr.mxu0 0.0
  %4106 = vmatpush2.msra.mxu0 0.0
  %4107 = vmatprep.subr.mxu0 0.0
  %4108 = vmatpush2.msra.mxu0 0.0
  %4109 = vmatprep.subr.mxu0 0.0
  %4110 = vmatpush2.msra.mxu0 0.0
  %4111 = vmatprep.subr.mxu0 0.0
  %4112 = vmatpush2.msra.mxu0 0.0
  %4113 = vmatprep.subr.mxu0 0.0
  %4114 = vmatpush2.msra.mxu0 0.0
  %4115 = vmatprep.subr.mxu0 0.0
  %4116 = vmatpush2.msra.mxu0 0.0
  %4117 = vmatprep.subr.mxu0 0.0
  %4118 = vmatpush2.msra.mxu0 0.0
  %4119 = vmatprep.subr.mxu0 0.0
  %4120 = vmatpush2.msra.mxu0 0.0
  %4121 = vmatprep.subr.mxu0 0.0
  %4122 = vmatpush2.msra.mxu0 0.0
  %4123 = vmatprep.subr.mxu0 0.0
  %4124 = vmatpush2.msra.mxu0 0.0
  %4125 = vmatprep.subr.mxu0 0.0
  %4126 = vmatpush2.msra.mxu0 0.0
  %4127 = vmatprep.subr.mxu0 0.0
  %4128 = vmatpush2.msra.mxu0 0.0
  %4129 = vmatprep.subr.mxu0 0.0
  %4130 = vmatpush2.msra.mxu0 0.0
  %4131 = vmatprep.mubr.f32.mxu0 0.0
  %4132 = vmatmul.mubr.f32.gmra.mxu0 %v3710
  %v4133 = vpop.f32.mrf.mxu0
  %v4134 = vadd.f32 0.0, %v4133
  %v4135 = vpop.f32.mrf.mxu0
  %v4136 = vadd.f32 0.0, %v4135
  %4137 = vdwg.mxu0
  %4138 = vmatprep.subr.mxu0 0.0
  %4139 = vmatpush1.msra.mxu0 0.0
  %4140 = vmatprep.subr.mxu0 0.0
  %4141 = vmatpush1.msra.mxu0 0.0
  %4142 = vmatprep.subr.mxu0 0.0
  %4143 = vmatpush1.msra.mxu0 0.0
  %4144 = vmatprep.subr.mxu0 0.0
  %4145 = vmatpush1.msra.mxu0 0.0
  %4146 = vmatprep.subr.mxu0 0.0
  %4147 = vmatpush1.msra.mxu0 0.0
  %4148 = vmatprep.subr.mxu0 0.0
  %4149 = vmatpush1.msra.mxu0 0.0
  %4150 = vmatprep.subr.mxu0 0.0
  %4151 = vmatpush1.msra.mxu0 0.0
  %4152 = vmatprep.subr.mxu0 0.0
  %4153 = vmatpush1.msra.mxu0 0.0
  %4154 = vmatprep.subr.mxu0 0.0
  %4155 = vmatpush1.msra.mxu0 0.0
  %4156 = vmatprep.subr.mxu0 0.0
  %4157 = vmatpush1.msra.mxu0 0.0
  %4158 = vmatprep.subr.mxu0 0.0
  %4159 = vmatpush1.msra.mxu0 0.0
  %4160 = vmatprep.subr.mxu0 0.0
  %4161 = vmatpush1.msra.mxu0 0.0
  %4162 = vmatprep.subr.mxu0 0.0
  %4163 = vmatpush1.msra.mxu0 0.0
  %4164 = vmatprep.subr.mxu0 0.0
  %4165 = vmatpush1.msra.mxu0 0.0
  %4166 = vmatprep.subr.mxu0 0.0
  %4167 = vmatpush1.msra.mxu0 0.0
  %4168 = vmatprep.subr.mxu0 %v3704
  %4169 = vmatpush1.msra.mxu0 %v3703
  %4170 = vmatprep.subr.mxu0 0.0
  %4171 = vmatpush2.msra.mxu0 0.0
  %4172 = vmatprep.subr.mxu0 0.0
  %4173 = vmatpush2.msra.mxu0 0.0
  %4174 = vmatprep.subr.mxu0 0.0
  %4175 = vmatpush2.msra.mxu0 0.0
  %4176 = vmatprep.subr.mxu0 0.0
  %4177 = vmatpush2.msra.mxu0 0.0
  %4178 = vmatprep.subr.mxu0 0.0
  %4179 = vmatpush2.msra.mxu0 0.0
  %4180 = vmatprep.subr.mxu0 0.0
  %4181 = vmatpush2.msra.mxu0 0.0
  %4182 = vmatprep.subr.mxu0 0.0
  %4183 = vmatpush2.msra.mxu0 0.0
  %4184 = vmatprep.subr.mxu0 0.0
  %4185 = vmatpush2.msra.mxu0 0.0
  %4186 = vmatprep.subr.mxu0 0.0
  %4187 = vmatpush2.msra.mxu0 0.0
  %4188 = vmatprep.subr.mxu0 0.0
  %4189 = vmatpush2.msra.mxu0 0.0
  %4190 = vmatprep.subr.mxu0 0.0
  %4191 = vmatpush2.msra.mxu0 0.0
  %4192 = vmatprep.subr.mxu0 0.0
  %4193 = vmatpush2.msra.mxu0 0.0
  %4194 = vmatprep.subr.mxu0 0.0
  %4195 = vmatpush2.msra.mxu0 0.0
  %4196 = vmatprep.subr.mxu0 0.0
  %4197 = vmatpush2.msra.mxu0 0.0
  %4198 = vmatprep.subr.mxu0 0.0
  %4199 = vmatpush2.msra.mxu0 0.0
  %4200 = vmatprep.subr.mxu0 0.0
  %4201 = vmatpush2.msra.mxu0 0.0
  %4202 = vmatprep.mubr.f32.mxu0 0.0
  %4203 = vmatmul.mubr.f32.gmra.mxu0 %v3710
  %v4204 = vpop.f32.mrf.mxu0
  %v4205 = vadd.f32 0.0, %v4204
  %v4206 = vpop.f32.mrf.mxu0
  %v4207 = vadd.f32 0.0, %v4206
  %4208 = vdwg.mxu0
  %4209 = vmatprep.subr.mxu0 0.0
  %4210 = vmatpush1.msra.mxu0 0.0
  %4211 = vmatprep.subr.mxu0 0.0
  %4212 = vmatpush1.msra.mxu0 0.0
  %4213 = vmatprep.subr.mxu0 0.0
  %4214 = vmatpush1.msra.mxu0 0.0
  %4215 = vmatprep.subr.mxu0 0.0
  %4216 = vmatpush1.msra.mxu0 0.0
  %4217 = vmatprep.subr.mxu0 0.0
  %4218 = vmatpush1.msra.mxu0 0.0
  %4219 = vmatprep.subr.mxu0 0.0
  %4220 = vmatpush1.msra.mxu0 0.0
  %4221 = vmatprep.subr.mxu0 0.0
  %4222 = vmatpush1.msra.mxu0 0.0
  %4223 = vmatprep.subr.mxu0 0.0
  %4224 = vmatpush1.msra.mxu0 0.0
  %4225 = vmatprep.subr.mxu0 0.0
  %4226 = vmatpush1.msra.mxu0 0.0
  %4227 = vmatprep.subr.mxu0 0.0
  %4228 = vmatpush1.msra.mxu0 0.0
  %4229 = vmatprep.subr.mxu0 0.0
  %4230 = vmatpush1.msra.mxu0 0.0
  %4231 = vmatprep.subr.mxu0 0.0
  %4232 = vmatpush1.msra.mxu0 0.0
  %4233 = vmatprep.subr.mxu0 0.0
  %4234 = vmatpush1.msra.mxu0 0.0
  %4235 = vmatprep.subr.mxu0 0.0
  %4236 = vmatpush1.msra.mxu0 0.0
  %4237 = vmatprep.subr.mxu0 0.0
  %4238 = vmatpush1.msra.mxu0 0.0
  %4239 = vmatprep.subr.mxu0 %v3706
  %4240 = vmatpush1.msra.mxu0 %v3705
  %4241 = vmatprep.subr.mxu0 0.0
  %4242 = vmatpush2.msra.mxu0 0.0
  %4243 = vmatprep.subr.mxu0 0.0
  %4244 = vmatpush2.msra.mxu0 0.0
  %4245 = vmatprep.subr.mxu0 0.0
  %4246 = vmatpush2.msra.mxu0 0.0
  %4247 = vmatprep.subr.mxu0 0.0
  %4248 = vmatpush2.msra.mxu0 0.0
  %4249 = vmatprep.subr.mxu0 0.0
  %4250 = vmatpush2.msra.mxu0 0.0
  %4251 = vmatprep.subr.mxu0 0.0
  %4252 = vmatpush2.msra.mxu0 0.0
  %4253 = vmatprep.subr.mxu0 0.0
  %4254 = vmatpush2.msra.mxu0 0.0
  %4255 = vmatprep.subr.mxu0 0.0
  %4256 = vmatpush2.msra.mxu0 0.0
  %4257 = vmatprep.subr.mxu0 0.0
  %4258 = vmatpush2.msra.mxu0 0.0
  %4259 = vmatprep.subr.mxu0 0.0
  %4260 = vmatpush2.msra.mxu0 0.0
  %4261 = vmatprep.subr.mxu0 0.0
  %4262 = vmatpush2.msra.mxu0 0.0
  %4263 = vmatprep.subr.mxu0 0.0
  %4264 = vmatpush2.msra.mxu0 0.0
  %4265 = vmatprep.subr.mxu0 0.0
  %4266 = vmatpush2.msra.mxu0 0.0
  %4267 = vmatprep.subr.mxu0 0.0
  %4268 = vmatpush2.msra.mxu0 0.0
  %4269 = vmatprep.subr.mxu0 0.0
  %4270 = vmatpush2.msra.mxu0 0.0
  %4271 = vmatprep.subr.mxu0 0.0
  %4272 = vmatpush2.msra.mxu0 0.0
  %4273 = vmatprep.mubr.f32.mxu0 0.0
  %4274 = vmatmul.mubr.f32.gmra.mxu0 %v3710
  %v4275 = vpop.f32.mrf.mxu0
  %v4276 = vadd.f32 0.0, %v4275
  %v4277 = vpop.f32.mrf.mxu0
  %v4278 = vadd.f32 0.0, %v4277
  %4279 = vdwg.mxu0
  %v4280 = vadd.f32 %v3536, %v3779
  %v4281 = vadd.f32 %v3537, %v3781
  %v4282 = vadd.f32 %v3538, %v3850
  %v4283 = vadd.f32 %v3539, %v3852
  %v4284 = vadd.f32 %v3540, %v3921
  %v4285 = vadd.f32 %v3541, %v3923
  %v4286 = vadd.f32 %v3542, %v3992
  %v4287 = vadd.f32 %v3543, %v3994
  %v4288 = vadd.f32 %v3544, %v4063
  %v4289 = vadd.f32 %v3545, %v4065
  %v4290 = vadd.f32 %v3546, %v4134
  %v4291 = vadd.f32 %v3547, %v4136
  %v4292 = vadd.f32 %v3548, %v4205
  %v4293 = vadd.f32 %v3549, %v4207
  %v4294 = vadd.f32 %v3550, %v4276
  %v4295 = vadd.f32 %v3551, %v4278
  %4296 = vrot.lane.b32.xlu0 %v743, 126
  %v4297 = vpop.permute.xlu0 %4296
  %4298 = vrot.lane.b32.xlu0 %v744, 126
  %v4299 = vpop.permute.xlu0 %4298
  %4300 = vrot.lane.b32.xlu0 %v745, 126
  %v4301 = vpop.permute.xlu0 %4300
  %4302 = vrot.lane.b32.xlu0 %v746, 126
  %v4303 = vpop.permute.xlu0 %4302
  %4304 = vrot.lane.b32.xlu0 %v747, 126
  %v4305 = vpop.permute.xlu0 %4304
  %4306 = vrot.lane.b32.xlu0 %v748, 126
  %v4307 = vpop.permute.xlu0 %4306
  %4308 = vrot.lane.b32.xlu0 %v749, 126
  %v4309 = vpop.permute.xlu0 %4308
  %4310 = vrot.lane.b32.xlu0 %v750, 126
  %v4311 = vpop.permute.xlu0 %4310
  %4312 = vrot.lane.b32.xlu0 %v751, 126
  %v4313 = vpop.permute.xlu0 %4312
  %4314 = vrot.lane.b32.xlu0 %v752, 126
  %v4315 = vpop.permute.xlu0 %4314
  %4316 = vrot.lane.b32.xlu0 %v753, 126
  %v4317 = vpop.permute.xlu0 %4316
  %4318 = vrot.lane.b32.xlu0 %v754, 126
  %v4319 = vpop.permute.xlu0 %4318
  %4320 = vrot.lane.b32.xlu0 %v755, 126
  %v4321 = vpop.permute.xlu0 %4320
  %4322 = vrot.lane.b32.xlu0 %v756, 126
  %v4323 = vpop.permute.xlu0 %4322
  %4324 = vrot.lane.b32.xlu0 %v757, 126
  %v4325 = vpop.permute.xlu0 %4324
  %4326 = vrot.lane.b32.xlu0 %v758, 126
  %v4327 = vpop.permute.xlu0 %4326
  %vm4328 = vcmp.lt.s32.totalorder %v796, 126
  %v4329 = vsel %vm4328, %v4325, %v4327
  %v4330 = vsel %vm4328, %v4323, %v4325
  %v4331 = vsel %vm4328, %v4321, %v4323
  %v4332 = vsel %vm4328, %v4319, %v4321
  %v4333 = vsel %vm4328, %v4317, %v4319
  %v4334 = vsel %vm4328, %v4315, %v4317
  %v4335 = vsel %vm4328, %v4313, %v4315
  %v4336 = vsel %vm4328, %v4311, %v4313
  %v4337 = vsel %vm4328, %v4309, %v4311
  %v4338 = vsel %vm4328, %v4307, %v4309
  %v4339 = vsel %vm4328, %v4305, %v4307
  %v4340 = vsel %vm4328, %v4303, %v4305
  %v4341 = vsel %vm4328, %v4301, %v4303
  %v4342 = vsel %vm4328, %v4299, %v4301
  %v4343 = vsel %vm4328, %v4297, %v4299
  %v4344 = vsel %vm4328, %v4327, %v4297
  %v4345 = vadd.s32 %v759, 2
  %v4346 = vadd.s32 %v760, 2
  %vm4347 = vcmp.ge.s32.totalorder %v4345, 0
  %vm4348 = vcmp.ge.s32.totalorder %v4346, 0
  %vm4349 = vcmp.lt.s32.totalorder %v4345, 256
  %vm4350 = vcmp.lt.s32.totalorder %v4346, 256
  %vm4351 = vmand %vm4347, %vm4349
  %vm4352 = vmand %vm4348, %vm4350
  %v4353 = vsel %vm4351, 1, 0
  %v4354 = vsel %vm4352, 1, 0
  %v4355 = vlaneseq
  %v4356 = vshrl.u32 %v4355, 7
  %v4357 = vsub.s32 0, %v4356
  %v4358 = vrot.slane %v4353, %v4357
  %v4359 = vlaneseq
  %v4360 = vshrl.u32 %v4359, 7
  %v4361 = vsub.s32 1, %v4360
  %v4362 = vrot.slane %v4353, %v4361
  %v4363 = vlaneseq
  %v4364 = vshrl.u32 %v4363, 7
  %v4365 = vsub.s32 2, %v4364
  %v4366 = vrot.slane %v4353, %v4365
  %v4367 = vlaneseq
  %v4368 = vshrl.u32 %v4367, 7
  %v4369 = vsub.s32 3, %v4368
  %v4370 = vrot.slane %v4353, %v4369
  %v4371 = vlaneseq
  %v4372 = vshrl.u32 %v4371, 7
  %v4373 = vsub.s32 4, %v4372
  %v4374 = vrot.slane %v4353, %v4373
  %v4375 = vlaneseq
  %v4376 = vshrl.u32 %v4375, 7
  %v4377 = vsub.s32 5, %v4376
  %v4378 = vrot.slane %v4353, %v4377
  %v4379 = vlaneseq
  %v4380 = vshrl.u32 %v4379, 7
  %v4381 = vsub.s32 6, %v4380
  %v4382 = vrot.slane %v4353, %v4381
  %v4383 = vlaneseq
  %v4384 = vshrl.u32 %v4383, 7
  %v4385 = vsub.s32 7, %v4384
  %v4386 = vrot.slane %v4353, %v4385
  %v4387 = vlaneseq
  %v4388 = vshrl.u32 %v4387, 7
  %v4389 = vsub.s32 0, %v4388
  %v4390 = vrot.slane %v4354, %v4389
  %v4391 = vlaneseq
  %v4392 = vshrl.u32 %v4391, 7
  %v4393 = vsub.s32 1, %v4392
  %v4394 = vrot.slane %v4354, %v4393
  %v4395 = vlaneseq
  %v4396 = vshrl.u32 %v4395, 7
  %v4397 = vsub.s32 2, %v4396
  %v4398 = vrot.slane %v4354, %v4397
  %v4399 = vlaneseq
  %v4400 = vshrl.u32 %v4399, 7
  %v4401 = vsub.s32 3, %v4400
  %v4402 = vrot.slane %v4354, %v4401
  %v4403 = vlaneseq
  %v4404 = vshrl.u32 %v4403, 7
  %v4405 = vsub.s32 4, %v4404
  %v4406 = vrot.slane %v4354, %v4405
  %v4407 = vlaneseq
  %v4408 = vshrl.u32 %v4407, 7
  %v4409 = vsub.s32 5, %v4408
  %v4410 = vrot.slane %v4354, %v4409
  %v4411 = vlaneseq
  %v4412 = vshrl.u32 %v4411, 7
  %v4413 = vsub.s32 6, %v4412
  %v4414 = vrot.slane %v4354, %v4413
  %v4415 = vlaneseq
  %v4416 = vshrl.u32 %v4415, 7
  %v4417 = vsub.s32 7, %v4416
  %v4418 = vrot.slane %v4354, %v4417
  %vm4419 = vcmp.eq.s32.totalorder %v4358, 1
  %vm4420 = vcmp.eq.s32.totalorder %v4362, 1
  %vm4421 = vcmp.eq.s32.totalorder %v4366, 1
  %vm4422 = vcmp.eq.s32.totalorder %v4370, 1
  %vm4423 = vcmp.eq.s32.totalorder %v4374, 1
  %vm4424 = vcmp.eq.s32.totalorder %v4378, 1
  %vm4425 = vcmp.eq.s32.totalorder %v4382, 1
  %vm4426 = vcmp.eq.s32.totalorder %v4386, 1
  %vm4427 = vcmp.eq.s32.totalorder %v4390, 1
  %vm4428 = vcmp.eq.s32.totalorder %v4394, 1
  %vm4429 = vcmp.eq.s32.totalorder %v4398, 1
  %vm4430 = vcmp.eq.s32.totalorder %v4402, 1
  %vm4431 = vcmp.eq.s32.totalorder %v4406, 1
  %vm4432 = vcmp.eq.s32.totalorder %v4410, 1
  %vm4433 = vcmp.eq.s32.totalorder %v4414, 1
  %vm4434 = vcmp.eq.s32.totalorder %v4418, 1
  %v4435 = vsel %vm4419, %v4343, 0.0
  %v4436 = vsel %vm4420, %v4342, 0.0
  %v4437 = vsel %vm4421, %v4341, 0.0
  %v4438 = vsel %vm4422, %v4340, 0.0
  %v4439 = vsel %vm4423, %v4339, 0.0
  %v4440 = vsel %vm4424, %v4338, 0.0
  %v4441 = vsel %vm4425, %v4337, 0.0
  %v4442 = vsel %vm4426, %v4336, 0.0
  %v4443 = vsel %vm4427, %v4335, 0.0
  %v4444 = vsel %vm4428, %v4334, 0.0
  %v4445 = vsel %vm4429, %v4333, 0.0
  %v4446 = vsel %vm4430, %v4332, 0.0
  %v4447 = vsel %vm4431, %v4331, 0.0
  %v4448 = vsel %vm4432, %v4330, 0.0
  %v4449 = vsel %vm4433, %v4329, 0.0
  %v4450 = vsel %vm4434, %v4344, 0.0
  %s4451 = scalar_lea.vmem %s5, 40
  %v4452 = vld [vmem:[%s4451] sm:$0xff]
  %v4454 = vsel %vm921, %v4452, 0
  %4456 = vmatprep.subr.mxu0 0.0
  %4457 = vmatpush1.msra.mxu0 0.0
  %4458 = vmatprep.subr.mxu0 0.0
  %4459 = vmatpush1.msra.mxu0 0.0
  %4460 = vmatprep.subr.mxu0 0.0
  %4461 = vmatpush1.msra.mxu0 0.0
  %4462 = vmatprep.subr.mxu0 0.0
  %4463 = vmatpush1.msra.mxu0 0.0
  %4464 = vmatprep.subr.mxu0 0.0
  %4465 = vmatpush1.msra.mxu0 0.0
  %4466 = vmatprep.subr.mxu0 0.0
  %4467 = vmatpush1.msra.mxu0 0.0
  %4468 = vmatprep.subr.mxu0 0.0
  %4469 = vmatpush1.msra.mxu0 0.0
  %4470 = vmatprep.subr.mxu0 0.0
  %4471 = vmatpush1.msra.mxu0 0.0
  %4472 = vmatprep.subr.mxu0 0.0
  %4473 = vmatpush1.msra.mxu0 0.0
  %4474 = vmatprep.subr.mxu0 0.0
  %4475 = vmatpush1.msra.mxu0 0.0
  %4476 = vmatprep.subr.mxu0 0.0
  %4477 = vmatpush1.msra.mxu0 0.0
  %4478 = vmatprep.subr.mxu0 0.0
  %4479 = vmatpush1.msra.mxu0 0.0
  %4480 = vmatprep.subr.mxu0 0.0
  %4481 = vmatpush1.msra.mxu0 0.0
  %4482 = vmatprep.subr.mxu0 0.0
  %4483 = vmatpush1.msra.mxu0 0.0
  %4484 = vmatprep.subr.mxu0 0.0
  %4485 = vmatpush1.msra.mxu0 0.0
  %4486 = vmatprep.subr.mxu0 %v4436
  %4487 = vmatpush1.msra.mxu0 %v4435
  %4488 = vmatprep.subr.mxu0 0.0
  %4489 = vmatpush2.msra.mxu0 0.0
  %4490 = vmatprep.subr.mxu0 0.0
  %4491 = vmatpush2.msra.mxu0 0.0
  %4492 = vmatprep.subr.mxu0 0.0
  %4493 = vmatpush2.msra.mxu0 0.0
  %4494 = vmatprep.subr.mxu0 0.0
  %4495 = vmatpush2.msra.mxu0 0.0
  %4496 = vmatprep.subr.mxu0 0.0
  %4497 = vmatpush2.msra.mxu0 0.0
  %4498 = vmatprep.subr.mxu0 0.0
  %4499 = vmatpush2.msra.mxu0 0.0
  %4500 = vmatprep.subr.mxu0 0.0
  %4501 = vmatpush2.msra.mxu0 0.0
  %4502 = vmatprep.subr.mxu0 0.0
  %4503 = vmatpush2.msra.mxu0 0.0
  %4504 = vmatprep.subr.mxu0 0.0
  %4505 = vmatpush2.msra.mxu0 0.0
  %4506 = vmatprep.subr.mxu0 0.0
  %4507 = vmatpush2.msra.mxu0 0.0
  %4508 = vmatprep.subr.mxu0 0.0
  %4509 = vmatpush2.msra.mxu0 0.0
  %4510 = vmatprep.subr.mxu0 0.0
  %4511 = vmatpush2.msra.mxu0 0.0
  %4512 = vmatprep.subr.mxu0 0.0
  %4513 = vmatpush2.msra.mxu0 0.0
  %4514 = vmatprep.subr.mxu0 0.0
  %4515 = vmatpush2.msra.mxu0 0.0
  %4516 = vmatprep.subr.mxu0 0.0
  %4517 = vmatpush2.msra.mxu0 0.0
  %4518 = vmatprep.subr.mxu0 0.0
  %4519 = vmatpush2.msra.mxu0 0.0
  %4520 = vmatprep.mubr.f32.mxu0 0.0
  %4521 = vmatmul.mubr.f32.gmra.mxu0 %v4454
  %v4522 = vpop.f32.mrf.mxu0
  %v4523 = vadd.f32 0.0, %v4522
  %v4524 = vpop.f32.mrf.mxu0
  %v4525 = vadd.f32 0.0, %v4524
  %4526 = vdwg.mxu0
  %4527 = vmatprep.subr.mxu0 0.0
  %4528 = vmatpush1.msra.mxu0 0.0
  %4529 = vmatprep.subr.mxu0 0.0
  %4530 = vmatpush1.msra.mxu0 0.0
  %4531 = vmatprep.subr.mxu0 0.0
  %4532 = vmatpush1.msra.mxu0 0.0
  %4533 = vmatprep.subr.mxu0 0.0
  %4534 = vmatpush1.msra.mxu0 0.0
  %4535 = vmatprep.subr.mxu0 0.0
  %4536 = vmatpush1.msra.mxu0 0.0
  %4537 = vmatprep.subr.mxu0 0.0
  %4538 = vmatpush1.msra.mxu0 0.0
  %4539 = vmatprep.subr.mxu0 0.0
  %4540 = vmatpush1.msra.mxu0 0.0
  %4541 = vmatprep.subr.mxu0 0.0
  %4542 = vmatpush1.msra.mxu0 0.0
  %4543 = vmatprep.subr.mxu0 0.0
  %4544 = vmatpush1.msra.mxu0 0.0
  %4545 = vmatprep.subr.mxu0 0.0
  %4546 = vmatpush1.msra.mxu0 0.0
  %4547 = vmatprep.subr.mxu0 0.0
  %4548 = vmatpush1.msra.mxu0 0.0
  %4549 = vmatprep.subr.mxu0 0.0
  %4550 = vmatpush1.msra.mxu0 0.0
  %4551 = vmatprep.subr.mxu0 0.0
  %4552 = vmatpush1.msra.mxu0 0.0
  %4553 = vmatprep.subr.mxu0 0.0
  %4554 = vmatpush1.msra.mxu0 0.0
  %4555 = vmatprep.subr.mxu0 0.0
  %4556 = vmatpush1.msra.mxu0 0.0
  %4557 = vmatprep.subr.mxu0 %v4438
  %4558 = vmatpush1.msra.mxu0 %v4437
  %4559 = vmatprep.subr.mxu0 0.0
  %4560 = vmatpush2.msra.mxu0 0.0
  %4561 = vmatprep.subr.mxu0 0.0
  %4562 = vmatpush2.msra.mxu0 0.0
  %4563 = vmatprep.subr.mxu0 0.0
  %4564 = vmatpush2.msra.mxu0 0.0
  %4565 = vmatprep.subr.mxu0 0.0
  %4566 = vmatpush2.msra.mxu0 0.0
  %4567 = vmatprep.subr.mxu0 0.0
  %4568 = vmatpush2.msra.mxu0 0.0
  %4569 = vmatprep.subr.mxu0 0.0
  %4570 = vmatpush2.msra.mxu0 0.0
  %4571 = vmatprep.subr.mxu0 0.0
  %4572 = vmatpush2.msra.mxu0 0.0
  %4573 = vmatprep.subr.mxu0 0.0
  %4574 = vmatpush2.msra.mxu0 0.0
  %4575 = vmatprep.subr.mxu0 0.0
  %4576 = vmatpush2.msra.mxu0 0.0
  %4577 = vmatprep.subr.mxu0 0.0
  %4578 = vmatpush2.msra.mxu0 0.0
  %4579 = vmatprep.subr.mxu0 0.0
  %4580 = vmatpush2.msra.mxu0 0.0
  %4581 = vmatprep.subr.mxu0 0.0
  %4582 = vmatpush2.msra.mxu0 0.0
  %4583 = vmatprep.subr.mxu0 0.0
  %4584 = vmatpush2.msra.mxu0 0.0
  %4585 = vmatprep.subr.mxu0 0.0
  %4586 = vmatpush2.msra.mxu0 0.0
  %4587 = vmatprep.subr.mxu0 0.0
  %4588 = vmatpush2.msra.mxu0 0.0
  %4589 = vmatprep.subr.mxu0 0.0
  %4590 = vmatpush2.msra.mxu0 0.0
  %4591 = vmatprep.mubr.f32.mxu0 0.0
  %4592 = vmatmul.mubr.f32.gmra.mxu0 %v4454
  %v4593 = vpop.f32.mrf.mxu0
  %v4594 = vadd.f32 0.0, %v4593
  %v4595 = vpop.f32.mrf.mxu0
  %v4596 = vadd.f32 0.0, %v4595
  %4597 = vdwg.mxu0
  %4598 = vmatprep.subr.mxu0 0.0
  %4599 = vmatpush1.msra.mxu0 0.0
  %4600 = vmatprep.subr.mxu0 0.0
  %4601 = vmatpush1.msra.mxu0 0.0
  %4602 = vmatprep.subr.mxu0 0.0
  %4603 = vmatpush1.msra.mxu0 0.0
  %4604 = vmatprep.subr.mxu0 0.0
  %4605 = vmatpush1.msra.mxu0 0.0
  %4606 = vmatprep.subr.mxu0 0.0
  %4607 = vmatpush1.msra.mxu0 0.0
  %4608 = vmatprep.subr.mxu0 0.0
  %4609 = vmatpush1.msra.mxu0 0.0
  %4610 = vmatprep.subr.mxu0 0.0
  %4611 = vmatpush1.msra.mxu0 0.0
  %4612 = vmatprep.subr.mxu0 0.0
  %4613 = vmatpush1.msra.mxu0 0.0
  %4614 = vmatprep.subr.mxu0 0.0
  %4615 = vmatpush1.msra.mxu0 0.0
  %4616 = vmatprep.subr.mxu0 0.0
  %4617 = vmatpush1.msra.mxu0 0.0
  %4618 = vmatprep.subr.mxu0 0.0
  %4619 = vmatpush1.msra.mxu0 0.0
  %4620 = vmatprep.subr.mxu0 0.0
  %4621 = vmatpush1.msra.mxu0 0.0
  %4622 = vmatprep.subr.mxu0 0.0
  %4623 = vmatpush1.msra.mxu0 0.0
  %4624 = vmatprep.subr.mxu0 0.0
  %4625 = vmatpush1.msra.mxu0 0.0
  %4626 = vmatprep.subr.mxu0 0.0
  %4627 = vmatpush1.msra.mxu0 0.0
  %4628 = vmatprep.subr.mxu0 %v4440
  %4629 = vmatpush1.msra.mxu0 %v4439
  %4630 = vmatprep.subr.mxu0 0.0
  %4631 = vmatpush2.msra.mxu0 0.0
  %4632 = vmatprep.subr.mxu0 0.0
  %4633 = vmatpush2.msra.mxu0 0.0
  %4634 = vmatprep.subr.mxu0 0.0
  %4635 = vmatpush2.msra.mxu0 0.0
  %4636 = vmatprep.subr.mxu0 0.0
  %4637 = vmatpush2.msra.mxu0 0.0
  %4638 = vmatprep.subr.mxu0 0.0
  %4639 = vmatpush2.msra.mxu0 0.0
  %4640 = vmatprep.subr.mxu0 0.0
  %4641 = vmatpush2.msra.mxu0 0.0
  %4642 = vmatprep.subr.mxu0 0.0
  %4643 = vmatpush2.msra.mxu0 0.0
  %4644 = vmatprep.subr.mxu0 0.0
  %4645 = vmatpush2.msra.mxu0 0.0
  %4646 = vmatprep.subr.mxu0 0.0
  %4647 = vmatpush2.msra.mxu0 0.0
  %4648 = vmatprep.subr.mxu0 0.0
  %4649 = vmatpush2.msra.mxu0 0.0
  %4650 = vmatprep.subr.mxu0 0.0
  %4651 = vmatpush2.msra.mxu0 0.0
  %4652 = vmatprep.subr.mxu0 0.0
  %4653 = vmatpush2.msra.mxu0 0.0
  %4654 = vmatprep.subr.mxu0 0.0
  %4655 = vmatpush2.msra.mxu0 0.0
  %4656 = vmatprep.subr.mxu0 0.0
  %4657 = vmatpush2.msra.mxu0 0.0
  %4658 = vmatprep.subr.mxu0 0.0
  %4659 = vmatpush2.msra.mxu0 0.0
  %4660 = vmatprep.subr.mxu0 0.0
  %4661 = vmatpush2.msra.mxu0 0.0
  %4662 = vmatprep.mubr.f32.mxu0 0.0
  %4663 = vmatmul.mubr.f32.gmra.mxu0 %v4454
  %v4664 = vpop.f32.mrf.mxu0
  %v4665 = vadd.f32 0.0, %v4664
  %v4666 = vpop.f32.mrf.mxu0
  %v4667 = vadd.f32 0.0, %v4666
  %4668 = vdwg.mxu0
  %4669 = vmatprep.subr.mxu0 0.0
  %4670 = vmatpush1.msra.mxu0 0.0
  %4671 = vmatprep.subr.mxu0 0.0
  %4672 = vmatpush1.msra.mxu0 0.0
  %4673 = vmatprep.subr.mxu0 0.0
  %4674 = vmatpush1.msra.mxu0 0.0
  %4675 = vmatprep.subr.mxu0 0.0
  %4676 = vmatpush1.msra.mxu0 0.0
  %4677 = vmatprep.subr.mxu0 0.0
  %4678 = vmatpush1.msra.mxu0 0.0
  %4679 = vmatprep.subr.mxu0 0.0
  %4680 = vmatpush1.msra.mxu0 0.0
  %4681 = vmatprep.subr.mxu0 0.0
  %4682 = vmatpush1.msra.mxu0 0.0
  %4683 = vmatprep.subr.mxu0 0.0
  %4684 = vmatpush1.msra.mxu0 0.0
  %4685 = vmatprep.subr.mxu0 0.0
  %4686 = vmatpush1.msra.mxu0 0.0
  %4687 = vmatprep.subr.mxu0 0.0
  %4688 = vmatpush1.msra.mxu0 0.0
  %4689 = vmatprep.subr.mxu0 0.0
  %4690 = vmatpush1.msra.mxu0 0.0
  %4691 = vmatprep.subr.mxu0 0.0
  %4692 = vmatpush1.msra.mxu0 0.0
  %4693 = vmatprep.subr.mxu0 0.0
  %4694 = vmatpush1.msra.mxu0 0.0
  %4695 = vmatprep.subr.mxu0 0.0
  %4696 = vmatpush1.msra.mxu0 0.0
  %4697 = vmatprep.subr.mxu0 0.0
  %4698 = vmatpush1.msra.mxu0 0.0
  %4699 = vmatprep.subr.mxu0 %v4442
  %4700 = vmatpush1.msra.mxu0 %v4441
  %4701 = vmatprep.subr.mxu0 0.0
  %4702 = vmatpush2.msra.mxu0 0.0
  %4703 = vmatprep.subr.mxu0 0.0
  %4704 = vmatpush2.msra.mxu0 0.0
  %4705 = vmatprep.subr.mxu0 0.0
  %4706 = vmatpush2.msra.mxu0 0.0
  %4707 = vmatprep.subr.mxu0 0.0
  %4708 = vmatpush2.msra.mxu0 0.0
  %4709 = vmatprep.subr.mxu0 0.0
  %4710 = vmatpush2.msra.mxu0 0.0
  %4711 = vmatprep.subr.mxu0 0.0
  %4712 = vmatpush2.msra.mxu0 0.0
  %4713 = vmatprep.subr.mxu0 0.0
  %4714 = vmatpush2.msra.mxu0 0.0
  %4715 = vmatprep.subr.mxu0 0.0
  %4716 = vmatpush2.msra.mxu0 0.0
  %4717 = vmatprep.subr.mxu0 0.0
  %4718 = vmatpush2.msra.mxu0 0.0
  %4719 = vmatprep.subr.mxu0 0.0
  %4720 = vmatpush2.msra.mxu0 0.0
  %4721 = vmatprep.subr.mxu0 0.0
  %4722 = vmatpush2.msra.mxu0 0.0
  %4723 = vmatprep.subr.mxu0 0.0
  %4724 = vmatpush2.msra.mxu0 0.0
  %4725 = vmatprep.subr.mxu0 0.0
  %4726 = vmatpush2.msra.mxu0 0.0
  %4727 = vmatprep.subr.mxu0 0.0
  %4728 = vmatpush2.msra.mxu0 0.0
  %4729 = vmatprep.subr.mxu0 0.0
  %4730 = vmatpush2.msra.mxu0 0.0
  %4731 = vmatprep.subr.mxu0 0.0
  %4732 = vmatpush2.msra.mxu0 0.0
  %4733 = vmatprep.mubr.f32.mxu0 0.0
  %4734 = vmatmul.mubr.f32.gmra.mxu0 %v4454
  %v4735 = vpop.f32.mrf.mxu0
  %v4736 = vadd.f32 0.0, %v4735
  %v4737 = vpop.f32.mrf.mxu0
  %v4738 = vadd.f32 0.0, %v4737
  %4739 = vdwg.mxu0
  %4740 = vmatprep.subr.mxu0 0.0
  %4741 = vmatpush1.msra.mxu0 0.0
  %4742 = vmatprep.subr.mxu0 0.0
  %4743 = vmatpush1.msra.mxu0 0.0
  %4744 = vmatprep.subr.mxu0 0.0
  %4745 = vmatpush1.msra.mxu0 0.0
  %4746 = vmatprep.subr.mxu0 0.0
  %4747 = vmatpush1.msra.mxu0 0.0
  %4748 = vmatprep.subr.mxu0 0.0
  %4749 = vmatpush1.msra.mxu0 0.0
  %4750 = vmatprep.subr.mxu0 0.0
  %4751 = vmatpush1.msra.mxu0 0.0
  %4752 = vmatprep.subr.mxu0 0.0
  %4753 = vmatpush1.msra.mxu0 0.0
  %4754 = vmatprep.subr.mxu0 0.0
  %4755 = vmatpush1.msra.mxu0 0.0
  %4756 = vmatprep.subr.mxu0 0.0
  %4757 = vmatpush1.msra.mxu0 0.0
  %4758 = vmatprep.subr.mxu0 0.0
  %4759 = vmatpush1.msra.mxu0 0.0
  %4760 = vmatprep.subr.mxu0 0.0
  %4761 = vmatpush1.msra.mxu0 0.0
  %4762 = vmatprep.subr.mxu0 0.0
  %4763 = vmatpush1.msra.mxu0 0.0
  %4764 = vmatprep.subr.mxu0 0.0
  %4765 = vmatpush1.msra.mxu0 0.0
  %4766 = vmatprep.subr.mxu0 0.0
  %4767 = vmatpush1.msra.mxu0 0.0
  %4768 = vmatprep.subr.mxu0 0.0
  %4769 = vmatpush1.msra.mxu0 0.0
  %4770 = vmatprep.subr.mxu0 %v4444
  %4771 = vmatpush1.msra.mxu0 %v4443
  %4772 = vmatprep.subr.mxu0 0.0
  %4773 = vmatpush2.msra.mxu0 0.0
  %4774 = vmatprep.subr.mxu0 0.0
  %4775 = vmatpush2.msra.mxu0 0.0
  %4776 = vmatprep.subr.mxu0 0.0
  %4777 = vmatpush2.msra.mxu0 0.0
  %4778 = vmatprep.subr.mxu0 0.0
  %4779 = vmatpush2.msra.mxu0 0.0
  %4780 = vmatprep.subr.mxu0 0.0
  %4781 = vmatpush2.msra.mxu0 0.0
  %4782 = vmatprep.subr.mxu0 0.0
  %4783 = vmatpush2.msra.mxu0 0.0
  %4784 = vmatprep.subr.mxu0 0.0
  %4785 = vmatpush2.msra.mxu0 0.0
  %4786 = vmatprep.subr.mxu0 0.0
  %4787 = vmatpush2.msra.mxu0 0.0
  %4788 = vmatprep.subr.mxu0 0.0
  %4789 = vmatpush2.msra.mxu0 0.0
  %4790 = vmatprep.subr.mxu0 0.0
  %4791 = vmatpush2.msra.mxu0 0.0
  %4792 = vmatprep.subr.mxu0 0.0
  %4793 = vmatpush2.msra.mxu0 0.0
  %4794 = vmatprep.subr.mxu0 0.0
  %4795 = vmatpush2.msra.mxu0 0.0
  %4796 = vmatprep.subr.mxu0 0.0
  %4797 = vmatpush2.msra.mxu0 0.0
  %4798 = vmatprep.subr.mxu0 0.0
  %4799 = vmatpush2.msra.mxu0 0.0
  %4800 = vmatprep.subr.mxu0 0.0
  %4801 = vmatpush2.msra.mxu0 0.0
  %4802 = vmatprep.subr.mxu0 0.0
  %4803 = vmatpush2.msra.mxu0 0.0
  %4804 = vmatprep.mubr.f32.mxu0 0.0
  %4805 = vmatmul.mubr.f32.gmra.mxu0 %v4454
  %v4806 = vpop.f32.mrf.mxu0
  %v4807 = vadd.f32 0.0, %v4806
  %v4808 = vpop.f32.mrf.mxu0
  %v4809 = vadd.f32 0.0, %v4808
  %4810 = vdwg.mxu0
  %4811 = vmatprep.subr.mxu0 0.0
  %4812 = vmatpush1.msra.mxu0 0.0
  %4813 = vmatprep.subr.mxu0 0.0
  %4814 = vmatpush1.msra.mxu0 0.0
  %4815 = vmatprep.subr.mxu0 0.0
  %4816 = vmatpush1.msra.mxu0 0.0
  %4817 = vmatprep.subr.mxu0 0.0
  %4818 = vmatpush1.msra.mxu0 0.0
  %4819 = vmatprep.subr.mxu0 0.0
  %4820 = vmatpush1.msra.mxu0 0.0
  %4821 = vmatprep.subr.mxu0 0.0
  %4822 = vmatpush1.msra.mxu0 0.0
  %4823 = vmatprep.subr.mxu0 0.0
  %4824 = vmatpush1.msra.mxu0 0.0
  %4825 = vmatprep.subr.mxu0 0.0
  %4826 = vmatpush1.msra.mxu0 0.0
  %4827 = vmatprep.subr.mxu0 0.0
  %4828 = vmatpush1.msra.mxu0 0.0
  %4829 = vmatprep.subr.mxu0 0.0
  %4830 = vmatpush1.msra.mxu0 0.0
  %4831 = vmatprep.subr.mxu0 0.0
  %4832 = vmatpush1.msra.mxu0 0.0
  %4833 = vmatprep.subr.mxu0 0.0
  %4834 = vmatpush1.msra.mxu0 0.0
  %4835 = vmatprep.subr.mxu0 0.0
  %4836 = vmatpush1.msra.mxu0 0.0
  %4837 = vmatprep.subr.mxu0 0.0
  %4838 = vmatpush1.msra.mxu0 0.0
  %4839 = vmatprep.subr.mxu0 0.0
  %4840 = vmatpush1.msra.mxu0 0.0
  %4841 = vmatprep.subr.mxu0 %v4446
  %4842 = vmatpush1.msra.mxu0 %v4445
  %4843 = vmatprep.subr.mxu0 0.0
  %4844 = vmatpush2.msra.mxu0 0.0
  %4845 = vmatprep.subr.mxu0 0.0
  %4846 = vmatpush2.msra.mxu0 0.0
  %4847 = vmatprep.subr.mxu0 0.0
  %4848 = vmatpush2.msra.mxu0 0.0
  %4849 = vmatprep.subr.mxu0 0.0
  %4850 = vmatpush2.msra.mxu0 0.0
  %4851 = vmatprep.subr.mxu0 0.0
  %4852 = vmatpush2.msra.mxu0 0.0
  %4853 = vmatprep.subr.mxu0 0.0
  %4854 = vmatpush2.msra.mxu0 0.0
  %4855 = vmatprep.subr.mxu0 0.0
  %4856 = vmatpush2.msra.mxu0 0.0
  %4857 = vmatprep.subr.mxu0 0.0
  %4858 = vmatpush2.msra.mxu0 0.0
  %4859 = vmatprep.subr.mxu0 0.0
  %4860 = vmatpush2.msra.mxu0 0.0
  %4861 = vmatprep.subr.mxu0 0.0
  %4862 = vmatpush2.msra.mxu0 0.0
  %4863 = vmatprep.subr.mxu0 0.0
  %4864 = vmatpush2.msra.mxu0 0.0
  %4865 = vmatprep.subr.mxu0 0.0
  %4866 = vmatpush2.msra.mxu0 0.0
  %4867 = vmatprep.subr.mxu0 0.0
  %4868 = vmatpush2.msra.mxu0 0.0
  %4869 = vmatprep.subr.mxu0 0.0
  %4870 = vmatpush2.msra.mxu0 0.0
  %4871 = vmatprep.subr.mxu0 0.0
  %4872 = vmatpush2.msra.mxu0 0.0
  %4873 = vmatprep.subr.mxu0 0.0
  %4874 = vmatpush2.msra.mxu0 0.0
  %4875 = vmatprep.mubr.f32.mxu0 0.0
  %4876 = vmatmul.mubr.f32.gmra.mxu0 %v4454
  %v4877 = vpop.f32.mrf.mxu0
  %v4878 = vadd.f32 0.0, %v4877
  %v4879 = vpop.f32.mrf.mxu0
  %v4880 = vadd.f32 0.0, %v4879
  %4881 = vdwg.mxu0
  %4882 = vmatprep.subr.mxu0 0.0
  %4883 = vmatpush1.msra.mxu0 0.0
  %4884 = vmatprep.subr.mxu0 0.0
  %4885 = vmatpush1.msra.mxu0 0.0
  %4886 = vmatprep.subr.mxu0 0.0
  %4887 = vmatpush1.msra.mxu0 0.0
  %4888 = vmatprep.subr.mxu0 0.0
  %4889 = vmatpush1.msra.mxu0 0.0
  %4890 = vmatprep.subr.mxu0 0.0
  %4891 = vmatpush1.msra.mxu0 0.0
  %4892 = vmatprep.subr.mxu0 0.0
  %4893 = vmatpush1.msra.mxu0 0.0
  %4894 = vmatprep.subr.mxu0 0.0
  %4895 = vmatpush1.msra.mxu0 0.0
  %4896 = vmatprep.subr.mxu0 0.0
  %4897 = vmatpush1.msra.mxu0 0.0
  %4898 = vmatprep.subr.mxu0 0.0
  %4899 = vmatpush1.msra.mxu0 0.0
  %4900 = vmatprep.subr.mxu0 0.0
  %4901 = vmatpush1.msra.mxu0 0.0
  %4902 = vmatprep.subr.mxu0 0.0
  %4903 = vmatpush1.msra.mxu0 0.0
  %4904 = vmatprep.subr.mxu0 0.0
  %4905 = vmatpush1.msra.mxu0 0.0
  %4906 = vmatprep.subr.mxu0 0.0
  %4907 = vmatpush1.msra.mxu0 0.0
  %4908 = vmatprep.subr.mxu0 0.0
  %4909 = vmatpush1.msra.mxu0 0.0
  %4910 = vmatprep.subr.mxu0 0.0
  %4911 = vmatpush1.msra.mxu0 0.0
  %4912 = vmatprep.subr.mxu0 %v4448
  %4913 = vmatpush1.msra.mxu0 %v4447
  %4914 = vmatprep.subr.mxu0 0.0
  %4915 = vmatpush2.msra.mxu0 0.0
  %4916 = vmatprep.subr.mxu0 0.0
  %4917 = vmatpush2.msra.mxu0 0.0
  %4918 = vmatprep.subr.mxu0 0.0
  %4919 = vmatpush2.msra.mxu0 0.0
  %4920 = vmatprep.subr.mxu0 0.0
  %4921 = vmatpush2.msra.mxu0 0.0
  %4922 = vmatprep.subr.mxu0 0.0
  %4923 = vmatpush2.msra.mxu0 0.0
  %4924 = vmatprep.subr.mxu0 0.0
  %4925 = vmatpush2.msra.mxu0 0.0
  %4926 = vmatprep.subr.mxu0 0.0
  %4927 = vmatpush2.msra.mxu0 0.0
  %4928 = vmatprep.subr.mxu0 0.0
  %4929 = vmatpush2.msra.mxu0 0.0
  %4930 = vmatprep.subr.mxu0 0.0
  %4931 = vmatpush2.msra.mxu0 0.0
  %4932 = vmatprep.subr.mxu0 0.0
  %4933 = vmatpush2.msra.mxu0 0.0
  %4934 = vmatprep.subr.mxu0 0.0
  %4935 = vmatpush2.msra.mxu0 0.0
  %4936 = vmatprep.subr.mxu0 0.0
  %4937 = vmatpush2.msra.mxu0 0.0
  %4938 = vmatprep.subr.mxu0 0.0
  %4939 = vmatpush2.msra.mxu0 0.0
  %4940 = vmatprep.subr.mxu0 0.0
  %4941 = vmatpush2.msra.mxu0 0.0
  %4942 = vmatprep.subr.mxu0 0.0
  %4943 = vmatpush2.msra.mxu0 0.0
  %4944 = vmatprep.subr.mxu0 0.0
  %4945 = vmatpush2.msra.mxu0 0.0
  %4946 = vmatprep.mubr.f32.mxu0 0.0
  %4947 = vmatmul.mubr.f32.gmra.mxu0 %v4454
  %v4948 = vpop.f32.mrf.mxu0
  %v4949 = vadd.f32 0.0, %v4948
  %v4950 = vpop.f32.mrf.mxu0
  %v4951 = vadd.f32 0.0, %v4950
  %4952 = vdwg.mxu0
  %4953 = vmatprep.subr.mxu0 0.0
  %4954 = vmatpush1.msra.mxu0 0.0
  %4955 = vmatprep.subr.mxu0 0.0
  %4956 = vmatpush1.msra.mxu0 0.0
  %4957 = vmatprep.subr.mxu0 0.0
  %4958 = vmatpush1.msra.mxu0 0.0
  %4959 = vmatprep.subr.mxu0 0.0
  %4960 = vmatpush1.msra.mxu0 0.0
  %4961 = vmatprep.subr.mxu0 0.0
  %4962 = vmatpush1.msra.mxu0 0.0
  %4963 = vmatprep.subr.mxu0 0.0
  %4964 = vmatpush1.msra.mxu0 0.0
  %4965 = vmatprep.subr.mxu0 0.0
  %4966 = vmatpush1.msra.mxu0 0.0
  %4967 = vmatprep.subr.mxu0 0.0
  %4968 = vmatpush1.msra.mxu0 0.0
  %4969 = vmatprep.subr.mxu0 0.0
  %4970 = vmatpush1.msra.mxu0 0.0
  %4971 = vmatprep.subr.mxu0 0.0
  %4972 = vmatpush1.msra.mxu0 0.0
  %4973 = vmatprep.subr.mxu0 0.0
  %4974 = vmatpush1.msra.mxu0 0.0
  %4975 = vmatprep.subr.mxu0 0.0
  %4976 = vmatpush1.msra.mxu0 0.0
  %4977 = vmatprep.subr.mxu0 0.0
  %4978 = vmatpush1.msra.mxu0 0.0
  %4979 = vmatprep.subr.mxu0 0.0
  %4980 = vmatpush1.msra.mxu0 0.0
  %4981 = vmatprep.subr.mxu0 0.0
  %4982 = vmatpush1.msra.mxu0 0.0
  %4983 = vmatprep.subr.mxu0 %v4450
  %4984 = vmatpush1.msra.mxu0 %v4449
  %4985 = vmatprep.subr.mxu0 0.0
  %4986 = vmatpush2.msra.mxu0 0.0
  %4987 = vmatprep.subr.mxu0 0.0
  %4988 = vmatpush2.msra.mxu0 0.0
  %4989 = vmatprep.subr.mxu0 0.0
  %4990 = vmatpush2.msra.mxu0 0.0
  %4991 = vmatprep.subr.mxu0 0.0
  %4992 = vmatpush2.msra.mxu0 0.0
  %4993 = vmatprep.subr.mxu0 0.0
  %4994 = vmatpush2.msra.mxu0 0.0
  %4995 = vmatprep.subr.mxu0 0.0
  %4996 = vmatpush2.msra.mxu0 0.0
  %4997 = vmatprep.subr.mxu0 0.0
  %4998 = vmatpush2.msra.mxu0 0.0
  %4999 = vmatprep.subr.mxu0 0.0
  %5000 = vmatpush2.msra.mxu0 0.0
  %5001 = vmatprep.subr.mxu0 0.0
  %5002 = vmatpush2.msra.mxu0 0.0
  %5003 = vmatprep.subr.mxu0 0.0
  %5004 = vmatpush2.msra.mxu0 0.0
  %5005 = vmatprep.subr.mxu0 0.0
  %5006 = vmatpush2.msra.mxu0 0.0
  %5007 = vmatprep.subr.mxu0 0.0
  %5008 = vmatpush2.msra.mxu0 0.0
  %5009 = vmatprep.subr.mxu0 0.0
  %5010 = vmatpush2.msra.mxu0 0.0
  %5011 = vmatprep.subr.mxu0 0.0
  %5012 = vmatpush2.msra.mxu0 0.0
  %5013 = vmatprep.subr.mxu0 0.0
  %5014 = vmatpush2.msra.mxu0 0.0
  %5015 = vmatprep.subr.mxu0 0.0
  %5016 = vmatpush2.msra.mxu0 0.0
  %5017 = vmatprep.mubr.f32.mxu0 0.0
  %5018 = vmatmul.mubr.f32.gmra.mxu0 %v4454
  %v5019 = vpop.f32.mrf.mxu0
  %v5020 = vadd.f32 0.0, %v5019
  %v5021 = vpop.f32.mrf.mxu0
  %v5022 = vadd.f32 0.0, %v5021
  %5023 = vdwg.mxu0
  %v5024 = vadd.f32 %v4280, %v4523
  %v5025 = vadd.f32 %v4281, %v4525
  %v5026 = vadd.f32 %v4282, %v4594
  %v5027 = vadd.f32 %v4283, %v4596
  %v5028 = vadd.f32 %v4284, %v4665
  %v5029 = vadd.f32 %v4285, %v4667
  %v5030 = vadd.f32 %v4286, %v4736
  %v5031 = vadd.f32 %v4287, %v4738
  %v5032 = vadd.f32 %v4288, %v4807
  %v5033 = vadd.f32 %v4289, %v4809
  %v5034 = vadd.f32 %v4290, %v4878
  %v5035 = vadd.f32 %v4291, %v4880
  %v5036 = vadd.f32 %v4292, %v4949
  %v5037 = vadd.f32 %v4293, %v4951
  %v5038 = vadd.f32 %v4294, %v5020
  %v5039 = vadd.f32 %v4295, %v5022
  %5040 = vrot.lane.b32.xlu0 %v743, 125
  %v5041 = vpop.permute.xlu0 %5040
  %5042 = vrot.lane.b32.xlu0 %v744, 125
  %v5043 = vpop.permute.xlu0 %5042
  %5044 = vrot.lane.b32.xlu0 %v745, 125
  %v5045 = vpop.permute.xlu0 %5044
  %5046 = vrot.lane.b32.xlu0 %v746, 125
  %v5047 = vpop.permute.xlu0 %5046
  %5048 = vrot.lane.b32.xlu0 %v747, 125
  %v5049 = vpop.permute.xlu0 %5048
  %5050 = vrot.lane.b32.xlu0 %v748, 125
  %v5051 = vpop.permute.xlu0 %5050
  %5052 = vrot.lane.b32.xlu0 %v749, 125
  %v5053 = vpop.permute.xlu0 %5052
  %5054 = vrot.lane.b32.xlu0 %v750, 125
  %v5055 = vpop.permute.xlu0 %5054
  %5056 = vrot.lane.b32.xlu0 %v751, 125
  %v5057 = vpop.permute.xlu0 %5056
  %5058 = vrot.lane.b32.xlu0 %v752, 125
  %v5059 = vpop.permute.xlu0 %5058
  %5060 = vrot.lane.b32.xlu0 %v753, 125
  %v5061 = vpop.permute.xlu0 %5060
  %5062 = vrot.lane.b32.xlu0 %v754, 125
  %v5063 = vpop.permute.xlu0 %5062
  %5064 = vrot.lane.b32.xlu0 %v755, 125
  %v5065 = vpop.permute.xlu0 %5064
  %5066 = vrot.lane.b32.xlu0 %v756, 125
  %v5067 = vpop.permute.xlu0 %5066
  %5068 = vrot.lane.b32.xlu0 %v757, 125
  %v5069 = vpop.permute.xlu0 %5068
  %5070 = vrot.lane.b32.xlu0 %v758, 125
  %v5071 = vpop.permute.xlu0 %5070
  %vm5072 = vcmp.lt.s32.totalorder %v796, 125
  %v5073 = vsel %vm5072, %v5069, %v5071
  %v5074 = vsel %vm5072, %v5067, %v5069
  %v5075 = vsel %vm5072, %v5065, %v5067
  %v5076 = vsel %vm5072, %v5063, %v5065
  %v5077 = vsel %vm5072, %v5061, %v5063
  %v5078 = vsel %vm5072, %v5059, %v5061
  %v5079 = vsel %vm5072, %v5057, %v5059
  %v5080 = vsel %vm5072, %v5055, %v5057
  %v5081 = vsel %vm5072, %v5053, %v5055
  %v5082 = vsel %vm5072, %v5051, %v5053
  %v5083 = vsel %vm5072, %v5049, %v5051
  %v5084 = vsel %vm5072, %v5047, %v5049
  %v5085 = vsel %vm5072, %v5045, %v5047
  %v5086 = vsel %vm5072, %v5043, %v5045
  %v5087 = vsel %vm5072, %v5041, %v5043
  %v5088 = vsel %vm5072, %v5071, %v5041
  %v5089 = vadd.s32 %v759, 3
  %v5090 = vadd.s32 %v760, 3
  %vm5091 = vcmp.ge.s32.totalorder %v5089, 0
  %vm5092 = vcmp.ge.s32.totalorder %v5090, 0
  %vm5093 = vcmp.lt.s32.totalorder %v5089, 256
  %vm5094 = vcmp.lt.s32.totalorder %v5090, 256
  %vm5095 = vmand %vm5091, %vm5093
  %vm5096 = vmand %vm5092, %vm5094
  %v5097 = vsel %vm5095, 1, 0
  %v5098 = vsel %vm5096, 1, 0
  %v5099 = vlaneseq
  %v5100 = vshrl.u32 %v5099, 7
  %v5101 = vsub.s32 0, %v5100
  %v5102 = vrot.slane %v5097, %v5101
  %v5103 = vlaneseq
  %v5104 = vshrl.u32 %v5103, 7
  %v5105 = vsub.s32 1, %v5104
  %v5106 = vrot.slane %v5097, %v5105
  %v5107 = vlaneseq
  %v5108 = vshrl.u32 %v5107, 7
  %v5109 = vsub.s32 2, %v5108
  %v5110 = vrot.slane %v5097, %v5109
  %v5111 = vlaneseq
  %v5112 = vshrl.u32 %v5111, 7
  %v5113 = vsub.s32 3, %v5112
  %v5114 = vrot.slane %v5097, %v5113
  %v5115 = vlaneseq
  %v5116 = vshrl.u32 %v5115, 7
  %v5117 = vsub.s32 4, %v5116
  %v5118 = vrot.slane %v5097, %v5117
  %v5119 = vlaneseq
  %v5120 = vshrl.u32 %v5119, 7
  %v5121 = vsub.s32 5, %v5120
  %v5122 = vrot.slane %v5097, %v5121
  %v5123 = vlaneseq
  %v5124 = vshrl.u32 %v5123, 7
  %v5125 = vsub.s32 6, %v5124
  %v5126 = vrot.slane %v5097, %v5125
  %v5127 = vlaneseq
  %v5128 = vshrl.u32 %v5127, 7
  %v5129 = vsub.s32 7, %v5128
  %v5130 = vrot.slane %v5097, %v5129
  %v5131 = vlaneseq
  %v5132 = vshrl.u32 %v5131, 7
  %v5133 = vsub.s32 0, %v5132
  %v5134 = vrot.slane %v5098, %v5133
  %v5135 = vlaneseq
  %v5136 = vshrl.u32 %v5135, 7
  %v5137 = vsub.s32 1, %v5136
  %v5138 = vrot.slane %v5098, %v5137
  %v5139 = vlaneseq
  %v5140 = vshrl.u32 %v5139, 7
  %v5141 = vsub.s32 2, %v5140
  %v5142 = vrot.slane %v5098, %v5141
  %v5143 = vlaneseq
  %v5144 = vshrl.u32 %v5143, 7
  %v5145 = vsub.s32 3, %v5144
  %v5146 = vrot.slane %v5098, %v5145
  %v5147 = vlaneseq
  %v5148 = vshrl.u32 %v5147, 7
  %v5149 = vsub.s32 4, %v5148
  %v5150 = vrot.slane %v5098, %v5149
  %v5151 = vlaneseq
  %v5152 = vshrl.u32 %v5151, 7
  %v5153 = vsub.s32 5, %v5152
  %v5154 = vrot.slane %v5098, %v5153
  %v5155 = vlaneseq
  %v5156 = vshrl.u32 %v5155, 7
  %v5157 = vsub.s32 6, %v5156
  %v5158 = vrot.slane %v5098, %v5157
  %v5159 = vlaneseq
  %v5160 = vshrl.u32 %v5159, 7
  %v5161 = vsub.s32 7, %v5160
  %v5162 = vrot.slane %v5098, %v5161
  %vm5163 = vcmp.eq.s32.totalorder %v5102, 1
  %vm5164 = vcmp.eq.s32.totalorder %v5106, 1
  %vm5165 = vcmp.eq.s32.totalorder %v5110, 1
  %vm5166 = vcmp.eq.s32.totalorder %v5114, 1
  %vm5167 = vcmp.eq.s32.totalorder %v5118, 1
  %vm5168 = vcmp.eq.s32.totalorder %v5122, 1
  %vm5169 = vcmp.eq.s32.totalorder %v5126, 1
  %vm5170 = vcmp.eq.s32.totalorder %v5130, 1
  %vm5171 = vcmp.eq.s32.totalorder %v5134, 1
  %vm5172 = vcmp.eq.s32.totalorder %v5138, 1
  %vm5173 = vcmp.eq.s32.totalorder %v5142, 1
  %vm5174 = vcmp.eq.s32.totalorder %v5146, 1
  %vm5175 = vcmp.eq.s32.totalorder %v5150, 1
  %vm5176 = vcmp.eq.s32.totalorder %v5154, 1
  %vm5177 = vcmp.eq.s32.totalorder %v5158, 1
  %vm5178 = vcmp.eq.s32.totalorder %v5162, 1
  %v5179 = vsel %vm5163, %v5087, 0.0
  %v5180 = vsel %vm5164, %v5086, 0.0
  %v5181 = vsel %vm5165, %v5085, 0.0
  %v5182 = vsel %vm5166, %v5084, 0.0
  %v5183 = vsel %vm5167, %v5083, 0.0
  %v5184 = vsel %vm5168, %v5082, 0.0
  %v5185 = vsel %vm5169, %v5081, 0.0
  %v5186 = vsel %vm5170, %v5080, 0.0
  %v5187 = vsel %vm5171, %v5079, 0.0
  %v5188 = vsel %vm5172, %v5078, 0.0
  %v5189 = vsel %vm5173, %v5077, 0.0
  %v5190 = vsel %vm5174, %v5076, 0.0
  %v5191 = vsel %vm5175, %v5075, 0.0
  %v5192 = vsel %vm5176, %v5074, 0.0
  %v5193 = vsel %vm5177, %v5073, 0.0
  %v5194 = vsel %vm5178, %v5088, 0.0
  %s5195 = scalar_lea.vmem %s5, 48
  %v5196 = vld [vmem:[%s5195] sm:$0xff]
  %v5198 = vsel %vm921, %v5196, 0
  %5200 = vmatprep.subr.mxu0 0.0
  %5201 = vmatpush1.msra.mxu0 0.0
  %5202 = vmatprep.subr.mxu0 0.0
  %5203 = vmatpush1.msra.mxu0 0.0
  %5204 = vmatprep.subr.mxu0 0.0
  %5205 = vmatpush1.msra.mxu0 0.0
  %5206 = vmatprep.subr.mxu0 0.0
  %5207 = vmatpush1.msra.mxu0 0.0
  %5208 = vmatprep.subr.mxu0 0.0
  %5209 = vmatpush1.msra.mxu0 0.0
  %5210 = vmatprep.subr.mxu0 0.0
  %5211 = vmatpush1.msra.mxu0 0.0
  %5212 = vmatprep.subr.mxu0 0.0
  %5213 = vmatpush1.msra.mxu0 0.0
  %5214 = vmatprep.subr.mxu0 0.0
  %5215 = vmatpush1.msra.mxu0 0.0
  %5216 = vmatprep.subr.mxu0 0.0
  %5217 = vmatpush1.msra.mxu0 0.0
  %5218 = vmatprep.subr.mxu0 0.0
  %5219 = vmatpush1.msra.mxu0 0.0
  %5220 = vmatprep.subr.mxu0 0.0
  %5221 = vmatpush1.msra.mxu0 0.0
  %5222 = vmatprep.subr.mxu0 0.0
  %5223 = vmatpush1.msra.mxu0 0.0
  %5224 = vmatprep.subr.mxu0 0.0
  %5225 = vmatpush1.msra.mxu0 0.0
  %5226 = vmatprep.subr.mxu0 0.0
  %5227 = vmatpush1.msra.mxu0 0.0
  %5228 = vmatprep.subr.mxu0 0.0
  %5229 = vmatpush1.msra.mxu0 0.0
  %5230 = vmatprep.subr.mxu0 %v5180
  %5231 = vmatpush1.msra.mxu0 %v5179
  %5232 = vmatprep.subr.mxu0 0.0
  %5233 = vmatpush2.msra.mxu0 0.0
  %5234 = vmatprep.subr.mxu0 0.0
  %5235 = vmatpush2.msra.mxu0 0.0
  %5236 = vmatprep.subr.mxu0 0.0
  %5237 = vmatpush2.msra.mxu0 0.0
  %5238 = vmatprep.subr.mxu0 0.0
  %5239 = vmatpush2.msra.mxu0 0.0
  %5240 = vmatprep.subr.mxu0 0.0
  %5241 = vmatpush2.msra.mxu0 0.0
  %5242 = vmatprep.subr.mxu0 0.0
  %5243 = vmatpush2.msra.mxu0 0.0
  %5244 = vmatprep.subr.mxu0 0.0
  %5245 = vmatpush2.msra.mxu0 0.0
  %5246 = vmatprep.subr.mxu0 0.0
  %5247 = vmatpush2.msra.mxu0 0.0
  %5248 = vmatprep.subr.mxu0 0.0
  %5249 = vmatpush2.msra.mxu0 0.0
  %5250 = vmatprep.subr.mxu0 0.0
  %5251 = vmatpush2.msra.mxu0 0.0
  %5252 = vmatprep.subr.mxu0 0.0
  %5253 = vmatpush2.msra.mxu0 0.0
  %5254 = vmatprep.subr.mxu0 0.0
  %5255 = vmatpush2.msra.mxu0 0.0
  %5256 = vmatprep.subr.mxu0 0.0
  %5257 = vmatpush2.msra.mxu0 0.0
  %5258 = vmatprep.subr.mxu0 0.0
  %5259 = vmatpush2.msra.mxu0 0.0
  %5260 = vmatprep.subr.mxu0 0.0
  %5261 = vmatpush2.msra.mxu0 0.0
  %5262 = vmatprep.subr.mxu0 0.0
  %5263 = vmatpush2.msra.mxu0 0.0
  %5264 = vmatprep.mubr.f32.mxu0 0.0
  %5265 = vmatmul.mubr.f32.gmra.mxu0 %v5198
  %v5266 = vpop.f32.mrf.mxu0
  %v5267 = vadd.f32 0.0, %v5266
  %v5268 = vpop.f32.mrf.mxu0
  %v5269 = vadd.f32 0.0, %v5268
  %5270 = vdwg.mxu0
  %5271 = vmatprep.subr.mxu0 0.0
  %5272 = vmatpush1.msra.mxu0 0.0
  %5273 = vmatprep.subr.mxu0 0.0
  %5274 = vmatpush1.msra.mxu0 0.0
  %5275 = vmatprep.subr.mxu0 0.0
  %5276 = vmatpush1.msra.mxu0 0.0
  %5277 = vmatprep.subr.mxu0 0.0
  %5278 = vmatpush1.msra.mxu0 0.0
  %5279 = vmatprep.subr.mxu0 0.0
  %5280 = vmatpush1.msra.mxu0 0.0
  %5281 = vmatprep.subr.mxu0 0.0
  %5282 = vmatpush1.msra.mxu0 0.0
  %5283 = vmatprep.subr.mxu0 0.0
  %5284 = vmatpush1.msra.mxu0 0.0
  %5285 = vmatprep.subr.mxu0 0.0
  %5286 = vmatpush1.msra.mxu0 0.0
  %5287 = vmatprep.subr.mxu0 0.0
  %5288 = vmatpush1.msra.mxu0 0.0
  %5289 = vmatprep.subr.mxu0 0.0
  %5290 = vmatpush1.msra.mxu0 0.0
  %5291 = vmatprep.subr.mxu0 0.0
  %5292 = vmatpush1.msra.mxu0 0.0
  %5293 = vmatprep.subr.mxu0 0.0
  %5294 = vmatpush1.msra.mxu0 0.0
  %5295 = vmatprep.subr.mxu0 0.0
  %5296 = vmatpush1.msra.mxu0 0.0
  %5297 = vmatprep.subr.mxu0 0.0
  %5298 = vmatpush1.msra.mxu0 0.0
  %5299 = vmatprep.subr.mxu0 0.0
  %5300 = vmatpush1.msra.mxu0 0.0
  %5301 = vmatprep.subr.mxu0 %v5182
  %5302 = vmatpush1.msra.mxu0 %v5181
  %5303 = vmatprep.subr.mxu0 0.0
  %5304 = vmatpush2.msra.mxu0 0.0
  %5305 = vmatprep.subr.mxu0 0.0
  %5306 = vmatpush2.msra.mxu0 0.0
  %5307 = vmatprep.subr.mxu0 0.0
  %5308 = vmatpush2.msra.mxu0 0.0
  %5309 = vmatprep.subr.mxu0 0.0
  %5310 = vmatpush2.msra.mxu0 0.0
  %5311 = vmatprep.subr.mxu0 0.0
  %5312 = vmatpush2.msra.mxu0 0.0
  %5313 = vmatprep.subr.mxu0 0.0
  %5314 = vmatpush2.msra.mxu0 0.0
  %5315 = vmatprep.subr.mxu0 0.0
  %5316 = vmatpush2.msra.mxu0 0.0
  %5317 = vmatprep.subr.mxu0 0.0
  %5318 = vmatpush2.msra.mxu0 0.0
  %5319 = vmatprep.subr.mxu0 0.0
  %5320 = vmatpush2.msra.mxu0 0.0
  %5321 = vmatprep.subr.mxu0 0.0
  %5322 = vmatpush2.msra.mxu0 0.0
  %5323 = vmatprep.subr.mxu0 0.0
  %5324 = vmatpush2.msra.mxu0 0.0
  %5325 = vmatprep.subr.mxu0 0.0
  %5326 = vmatpush2.msra.mxu0 0.0
  %5327 = vmatprep.subr.mxu0 0.0
  %5328 = vmatpush2.msra.mxu0 0.0
  %5329 = vmatprep.subr.mxu0 0.0
  %5330 = vmatpush2.msra.mxu0 0.0
  %5331 = vmatprep.subr.mxu0 0.0
  %5332 = vmatpush2.msra.mxu0 0.0
  %5333 = vmatprep.subr.mxu0 0.0
  %5334 = vmatpush2.msra.mxu0 0.0
  %5335 = vmatprep.mubr.f32.mxu0 0.0
  %5336 = vmatmul.mubr.f32.gmra.mxu0 %v5198
  %v5337 = vpop.f32.mrf.mxu0
  %v5338 = vadd.f32 0.0, %v5337
  %v5339 = vpop.f32.mrf.mxu0
  %v5340 = vadd.f32 0.0, %v5339
  %5341 = vdwg.mxu0
  %5342 = vmatprep.subr.mxu0 0.0
  %5343 = vmatpush1.msra.mxu0 0.0
  %5344 = vmatprep.subr.mxu0 0.0
  %5345 = vmatpush1.msra.mxu0 0.0
  %5346 = vmatprep.subr.mxu0 0.0
  %5347 = vmatpush1.msra.mxu0 0.0
  %5348 = vmatprep.subr.mxu0 0.0
  %5349 = vmatpush1.msra.mxu0 0.0
  %5350 = vmatprep.subr.mxu0 0.0
  %5351 = vmatpush1.msra.mxu0 0.0
  %5352 = vmatprep.subr.mxu0 0.0
  %5353 = vmatpush1.msra.mxu0 0.0
  %5354 = vmatprep.subr.mxu0 0.0
  %5355 = vmatpush1.msra.mxu0 0.0
  %5356 = vmatprep.subr.mxu0 0.0
  %5357 = vmatpush1.msra.mxu0 0.0
  %5358 = vmatprep.subr.mxu0 0.0
  %5359 = vmatpush1.msra.mxu0 0.0
  %5360 = vmatprep.subr.mxu0 0.0
  %5361 = vmatpush1.msra.mxu0 0.0
  %5362 = vmatprep.subr.mxu0 0.0
  %5363 = vmatpush1.msra.mxu0 0.0
  %5364 = vmatprep.subr.mxu0 0.0
  %5365 = vmatpush1.msra.mxu0 0.0
  %5366 = vmatprep.subr.mxu0 0.0
  %5367 = vmatpush1.msra.mxu0 0.0
  %5368 = vmatprep.subr.mxu0 0.0
  %5369 = vmatpush1.msra.mxu0 0.0
  %5370 = vmatprep.subr.mxu0 0.0
  %5371 = vmatpush1.msra.mxu0 0.0
  %5372 = vmatprep.subr.mxu0 %v5184
  %5373 = vmatpush1.msra.mxu0 %v5183
  %5374 = vmatprep.subr.mxu0 0.0
  %5375 = vmatpush2.msra.mxu0 0.0
  %5376 = vmatprep.subr.mxu0 0.0
  %5377 = vmatpush2.msra.mxu0 0.0
  %5378 = vmatprep.subr.mxu0 0.0
  %5379 = vmatpush2.msra.mxu0 0.0
  %5380 = vmatprep.subr.mxu0 0.0
  %5381 = vmatpush2.msra.mxu0 0.0
  %5382 = vmatprep.subr.mxu0 0.0
  %5383 = vmatpush2.msra.mxu0 0.0
  %5384 = vmatprep.subr.mxu0 0.0
  %5385 = vmatpush2.msra.mxu0 0.0
  %5386 = vmatprep.subr.mxu0 0.0
  %5387 = vmatpush2.msra.mxu0 0.0
  %5388 = vmatprep.subr.mxu0 0.0
  %5389 = vmatpush2.msra.mxu0 0.0
  %5390 = vmatprep.subr.mxu0 0.0
  %5391 = vmatpush2.msra.mxu0 0.0
  %5392 = vmatprep.subr.mxu0 0.0
  %5393 = vmatpush2.msra.mxu0 0.0
  %5394 = vmatprep.subr.mxu0 0.0
  %5395 = vmatpush2.msra.mxu0 0.0
  %5396 = vmatprep.subr.mxu0 0.0
  %5397 = vmatpush2.msra.mxu0 0.0
  %5398 = vmatprep.subr.mxu0 0.0
  %5399 = vmatpush2.msra.mxu0 0.0
  %5400 = vmatprep.subr.mxu0 0.0
  %5401 = vmatpush2.msra.mxu0 0.0
  %5402 = vmatprep.subr.mxu0 0.0
  %5403 = vmatpush2.msra.mxu0 0.0
  %5404 = vmatprep.subr.mxu0 0.0
  %5405 = vmatpush2.msra.mxu0 0.0
  %5406 = vmatprep.mubr.f32.mxu0 0.0
  %5407 = vmatmul.mubr.f32.gmra.mxu0 %v5198
  %v5408 = vpop.f32.mrf.mxu0
  %v5409 = vadd.f32 0.0, %v5408
  %v5410 = vpop.f32.mrf.mxu0
  %v5411 = vadd.f32 0.0, %v5410
  %5412 = vdwg.mxu0
  %5413 = vmatprep.subr.mxu0 0.0
  %5414 = vmatpush1.msra.mxu0 0.0
  %5415 = vmatprep.subr.mxu0 0.0
  %5416 = vmatpush1.msra.mxu0 0.0
  %5417 = vmatprep.subr.mxu0 0.0
  %5418 = vmatpush1.msra.mxu0 0.0
  %5419 = vmatprep.subr.mxu0 0.0
  %5420 = vmatpush1.msra.mxu0 0.0
  %5421 = vmatprep.subr.mxu0 0.0
  %5422 = vmatpush1.msra.mxu0 0.0
  %5423 = vmatprep.subr.mxu0 0.0
  %5424 = vmatpush1.msra.mxu0 0.0
  %5425 = vmatprep.subr.mxu0 0.0
  %5426 = vmatpush1.msra.mxu0 0.0
  %5427 = vmatprep.subr.mxu0 0.0
  %5428 = vmatpush1.msra.mxu0 0.0
  %5429 = vmatprep.subr.mxu0 0.0
  %5430 = vmatpush1.msra.mxu0 0.0
  %5431 = vmatprep.subr.mxu0 0.0
  %5432 = vmatpush1.msra.mxu0 0.0
  %5433 = vmatprep.subr.mxu0 0.0
  %5434 = vmatpush1.msra.mxu0 0.0
  %5435 = vmatprep.subr.mxu0 0.0
  %5436 = vmatpush1.msra.mxu0 0.0
  %5437 = vmatprep.subr.mxu0 0.0
  %5438 = vmatpush1.msra.mxu0 0.0
  %5439 = vmatprep.subr.mxu0 0.0
  %5440 = vmatpush1.msra.mxu0 0.0
  %5441 = vmatprep.subr.mxu0 0.0
  %5442 = vmatpush1.msra.mxu0 0.0
  %5443 = vmatprep.subr.mxu0 %v5186
  %5444 = vmatpush1.msra.mxu0 %v5185
  %5445 = vmatprep.subr.mxu0 0.0
  %5446 = vmatpush2.msra.mxu0 0.0
  %5447 = vmatprep.subr.mxu0 0.0
  %5448 = vmatpush2.msra.mxu0 0.0
  %5449 = vmatprep.subr.mxu0 0.0
  %5450 = vmatpush2.msra.mxu0 0.0
  %5451 = vmatprep.subr.mxu0 0.0
  %5452 = vmatpush2.msra.mxu0 0.0
  %5453 = vmatprep.subr.mxu0 0.0
  %5454 = vmatpush2.msra.mxu0 0.0
  %5455 = vmatprep.subr.mxu0 0.0
  %5456 = vmatpush2.msra.mxu0 0.0
  %5457 = vmatprep.subr.mxu0 0.0
  %5458 = vmatpush2.msra.mxu0 0.0
  %5459 = vmatprep.subr.mxu0 0.0
  %5460 = vmatpush2.msra.mxu0 0.0
  %5461 = vmatprep.subr.mxu0 0.0
  %5462 = vmatpush2.msra.mxu0 0.0
  %5463 = vmatprep.subr.mxu0 0.0
  %5464 = vmatpush2.msra.mxu0 0.0
  %5465 = vmatprep.subr.mxu0 0.0
  %5466 = vmatpush2.msra.mxu0 0.0
  %5467 = vmatprep.subr.mxu0 0.0
  %5468 = vmatpush2.msra.mxu0 0.0
  %5469 = vmatprep.subr.mxu0 0.0
  %5470 = vmatpush2.msra.mxu0 0.0
  %5471 = vmatprep.subr.mxu0 0.0
  %5472 = vmatpush2.msra.mxu0 0.0
  %5473 = vmatprep.subr.mxu0 0.0
  %5474 = vmatpush2.msra.mxu0 0.0
  %5475 = vmatprep.subr.mxu0 0.0
  %5476 = vmatpush2.msra.mxu0 0.0
  %5477 = vmatprep.mubr.f32.mxu0 0.0
  %5478 = vmatmul.mubr.f32.gmra.mxu0 %v5198
  %v5479 = vpop.f32.mrf.mxu0
  %v5480 = vadd.f32 0.0, %v5479
  %v5481 = vpop.f32.mrf.mxu0
  %v5482 = vadd.f32 0.0, %v5481
  %5483 = vdwg.mxu0
  %5484 = vmatprep.subr.mxu0 0.0
  %5485 = vmatpush1.msra.mxu0 0.0
  %5486 = vmatprep.subr.mxu0 0.0
  %5487 = vmatpush1.msra.mxu0 0.0
  %5488 = vmatprep.subr.mxu0 0.0
  %5489 = vmatpush1.msra.mxu0 0.0
  %5490 = vmatprep.subr.mxu0 0.0
  %5491 = vmatpush1.msra.mxu0 0.0
  %5492 = vmatprep.subr.mxu0 0.0
  %5493 = vmatpush1.msra.mxu0 0.0
  %5494 = vmatprep.subr.mxu0 0.0
  %5495 = vmatpush1.msra.mxu0 0.0
  %5496 = vmatprep.subr.mxu0 0.0
  %5497 = vmatpush1.msra.mxu0 0.0
  %5498 = vmatprep.subr.mxu0 0.0
  %5499 = vmatpush1.msra.mxu0 0.0
  %5500 = vmatprep.subr.mxu0 0.0
  %5501 = vmatpush1.msra.mxu0 0.0
  %5502 = vmatprep.subr.mxu0 0.0
  %5503 = vmatpush1.msra.mxu0 0.0
  %5504 = vmatprep.subr.mxu0 0.0
  %5505 = vmatpush1.msra.mxu0 0.0
  %5506 = vmatprep.subr.mxu0 0.0
  %5507 = vmatpush1.msra.mxu0 0.0
  %5508 = vmatprep.subr.mxu0 0.0
  %5509 = vmatpush1.msra.mxu0 0.0
  %5510 = vmatprep.subr.mxu0 0.0
  %5511 = vmatpush1.msra.mxu0 0.0
  %5512 = vmatprep.subr.mxu0 0.0
  %5513 = vmatpush1.msra.mxu0 0.0
  %5514 = vmatprep.subr.mxu0 %v5188
  %5515 = vmatpush1.msra.mxu0 %v5187
  %5516 = vmatprep.subr.mxu0 0.0
  %5517 = vmatpush2.msra.mxu0 0.0
  %5518 = vmatprep.subr.mxu0 0.0
  %5519 = vmatpush2.msra.mxu0 0.0
  %5520 = vmatprep.subr.mxu0 0.0
  %5521 = vmatpush2.msra.mxu0 0.0
  %5522 = vmatprep.subr.mxu0 0.0
  %5523 = vmatpush2.msra.mxu0 0.0
  %5524 = vmatprep.subr.mxu0 0.0
  %5525 = vmatpush2.msra.mxu0 0.0
  %5526 = vmatprep.subr.mxu0 0.0
  %5527 = vmatpush2.msra.mxu0 0.0
  %5528 = vmatprep.subr.mxu0 0.0
  %5529 = vmatpush2.msra.mxu0 0.0
  %5530 = vmatprep.subr.mxu0 0.0
  %5531 = vmatpush2.msra.mxu0 0.0
  %5532 = vmatprep.subr.mxu0 0.0
  %5533 = vmatpush2.msra.mxu0 0.0
  %5534 = vmatprep.subr.mxu0 0.0
  %5535 = vmatpush2.msra.mxu0 0.0
  %5536 = vmatprep.subr.mxu0 0.0
  %5537 = vmatpush2.msra.mxu0 0.0
  %5538 = vmatprep.subr.mxu0 0.0
  %5539 = vmatpush2.msra.mxu0 0.0
  %5540 = vmatprep.subr.mxu0 0.0
  %5541 = vmatpush2.msra.mxu0 0.0
  %5542 = vmatprep.subr.mxu0 0.0
  %5543 = vmatpush2.msra.mxu0 0.0
  %5544 = vmatprep.subr.mxu0 0.0
  %5545 = vmatpush2.msra.mxu0 0.0
  %5546 = vmatprep.subr.mxu0 0.0
  %5547 = vmatpush2.msra.mxu0 0.0
  %5548 = vmatprep.mubr.f32.mxu0 0.0
  %5549 = vmatmul.mubr.f32.gmra.mxu0 %v5198
  %v5550 = vpop.f32.mrf.mxu0
  %v5551 = vadd.f32 0.0, %v5550
  %v5552 = vpop.f32.mrf.mxu0
  %v5553 = vadd.f32 0.0, %v5552
  %5554 = vdwg.mxu0
  %5555 = vmatprep.subr.mxu0 0.0
  %5556 = vmatpush1.msra.mxu0 0.0
  %5557 = vmatprep.subr.mxu0 0.0
  %5558 = vmatpush1.msra.mxu0 0.0
  %5559 = vmatprep.subr.mxu0 0.0
  %5560 = vmatpush1.msra.mxu0 0.0
  %5561 = vmatprep.subr.mxu0 0.0
  %5562 = vmatpush1.msra.mxu0 0.0
  %5563 = vmatprep.subr.mxu0 0.0
  %5564 = vmatpush1.msra.mxu0 0.0
  %5565 = vmatprep.subr.mxu0 0.0
  %5566 = vmatpush1.msra.mxu0 0.0
  %5567 = vmatprep.subr.mxu0 0.0
  %5568 = vmatpush1.msra.mxu0 0.0
  %5569 = vmatprep.subr.mxu0 0.0
  %5570 = vmatpush1.msra.mxu0 0.0
  %5571 = vmatprep.subr.mxu0 0.0
  %5572 = vmatpush1.msra.mxu0 0.0
  %5573 = vmatprep.subr.mxu0 0.0
  %5574 = vmatpush1.msra.mxu0 0.0
  %5575 = vmatprep.subr.mxu0 0.0
  %5576 = vmatpush1.msra.mxu0 0.0
  %5577 = vmatprep.subr.mxu0 0.0
  %5578 = vmatpush1.msra.mxu0 0.0
  %5579 = vmatprep.subr.mxu0 0.0
  %5580 = vmatpush1.msra.mxu0 0.0
  %5581 = vmatprep.subr.mxu0 0.0
  %5582 = vmatpush1.msra.mxu0 0.0
  %5583 = vmatprep.subr.mxu0 0.0
  %5584 = vmatpush1.msra.mxu0 0.0
  %5585 = vmatprep.subr.mxu0 %v5190
  %5586 = vmatpush1.msra.mxu0 %v5189
  %5587 = vmatprep.subr.mxu0 0.0
  %5588 = vmatpush2.msra.mxu0 0.0
  %5589 = vmatprep.subr.mxu0 0.0
  %5590 = vmatpush2.msra.mxu0 0.0
  %5591 = vmatprep.subr.mxu0 0.0
  %5592 = vmatpush2.msra.mxu0 0.0
  %5593 = vmatprep.subr.mxu0 0.0
  %5594 = vmatpush2.msra.mxu0 0.0
  %5595 = vmatprep.subr.mxu0 0.0
  %5596 = vmatpush2.msra.mxu0 0.0
  %5597 = vmatprep.subr.mxu0 0.0
  %5598 = vmatpush2.msra.mxu0 0.0
  %5599 = vmatprep.subr.mxu0 0.0
  %5600 = vmatpush2.msra.mxu0 0.0
  %5601 = vmatprep.subr.mxu0 0.0
  %5602 = vmatpush2.msra.mxu0 0.0
  %5603 = vmatprep.subr.mxu0 0.0
  %5604 = vmatpush2.msra.mxu0 0.0
  %5605 = vmatprep.subr.mxu0 0.0
  %5606 = vmatpush2.msra.mxu0 0.0
  %5607 = vmatprep.subr.mxu0 0.0
  %5608 = vmatpush2.msra.mxu0 0.0
  %5609 = vmatprep.subr.mxu0 0.0
  %5610 = vmatpush2.msra.mxu0 0.0
  %5611 = vmatprep.subr.mxu0 0.0
  %5612 = vmatpush2.msra.mxu0 0.0
  %5613 = vmatprep.subr.mxu0 0.0
  %5614 = vmatpush2.msra.mxu0 0.0
  %5615 = vmatprep.subr.mxu0 0.0
  %5616 = vmatpush2.msra.mxu0 0.0
  %5617 = vmatprep.subr.mxu0 0.0
  %5618 = vmatpush2.msra.mxu0 0.0
  %5619 = vmatprep.mubr.f32.mxu0 0.0
  %5620 = vmatmul.mubr.f32.gmra.mxu0 %v5198
  %v5621 = vpop.f32.mrf.mxu0
  %v5622 = vadd.f32 0.0, %v5621
  %v5623 = vpop.f32.mrf.mxu0
  %v5624 = vadd.f32 0.0, %v5623
  %5625 = vdwg.mxu0
  %5626 = vmatprep.subr.mxu0 0.0
  %5627 = vmatpush1.msra.mxu0 0.0
  %5628 = vmatprep.subr.mxu0 0.0
  %5629 = vmatpush1.msra.mxu0 0.0
  %5630 = vmatprep.subr.mxu0 0.0
  %5631 = vmatpush1.msra.mxu0 0.0
  %5632 = vmatprep.subr.mxu0 0.0
  %5633 = vmatpush1.msra.mxu0 0.0
  %5634 = vmatprep.subr.mxu0 0.0
  %5635 = vmatpush1.msra.mxu0 0.0
  %5636 = vmatprep.subr.mxu0 0.0
  %5637 = vmatpush1.msra.mxu0 0.0
  %5638 = vmatprep.subr.mxu0 0.0
  %5639 = vmatpush1.msra.mxu0 0.0
  %5640 = vmatprep.subr.mxu0 0.0
  %5641 = vmatpush1.msra.mxu0 0.0
  %5642 = vmatprep.subr.mxu0 0.0
  %5643 = vmatpush1.msra.mxu0 0.0
  %5644 = vmatprep.subr.mxu0 0.0
  %5645 = vmatpush1.msra.mxu0 0.0
  %5646 = vmatprep.subr.mxu0 0.0
  %5647 = vmatpush1.msra.mxu0 0.0
  %5648 = vmatprep.subr.mxu0 0.0
  %5649 = vmatpush1.msra.mxu0 0.0
  %5650 = vmatprep.subr.mxu0 0.0
  %5651 = vmatpush1.msra.mxu0 0.0
  %5652 = vmatprep.subr.mxu0 0.0
  %5653 = vmatpush1.msra.mxu0 0.0
  %5654 = vmatprep.subr.mxu0 0.0
  %5655 = vmatpush1.msra.mxu0 0.0
  %5656 = vmatprep.subr.mxu0 %v5192
  %5657 = vmatpush1.msra.mxu0 %v5191
  %5658 = vmatprep.subr.mxu0 0.0
  %5659 = vmatpush2.msra.mxu0 0.0
  %5660 = vmatprep.subr.mxu0 0.0
  %5661 = vmatpush2.msra.mxu0 0.0
  %5662 = vmatprep.subr.mxu0 0.0
  %5663 = vmatpush2.msra.mxu0 0.0
  %5664 = vmatprep.subr.mxu0 0.0
  %5665 = vmatpush2.msra.mxu0 0.0
  %5666 = vmatprep.subr.mxu0 0.0
  %5667 = vmatpush2.msra.mxu0 0.0
  %5668 = vmatprep.subr.mxu0 0.0
  %5669 = vmatpush2.msra.mxu0 0.0
  %5670 = vmatprep.subr.mxu0 0.0
  %5671 = vmatpush2.msra.mxu0 0.0
  %5672 = vmatprep.subr.mxu0 0.0
  %5673 = vmatpush2.msra.mxu0 0.0
  %5674 = vmatprep.subr.mxu0 0.0
  %5675 = vmatpush2.msra.mxu0 0.0
  %5676 = vmatprep.subr.mxu0 0.0
  %5677 = vmatpush2.msra.mxu0 0.0
  %5678 = vmatprep.subr.mxu0 0.0
  %5679 = vmatpush2.msra.mxu0 0.0
  %5680 = vmatprep.subr.mxu0 0.0
  %5681 = vmatpush2.msra.mxu0 0.0
  %5682 = vmatprep.subr.mxu0 0.0
  %5683 = vmatpush2.msra.mxu0 0.0
  %5684 = vmatprep.subr.mxu0 0.0
  %5685 = vmatpush2.msra.mxu0 0.0
  %5686 = vmatprep.subr.mxu0 0.0
  %5687 = vmatpush2.msra.mxu0 0.0
  %5688 = vmatprep.subr.mxu0 0.0
  %5689 = vmatpush2.msra.mxu0 0.0
  %5690 = vmatprep.mubr.f32.mxu0 0.0
  %5691 = vmatmul.mubr.f32.gmra.mxu0 %v5198
  %v5692 = vpop.f32.mrf.mxu0
  %v5693 = vadd.f32 0.0, %v5692
  %v5694 = vpop.f32.mrf.mxu0
  %v5695 = vadd.f32 0.0, %v5694
  %5696 = vdwg.mxu0
  %5697 = vmatprep.subr.mxu0 0.0
  %5698 = vmatpush1.msra.mxu0 0.0
  %5699 = vmatprep.subr.mxu0 0.0
  %5700 = vmatpush1.msra.mxu0 0.0
  %5701 = vmatprep.subr.mxu0 0.0
  %5702 = vmatpush1.msra.mxu0 0.0
  %5703 = vmatprep.subr.mxu0 0.0
  %5704 = vmatpush1.msra.mxu0 0.0
  %5705 = vmatprep.subr.mxu0 0.0
  %5706 = vmatpush1.msra.mxu0 0.0
  %5707 = vmatprep.subr.mxu0 0.0
  %5708 = vmatpush1.msra.mxu0 0.0
  %5709 = vmatprep.subr.mxu0 0.0
  %5710 = vmatpush1.msra.mxu0 0.0
  %5711 = vmatprep.subr.mxu0 0.0
  %5712 = vmatpush1.msra.mxu0 0.0
  %5713 = vmatprep.subr.mxu0 0.0
  %5714 = vmatpush1.msra.mxu0 0.0
  %5715 = vmatprep.subr.mxu0 0.0
  %5716 = vmatpush1.msra.mxu0 0.0
  %5717 = vmatprep.subr.mxu0 0.0
  %5718 = vmatpush1.msra.mxu0 0.0
  %5719 = vmatprep.subr.mxu0 0.0
  %5720 = vmatpush1.msra.mxu0 0.0
  %5721 = vmatprep.subr.mxu0 0.0
  %5722 = vmatpush1.msra.mxu0 0.0
  %5723 = vmatprep.subr.mxu0 0.0
  %5724 = vmatpush1.msra.mxu0 0.0
  %5725 = vmatprep.subr.mxu0 0.0
  %5726 = vmatpush1.msra.mxu0 0.0
  %5727 = vmatprep.subr.mxu0 %v5194
  %5728 = vmatpush1.msra.mxu0 %v5193
  %5729 = vmatprep.subr.mxu0 0.0
  %5730 = vmatpush2.msra.mxu0 0.0
  %5731 = vmatprep.subr.mxu0 0.0
  %5732 = vmatpush2.msra.mxu0 0.0
  %5733 = vmatprep.subr.mxu0 0.0
  %5734 = vmatpush2.msra.mxu0 0.0
  %5735 = vmatprep.subr.mxu0 0.0
  %5736 = vmatpush2.msra.mxu0 0.0
  %5737 = vmatprep.subr.mxu0 0.0
  %5738 = vmatpush2.msra.mxu0 0.0
  %5739 = vmatprep.subr.mxu0 0.0
  %5740 = vmatpush2.msra.mxu0 0.0
  %5741 = vmatprep.subr.mxu0 0.0
  %5742 = vmatpush2.msra.mxu0 0.0
  %5743 = vmatprep.subr.mxu0 0.0
  %5744 = vmatpush2.msra.mxu0 0.0
  %5745 = vmatprep.subr.mxu0 0.0
  %5746 = vmatpush2.msra.mxu0 0.0
  %5747 = vmatprep.subr.mxu0 0.0
  %5748 = vmatpush2.msra.mxu0 0.0
  %5749 = vmatprep.subr.mxu0 0.0
  %5750 = vmatpush2.msra.mxu0 0.0
  %5751 = vmatprep.subr.mxu0 0.0
  %5752 = vmatpush2.msra.mxu0 0.0
  %5753 = vmatprep.subr.mxu0 0.0
  %5754 = vmatpush2.msra.mxu0 0.0
  %5755 = vmatprep.subr.mxu0 0.0
  %5756 = vmatpush2.msra.mxu0 0.0
  %5757 = vmatprep.subr.mxu0 0.0
  %5758 = vmatpush2.msra.mxu0 0.0
  %5759 = vmatprep.subr.mxu0 0.0
  %5760 = vmatpush2.msra.mxu0 0.0
  %5761 = vmatprep.mubr.f32.mxu0 0.0
  %5762 = vmatmul.mubr.f32.gmra.mxu0 %v5198
  %v5763 = vpop.f32.mrf.mxu0
  %v5764 = vadd.f32 0.0, %v5763
  %v5765 = vpop.f32.mrf.mxu0
  %v5766 = vadd.f32 0.0, %v5765
  %5767 = vdwg.mxu0
  %v5768 = vadd.f32 %v5024, %v5267
  %v5769 = vadd.f32 %v5025, %v5269
  %v5770 = vadd.f32 %v5026, %v5338
  %v5771 = vadd.f32 %v5027, %v5340
  %v5772 = vadd.f32 %v5028, %v5409
  %v5773 = vadd.f32 %v5029, %v5411
  %v5774 = vadd.f32 %v5030, %v5480
  %v5775 = vadd.f32 %v5031, %v5482
  %v5776 = vadd.f32 %v5032, %v5551
  %v5777 = vadd.f32 %v5033, %v5553
  %v5778 = vadd.f32 %v5034, %v5622
  %v5779 = vadd.f32 %v5035, %v5624
  %v5780 = vadd.f32 %v5036, %v5693
  %v5781 = vadd.f32 %v5037, %v5695
  %v5782 = vadd.f32 %v5038, %v5764
  %v5783 = vadd.f32 %v5039, %v5766
  %v5784 = vld [vmem:[%s6] sm:$0xff]
  %5786 = vset.pattern.permute.xlu0 0
  %5787 = vperm.xlu0 %5786, %v5784
  %v5788 = vpop.permute.xlu0 %5787
  %v5790 = vmul.f32 %v5768, %v5788
  %v5791 = vmul.f32 %v5769, %v5788
  %v5792 = vmul.f32 %v5770, %v5788
  %v5793 = vmul.f32 %v5771, %v5788
  %v5794 = vmul.f32 %v5772, %v5788
  %v5795 = vmul.f32 %v5773, %v5788
  %v5796 = vmul.f32 %v5774, %v5788
  %v5797 = vmul.f32 %v5775, %v5788
  %v5798 = vmul.f32 %v5776, %v5788
  %v5799 = vmul.f32 %v5777, %v5788
  %v5800 = vmul.f32 %v5778, %v5788
  %v5801 = vmul.f32 %v5779, %v5788
  %v5802 = vmul.f32 %v5780, %v5788
  %v5803 = vmul.f32 %v5781, %v5788
  %v5804 = vmul.f32 %v5782, %v5788
  %v5805 = vmul.f32 %v5783, %v5788
  %v5806 = vld [vmem:[%s7] sm:$0xff]
  %5808 = vset.pattern.permute.xlu0 0
  %5809 = vperm.xlu0 %5808, %v5806
  %v5810 = vpop.permute.xlu0 %5809
  %v5812 = vadd.f32 %v5790, %v5810
  %v5813 = vadd.f32 %v5791, %v5810
  %v5814 = vadd.f32 %v5792, %v5810
  %v5815 = vadd.f32 %v5793, %v5810
  %v5816 = vadd.f32 %v5794, %v5810
  %v5817 = vadd.f32 %v5795, %v5810
  %v5818 = vadd.f32 %v5796, %v5810
  %v5819 = vadd.f32 %v5797, %v5810
  %v5820 = vadd.f32 %v5798, %v5810
  %v5821 = vadd.f32 %v5799, %v5810
  %v5822 = vadd.f32 %v5800, %v5810
  %v5823 = vadd.f32 %v5801, %v5810
  %v5824 = vadd.f32 %v5802, %v5810
  %v5825 = vadd.f32 %v5803, %v5810
  %v5826 = vadd.f32 %v5804, %v5810
  %v5827 = vadd.f32 %v5805, %v5810
  %v5828 = vmax.f32 %v5812, 0.0
  %v5829 = vmax.f32 %v5813, 0.0
  %v5830 = vmax.f32 %v5814, 0.0
  %v5831 = vmax.f32 %v5815, 0.0
  %v5832 = vmax.f32 %v5816, 0.0
  %v5833 = vmax.f32 %v5817, 0.0
  %v5834 = vmax.f32 %v5818, 0.0
  %v5835 = vmax.f32 %v5819, 0.0
  %v5836 = vmax.f32 %v5820, 0.0
  %v5837 = vmax.f32 %v5821, 0.0
  %v5838 = vmax.f32 %v5822, 0.0
  %v5839 = vmax.f32 %v5823, 0.0
  %v5840 = vmax.f32 %v5824, 0.0
  %v5841 = vmax.f32 %v5825, 0.0
  %v5842 = vmax.f32 %v5826, 0.0
  %v5843 = vmax.f32 %v5827, 0.0
  %5844 = vst [vmem:[%s8] sm:$0xff] %v5828
  %5845 = vst [vmem:[%s8 + $0x8] sm:$0xff] %v5829
  %5846 = vst [vmem:[%s8 + $0x10] sm:$0xff] %v5830
  %5847 = vst [vmem:[%s8 + $0x18] sm:$0xff] %v5831
  %5848 = vst [vmem:[%s8 + $0x20] sm:$0xff] %v5832
  %5849 = vst [vmem:[%s8 + $0x28] sm:$0xff] %v5833
  %5850 = vst [vmem:[%s8 + $0x30] sm:$0xff] %v5834
  %5851 = vst [vmem:[%s8 + $0x38] sm:$0xff] %v5835
  %5852 = vst [vmem:[%s8 + $0x40] sm:$0xff] %v5836
  %5853 = vst [vmem:[%s8 + $0x48] sm:$0xff] %v5837
  %5854 = vst [vmem:[%s8 + $0x50] sm:$0xff] %v5838
  %5855 = vst [vmem:[%s8 + $0x58] sm:$0xff] %v5839
  %5856 = vst [vmem:[%s8 + $0x60] sm:$0xff] %v5840
  %5857 = vst [vmem:[%s8 + $0x68] sm:$0xff] %v5841
  %5858 = vst [vmem:[%s8 + $0x70] sm:$0xff] %v5842
  %5859 = vst [vmem:[%s8 + $0x78] sm:$0xff] %v5843
  // Predicated region
  $region34: #{gnn_layer_gat_forward.2} parent=0 // pred_check
    _
  $region35: #{gnn_layer_gat_forward.2} parent=0 // pred_check_branch
    %5861 = sbr.rel (0) target = $region37
  $region36: #{gnn_layer_gat_forward.2} parent=0 // pred_region
    _
  $region37: #{gnn_layer_gat_forward.2} parent=0 // pred_fallthru
    _
  // Predicated region
  $region38: #{gnn_layer_gat_forward.2} parent=0 // pred_check
    _
  $region39: #{gnn_layer_gat_forward.2} parent=0 // pred_check_branch
    %5863 = sbr.rel (0) target = $region41
  $region40: #{gnn_layer_gat_forward.2} parent=0 // pred_region
    _
  $region41: #{gnn_layer_gat_forward.2} parent=0 // pred_fallthru
    _

</llo_original>
